<compile_context>
chip_gen: v5e
topology: v5e:2x2
jax: 0.10.0
libtpu: 0.0.40
codegen_flags: <defaults>
</compile_context>

<pallas_src>
import functools

import jax
import jax.numpy as jnp
from jax.experimental import pallas as pl
from jax.experimental.pallas import tpu as pltpu

HIDDEN_DIM = 128
INPUT_DIM = 5000
OUTPUT_DIM = 5


def mlp_kernel(x_ref, w1_ref, b1_ref, w2_ref, b2_ref, o_ref, *, compute_dtype):
    # In-kernel f32 -> bf16 cast of the streamed activation tile (review #1).
    xt = x_ref[...].astype(compute_dtype)
    # fc1 on the MXU: bf16 x bf16 with f32 accumulation.
    h = jnp.dot(xt, w1_ref[...], preferred_element_type=jnp.float32)
    # bias + ReLU in f32 on the VPU (b1 is (1, hidden) and broadcasts over rows).
    h = jnp.maximum(h + b1_ref[...], 0.0)
    # fc2 straight from registers (review #5): no VMEM scratch round-trip.
    z = jnp.dot(h.astype(compute_dtype), w2_ref[...],
                preferred_element_type=jnp.float32)
    o_ref[...] = (z + b2_ref[...]).astype(o_ref.dtype)


def _round_up(n, m):
    return ((n + m - 1) // m) * m


def _vmem_limit_bytes():
    # Per-generation VMEM budget: never request more than 3/4 of physical VMEM
    # (v7x only has 64 MiB per TensorCore), capped at 64 MiB.
    cap = 128 << 20
    try:
        info = pltpu.get_tpu_info()
        cap = int(getattr(info, "vmem_capacity_bytes", cap)) or cap
    except Exception:
        pass
    return int(min(64 << 20, (cap * 3) // 4))


def feed_forward_nn(x, w1, b1, w2, b2, *, tile_b=256,
                    compute_dtype=jnp.bfloat16):
    """Forward pass of FeedForwardNN: relu(x @ w1 + b1) @ w2 + b2.

    x:  [B, in_dim] float32 (streamed; cast to bf16 inside the kernel)
    w1: [in_dim, hidden], b1: [hidden] or [1, hidden]
    w2: [hidden, out],    b2: [out]    or [1, out]
    tile_b: batch tile. 256 is a good default on all generations (multiple of
            256 fills the MXU on v6e/v7x); 512 is reasonable on v5e/v6e for
            very large B.
    """
    B, in_dim = x.shape
    hid = w1.shape[-1]
    out_dim = w2.shape[-1]

    # Clamp the tile for tiny batches; keep it sublane-aligned (multiple of 8).
    tile_b = _round_up(min(tile_b, _round_up(B, 8)), 8)
    num_tiles = pl.cdiv(B, tile_b)
    b_pad = num_tiles * tile_b
    if b_pad != B:
        x = jnp.pad(x, ((0, b_pad - B), (0, 0)))

    # Weights to bf16 in the wrapper (1.3 MB, read once). x stays f32 (review #1).
    w1c = w1.astype(compute_dtype)
    w2c = w2.astype(compute_dtype)
    b1f = b1.astype(jnp.float32).reshape(1, hid)
    b2f = b2.astype(jnp.float32).reshape(1, out_dim)

    kernel = functools.partial(mlp_kernel, compute_dtype=compute_dtype)

    out = pl.pallas_call(
        kernel,
        out_shape=jax.ShapeDtypeStruct((b_pad, out_dim), jnp.float32),
        grid_spec=pltpu.PrefetchScalarGridSpec(
            num_scalar_prefetch=0,
            grid=(num_tiles,),
            in_specs=[
                # Streamed / double-buffered f32 activation tile.
                pl.BlockSpec((tile_b, in_dim), lambda i: (i, 0)),
                # Constant block index -> fetched once, resident across grid.
                pl.BlockSpec((in_dim, hid), lambda i: (0, 0)),
                pl.BlockSpec((1, hid), lambda i: (0, 0)),
                pl.BlockSpec((hid, out_dim), lambda i: (0, 0)),
                pl.BlockSpec((1, out_dim), lambda i: (0, 0)),
            ],
            out_specs=pl.BlockSpec((tile_b, out_dim), lambda i: (i, 0)),
        ),
        compiler_params=pltpu.CompilerParams(
            dimension_semantics=("parallel",),
            vmem_limit_bytes=_vmem_limit_bytes(),
        ),
    )(x, w1c, b1f, w2c, b2f)

    return out[:B] if b_pad != B else out


def init_params(key, in_dim, hid, out_dim):
    # Deterministic init mimicking torch.nn.Linear's U(-1/sqrt(fan_in), ...).
    k1, k2, k3, k4 = jax.random.split(key, 4)
    lim1 = 1.0 / jnp.sqrt(in_dim)
    lim2 = 1.0 / jnp.sqrt(hid)
    w1 = jax.random.uniform(k1, (in_dim, hid), jnp.float32, -lim1, lim1)
    b1 = jax.random.uniform(k2, (1, hid), jnp.float32, -lim1, lim1)
    w2 = jax.random.uniform(k3, (hid, out_dim), jnp.float32, -lim2, lim2)
    b2 = jax.random.uniform(k4, (1, out_dim), jnp.float32, -lim2, lim2)
    return w1, b1, w2, b2


def _reference(x, w1, b1, w2, b2):
    # Reference with the same bf16 operand rounding + f32 accumulation as the
    # kernel (bf16*bf16 products are exact in f32).
    f32 = jnp.float32
    xb = x.astype(jnp.bfloat16).astype(f32)
    w1b = w1.astype(jnp.bfloat16).astype(f32)
    w2b = w2.astype(jnp.bfloat16).astype(f32)
    h = jnp.maximum(xb @ w1b + b1, 0.0)
    hb = h.astype(jnp.bfloat16).astype(f32)
    return hb @ w2b + b2


if __name__ == "__main__":
    key = jax.random.PRNGKey(0)
    kx, kp = jax.random.split(key)

    # 4 batch tiles at the default tile_b=256: even tile count so v7x can
    # shard the parallel grid axis across both TensorCores and still pipeline.
    B = 1024
    x = jax.random.normal(kx, (B, INPUT_DIM), jnp.float32)
    w1, b1, w2, b2 = init_params(kp, INPUT_DIM, HIDDEN_DIM, OUTPUT_DIM)

    out = jax.block_until_ready(feed_forward_nn(x, w1, b1, w2, b2))
    ref = _reference(x, w1, b1, w2, b2)
    assert out.shape == (B, OUTPUT_DIM)
    assert jnp.allclose(out, ref, atol=2e-2, rtol=2e-2), (
        float(jnp.max(jnp.abs(out - ref)))
    )

    # Ragged batch: exercises the wrapper-side padding + tile clamping path.
    out_r = jax.block_until_ready(feed_forward_nn(x[:13], w1, b1, w2, b2))
    assert out_r.shape == (13, OUTPUT_DIM)
    assert jnp.allclose(out_r, ref[:13], atol=2e-2, rtol=2e-2)

    print("KERNEL_OK")
</pallas_src>

<mosaic_0001>
module attributes {stable_mosaic.version = 11 : i64} {
  func.func @mlp_kernel(%arg0: i32, %arg1: memref<256x5000xf32, #tpu.memory_space<vmem>>, %arg2: memref<5000x128xbf16, #tpu.memory_space<vmem>>, %arg3: memref<1x128xf32, #tpu.memory_space<vmem>>, %arg4: memref<128x5xbf16, #tpu.memory_space<vmem>>, %arg5: memref<1x5xf32, #tpu.memory_space<vmem>>, %arg6: memref<256x5xf32, #tpu.memory_space<vmem>>) attributes {dimension_semantics = [#tpu.dimension_semantics<parallel>], iteration_bounds = array<i64: 4>, scalar_prefetch = 0 : i64, scratch_operands = 0 : i64, tpu.core_type = #tpu.core_type<tc>, window_params = [{transform_indices = @transform_0, window_bounds = array<i64: 256, 5000>}, {pipeline_mode = #tpu.pipeline_mode<synchronous>, transform_indices = @transform_1, window_bounds = array<i64: 5000, 128>}, {pipeline_mode = #tpu.pipeline_mode<synchronous>, transform_indices = @transform_2, window_bounds = array<i64: 1, 128>}, {pipeline_mode = #tpu.pipeline_mode<synchronous>, transform_indices = @transform_3, window_bounds = array<i64: 128, 5>}, {pipeline_mode = #tpu.pipeline_mode<synchronous>, transform_indices = @transform_4, window_bounds = array<i64: 1, 5>}, {transform_indices = @transform_5, window_bounds = array<i64: 256, 5>}]} {
    %c0 = arith.constant 0 : index
    %c0_0 = arith.constant 0 : index
    %0 = vector.load %arg1[%c0, %c0_0] : memref<256x5000xf32, #tpu.memory_space<vmem>>, vector<256x5000xf32>
    %1 = arith.truncf %0 : vector<256x5000xf32> to vector<256x5000xbf16>
    %c0_1 = arith.constant 0 : index
    %c0_2 = arith.constant 0 : index
    %2 = vector.load %arg2[%c0_1, %c0_2] : memref<5000x128xbf16, #tpu.memory_space<vmem>>, vector<5000x128xbf16>
    %cst = arith.constant dense<0.000000e+00> : vector<256x128xf32>
    %3 = tpu.matmul %1, %2, %cst {dimension_numbers = #tpu.dot_dimension_numbers<[1], [0], [0], [1], [0, 0, 1, 1], [], []>} : vector<256x5000xbf16>, vector<5000x128xbf16>, vector<256x128xf32> -> vector<256x128xf32>
    %c0_3 = arith.constant 0 : index
    %c0_4 = arith.constant 0 : index
    %4 = vector.load %arg3[%c0_3, %c0_4] : memref<1x128xf32, #tpu.memory_space<vmem>>, vector<1x128xf32>
    %5 = vector.broadcast %4 : vector<1x128xf32> to vector<256x128xf32>
    %6 = arith.addf %3, %5 : vector<256x128xf32>
    %cst_5 = arith.constant 0.000000e+00 : f32
    %7 = vector.broadcast %cst_5 : f32 to vector<256x128xf32>
    %8 = arith.maximumf %6, %7 : vector<256x128xf32>
    %9 = arith.truncf %8 : vector<256x128xf32> to vector<256x128xbf16>
    %c0_6 = arith.constant 0 : index
    %c0_7 = arith.constant 0 : index
    %10 = vector.load %arg4[%c0_6, %c0_7] : memref<128x5xbf16, #tpu.memory_space<vmem>>, vector<128x5xbf16>
    %cst_8 = arith.constant dense<0.000000e+00> : vector<256x5xf32>
    %11 = tpu.matmul %9, %10, %cst_8 {dimension_numbers = #tpu.dot_dimension_numbers<[1], [0], [0], [1], [0, 0, 1, 1], [], []>} : vector<256x128xbf16>, vector<128x5xbf16>, vector<256x5xf32> -> vector<256x5xf32>
    %c0_9 = arith.constant 0 : index
    %c0_10 = arith.constant 0 : index
    %12 = vector.load %arg5[%c0_9, %c0_10] : memref<1x5xf32, #tpu.memory_space<vmem>>, vector<1x5xf32>
    %13 = vector.broadcast %12 : vector<1x5xf32> to vector<256x5xf32>
    %14 = arith.addf %11, %13 : vector<256x5xf32>
    %c0_11 = arith.constant 0 : index
    %c0_12 = arith.constant 0 : index
    %15 = vector.load %arg6[%c0_11, %c0_12] : memref<256x5xf32, #tpu.memory_space<vmem>>, vector<256x5xf32>
    tpu.vector_store %arg6[%c0_11, %c0_12], %14 {strides = array<i32>} : memref<256x5xf32, #tpu.memory_space<vmem>>, vector<256x5xf32>,
    return
  }
  func.func @transform_0(%arg0: i32) -> (i32, i32) {
    %c0_i32 = arith.constant 0 : i32
    %c0_i32_0 = arith.constant 0 : i32
    return %arg0, %c0_i32 : i32, i32
  }
  func.func @transform_1(%arg0: i32) -> (i32, i32) {
    %c0_i32 = arith.constant 0 : i32
    %c0_i32_0 = arith.constant 0 : i32
    %c0_i32_1 = arith.constant 0 : i32
    return %c0_i32, %c0_i32_0 : i32, i32
  }
  func.func @transform_2(%arg0: i32) -> (i32, i32) {
    %c0_i32 = arith.constant 0 : i32
    %c0_i32_0 = arith.constant 0 : i32
    %c0_i32_1 = arith.constant 0 : i32
    return %c0_i32, %c0_i32_0 : i32, i32
  }
  func.func @transform_3(%arg0: i32) -> (i32, i32) {
    %c0_i32 = arith.constant 0 : i32
    %c0_i32_0 = arith.constant 0 : i32
    %c0_i32_1 = arith.constant 0 : i32
    return %c0_i32, %c0_i32_0 : i32, i32
  }
  func.func @transform_4(%arg0: i32) -> (i32, i32) {
    %c0_i32 = arith.constant 0 : i32
    %c0_i32_0 = arith.constant 0 : i32
    %c0_i32_1 = arith.constant 0 : i32
    return %c0_i32, %c0_i32_0 : i32, i32
  }
  func.func @transform_5(%arg0: i32) -> (i32, i32) {
    %c0_i32 = arith.constant 0 : i32
    %c0_i32_0 = arith.constant 0 : i32
    return %arg0, %c0_i32 : i32, i32
  }
}

</mosaic_0001>

<llo_original>
// kernel: tpu_custom_call.1
$region0: #{tpu_custom_call.1}
  #allocation0 [shape = 'u32[]', space=smem, size = 0x4, offset = 0x4, fixed_abs, tag = 'smem constant byte address 0x4 - core index']
  #allocation1 [shape = 'u32[72,128]{1,0:T(1,128)}', space=vmem, size = 0x9000, scoped, tag = 'internal scratch']
  %s0 = inlined_call_operand.vmem [shape: f32[1024,5000], index: 0, kind: input, shape index: {}]
  %s1 = inlined_call_operand.vmem [shape: bf16[5000,128], index: 1, kind: input, shape index: {}]
  %s2 = inlined_call_operand.vmem [shape: f32[1,128], index: 2, kind: input, shape index: {}]
  %s3 = inlined_call_operand.vmem [shape: bf16[128,5], index: 3, kind: input, shape index: {}]
  %s4 = inlined_call_operand.vmem [shape: f32[1,5], index: 4, kind: input, shape index: {}]
  %s5 = inlined_call_operand.vmem [shape: f32[1024,5], index: 5, kind: output, shape index: {}]
  %s6 = sld [smem:[#allocation0]]
  $region53: #{tpu_custom_call.1} parent=0
    _
  %s8 = ssub.s32 1, %s6
  %s9 = scalar_select 0, %s8, %s6
  loop: start=0, step=1, limit=6
  $region2: #{tpu_custom_call.1} parent=0 // loop_pre_header
    _
  $region3: #{tpu_custom_call.1} parent=0 // loop_header
    %s11 = sphi 0, %s15
    %p12 = scmp.ge.s32.totalorder %s11, 6
    %s21 = sphi 0, %s23
    %s24 = sphi 0, %s21
    %s25 = sphi 0, %s24
    %s41 = sphi 0, %s25
    %s45 = sphi 0, %s45
    %s47 = sphi 0, %s45
    %s48 = sphi 0, %s47
    %s62 = sphi 0, %s48
    %s66 = sphi 0, %s66
    %s68 = sphi 0, %s66
    %s69 = sphi 0, %s68
    %s83 = sphi 0, %s69
    %s87 = sphi 0, %s87
    %s89 = sphi 0, %s87
    %s90 = sphi 0, %s89
    %s104 = sphi 0, %s90
    %s108 = sphi 0, %s108
    %s110 = sphi 0, %s108
    %s111 = sphi 0, %s110
    %s125 = sphi 0, %s111
    %s131 = sphi 0, %s133
    %s134 = sphi 0, %s131
    %s135 = sphi 0, %s134
    %s151 = sphi 0, %s135
  $region4: #{tpu_custom_call.1} parent=0 // loop_header_branch
    %14 = sbr.rel (%p12) target = $region8
  $region5: #{tpu_custom_call.1} parent=0 // loop_body
    %s16 = ssub.s32 %s11, 1
    %s17 = ssub.s32 %s11, 2
    %s18 = sadd.s32 %s11, 1
    %s19 = ssub.s32 %s11, %s18
    %p20 = scmp.eq.s32.totalorder %s19, 0
    %s22 = sadd.s32 %s21, 1
    %s23 = scalar_select %p20, %s21, %s22
    %p26 = pneg %p20
    %p27 = scmp.eq.s32.totalorder %s11, 3
    %p28 = por %p26, %p27
    %p29 = scmp.ne.s32.totalorder %s21, %s24
    %p30 = scmp.eq.s32.totalorder %s11, 0
    %p31 = por %p29, %p30
    %p32 = scmp.ne.s32.totalorder %s21, %s24
    %p33 = scmp.eq.s32.totalorder %s16, 3
    %p34 = por %p32, %p33
    %p35 = scmp.ne.s32.totalorder %s24, %s25
    %p36 = scmp.eq.s32.totalorder %s16, 0
    %p37 = por %p35, %p36
    %p38 = scmp.ne.s32.totalorder %s24, %s25
    %p39 = scmp.eq.s32.totalorder %s17, 3
    %p40 = por %p38, %p39
    %p42 = scmp.ne.s32.totalorder %s25, %s41
    %p43 = scmp.eq.s32.totalorder %s17, 0
    %p44 = por %p42, %p43
    %s46 = sadd.s32 %s45, 1
    %p49 = scmp.eq.s32.totalorder %s11, 3
    %p50 = scmp.ne.s32.totalorder %s45, %s47
    %p51 = scmp.eq.s32.totalorder %s11, 0
    %p52 = por %p50, %p51
    %p53 = scmp.ne.s32.totalorder %s45, %s47
    %p54 = scmp.eq.s32.totalorder %s16, 3
    %p55 = por %p53, %p54
    %p56 = scmp.ne.s32.totalorder %s47, %s48
    %p57 = scmp.eq.s32.totalorder %s16, 0
    %p58 = por %p56, %p57
    %p59 = scmp.ne.s32.totalorder %s47, %s48
    %p60 = scmp.eq.s32.totalorder %s17, 3
    %p61 = por %p59, %p60
    %p63 = scmp.ne.s32.totalorder %s48, %s62
    %p64 = scmp.eq.s32.totalorder %s17, 0
    %p65 = por %p63, %p64
    %s67 = sadd.s32 %s66, 1
    %p70 = scmp.eq.s32.totalorder %s11, 3
    %p71 = scmp.ne.s32.totalorder %s66, %s68
    %p72 = scmp.eq.s32.totalorder %s11, 0
    %p73 = por %p71, %p72
    %p74 = scmp.ne.s32.totalorder %s66, %s68
    %p75 = scmp.eq.s32.totalorder %s16, 3
    %p76 = por %p74, %p75
    %p77 = scmp.ne.s32.totalorder %s68, %s69
    %p78 = scmp.eq.s32.totalorder %s16, 0
    %p79 = por %p77, %p78
    %p80 = scmp.ne.s32.totalorder %s68, %s69
    %p81 = scmp.eq.s32.totalorder %s17, 3
    %p82 = por %p80, %p81
    %p84 = scmp.ne.s32.totalorder %s69, %s83
    %p85 = scmp.eq.s32.totalorder %s17, 0
    %p86 = por %p84, %p85
    %s88 = sadd.s32 %s87, 1
    %p91 = scmp.eq.s32.totalorder %s11, 3
    %p92 = scmp.ne.s32.totalorder %s87, %s89
    %p93 = scmp.eq.s32.totalorder %s11, 0
    %p94 = por %p92, %p93
    %p95 = scmp.ne.s32.totalorder %s87, %s89
    %p96 = scmp.eq.s32.totalorder %s16, 3
    %p97 = por %p95, %p96
    %p98 = scmp.ne.s32.totalorder %s89, %s90
    %p99 = scmp.eq.s32.totalorder %s16, 0
    %p100 = por %p98, %p99
    %p101 = scmp.ne.s32.totalorder %s89, %s90
    %p102 = scmp.eq.s32.totalorder %s17, 3
    %p103 = por %p101, %p102
    %p105 = scmp.ne.s32.totalorder %s90, %s104
    %p106 = scmp.eq.s32.totalorder %s17, 0
    %p107 = por %p105, %p106
    %s109 = sadd.s32 %s108, 1
    %p112 = scmp.eq.s32.totalorder %s11, 3
    %p113 = scmp.ne.s32.totalorder %s108, %s110
    %p114 = scmp.eq.s32.totalorder %s11, 0
    %p115 = por %p113, %p114
    %p116 = scmp.ne.s32.totalorder %s108, %s110
    %p117 = scmp.eq.s32.totalorder %s16, 3
    %p118 = por %p116, %p117
    %p119 = scmp.ne.s32.totalorder %s110, %s111
    %p120 = scmp.eq.s32.totalorder %s16, 0
    %p121 = por %p119, %p120
    %p122 = scmp.ne.s32.totalorder %s110, %s111
    %p123 = scmp.eq.s32.totalorder %s17, 3
    %p124 = por %p122, %p123
    %p126 = scmp.ne.s32.totalorder %s111, %s125
    %p127 = scmp.eq.s32.totalorder %s17, 0
    %p128 = por %p126, %p127
    %s129 = ssub.s32 %s11, %s18
    %p130 = scmp.eq.s32.totalorder %s129, 0
    %s132 = sadd.s32 %s131, 1
    %s133 = scalar_select %p130, %s131, %s132
    %p136 = pneg %p130
    %p137 = scmp.eq.s32.totalorder %s11, 3
    %p138 = por %p136, %p137
    %p139 = scmp.ne.s32.totalorder %s131, %s134
    %p140 = scmp.eq.s32.totalorder %s11, 0
    %p141 = por %p139, %p140
    %p142 = scmp.ne.s32.totalorder %s131, %s134
    %p143 = scmp.eq.s32.totalorder %s16, 3
    %p144 = por %p142, %p143
    %p145 = scmp.ne.s32.totalorder %s134, %s135
    %p146 = scmp.eq.s32.totalorder %s16, 0
    %p147 = por %p145, %p146
    %p148 = scmp.ne.s32.totalorder %s134, %s135
    %p149 = scmp.eq.s32.totalorder %s17, 3
    %p150 = por %p148, %p149
    %p152 = scmp.ne.s32.totalorder %s135, %s151
    %p153 = scmp.eq.s32.totalorder %s17, 0
    %p154 = por %p152, %p153
    %p155 = scmp.le.s32.totalorder 1, %s11
    %p156 = scmp.lt.s32.totalorder %s11, 5
    %p157 = pnand %p155, %p156
    %p158 = pneg %p157
    // Predicated region
    $region9: #{tpu_custom_call.1} parent=5 // pred_check
      _
    $region10: #{tpu_custom_call.1} parent=5 // pred_check_branch
      %160 = sbr.rel (%p157) target = $region12
    $region11: #{tpu_custom_call.1} parent=5 // pred_region
      %s161 = ssub.s32 %s11, 1
      // Predicated region
      $region13: #{tpu_custom_call.1} parent=11 // pred_check
        %p162 = pneg %p58
      $region14: #{tpu_custom_call.1} parent=11 // pred_check_branch
        %164 = sbr.rel (%p162) target = $region16
      $region15: #{tpu_custom_call.1} parent=11 // pred_region
        _
      $region16: #{tpu_custom_call.1} parent=11 // pred_fallthru
        _
      // Predicated region
      $region17: #{tpu_custom_call.1} parent=11 // pred_check
        %p165 = pneg %p79
      $region18: #{tpu_custom_call.1} parent=11 // pred_check_branch
        %167 = sbr.rel (%p165) target = $region20
      $region19: #{tpu_custom_call.1} parent=11 // pred_region
        _
      $region20: #{tpu_custom_call.1} parent=11 // pred_fallthru
        _
      // Predicated region
      $region21: #{tpu_custom_call.1} parent=11 // pred_check
        %p168 = pneg %p100
      $region22: #{tpu_custom_call.1} parent=11 // pred_check_branch
        %170 = sbr.rel (%p168) target = $region24
      $region23: #{tpu_custom_call.1} parent=11 // pred_region
        _
      $region24: #{tpu_custom_call.1} parent=11 // pred_fallthru
        _
      // Predicated region
      $region25: #{tpu_custom_call.1} parent=11 // pred_check
        %p171 = pneg %p121
      $region26: #{tpu_custom_call.1} parent=11 // pred_check_branch
        %173 = sbr.rel (%p171) target = $region28
      $region27: #{tpu_custom_call.1} parent=11 // pred_region
        _
      $region28: #{tpu_custom_call.1} parent=11 // pred_fallthru
        _
    $region12: #{tpu_custom_call.1} parent=5 // pred_fallthru
      _
    %p174 = scmp.lt.s32.totalorder %s11, 4
    // Predicated region
    $region29: #{tpu_custom_call.1} parent=5 // pred_check
      %p175 = pneg %p174
    $region30: #{tpu_custom_call.1} parent=5 // pred_check_branch
      %177 = sbr.rel (%p175) target = $region32
    $region31: #{tpu_custom_call.1} parent=5 // pred_region
      // Predicated region
      $region33: #{tpu_custom_call.1} parent=31 // pred_check
        %p178 = pneg %p31
      $region34: #{tpu_custom_call.1} parent=31 // pred_check_branch
        %180 = sbr.rel (%p178) target = $region36
      $region35: #{tpu_custom_call.1} parent=31 // pred_region
        %s181 = smul.u32 32, %s11
        %p182 = scmp.lt.s32.totalorder %s181, 127
        %s183 = scalar_select %p182, %s181, 127
        %s184 = smul.addr %s183, 40
        %s185 = smul.addr %s184, 8
        %s186 = scalar_lea.vmem %s0, %s185
        %s187 = smul.u32 32, %s11
      $region36: #{tpu_custom_call.1} parent=31 // pred_fallthru
        _
    $region32: #{tpu_custom_call.1} parent=5 // pred_fallthru
      _
    %p188 = scmp.le.s32.totalorder 1, %s11
    %p189 = scmp.lt.s32.totalorder %s11, 5
    %p190 = pnand %p188, %p189
    %p191 = pneg %p190
    // Predicated region
    $region37: #{tpu_custom_call.1} parent=5 // pred_check
      _
    $region38: #{tpu_custom_call.1} parent=5 // pred_check_branch
      %193 = sbr.rel (%p190) target = $region40
    $region39: #{tpu_custom_call.1} parent=5 // pred_region
      %s194 = ssub.s32 %s11, 1
      %s195 = smul.u32 32, %s16
      %p196 = scmp.lt.s32.totalorder %s195, 127
      %s197 = scalar_select %p196, %s195, 127
      %s198 = smul.addr %s197, 40
      %s199 = smul.addr %s198, 8
      %s200 = scalar_lea.vmem %s0, %s199
      %p201 = pneg %p37
      %p202 = pneg %p34
      %p203 = pneg %p58
      %p204 = pneg %p55
      %p205 = pneg %p79
      %p206 = pneg %p76
      %p207 = pneg %p100
      %p208 = pneg %p97
      %p209 = pneg %p121
      %p210 = pneg %p118
      %p211 = pneg %p147
      %p212 = pneg %p144
      %s213 = smul.u32 32, %s16
      %p214 = scmp.lt.s32.totalorder %s213, 127
      %s215 = scalar_select %p214, %s213, 127
      %s216 = smul.addr %s215, 8
      %s217 = scalar_lea.vmem %s5, %s216
      %s218 = smul.u32 32, %s16
      %p219 = scmp.lt.s32.totalorder %s218, 127
      %s220 = scalar_select %p219, %s218, 127
      %s221 = smul.addr %s220, 40
      %s222 = smul.addr %s221, 8
      %s223 = scalar_lea.vmem %s0, %s222
      %s224 = smul.u32 32, %s16
      %s225 = smul.u32 32, %s16
      %p226 = scmp.lt.s32.totalorder %s225, 127
      %s227 = scalar_select %p226, %s225, 127
      %s228 = smul.addr %s227, 8
      %s229 = scalar_lea.vmem %s5, %s228
      %s230 = smul.u32 32, %s16
      %v232 = vld [vmem:[%s223] sm:$0xff]
      %v233 = vld [vmem:[%s223 + $0x8] sm:$0xff]
      %v234 = vld [vmem:[%s223 + $0x10] sm:$0xff]
      %v235 = vld [vmem:[%s223 + $0x18] sm:$0xff]
      %v236 = vld [vmem:[%s223 + $0x20] sm:$0xff]
      %v237 = vld [vmem:[%s223 + $0x28] sm:$0xff]
      %v238 = vld [vmem:[%s223 + $0x30] sm:$0xff]
      %v239 = vld [vmem:[%s223 + $0x38] sm:$0xff]
      %v240 = vld [vmem:[%s223 + $0x40] sm:$0xff]
      %v241 = vld [vmem:[%s223 + $0x48] sm:$0xff]
      %v242 = vld [vmem:[%s223 + $0x50] sm:$0xff]
      %v243 = vld [vmem:[%s223 + $0x58] sm:$0xff]
      %v244 = vld [vmem:[%s223 + $0x60] sm:$0xff]
      %v245 = vld [vmem:[%s223 + $0x68] sm:$0xff]
      %v246 = vld [vmem:[%s223 + $0x70] sm:$0xff]
      %v247 = vld [vmem:[%s223 + $0x78] sm:$0xff]
      %v248 = vld [vmem:[%s223 + $0x80] sm:$0xff]
      %v249 = vld [vmem:[%s223 + $0x88] sm:$0xff]
      %v250 = vld [vmem:[%s223 + $0x90] sm:$0xff]
      %v251 = vld [vmem:[%s223 + $0x98] sm:$0xff]
      %v252 = vld [vmem:[%s223 + $0xa0] sm:$0xff]
      %v253 = vld [vmem:[%s223 + $0xa8] sm:$0xff]
      %v254 = vld [vmem:[%s223 + $0xb0] sm:$0xff]
      %v255 = vld [vmem:[%s223 + $0xb8] sm:$0xff]
      %v256 = vld [vmem:[%s223 + $0xc0] sm:$0xff]
      %v257 = vld [vmem:[%s223 + $0xc8] sm:$0xff]
      %v258 = vld [vmem:[%s223 + $0xd0] sm:$0xff]
      %v259 = vld [vmem:[%s223 + $0xd8] sm:$0xff]
      %v260 = vld [vmem:[%s223 + $0xe0] sm:$0xff]
      %v261 = vld [vmem:[%s223 + $0xe8] sm:$0xff]
      %v262 = vld [vmem:[%s223 + $0xf0] sm:$0xff]
      %v263 = vld [vmem:[%s223 + $0xf8] sm:$0xff]
      %v264 = vld [vmem:[%s223 + $0x100] sm:$0xff]
      %v265 = vld [vmem:[%s223 + $0x108] sm:$0xff]
      %v266 = vld [vmem:[%s223 + $0x110] sm:$0xff]
      %v267 = vld [vmem:[%s223 + $0x118] sm:$0xff]
      %v268 = vld [vmem:[%s223 + $0x120] sm:$0xff]
      %v269 = vld [vmem:[%s223 + $0x128] sm:$0xff]
      %v270 = vld [vmem:[%s223 + $0x130] sm:$0xff]
      %v271 = vld [vmem:[%s223 + $0x138] sm:$0xff]
      %v272 = vld [vmem:[%s223 + $0x140] sm:$0xff]
      %v273 = vld [vmem:[%s223 + $0x148] sm:$0xff]
      %v274 = vld [vmem:[%s223 + $0x150] sm:$0xff]
      %v275 = vld [vmem:[%s223 + $0x158] sm:$0xff]
      %v276 = vld [vmem:[%s223 + $0x160] sm:$0xff]
      %v277 = vld [vmem:[%s223 + $0x168] sm:$0xff]
      %v278 = vld [vmem:[%s223 + $0x170] sm:$0xff]
      %v279 = vld [vmem:[%s223 + $0x178] sm:$0xff]
      %v280 = vld [vmem:[%s223 + $0x180] sm:$0xff]
      %v281 = vld [vmem:[%s223 + $0x188] sm:$0xff]
      %v282 = vld [vmem:[%s223 + $0x190] sm:$0xff]
      %v283 = vld [vmem:[%s223 + $0x198] sm:$0xff]
      %v284 = vld [vmem:[%s223 + $0x1a0] sm:$0xff]
      %v285 = vld [vmem:[%s223 + $0x1a8] sm:$0xff]
      %v286 = vld [vmem:[%s223 + $0x1b0] sm:$0xff]
      %v287 = vld [vmem:[%s223 + $0x1b8] sm:$0xff]
      %v288 = vld [vmem:[%s223 + $0x1c0] sm:$0xff]
      %v289 = vld [vmem:[%s223 + $0x1c8] sm:$0xff]
      %v290 = vld [vmem:[%s223 + $0x1d0] sm:$0xff]
      %v291 = vld [vmem:[%s223 + $0x1d8] sm:$0xff]
      %v292 = vld [vmem:[%s223 + $0x1e0] sm:$0xff]
      %v293 = vld [vmem:[%s223 + $0x1e8] sm:$0xff]
      %v294 = vld [vmem:[%s223 + $0x1f0] sm:$0xff]
      %v295 = vld [vmem:[%s223 + $0x1f8] sm:$0xff]
      %v296 = vld [vmem:[%s223 + $0x200] sm:$0xff]
      %v297 = vld [vmem:[%s223 + $0x208] sm:$0xff]
      %v298 = vld [vmem:[%s223 + $0x210] sm:$0xff]
      %v299 = vld [vmem:[%s223 + $0x218] sm:$0xff]
      %v300 = vld [vmem:[%s223 + $0x220] sm:$0xff]
      %v301 = vld [vmem:[%s223 + $0x228] sm:$0xff]
      %v302 = vld [vmem:[%s223 + $0x230] sm:$0xff]
      %v303 = vld [vmem:[%s223 + $0x238] sm:$0xff]
      %v304 = vld [vmem:[%s223 + $0x240] sm:$0xff]
      %v305 = vld [vmem:[%s223 + $0x248] sm:$0xff]
      %v306 = vld [vmem:[%s223 + $0x250] sm:$0xff]
      %v307 = vld [vmem:[%s223 + $0x258] sm:$0xff]
      %v308 = vld [vmem:[%s223 + $0x260] sm:$0xff]
      %v309 = vld [vmem:[%s223 + $0x268] sm:$0xff]
      %v310 = vld [vmem:[%s223 + $0x270] sm:$0xff]
      %v311 = vld [vmem:[%s223 + $0x278] sm:$0xff]
      %v312 = vld [vmem:[%s223 + $0x280] sm:$0xff]
      %v313 = vld [vmem:[%s223 + $0x288] sm:$0xff]
      %v314 = vld [vmem:[%s223 + $0x290] sm:$0xff]
      %v315 = vld [vmem:[%s223 + $0x298] sm:$0xff]
      %v316 = vld [vmem:[%s223 + $0x2a0] sm:$0xff]
      %v317 = vld [vmem:[%s223 + $0x2a8] sm:$0xff]
      %v318 = vld [vmem:[%s223 + $0x2b0] sm:$0xff]
      %v319 = vld [vmem:[%s223 + $0x2b8] sm:$0xff]
      %v320 = vld [vmem:[%s223 + $0x2c0] sm:$0xff]
      %v321 = vld [vmem:[%s223 + $0x2c8] sm:$0xff]
      %v322 = vld [vmem:[%s223 + $0x2d0] sm:$0xff]
      %v323 = vld [vmem:[%s223 + $0x2d8] sm:$0xff]
      %v324 = vld [vmem:[%s223 + $0x2e0] sm:$0xff]
      %v325 = vld [vmem:[%s223 + $0x2e8] sm:$0xff]
      %v326 = vld [vmem:[%s223 + $0x2f0] sm:$0xff]
      %v327 = vld [vmem:[%s223 + $0x2f8] sm:$0xff]
      %v328 = vld [vmem:[%s223 + $0x300] sm:$0xff]
      %v329 = vld [vmem:[%s223 + $0x308] sm:$0xff]
      %v330 = vld [vmem:[%s223 + $0x310] sm:$0xff]
      %v331 = vld [vmem:[%s223 + $0x318] sm:$0xff]
      %v332 = vld [vmem:[%s223 + $0x320] sm:$0xff]
      %v333 = vld [vmem:[%s223 + $0x328] sm:$0xff]
      %v334 = vld [vmem:[%s223 + $0x330] sm:$0xff]
      %v335 = vld [vmem:[%s223 + $0x338] sm:$0xff]
      %v336 = vld [vmem:[%s223 + $0x340] sm:$0xff]
      %v337 = vld [vmem:[%s223 + $0x348] sm:$0xff]
      %v338 = vld [vmem:[%s223 + $0x350] sm:$0xff]
      %v339 = vld [vmem:[%s223 + $0x358] sm:$0xff]
      %v340 = vld [vmem:[%s223 + $0x360] sm:$0xff]
      %v341 = vld [vmem:[%s223 + $0x368] sm:$0xff]
      %v342 = vld [vmem:[%s223 + $0x370] sm:$0xff]
      %v343 = vld [vmem:[%s223 + $0x378] sm:$0xff]
      %v344 = vld [vmem:[%s223 + $0x380] sm:$0xff]
      %v345 = vld [vmem:[%s223 + $0x388] sm:$0xff]
      %v346 = vld [vmem:[%s223 + $0x390] sm:$0xff]
      %v347 = vld [vmem:[%s223 + $0x398] sm:$0xff]
      %v348 = vld [vmem:[%s223 + $0x3a0] sm:$0xff]
      %v349 = vld [vmem:[%s223 + $0x3a8] sm:$0xff]
      %v350 = vld [vmem:[%s223 + $0x3b0] sm:$0xff]
      %v351 = vld [vmem:[%s223 + $0x3b8] sm:$0xff]
      %v352 = vld [vmem:[%s223 + $0x3c0] sm:$0xff]
      %v353 = vld [vmem:[%s223 + $0x3c8] sm:$0xff]
      %v354 = vld [vmem:[%s223 + $0x3d0] sm:$0xff]
      %v355 = vld [vmem:[%s223 + $0x3d8] sm:$0xff]
      %v356 = vld [vmem:[%s223 + $0x3e0] sm:$0xff]
      %v357 = vld [vmem:[%s223 + $0x3e8] sm:$0xff]
      %v358 = vld [vmem:[%s223 + $0x3f0] sm:$0xff]
      %v359 = vld [vmem:[%s223 + $0x3f8] sm:$0xff]
      %v360 = vld [vmem:[%s223 + $0x400] sm:$0xff]
      %v361 = vld [vmem:[%s223 + $0x408] sm:$0xff]
      %v362 = vld [vmem:[%s223 + $0x410] sm:$0xff]
      %v363 = vld [vmem:[%s223 + $0x418] sm:$0xff]
      %v364 = vld [vmem:[%s223 + $0x420] sm:$0xff]
      %v365 = vld [vmem:[%s223 + $0x428] sm:$0xff]
      %v366 = vld [vmem:[%s223 + $0x430] sm:$0xff]
      %v367 = vld [vmem:[%s223 + $0x438] sm:$0xff]
      %v368 = vld [vmem:[%s223 + $0x440] sm:$0xff]
      %v369 = vld [vmem:[%s223 + $0x448] sm:$0xff]
      %v370 = vld [vmem:[%s223 + $0x450] sm:$0xff]
      %v371 = vld [vmem:[%s223 + $0x458] sm:$0xff]
      %v372 = vld [vmem:[%s223 + $0x460] sm:$0xff]
      %v373 = vld [vmem:[%s223 + $0x468] sm:$0xff]
      %v374 = vld [vmem:[%s223 + $0x470] sm:$0xff]
      %v375 = vld [vmem:[%s223 + $0x478] sm:$0xff]
      %v376 = vld [vmem:[%s223 + $0x480] sm:$0xff]
      %v377 = vld [vmem:[%s223 + $0x488] sm:$0xff]
      %v378 = vld [vmem:[%s223 + $0x490] sm:$0xff]
      %v379 = vld [vmem:[%s223 + $0x498] sm:$0xff]
      %v380 = vld [vmem:[%s223 + $0x4a0] sm:$0xff]
      %v381 = vld [vmem:[%s223 + $0x4a8] sm:$0xff]
      %v382 = vld [vmem:[%s223 + $0x4b0] sm:$0xff]
      %v383 = vld [vmem:[%s223 + $0x4b8] sm:$0xff]
      %v384 = vld [vmem:[%s223 + $0x4c0] sm:$0xff]
      %v385 = vld [vmem:[%s223 + $0x4c8] sm:$0xff]
      %v386 = vld [vmem:[%s223 + $0x4d0] sm:$0xff]
      %v387 = vld [vmem:[%s223 + $0x4d8] sm:$0xff]
      %v388 = vld [vmem:[%s223 + $0x4e0] sm:$0xff]
      %v389 = vld [vmem:[%s223 + $0x4e8] sm:$0xff]
      %v390 = vld [vmem:[%s223 + $0x4f0] sm:$0xff]
      %v391 = vld [vmem:[%s223 + $0x4f8] sm:$0xff]
      %v392 = vld [vmem:[%s223 + $0x500] sm:$0xff]
      %v393 = vld [vmem:[%s223 + $0x508] sm:$0xff]
      %v394 = vld [vmem:[%s223 + $0x510] sm:$0xff]
      %v395 = vld [vmem:[%s223 + $0x518] sm:$0xff]
      %v396 = vld [vmem:[%s223 + $0x520] sm:$0xff]
      %v397 = vld [vmem:[%s223 + $0x528] sm:$0xff]
      %v398 = vld [vmem:[%s223 + $0x530] sm:$0xff]
      %v399 = vld [vmem:[%s223 + $0x538] sm:$0xff]
      %v400 = vld [vmem:[%s223 + $0x540] sm:$0xff]
      %v401 = vld [vmem:[%s223 + $0x548] sm:$0xff]
      %v402 = vld [vmem:[%s223 + $0x550] sm:$0xff]
      %v403 = vld [vmem:[%s223 + $0x558] sm:$0xff]
      %v404 = vld [vmem:[%s223 + $0x560] sm:$0xff]
      %v405 = vld [vmem:[%s223 + $0x568] sm:$0xff]
      %v406 = vld [vmem:[%s223 + $0x570] sm:$0xff]
      %v407 = vld [vmem:[%s223 + $0x578] sm:$0xff]
      %v408 = vld [vmem:[%s223 + $0x580] sm:$0xff]
      %v409 = vld [vmem:[%s223 + $0x588] sm:$0xff]
      %v410 = vld [vmem:[%s223 + $0x590] sm:$0xff]
      %v411 = vld [vmem:[%s223 + $0x598] sm:$0xff]
      %v412 = vld [vmem:[%s223 + $0x5a0] sm:$0xff]
      %v413 = vld [vmem:[%s223 + $0x5a8] sm:$0xff]
      %v414 = vld [vmem:[%s223 + $0x5b0] sm:$0xff]
      %v415 = vld [vmem:[%s223 + $0x5b8] sm:$0xff]
      %v416 = vld [vmem:[%s223 + $0x5c0] sm:$0xff]
      %v417 = vld [vmem:[%s223 + $0x5c8] sm:$0xff]
      %v418 = vld [vmem:[%s223 + $0x5d0] sm:$0xff]
      %v419 = vld [vmem:[%s223 + $0x5d8] sm:$0xff]
      %v420 = vld [vmem:[%s223 + $0x5e0] sm:$0xff]
      %v421 = vld [vmem:[%s223 + $0x5e8] sm:$0xff]
      %v422 = vld [vmem:[%s223 + $0x5f0] sm:$0xff]
      %v423 = vld [vmem:[%s223 + $0x5f8] sm:$0xff]
      %v424 = vld [vmem:[%s223 + $0x600] sm:$0xff]
      %v425 = vld [vmem:[%s223 + $0x608] sm:$0xff]
      %v426 = vld [vmem:[%s223 + $0x610] sm:$0xff]
      %v427 = vld [vmem:[%s223 + $0x618] sm:$0xff]
      %v428 = vld [vmem:[%s223 + $0x620] sm:$0xff]
      %v429 = vld [vmem:[%s223 + $0x628] sm:$0xff]
      %v430 = vld [vmem:[%s223 + $0x630] sm:$0xff]
      %v431 = vld [vmem:[%s223 + $0x638] sm:$0xff]
      %v432 = vld [vmem:[%s223 + $0x640] sm:$0xff]
      %v433 = vld [vmem:[%s223 + $0x648] sm:$0xff]
      %v434 = vld [vmem:[%s223 + $0x650] sm:$0xff]
      %v435 = vld [vmem:[%s223 + $0x658] sm:$0xff]
      %v436 = vld [vmem:[%s223 + $0x660] sm:$0xff]
      %v437 = vld [vmem:[%s223 + $0x668] sm:$0xff]
      %v438 = vld [vmem:[%s223 + $0x670] sm:$0xff]
      %v439 = vld [vmem:[%s223 + $0x678] sm:$0xff]
      %v440 = vld [vmem:[%s223 + $0x680] sm:$0xff]
      %v441 = vld [vmem:[%s223 + $0x688] sm:$0xff]
      %v442 = vld [vmem:[%s223 + $0x690] sm:$0xff]
      %v443 = vld [vmem:[%s223 + $0x698] sm:$0xff]
      %v444 = vld [vmem:[%s223 + $0x6a0] sm:$0xff]
      %v445 = vld [vmem:[%s223 + $0x6a8] sm:$0xff]
      %v446 = vld [vmem:[%s223 + $0x6b0] sm:$0xff]
      %v447 = vld [vmem:[%s223 + $0x6b8] sm:$0xff]
      %v448 = vld [vmem:[%s223 + $0x6c0] sm:$0xff]
      %v449 = vld [vmem:[%s223 + $0x6c8] sm:$0xff]
      %v450 = vld [vmem:[%s223 + $0x6d0] sm:$0xff]
      %v451 = vld [vmem:[%s223 + $0x6d8] sm:$0xff]
      %v452 = vld [vmem:[%s223 + $0x6e0] sm:$0xff]
      %v453 = vld [vmem:[%s223 + $0x6e8] sm:$0xff]
      %v454 = vld [vmem:[%s223 + $0x6f0] sm:$0xff]
      %v455 = vld [vmem:[%s223 + $0x6f8] sm:$0xff]
      %v456 = vld [vmem:[%s223 + $0x700] sm:$0xff]
      %v457 = vld [vmem:[%s223 + $0x708] sm:$0xff]
      %v458 = vld [vmem:[%s223 + $0x710] sm:$0xff]
      %v459 = vld [vmem:[%s223 + $0x718] sm:$0xff]
      %v460 = vld [vmem:[%s223 + $0x720] sm:$0xff]
      %v461 = vld [vmem:[%s223 + $0x728] sm:$0xff]
      %v462 = vld [vmem:[%s223 + $0x730] sm:$0xff]
      %v463 = vld [vmem:[%s223 + $0x738] sm:$0xff]
      %v464 = vld [vmem:[%s223 + $0x740] sm:$0xff]
      %v465 = vld [vmem:[%s223 + $0x748] sm:$0xff]
      %v466 = vld [vmem:[%s223 + $0x750] sm:$0xff]
      %v467 = vld [vmem:[%s223 + $0x758] sm:$0xff]
      %v468 = vld [vmem:[%s223 + $0x760] sm:$0xff]
      %v469 = vld [vmem:[%s223 + $0x768] sm:$0xff]
      %v470 = vld [vmem:[%s223 + $0x770] sm:$0xff]
      %v471 = vld [vmem:[%s223 + $0x778] sm:$0xff]
      %v472 = vld [vmem:[%s223 + $0x780] sm:$0xff]
      %v473 = vld [vmem:[%s223 + $0x788] sm:$0xff]
      %v474 = vld [vmem:[%s223 + $0x790] sm:$0xff]
      %v475 = vld [vmem:[%s223 + $0x798] sm:$0xff]
      %v476 = vld [vmem:[%s223 + $0x7a0] sm:$0xff]
      %v477 = vld [vmem:[%s223 + $0x7a8] sm:$0xff]
      %v478 = vld [vmem:[%s223 + $0x7b0] sm:$0xff]
      %v479 = vld [vmem:[%s223 + $0x7b8] sm:$0xff]
      %v480 = vld [vmem:[%s223 + $0x7c0] sm:$0xff]
      %v481 = vld [vmem:[%s223 + $0x7c8] sm:$0xff]
      %v482 = vld [vmem:[%s223 + $0x7d0] sm:$0xff]
      %v483 = vld [vmem:[%s223 + $0x7d8] sm:$0xff]
      %v484 = vld [vmem:[%s223 + $0x7e0] sm:$0xff]
      %v485 = vld [vmem:[%s223 + $0x7e8] sm:$0xff]
      %v486 = vld [vmem:[%s223 + $0x7f0] sm:$0xff]
      %v487 = vld [vmem:[%s223 + $0x7f8] sm:$0xff]
      %v488 = vld [vmem:[%s223 + $0x800] sm:$0xff]
      %v489 = vld [vmem:[%s223 + $0x808] sm:$0xff]
      %v490 = vld [vmem:[%s223 + $0x810] sm:$0xff]
      %v491 = vld [vmem:[%s223 + $0x818] sm:$0xff]
      %v492 = vld [vmem:[%s223 + $0x820] sm:$0xff]
      %v493 = vld [vmem:[%s223 + $0x828] sm:$0xff]
      %v494 = vld [vmem:[%s223 + $0x830] sm:$0xff]
      %v495 = vld [vmem:[%s223 + $0x838] sm:$0xff]
      %v496 = vld [vmem:[%s223 + $0x840] sm:$0xff]
      %v497 = vld [vmem:[%s223 + $0x848] sm:$0xff]
      %v498 = vld [vmem:[%s223 + $0x850] sm:$0xff]
      %v499 = vld [vmem:[%s223 + $0x858] sm:$0xff]
      %v500 = vld [vmem:[%s223 + $0x860] sm:$0xff]
      %v501 = vld [vmem:[%s223 + $0x868] sm:$0xff]
      %v502 = vld [vmem:[%s223 + $0x870] sm:$0xff]
      %v503 = vld [vmem:[%s223 + $0x878] sm:$0xff]
      %v504 = vld [vmem:[%s223 + $0x880] sm:$0xff]
      %v505 = vld [vmem:[%s223 + $0x888] sm:$0xff]
      %v506 = vld [vmem:[%s223 + $0x890] sm:$0xff]
      %v507 = vld [vmem:[%s223 + $0x898] sm:$0xff]
      %v508 = vld [vmem:[%s223 + $0x8a0] sm:$0xff]
      %v509 = vld [vmem:[%s223 + $0x8a8] sm:$0xff]
      %v510 = vld [vmem:[%s223 + $0x8b0] sm:$0xff]
      %v511 = vld [vmem:[%s223 + $0x8b8] sm:$0xff]
      %v512 = vld [vmem:[%s223 + $0x8c0] sm:$0xff]
      %v513 = vld [vmem:[%s223 + $0x8c8] sm:$0xff]
      %v514 = vld [vmem:[%s223 + $0x8d0] sm:$0xff]
      %v515 = vld [vmem:[%s223 + $0x8d8] sm:$0xff]
      %v516 = vld [vmem:[%s223 + $0x8e0] sm:$0xff]
      %v517 = vld [vmem:[%s223 + $0x8e8] sm:$0xff]
      %v518 = vld [vmem:[%s223 + $0x8f0] sm:$0xff]
      %v519 = vld [vmem:[%s223 + $0x8f8] sm:$0xff]
      %v520 = vld [vmem:[%s223 + $0x900] sm:$0xff]
      %v521 = vld [vmem:[%s223 + $0x908] sm:$0xff]
      %v522 = vld [vmem:[%s223 + $0x910] sm:$0xff]
      %v523 = vld [vmem:[%s223 + $0x918] sm:$0xff]
      %v524 = vld [vmem:[%s223 + $0x920] sm:$0xff]
      %v525 = vld [vmem:[%s223 + $0x928] sm:$0xff]
      %v526 = vld [vmem:[%s223 + $0x930] sm:$0xff]
      %v527 = vld [vmem:[%s223 + $0x938] sm:$0xff]
      %v528 = vld [vmem:[%s223 + $0x940] sm:$0xff]
      %v529 = vld [vmem:[%s223 + $0x948] sm:$0xff]
      %v530 = vld [vmem:[%s223 + $0x950] sm:$0xff]
      %v531 = vld [vmem:[%s223 + $0x958] sm:$0xff]
      %v532 = vld [vmem:[%s223 + $0x960] sm:$0xff]
      %v533 = vld [vmem:[%s223 + $0x968] sm:$0xff]
      %v534 = vld [vmem:[%s223 + $0x970] sm:$0xff]
      %v535 = vld [vmem:[%s223 + $0x978] sm:$0xff]
      %v536 = vld [vmem:[%s223 + $0x980] sm:$0xff]
      %v537 = vld [vmem:[%s223 + $0x988] sm:$0xff]
      %v538 = vld [vmem:[%s223 + $0x990] sm:$0xff]
      %v539 = vld [vmem:[%s223 + $0x998] sm:$0xff]
      %v540 = vld [vmem:[%s223 + $0x9a0] sm:$0xff]
      %v541 = vld [vmem:[%s223 + $0x9a8] sm:$0xff]
      %v542 = vld [vmem:[%s223 + $0x9b0] sm:$0xff]
      %v543 = vld [vmem:[%s223 + $0x9b8] sm:$0xff]
      %v544 = vld [vmem:[%s223 + $0x9c0] sm:$0xff]
      %v545 = vld [vmem:[%s223 + $0x9c8] sm:$0xff]
      %v546 = vld [vmem:[%s223 + $0x9d0] sm:$0xff]
      %v547 = vld [vmem:[%s223 + $0x9d8] sm:$0xff]
      %v548 = vld [vmem:[%s223 + $0x9e0] sm:$0xff]
      %v549 = vld [vmem:[%s223 + $0x9e8] sm:$0xff]
      %v550 = vld [vmem:[%s223 + $0x9f0] sm:$0xff]
      %v551 = vld [vmem:[%s223 + $0x9f8] sm:$0xff]
      %v552 = vld [vmem:[%s223 + $0xa00] sm:$0xff]
      %v553 = vld [vmem:[%s223 + $0xa08] sm:$0xff]
      %v554 = vld [vmem:[%s223 + $0xa10] sm:$0xff]
      %v555 = vld [vmem:[%s223 + $0xa18] sm:$0xff]
      %v556 = vld [vmem:[%s223 + $0xa20] sm:$0xff]
      %v557 = vld [vmem:[%s223 + $0xa28] sm:$0xff]
      %v558 = vld [vmem:[%s223 + $0xa30] sm:$0xff]
      %v559 = vld [vmem:[%s223 + $0xa38] sm:$0xff]
      %v560 = vld [vmem:[%s223 + $0xa40] sm:$0xff]
      %v561 = vld [vmem:[%s223 + $0xa48] sm:$0xff]
      %v562 = vld [vmem:[%s223 + $0xa50] sm:$0xff]
      %v563 = vld [vmem:[%s223 + $0xa58] sm:$0xff]
      %v564 = vld [vmem:[%s223 + $0xa60] sm:$0xff]
      %v565 = vld [vmem:[%s223 + $0xa68] sm:$0xff]
      %v566 = vld [vmem:[%s223 + $0xa70] sm:$0xff]
      %v567 = vld [vmem:[%s223 + $0xa78] sm:$0xff]
      %v568 = vld [vmem:[%s223 + $0xa80] sm:$0xff]
      %v569 = vld [vmem:[%s223 + $0xa88] sm:$0xff]
      %v570 = vld [vmem:[%s223 + $0xa90] sm:$0xff]
      %v571 = vld [vmem:[%s223 + $0xa98] sm:$0xff]
      %v572 = vld [vmem:[%s223 + $0xaa0] sm:$0xff]
      %v573 = vld [vmem:[%s223 + $0xaa8] sm:$0xff]
      %v574 = vld [vmem:[%s223 + $0xab0] sm:$0xff]
      %v575 = vld [vmem:[%s223 + $0xab8] sm:$0xff]
      %v576 = vld [vmem:[%s223 + $0xac0] sm:$0xff]
      %v577 = vld [vmem:[%s223 + $0xac8] sm:$0xff]
      %v578 = vld [vmem:[%s223 + $0xad0] sm:$0xff]
      %v579 = vld [vmem:[%s223 + $0xad8] sm:$0xff]
      %v580 = vld [vmem:[%s223 + $0xae0] sm:$0xff]
      %v581 = vld [vmem:[%s223 + $0xae8] sm:$0xff]
      %v582 = vld [vmem:[%s223 + $0xaf0] sm:$0xff]
      %v583 = vld [vmem:[%s223 + $0xaf8] sm:$0xff]
      %v584 = vld [vmem:[%s223 + $0xb00] sm:$0xff]
      %v585 = vld [vmem:[%s223 + $0xb08] sm:$0xff]
      %v586 = vld [vmem:[%s223 + $0xb10] sm:$0xff]
      %v587 = vld [vmem:[%s223 + $0xb18] sm:$0xff]
      %v588 = vld [vmem:[%s223 + $0xb20] sm:$0xff]
      %v589 = vld [vmem:[%s223 + $0xb28] sm:$0xff]
      %v590 = vld [vmem:[%s223 + $0xb30] sm:$0xff]
      %v591 = vld [vmem:[%s223 + $0xb38] sm:$0xff]
      %v592 = vld [vmem:[%s223 + $0xb40] sm:$0xff]
      %v593 = vld [vmem:[%s223 + $0xb48] sm:$0xff]
      %v594 = vld [vmem:[%s223 + $0xb50] sm:$0xff]
      %v595 = vld [vmem:[%s223 + $0xb58] sm:$0xff]
      %v596 = vld [vmem:[%s223 + $0xb60] sm:$0xff]
      %v597 = vld [vmem:[%s223 + $0xb68] sm:$0xff]
      %v598 = vld [vmem:[%s223 + $0xb70] sm:$0xff]
      %v599 = vld [vmem:[%s223 + $0xb78] sm:$0xff]
      %v600 = vld [vmem:[%s223 + $0xb80] sm:$0xff]
      %v601 = vld [vmem:[%s223 + $0xb88] sm:$0xff]
      %v602 = vld [vmem:[%s223 + $0xb90] sm:$0xff]
      %v603 = vld [vmem:[%s223 + $0xb98] sm:$0xff]
      %v604 = vld [vmem:[%s223 + $0xba0] sm:$0xff]
      %v605 = vld [vmem:[%s223 + $0xba8] sm:$0xff]
      %v606 = vld [vmem:[%s223 + $0xbb0] sm:$0xff]
      %v607 = vld [vmem:[%s223 + $0xbb8] sm:$0xff]
      %v608 = vld [vmem:[%s223 + $0xbc0] sm:$0xff]
      %v609 = vld [vmem:[%s223 + $0xbc8] sm:$0xff]
      %v610 = vld [vmem:[%s223 + $0xbd0] sm:$0xff]
      %v611 = vld [vmem:[%s223 + $0xbd8] sm:$0xff]
      %v612 = vld [vmem:[%s223 + $0xbe0] sm:$0xff]
      %v613 = vld [vmem:[%s223 + $0xbe8] sm:$0xff]
      %v614 = vld [vmem:[%s223 + $0xbf0] sm:$0xff]
      %v615 = vld [vmem:[%s223 + $0xbf8] sm:$0xff]
      %v616 = vld [vmem:[%s223 + $0xc00] sm:$0xff]
      %v617 = vld [vmem:[%s223 + $0xc08] sm:$0xff]
      %v618 = vld [vmem:[%s223 + $0xc10] sm:$0xff]
      %v619 = vld [vmem:[%s223 + $0xc18] sm:$0xff]
      %v620 = vld [vmem:[%s223 + $0xc20] sm:$0xff]
      %v621 = vld [vmem:[%s223 + $0xc28] sm:$0xff]
      %v622 = vld [vmem:[%s223 + $0xc30] sm:$0xff]
      %v623 = vld [vmem:[%s223 + $0xc38] sm:$0xff]
      %v624 = vld [vmem:[%s223 + $0xc40] sm:$0xff]
      %v625 = vld [vmem:[%s223 + $0xc48] sm:$0xff]
      %v626 = vld [vmem:[%s223 + $0xc50] sm:$0xff]
      %v627 = vld [vmem:[%s223 + $0xc58] sm:$0xff]
      %v628 = vld [vmem:[%s223 + $0xc60] sm:$0xff]
      %v629 = vld [vmem:[%s223 + $0xc68] sm:$0xff]
      %v630 = vld [vmem:[%s223 + $0xc70] sm:$0xff]
      %v631 = vld [vmem:[%s223 + $0xc78] sm:$0xff]
      %v632 = vld [vmem:[%s223 + $0xc80] sm:$0xff]
      %v633 = vld [vmem:[%s223 + $0xc88] sm:$0xff]
      %v634 = vld [vmem:[%s223 + $0xc90] sm:$0xff]
      %v635 = vld [vmem:[%s223 + $0xc98] sm:$0xff]
      %v636 = vld [vmem:[%s223 + $0xca0] sm:$0xff]
      %v637 = vld [vmem:[%s223 + $0xca8] sm:$0xff]
      %v638 = vld [vmem:[%s223 + $0xcb0] sm:$0xff]
      %v639 = vld [vmem:[%s223 + $0xcb8] sm:$0xff]
      %v640 = vld [vmem:[%s223 + $0xcc0] sm:$0xff]
      %v641 = vld [vmem:[%s223 + $0xcc8] sm:$0xff]
      %v642 = vld [vmem:[%s223 + $0xcd0] sm:$0xff]
      %v643 = vld [vmem:[%s223 + $0xcd8] sm:$0xff]
      %v644 = vld [vmem:[%s223 + $0xce0] sm:$0xff]
      %v645 = vld [vmem:[%s223 + $0xce8] sm:$0xff]
      %v646 = vld [vmem:[%s223 + $0xcf0] sm:$0xff]
      %v647 = vld [vmem:[%s223 + $0xcf8] sm:$0xff]
      %v648 = vld [vmem:[%s223 + $0xd00] sm:$0xff]
      %v649 = vld [vmem:[%s223 + $0xd08] sm:$0xff]
      %v650 = vld [vmem:[%s223 + $0xd10] sm:$0xff]
      %v651 = vld [vmem:[%s223 + $0xd18] sm:$0xff]
      %v652 = vld [vmem:[%s223 + $0xd20] sm:$0xff]
      %v653 = vld [vmem:[%s223 + $0xd28] sm:$0xff]
      %v654 = vld [vmem:[%s223 + $0xd30] sm:$0xff]
      %v655 = vld [vmem:[%s223 + $0xd38] sm:$0xff]
      %v656 = vld [vmem:[%s223 + $0xd40] sm:$0xff]
      %v657 = vld [vmem:[%s223 + $0xd48] sm:$0xff]
      %v658 = vld [vmem:[%s223 + $0xd50] sm:$0xff]
      %v659 = vld [vmem:[%s223 + $0xd58] sm:$0xff]
      %v660 = vld [vmem:[%s223 + $0xd60] sm:$0xff]
      %v661 = vld [vmem:[%s223 + $0xd68] sm:$0xff]
      %v662 = vld [vmem:[%s223 + $0xd70] sm:$0xff]
      %v663 = vld [vmem:[%s223 + $0xd78] sm:$0xff]
      %v664 = vld [vmem:[%s223 + $0xd80] sm:$0xff]
      %v665 = vld [vmem:[%s223 + $0xd88] sm:$0xff]
      %v666 = vld [vmem:[%s223 + $0xd90] sm:$0xff]
      %v667 = vld [vmem:[%s223 + $0xd98] sm:$0xff]
      %v668 = vld [vmem:[%s223 + $0xda0] sm:$0xff]
      %v669 = vld [vmem:[%s223 + $0xda8] sm:$0xff]
      %v670 = vld [vmem:[%s223 + $0xdb0] sm:$0xff]
      %v671 = vld [vmem:[%s223 + $0xdb8] sm:$0xff]
      %v672 = vld [vmem:[%s223 + $0xdc0] sm:$0xff]
      %v673 = vld [vmem:[%s223 + $0xdc8] sm:$0xff]
      %v674 = vld [vmem:[%s223 + $0xdd0] sm:$0xff]
      %v675 = vld [vmem:[%s223 + $0xdd8] sm:$0xff]
      %v676 = vld [vmem:[%s223 + $0xde0] sm:$0xff]
      %v677 = vld [vmem:[%s223 + $0xde8] sm:$0xff]
      %v678 = vld [vmem:[%s223 + $0xdf0] sm:$0xff]
      %v679 = vld [vmem:[%s223 + $0xdf8] sm:$0xff]
      %v680 = vld [vmem:[%s223 + $0xe00] sm:$0xff]
      %v681 = vld [vmem:[%s223 + $0xe08] sm:$0xff]
      %v682 = vld [vmem:[%s223 + $0xe10] sm:$0xff]
      %v683 = vld [vmem:[%s223 + $0xe18] sm:$0xff]
      %v684 = vld [vmem:[%s223 + $0xe20] sm:$0xff]
      %v685 = vld [vmem:[%s223 + $0xe28] sm:$0xff]
      %v686 = vld [vmem:[%s223 + $0xe30] sm:$0xff]
      %v687 = vld [vmem:[%s223 + $0xe38] sm:$0xff]
      %v688 = vld [vmem:[%s223 + $0xe40] sm:$0xff]
      %v689 = vld [vmem:[%s223 + $0xe48] sm:$0xff]
      %v690 = vld [vmem:[%s223 + $0xe50] sm:$0xff]
      %v691 = vld [vmem:[%s223 + $0xe58] sm:$0xff]
      %v692 = vld [vmem:[%s223 + $0xe60] sm:$0xff]
      %v693 = vld [vmem:[%s223 + $0xe68] sm:$0xff]
      %v694 = vld [vmem:[%s223 + $0xe70] sm:$0xff]
      %v695 = vld [vmem:[%s223 + $0xe78] sm:$0xff]
      %v696 = vld [vmem:[%s223 + $0xe80] sm:$0xff]
      %v697 = vld [vmem:[%s223 + $0xe88] sm:$0xff]
      %v698 = vld [vmem:[%s223 + $0xe90] sm:$0xff]
      %v699 = vld [vmem:[%s223 + $0xe98] sm:$0xff]
      %v700 = vld [vmem:[%s223 + $0xea0] sm:$0xff]
      %v701 = vld [vmem:[%s223 + $0xea8] sm:$0xff]
      %v702 = vld [vmem:[%s223 + $0xeb0] sm:$0xff]
      %v703 = vld [vmem:[%s223 + $0xeb8] sm:$0xff]
      %v704 = vld [vmem:[%s223 + $0xec0] sm:$0xff]
      %v705 = vld [vmem:[%s223 + $0xec8] sm:$0xff]
      %v706 = vld [vmem:[%s223 + $0xed0] sm:$0xff]
      %v707 = vld [vmem:[%s223 + $0xed8] sm:$0xff]
      %v708 = vld [vmem:[%s223 + $0xee0] sm:$0xff]
      %v709 = vld [vmem:[%s223 + $0xee8] sm:$0xff]
      %v710 = vld [vmem:[%s223 + $0xef0] sm:$0xff]
      %v711 = vld [vmem:[%s223 + $0xef8] sm:$0xff]
      %v712 = vld [vmem:[%s223 + $0xf00] sm:$0xff]
      %v713 = vld [vmem:[%s223 + $0xf08] sm:$0xff]
      %v714 = vld [vmem:[%s223 + $0xf10] sm:$0xff]
      %v715 = vld [vmem:[%s223 + $0xf18] sm:$0xff]
      %v716 = vld [vmem:[%s223 + $0xf20] sm:$0xff]
      %v717 = vld [vmem:[%s223 + $0xf28] sm:$0xff]
      %v718 = vld [vmem:[%s223 + $0xf30] sm:$0xff]
      %v719 = vld [vmem:[%s223 + $0xf38] sm:$0xff]
      %v720 = vld [vmem:[%s223 + $0xf40] sm:$0xff]
      %v721 = vld [vmem:[%s223 + $0xf48] sm:$0xff]
      %v722 = vld [vmem:[%s223 + $0xf50] sm:$0xff]
      %v723 = vld [vmem:[%s223 + $0xf58] sm:$0xff]
      %v724 = vld [vmem:[%s223 + $0xf60] sm:$0xff]
      %v725 = vld [vmem:[%s223 + $0xf68] sm:$0xff]
      %v726 = vld [vmem:[%s223 + $0xf70] sm:$0xff]
      %v727 = vld [vmem:[%s223 + $0xf78] sm:$0xff]
      %v728 = vld [vmem:[%s223 + $0xf80] sm:$0xff]
      %v729 = vld [vmem:[%s223 + $0xf88] sm:$0xff]
      %v730 = vld [vmem:[%s223 + $0xf90] sm:$0xff]
      %v731 = vld [vmem:[%s223 + $0xf98] sm:$0xff]
      %v732 = vld [vmem:[%s223 + $0xfa0] sm:$0xff]
      %v733 = vld [vmem:[%s223 + $0xfa8] sm:$0xff]
      %v734 = vld [vmem:[%s223 + $0xfb0] sm:$0xff]
      %v735 = vld [vmem:[%s223 + $0xfb8] sm:$0xff]
      %v736 = vld [vmem:[%s223 + $0xfc0] sm:$0xff]
      %v737 = vld [vmem:[%s223 + $0xfc8] sm:$0xff]
      %v738 = vld [vmem:[%s223 + $0xfd0] sm:$0xff]
      %v739 = vld [vmem:[%s223 + $0xfd8] sm:$0xff]
      %v740 = vld [vmem:[%s223 + $0xfe0] sm:$0xff]
      %v741 = vld [vmem:[%s223 + $0xfe8] sm:$0xff]
      %v742 = vld [vmem:[%s223 + $0xff0] sm:$0xff]
      %v743 = vld [vmem:[%s223 + $0xff8] sm:$0xff]
      %v744 = vld [vmem:[%s223 + $0x1000] sm:$0xff]
      %v745 = vld [vmem:[%s223 + $0x1008] sm:$0xff]
      %v746 = vld [vmem:[%s223 + $0x1010] sm:$0xff]
      %v747 = vld [vmem:[%s223 + $0x1018] sm:$0xff]
      %v748 = vld [vmem:[%s223 + $0x1020] sm:$0xff]
      %v749 = vld [vmem:[%s223 + $0x1028] sm:$0xff]
      %v750 = vld [vmem:[%s223 + $0x1030] sm:$0xff]
      %v751 = vld [vmem:[%s223 + $0x1038] sm:$0xff]
      %v752 = vld [vmem:[%s223 + $0x1040] sm:$0xff]
      %v753 = vld [vmem:[%s223 + $0x1048] sm:$0xff]
      %v754 = vld [vmem:[%s223 + $0x1050] sm:$0xff]
      %v755 = vld [vmem:[%s223 + $0x1058] sm:$0xff]
      %v756 = vld [vmem:[%s223 + $0x1060] sm:$0xff]
      %v757 = vld [vmem:[%s223 + $0x1068] sm:$0xff]
      %v758 = vld [vmem:[%s223 + $0x1070] sm:$0xff]
      %v759 = vld [vmem:[%s223 + $0x1078] sm:$0xff]
      %v760 = vld [vmem:[%s223 + $0x1080] sm:$0xff]
      %v761 = vld [vmem:[%s223 + $0x1088] sm:$0xff]
      %v762 = vld [vmem:[%s223 + $0x1090] sm:$0xff]
      %v763 = vld [vmem:[%s223 + $0x1098] sm:$0xff]
      %v764 = vld [vmem:[%s223 + $0x10a0] sm:$0xff]
      %v765 = vld [vmem:[%s223 + $0x10a8] sm:$0xff]
      %v766 = vld [vmem:[%s223 + $0x10b0] sm:$0xff]
      %v767 = vld [vmem:[%s223 + $0x10b8] sm:$0xff]
      %v768 = vld [vmem:[%s223 + $0x10c0] sm:$0xff]
      %v769 = vld [vmem:[%s223 + $0x10c8] sm:$0xff]
      %v770 = vld [vmem:[%s223 + $0x10d0] sm:$0xff]
      %v771 = vld [vmem:[%s223 + $0x10d8] sm:$0xff]
      %v772 = vld [vmem:[%s223 + $0x10e0] sm:$0xff]
      %v773 = vld [vmem:[%s223 + $0x10e8] sm:$0xff]
      %v774 = vld [vmem:[%s223 + $0x10f0] sm:$0xff]
      %v775 = vld [vmem:[%s223 + $0x10f8] sm:$0xff]
      %v776 = vld [vmem:[%s223 + $0x1100] sm:$0xff]
      %v777 = vld [vmem:[%s223 + $0x1108] sm:$0xff]
      %v778 = vld [vmem:[%s223 + $0x1110] sm:$0xff]
      %v779 = vld [vmem:[%s223 + $0x1118] sm:$0xff]
      %v780 = vld [vmem:[%s223 + $0x1120] sm:$0xff]
      %v781 = vld [vmem:[%s223 + $0x1128] sm:$0xff]
      %v782 = vld [vmem:[%s223 + $0x1130] sm:$0xff]
      %v783 = vld [vmem:[%s223 + $0x1138] sm:$0xff]
      %v784 = vld [vmem:[%s223 + $0x1140] sm:$0xff]
      %v785 = vld [vmem:[%s223 + $0x1148] sm:$0xff]
      %v786 = vld [vmem:[%s223 + $0x1150] sm:$0xff]
      %v787 = vld [vmem:[%s223 + $0x1158] sm:$0xff]
      %v788 = vld [vmem:[%s223 + $0x1160] sm:$0xff]
      %v789 = vld [vmem:[%s223 + $0x1168] sm:$0xff]
      %v790 = vld [vmem:[%s223 + $0x1170] sm:$0xff]
      %v791 = vld [vmem:[%s223 + $0x1178] sm:$0xff]
      %v792 = vld [vmem:[%s223 + $0x1180] sm:$0xff]
      %v793 = vld [vmem:[%s223 + $0x1188] sm:$0xff]
      %v794 = vld [vmem:[%s223 + $0x1190] sm:$0xff]
      %v795 = vld [vmem:[%s223 + $0x1198] sm:$0xff]
      %v796 = vld [vmem:[%s223 + $0x11a0] sm:$0xff]
      %v797 = vld [vmem:[%s223 + $0x11a8] sm:$0xff]
      %v798 = vld [vmem:[%s223 + $0x11b0] sm:$0xff]
      %v799 = vld [vmem:[%s223 + $0x11b8] sm:$0xff]
      %v800 = vld [vmem:[%s223 + $0x11c0] sm:$0xff]
      %v801 = vld [vmem:[%s223 + $0x11c8] sm:$0xff]
      %v802 = vld [vmem:[%s223 + $0x11d0] sm:$0xff]
      %v803 = vld [vmem:[%s223 + $0x11d8] sm:$0xff]
      %v804 = vld [vmem:[%s223 + $0x11e0] sm:$0xff]
      %v805 = vld [vmem:[%s223 + $0x11e8] sm:$0xff]
      %v806 = vld [vmem:[%s223 + $0x11f0] sm:$0xff]
      %v807 = vld [vmem:[%s223 + $0x11f8] sm:$0xff]
      %v808 = vld [vmem:[%s223 + $0x1200] sm:$0xff]
      %v809 = vld [vmem:[%s223 + $0x1208] sm:$0xff]
      %v810 = vld [vmem:[%s223 + $0x1210] sm:$0xff]
      %v811 = vld [vmem:[%s223 + $0x1218] sm:$0xff]
      %v812 = vld [vmem:[%s223 + $0x1220] sm:$0xff]
      %v813 = vld [vmem:[%s223 + $0x1228] sm:$0xff]
      %v814 = vld [vmem:[%s223 + $0x1230] sm:$0xff]
      %v815 = vld [vmem:[%s223 + $0x1238] sm:$0xff]
      %v816 = vld [vmem:[%s223 + $0x1240] sm:$0xff]
      %v817 = vld [vmem:[%s223 + $0x1248] sm:$0xff]
      %v818 = vld [vmem:[%s223 + $0x1250] sm:$0xff]
      %v819 = vld [vmem:[%s223 + $0x1258] sm:$0xff]
      %v820 = vld [vmem:[%s223 + $0x1260] sm:$0xff]
      %v821 = vld [vmem:[%s223 + $0x1268] sm:$0xff]
      %v822 = vld [vmem:[%s223 + $0x1270] sm:$0xff]
      %v823 = vld [vmem:[%s223 + $0x1278] sm:$0xff]
      %v824 = vld [vmem:[%s223 + $0x1280] sm:$0xff]
      %v825 = vld [vmem:[%s223 + $0x1288] sm:$0xff]
      %v826 = vld [vmem:[%s223 + $0x1290] sm:$0xff]
      %v827 = vld [vmem:[%s223 + $0x1298] sm:$0xff]
      %v828 = vld [vmem:[%s223 + $0x12a0] sm:$0xff]
      %v829 = vld [vmem:[%s223 + $0x12a8] sm:$0xff]
      %v830 = vld [vmem:[%s223 + $0x12b0] sm:$0xff]
      %v831 = vld [vmem:[%s223 + $0x12b8] sm:$0xff]
      %v832 = vld [vmem:[%s223 + $0x12c0] sm:$0xff]
      %v833 = vld [vmem:[%s223 + $0x12c8] sm:$0xff]
      %v834 = vld [vmem:[%s223 + $0x12d0] sm:$0xff]
      %v835 = vld [vmem:[%s223 + $0x12d8] sm:$0xff]
      %v836 = vld [vmem:[%s223 + $0x12e0] sm:$0xff]
      %v837 = vld [vmem:[%s223 + $0x12e8] sm:$0xff]
      %v838 = vld [vmem:[%s223 + $0x12f0] sm:$0xff]
      %v839 = vld [vmem:[%s223 + $0x12f8] sm:$0xff]
      %v840 = vld [vmem:[%s223 + $0x1300] sm:$0xff]
      %v841 = vld [vmem:[%s223 + $0x1308] sm:$0xff]
      %v842 = vld [vmem:[%s223 + $0x1310] sm:$0xff]
      %v843 = vld [vmem:[%s223 + $0x1318] sm:$0xff]
      %v844 = vld [vmem:[%s223 + $0x1320] sm:$0xff]
      %v845 = vld [vmem:[%s223 + $0x1328] sm:$0xff]
      %v846 = vld [vmem:[%s223 + $0x1330] sm:$0xff]
      %v847 = vld [vmem:[%s223 + $0x1338] sm:$0xff]
      %v848 = vld [vmem:[%s223 + $0x1340] sm:$0xff]
      %v849 = vld [vmem:[%s223 + $0x1348] sm:$0xff]
      %v850 = vld [vmem:[%s223 + $0x1350] sm:$0xff]
      %v851 = vld [vmem:[%s223 + $0x1358] sm:$0xff]
      %v852 = vld [vmem:[%s223 + $0x1360] sm:$0xff]
      %v853 = vld [vmem:[%s223 + $0x1368] sm:$0xff]
      %v854 = vld [vmem:[%s223 + $0x1370] sm:$0xff]
      %v855 = vld [vmem:[%s223 + $0x1378] sm:$0xff]
      %v856 = vld [vmem:[%s223 + $0x1380] sm:$0xff]
      %v857 = vld [vmem:[%s223 + $0x1388] sm:$0xff]
      %v858 = vld [vmem:[%s223 + $0x1390] sm:$0xff]
      %v859 = vld [vmem:[%s223 + $0x1398] sm:$0xff]
      %v860 = vld [vmem:[%s223 + $0x13a0] sm:$0xff]
      %v861 = vld [vmem:[%s223 + $0x13a8] sm:$0xff]
      %v862 = vld [vmem:[%s223 + $0x13b0] sm:$0xff]
      %v863 = vld [vmem:[%s223 + $0x13b8] sm:$0xff]
      %v864 = vld [vmem:[%s223 + $0x13c0] sm:$0xff]
      %v865 = vld [vmem:[%s223 + $0x13c8] sm:$0xff]
      %v866 = vld [vmem:[%s223 + $0x13d0] sm:$0xff]
      %v867 = vld [vmem:[%s223 + $0x13d8] sm:$0xff]
      %v868 = vld [vmem:[%s223 + $0x13e0] sm:$0xff]
      %v869 = vld [vmem:[%s223 + $0x13e8] sm:$0xff]
      %v870 = vld [vmem:[%s223 + $0x13f0] sm:$0xff]
      %v871 = vld [vmem:[%s223 + $0x13f8] sm:$0xff]
      %v872 = vld [vmem:[%s223 + $0x1400] sm:$0xff]
      %v873 = vld [vmem:[%s223 + $0x1408] sm:$0xff]
      %v874 = vld [vmem:[%s223 + $0x1410] sm:$0xff]
      %v875 = vld [vmem:[%s223 + $0x1418] sm:$0xff]
      %v876 = vld [vmem:[%s223 + $0x1420] sm:$0xff]
      %v877 = vld [vmem:[%s223 + $0x1428] sm:$0xff]
      %v878 = vld [vmem:[%s223 + $0x1430] sm:$0xff]
      %v879 = vld [vmem:[%s223 + $0x1438] sm:$0xff]
      %v880 = vld [vmem:[%s223 + $0x1440] sm:$0xff]
      %v881 = vld [vmem:[%s223 + $0x1448] sm:$0xff]
      %v882 = vld [vmem:[%s223 + $0x1450] sm:$0xff]
      %v883 = vld [vmem:[%s223 + $0x1458] sm:$0xff]
      %v884 = vld [vmem:[%s223 + $0x1460] sm:$0xff]
      %v885 = vld [vmem:[%s223 + $0x1468] sm:$0xff]
      %v886 = vld [vmem:[%s223 + $0x1470] sm:$0xff]
      %v887 = vld [vmem:[%s223 + $0x1478] sm:$0xff]
      %v888 = vld [vmem:[%s223 + $0x1480] sm:$0xff]
      %v889 = vld [vmem:[%s223 + $0x1488] sm:$0xff]
      %v890 = vld [vmem:[%s223 + $0x1490] sm:$0xff]
      %v891 = vld [vmem:[%s223 + $0x1498] sm:$0xff]
      %v892 = vld [vmem:[%s223 + $0x14a0] sm:$0xff]
      %v893 = vld [vmem:[%s223 + $0x14a8] sm:$0xff]
      %v894 = vld [vmem:[%s223 + $0x14b0] sm:$0xff]
      %v895 = vld [vmem:[%s223 + $0x14b8] sm:$0xff]
      %v896 = vld [vmem:[%s223 + $0x14c0] sm:$0xff]
      %v897 = vld [vmem:[%s223 + $0x14c8] sm:$0xff]
      %v898 = vld [vmem:[%s223 + $0x14d0] sm:$0xff]
      %v899 = vld [vmem:[%s223 + $0x14d8] sm:$0xff]
      %v900 = vld [vmem:[%s223 + $0x14e0] sm:$0xff]
      %v901 = vld [vmem:[%s223 + $0x14e8] sm:$0xff]
      %v902 = vld [vmem:[%s223 + $0x14f0] sm:$0xff]
      %v903 = vld [vmem:[%s223 + $0x14f8] sm:$0xff]
      %v904 = vld [vmem:[%s223 + $0x1500] sm:$0xff]
      %v905 = vld [vmem:[%s223 + $0x1508] sm:$0xff]
      %v906 = vld [vmem:[%s223 + $0x1510] sm:$0xff]
      %v907 = vld [vmem:[%s223 + $0x1518] sm:$0xff]
      %v908 = vld [vmem:[%s223 + $0x1520] sm:$0xff]
      %v909 = vld [vmem:[%s223 + $0x1528] sm:$0xff]
      %v910 = vld [vmem:[%s223 + $0x1530] sm:$0xff]
      %v911 = vld [vmem:[%s223 + $0x1538] sm:$0xff]
      %v912 = vld [vmem:[%s223 + $0x1540] sm:$0xff]
      %v913 = vld [vmem:[%s223 + $0x1548] sm:$0xff]
      %v914 = vld [vmem:[%s223 + $0x1550] sm:$0xff]
      %v915 = vld [vmem:[%s223 + $0x1558] sm:$0xff]
      %v916 = vld [vmem:[%s223 + $0x1560] sm:$0xff]
      %v917 = vld [vmem:[%s223 + $0x1568] sm:$0xff]
      %v918 = vld [vmem:[%s223 + $0x1570] sm:$0xff]
      %v919 = vld [vmem:[%s223 + $0x1578] sm:$0xff]
      %v920 = vld [vmem:[%s223 + $0x1580] sm:$0xff]
      %v921 = vld [vmem:[%s223 + $0x1588] sm:$0xff]
      %v922 = vld [vmem:[%s223 + $0x1590] sm:$0xff]
      %v923 = vld [vmem:[%s223 + $0x1598] sm:$0xff]
      %v924 = vld [vmem:[%s223 + $0x15a0] sm:$0xff]
      %v925 = vld [vmem:[%s223 + $0x15a8] sm:$0xff]
      %v926 = vld [vmem:[%s223 + $0x15b0] sm:$0xff]
      %v927 = vld [vmem:[%s223 + $0x15b8] sm:$0xff]
      %v928 = vld [vmem:[%s223 + $0x15c0] sm:$0xff]
      %v929 = vld [vmem:[%s223 + $0x15c8] sm:$0xff]
      %v930 = vld [vmem:[%s223 + $0x15d0] sm:$0xff]
      %v931 = vld [vmem:[%s223 + $0x15d8] sm:$0xff]
      %v932 = vld [vmem:[%s223 + $0x15e0] sm:$0xff]
      %v933 = vld [vmem:[%s223 + $0x15e8] sm:$0xff]
      %v934 = vld [vmem:[%s223 + $0x15f0] sm:$0xff]
      %v935 = vld [vmem:[%s223 + $0x15f8] sm:$0xff]
      %v936 = vld [vmem:[%s223 + $0x1600] sm:$0xff]
      %v937 = vld [vmem:[%s223 + $0x1608] sm:$0xff]
      %v938 = vld [vmem:[%s223 + $0x1610] sm:$0xff]
      %v939 = vld [vmem:[%s223 + $0x1618] sm:$0xff]
      %v940 = vld [vmem:[%s223 + $0x1620] sm:$0xff]
      %v941 = vld [vmem:[%s223 + $0x1628] sm:$0xff]
      %v942 = vld [vmem:[%s223 + $0x1630] sm:$0xff]
      %v943 = vld [vmem:[%s223 + $0x1638] sm:$0xff]
      %v944 = vld [vmem:[%s223 + $0x1640] sm:$0xff]
      %v945 = vld [vmem:[%s223 + $0x1648] sm:$0xff]
      %v946 = vld [vmem:[%s223 + $0x1650] sm:$0xff]
      %v947 = vld [vmem:[%s223 + $0x1658] sm:$0xff]
      %v948 = vld [vmem:[%s223 + $0x1660] sm:$0xff]
      %v949 = vld [vmem:[%s223 + $0x1668] sm:$0xff]
      %v950 = vld [vmem:[%s223 + $0x1670] sm:$0xff]
      %v951 = vld [vmem:[%s223 + $0x1678] sm:$0xff]
      %v952 = vld [vmem:[%s223 + $0x1680] sm:$0xff]
      %v953 = vld [vmem:[%s223 + $0x1688] sm:$0xff]
      %v954 = vld [vmem:[%s223 + $0x1690] sm:$0xff]
      %v955 = vld [vmem:[%s223 + $0x1698] sm:$0xff]
      %v956 = vld [vmem:[%s223 + $0x16a0] sm:$0xff]
      %v957 = vld [vmem:[%s223 + $0x16a8] sm:$0xff]
      %v958 = vld [vmem:[%s223 + $0x16b0] sm:$0xff]
      %v959 = vld [vmem:[%s223 + $0x16b8] sm:$0xff]
      %v960 = vld [vmem:[%s223 + $0x16c0] sm:$0xff]
      %v961 = vld [vmem:[%s223 + $0x16c8] sm:$0xff]
      %v962 = vld [vmem:[%s223 + $0x16d0] sm:$0xff]
      %v963 = vld [vmem:[%s223 + $0x16d8] sm:$0xff]
      %v964 = vld [vmem:[%s223 + $0x16e0] sm:$0xff]
      %v965 = vld [vmem:[%s223 + $0x16e8] sm:$0xff]
      %v966 = vld [vmem:[%s223 + $0x16f0] sm:$0xff]
      %v967 = vld [vmem:[%s223 + $0x16f8] sm:$0xff]
      %v968 = vld [vmem:[%s223 + $0x1700] sm:$0xff]
      %v969 = vld [vmem:[%s223 + $0x1708] sm:$0xff]
      %v970 = vld [vmem:[%s223 + $0x1710] sm:$0xff]
      %v971 = vld [vmem:[%s223 + $0x1718] sm:$0xff]
      %v972 = vld [vmem:[%s223 + $0x1720] sm:$0xff]
      %v973 = vld [vmem:[%s223 + $0x1728] sm:$0xff]
      %v974 = vld [vmem:[%s223 + $0x1730] sm:$0xff]
      %v975 = vld [vmem:[%s223 + $0x1738] sm:$0xff]
      %v976 = vld [vmem:[%s223 + $0x1740] sm:$0xff]
      %v977 = vld [vmem:[%s223 + $0x1748] sm:$0xff]
      %v978 = vld [vmem:[%s223 + $0x1750] sm:$0xff]
      %v979 = vld [vmem:[%s223 + $0x1758] sm:$0xff]
      %v980 = vld [vmem:[%s223 + $0x1760] sm:$0xff]
      %v981 = vld [vmem:[%s223 + $0x1768] sm:$0xff]
      %v982 = vld [vmem:[%s223 + $0x1770] sm:$0xff]
      %v983 = vld [vmem:[%s223 + $0x1778] sm:$0xff]
      %v984 = vld [vmem:[%s223 + $0x1780] sm:$0xff]
      %v985 = vld [vmem:[%s223 + $0x1788] sm:$0xff]
      %v986 = vld [vmem:[%s223 + $0x1790] sm:$0xff]
      %v987 = vld [vmem:[%s223 + $0x1798] sm:$0xff]
      %v988 = vld [vmem:[%s223 + $0x17a0] sm:$0xff]
      %v989 = vld [vmem:[%s223 + $0x17a8] sm:$0xff]
      %v990 = vld [vmem:[%s223 + $0x17b0] sm:$0xff]
      %v991 = vld [vmem:[%s223 + $0x17b8] sm:$0xff]
      %v992 = vld [vmem:[%s223 + $0x17c0] sm:$0xff]
      %v993 = vld [vmem:[%s223 + $0x17c8] sm:$0xff]
      %v994 = vld [vmem:[%s223 + $0x17d0] sm:$0xff]
      %v995 = vld [vmem:[%s223 + $0x17d8] sm:$0xff]
      %v996 = vld [vmem:[%s223 + $0x17e0] sm:$0xff]
      %v997 = vld [vmem:[%s223 + $0x17e8] sm:$0xff]
      %v998 = vld [vmem:[%s223 + $0x17f0] sm:$0xff]
      %v999 = vld [vmem:[%s223 + $0x17f8] sm:$0xff]
      %v1000 = vld [vmem:[%s223 + $0x1800] sm:$0xff]
      %v1001 = vld [vmem:[%s223 + $0x1808] sm:$0xff]
      %v1002 = vld [vmem:[%s223 + $0x1810] sm:$0xff]
      %v1003 = vld [vmem:[%s223 + $0x1818] sm:$0xff]
      %v1004 = vld [vmem:[%s223 + $0x1820] sm:$0xff]
      %v1005 = vld [vmem:[%s223 + $0x1828] sm:$0xff]
      %v1006 = vld [vmem:[%s223 + $0x1830] sm:$0xff]
      %v1007 = vld [vmem:[%s223 + $0x1838] sm:$0xff]
      %v1008 = vld [vmem:[%s223 + $0x1840] sm:$0xff]
      %v1009 = vld [vmem:[%s223 + $0x1848] sm:$0xff]
      %v1010 = vld [vmem:[%s223 + $0x1850] sm:$0xff]
      %v1011 = vld [vmem:[%s223 + $0x1858] sm:$0xff]
      %v1012 = vld [vmem:[%s223 + $0x1860] sm:$0xff]
      %v1013 = vld [vmem:[%s223 + $0x1868] sm:$0xff]
      %v1014 = vld [vmem:[%s223 + $0x1870] sm:$0xff]
      %v1015 = vld [vmem:[%s223 + $0x1878] sm:$0xff]
      %v1016 = vld [vmem:[%s223 + $0x1880] sm:$0xff]
      %v1017 = vld [vmem:[%s223 + $0x1888] sm:$0xff]
      %v1018 = vld [vmem:[%s223 + $0x1890] sm:$0xff]
      %v1019 = vld [vmem:[%s223 + $0x1898] sm:$0xff]
      %v1020 = vld [vmem:[%s223 + $0x18a0] sm:$0xff]
      %v1021 = vld [vmem:[%s223 + $0x18a8] sm:$0xff]
      %v1022 = vld [vmem:[%s223 + $0x18b0] sm:$0xff]
      %v1023 = vld [vmem:[%s223 + $0x18b8] sm:$0xff]
      %v1024 = vld [vmem:[%s223 + $0x18c0] sm:$0xff]
      %v1025 = vld [vmem:[%s223 + $0x18c8] sm:$0xff]
      %v1026 = vld [vmem:[%s223 + $0x18d0] sm:$0xff]
      %v1027 = vld [vmem:[%s223 + $0x18d8] sm:$0xff]
      %v1028 = vld [vmem:[%s223 + $0x18e0] sm:$0xff]
      %v1029 = vld [vmem:[%s223 + $0x18e8] sm:$0xff]
      %v1030 = vld [vmem:[%s223 + $0x18f0] sm:$0xff]
      %v1031 = vld [vmem:[%s223 + $0x18f8] sm:$0xff]
      %v1032 = vld [vmem:[%s223 + $0x1900] sm:$0xff]
      %v1033 = vld [vmem:[%s223 + $0x1908] sm:$0xff]
      %v1034 = vld [vmem:[%s223 + $0x1910] sm:$0xff]
      %v1035 = vld [vmem:[%s223 + $0x1918] sm:$0xff]
      %v1036 = vld [vmem:[%s223 + $0x1920] sm:$0xff]
      %v1037 = vld [vmem:[%s223 + $0x1928] sm:$0xff]
      %v1038 = vld [vmem:[%s223 + $0x1930] sm:$0xff]
      %v1039 = vld [vmem:[%s223 + $0x1938] sm:$0xff]
      %v1040 = vld [vmem:[%s223 + $0x1940] sm:$0xff]
      %v1041 = vld [vmem:[%s223 + $0x1948] sm:$0xff]
      %v1042 = vld [vmem:[%s223 + $0x1950] sm:$0xff]
      %v1043 = vld [vmem:[%s223 + $0x1958] sm:$0xff]
      %v1044 = vld [vmem:[%s223 + $0x1960] sm:$0xff]
      %v1045 = vld [vmem:[%s223 + $0x1968] sm:$0xff]
      %v1046 = vld [vmem:[%s223 + $0x1970] sm:$0xff]
      %v1047 = vld [vmem:[%s223 + $0x1978] sm:$0xff]
      %v1048 = vld [vmem:[%s223 + $0x1980] sm:$0xff]
      %v1049 = vld [vmem:[%s223 + $0x1988] sm:$0xff]
      %v1050 = vld [vmem:[%s223 + $0x1990] sm:$0xff]
      %v1051 = vld [vmem:[%s223 + $0x1998] sm:$0xff]
      %v1052 = vld [vmem:[%s223 + $0x19a0] sm:$0xff]
      %v1053 = vld [vmem:[%s223 + $0x19a8] sm:$0xff]
      %v1054 = vld [vmem:[%s223 + $0x19b0] sm:$0xff]
      %v1055 = vld [vmem:[%s223 + $0x19b8] sm:$0xff]
      %v1056 = vld [vmem:[%s223 + $0x19c0] sm:$0xff]
      %v1057 = vld [vmem:[%s223 + $0x19c8] sm:$0xff]
      %v1058 = vld [vmem:[%s223 + $0x19d0] sm:$0xff]
      %v1059 = vld [vmem:[%s223 + $0x19d8] sm:$0xff]
      %v1060 = vld [vmem:[%s223 + $0x19e0] sm:$0xff]
      %v1061 = vld [vmem:[%s223 + $0x19e8] sm:$0xff]
      %v1062 = vld [vmem:[%s223 + $0x19f0] sm:$0xff]
      %v1063 = vld [vmem:[%s223 + $0x19f8] sm:$0xff]
      %v1064 = vld [vmem:[%s223 + $0x1a00] sm:$0xff]
      %v1065 = vld [vmem:[%s223 + $0x1a08] sm:$0xff]
      %v1066 = vld [vmem:[%s223 + $0x1a10] sm:$0xff]
      %v1067 = vld [vmem:[%s223 + $0x1a18] sm:$0xff]
      %v1068 = vld [vmem:[%s223 + $0x1a20] sm:$0xff]
      %v1069 = vld [vmem:[%s223 + $0x1a28] sm:$0xff]
      %v1070 = vld [vmem:[%s223 + $0x1a30] sm:$0xff]
      %v1071 = vld [vmem:[%s223 + $0x1a38] sm:$0xff]
      %v1072 = vld [vmem:[%s223 + $0x1a40] sm:$0xff]
      %v1073 = vld [vmem:[%s223 + $0x1a48] sm:$0xff]
      %v1074 = vld [vmem:[%s223 + $0x1a50] sm:$0xff]
      %v1075 = vld [vmem:[%s223 + $0x1a58] sm:$0xff]
      %v1076 = vld [vmem:[%s223 + $0x1a60] sm:$0xff]
      %v1077 = vld [vmem:[%s223 + $0x1a68] sm:$0xff]
      %v1078 = vld [vmem:[%s223 + $0x1a70] sm:$0xff]
      %v1079 = vld [vmem:[%s223 + $0x1a78] sm:$0xff]
      %v1080 = vld [vmem:[%s223 + $0x1a80] sm:$0xff]
      %v1081 = vld [vmem:[%s223 + $0x1a88] sm:$0xff]
      %v1082 = vld [vmem:[%s223 + $0x1a90] sm:$0xff]
      %v1083 = vld [vmem:[%s223 + $0x1a98] sm:$0xff]
      %v1084 = vld [vmem:[%s223 + $0x1aa0] sm:$0xff]
      %v1085 = vld [vmem:[%s223 + $0x1aa8] sm:$0xff]
      %v1086 = vld [vmem:[%s223 + $0x1ab0] sm:$0xff]
      %v1087 = vld [vmem:[%s223 + $0x1ab8] sm:$0xff]
      %v1088 = vld [vmem:[%s223 + $0x1ac0] sm:$0xff]
      %v1089 = vld [vmem:[%s223 + $0x1ac8] sm:$0xff]
      %v1090 = vld [vmem:[%s223 + $0x1ad0] sm:$0xff]
      %v1091 = vld [vmem:[%s223 + $0x1ad8] sm:$0xff]
      %v1092 = vld [vmem:[%s223 + $0x1ae0] sm:$0xff]
      %v1093 = vld [vmem:[%s223 + $0x1ae8] sm:$0xff]
      %v1094 = vld [vmem:[%s223 + $0x1af0] sm:$0xff]
      %v1095 = vld [vmem:[%s223 + $0x1af8] sm:$0xff]
      %v1096 = vld [vmem:[%s223 + $0x1b00] sm:$0xff]
      %v1097 = vld [vmem:[%s223 + $0x1b08] sm:$0xff]
      %v1098 = vld [vmem:[%s223 + $0x1b10] sm:$0xff]
      %v1099 = vld [vmem:[%s223 + $0x1b18] sm:$0xff]
      %v1100 = vld [vmem:[%s223 + $0x1b20] sm:$0xff]
      %v1101 = vld [vmem:[%s223 + $0x1b28] sm:$0xff]
      %v1102 = vld [vmem:[%s223 + $0x1b30] sm:$0xff]
      %v1103 = vld [vmem:[%s223 + $0x1b38] sm:$0xff]
      %v1104 = vld [vmem:[%s223 + $0x1b40] sm:$0xff]
      %v1105 = vld [vmem:[%s223 + $0x1b48] sm:$0xff]
      %v1106 = vld [vmem:[%s223 + $0x1b50] sm:$0xff]
      %v1107 = vld [vmem:[%s223 + $0x1b58] sm:$0xff]
      %v1108 = vld [vmem:[%s223 + $0x1b60] sm:$0xff]
      %v1109 = vld [vmem:[%s223 + $0x1b68] sm:$0xff]
      %v1110 = vld [vmem:[%s223 + $0x1b70] sm:$0xff]
      %v1111 = vld [vmem:[%s223 + $0x1b78] sm:$0xff]
      %v1112 = vld [vmem:[%s223 + $0x1b80] sm:$0xff]
      %v1113 = vld [vmem:[%s223 + $0x1b88] sm:$0xff]
      %v1114 = vld [vmem:[%s223 + $0x1b90] sm:$0xff]
      %v1115 = vld [vmem:[%s223 + $0x1b98] sm:$0xff]
      %v1116 = vld [vmem:[%s223 + $0x1ba0] sm:$0xff]
      %v1117 = vld [vmem:[%s223 + $0x1ba8] sm:$0xff]
      %v1118 = vld [vmem:[%s223 + $0x1bb0] sm:$0xff]
      %v1119 = vld [vmem:[%s223 + $0x1bb8] sm:$0xff]
      %v1120 = vld [vmem:[%s223 + $0x1bc0] sm:$0xff]
      %v1121 = vld [vmem:[%s223 + $0x1bc8] sm:$0xff]
      %v1122 = vld [vmem:[%s223 + $0x1bd0] sm:$0xff]
      %v1123 = vld [vmem:[%s223 + $0x1bd8] sm:$0xff]
      %v1124 = vld [vmem:[%s223 + $0x1be0] sm:$0xff]
      %v1125 = vld [vmem:[%s223 + $0x1be8] sm:$0xff]
      %v1126 = vld [vmem:[%s223 + $0x1bf0] sm:$0xff]
      %v1127 = vld [vmem:[%s223 + $0x1bf8] sm:$0xff]
      %v1128 = vld [vmem:[%s223 + $0x1c00] sm:$0xff]
      %v1129 = vld [vmem:[%s223 + $0x1c08] sm:$0xff]
      %v1130 = vld [vmem:[%s223 + $0x1c10] sm:$0xff]
      %v1131 = vld [vmem:[%s223 + $0x1c18] sm:$0xff]
      %v1132 = vld [vmem:[%s223 + $0x1c20] sm:$0xff]
      %v1133 = vld [vmem:[%s223 + $0x1c28] sm:$0xff]
      %v1134 = vld [vmem:[%s223 + $0x1c30] sm:$0xff]
      %v1135 = vld [vmem:[%s223 + $0x1c38] sm:$0xff]
      %v1136 = vld [vmem:[%s223 + $0x1c40] sm:$0xff]
      %v1137 = vld [vmem:[%s223 + $0x1c48] sm:$0xff]
      %v1138 = vld [vmem:[%s223 + $0x1c50] sm:$0xff]
      %v1139 = vld [vmem:[%s223 + $0x1c58] sm:$0xff]
      %v1140 = vld [vmem:[%s223 + $0x1c60] sm:$0xff]
      %v1141 = vld [vmem:[%s223 + $0x1c68] sm:$0xff]
      %v1142 = vld [vmem:[%s223 + $0x1c70] sm:$0xff]
      %v1143 = vld [vmem:[%s223 + $0x1c78] sm:$0xff]
      %v1144 = vld [vmem:[%s223 + $0x1c80] sm:$0xff]
      %v1145 = vld [vmem:[%s223 + $0x1c88] sm:$0xff]
      %v1146 = vld [vmem:[%s223 + $0x1c90] sm:$0xff]
      %v1147 = vld [vmem:[%s223 + $0x1c98] sm:$0xff]
      %v1148 = vld [vmem:[%s223 + $0x1ca0] sm:$0xff]
      %v1149 = vld [vmem:[%s223 + $0x1ca8] sm:$0xff]
      %v1150 = vld [vmem:[%s223 + $0x1cb0] sm:$0xff]
      %v1151 = vld [vmem:[%s223 + $0x1cb8] sm:$0xff]
      %v1152 = vld [vmem:[%s223 + $0x1cc0] sm:$0xff]
      %v1153 = vld [vmem:[%s223 + $0x1cc8] sm:$0xff]
      %v1154 = vld [vmem:[%s223 + $0x1cd0] sm:$0xff]
      %v1155 = vld [vmem:[%s223 + $0x1cd8] sm:$0xff]
      %v1156 = vld [vmem:[%s223 + $0x1ce0] sm:$0xff]
      %v1157 = vld [vmem:[%s223 + $0x1ce8] sm:$0xff]
      %v1158 = vld [vmem:[%s223 + $0x1cf0] sm:$0xff]
      %v1159 = vld [vmem:[%s223 + $0x1cf8] sm:$0xff]
      %v1160 = vld [vmem:[%s223 + $0x1d00] sm:$0xff]
      %v1161 = vld [vmem:[%s223 + $0x1d08] sm:$0xff]
      %v1162 = vld [vmem:[%s223 + $0x1d10] sm:$0xff]
      %v1163 = vld [vmem:[%s223 + $0x1d18] sm:$0xff]
      %v1164 = vld [vmem:[%s223 + $0x1d20] sm:$0xff]
      %v1165 = vld [vmem:[%s223 + $0x1d28] sm:$0xff]
      %v1166 = vld [vmem:[%s223 + $0x1d30] sm:$0xff]
      %v1167 = vld [vmem:[%s223 + $0x1d38] sm:$0xff]
      %v1168 = vld [vmem:[%s223 + $0x1d40] sm:$0xff]
      %v1169 = vld [vmem:[%s223 + $0x1d48] sm:$0xff]
      %v1170 = vld [vmem:[%s223 + $0x1d50] sm:$0xff]
      %v1171 = vld [vmem:[%s223 + $0x1d58] sm:$0xff]
      %v1172 = vld [vmem:[%s223 + $0x1d60] sm:$0xff]
      %v1173 = vld [vmem:[%s223 + $0x1d68] sm:$0xff]
      %v1174 = vld [vmem:[%s223 + $0x1d70] sm:$0xff]
      %v1175 = vld [vmem:[%s223 + $0x1d78] sm:$0xff]
      %v1176 = vld [vmem:[%s223 + $0x1d80] sm:$0xff]
      %v1177 = vld [vmem:[%s223 + $0x1d88] sm:$0xff]
      %v1178 = vld [vmem:[%s223 + $0x1d90] sm:$0xff]
      %v1179 = vld [vmem:[%s223 + $0x1d98] sm:$0xff]
      %v1180 = vld [vmem:[%s223 + $0x1da0] sm:$0xff]
      %v1181 = vld [vmem:[%s223 + $0x1da8] sm:$0xff]
      %v1182 = vld [vmem:[%s223 + $0x1db0] sm:$0xff]
      %v1183 = vld [vmem:[%s223 + $0x1db8] sm:$0xff]
      %v1184 = vld [vmem:[%s223 + $0x1dc0] sm:$0xff]
      %v1185 = vld [vmem:[%s223 + $0x1dc8] sm:$0xff]
      %v1186 = vld [vmem:[%s223 + $0x1dd0] sm:$0xff]
      %v1187 = vld [vmem:[%s223 + $0x1dd8] sm:$0xff]
      %v1188 = vld [vmem:[%s223 + $0x1de0] sm:$0xff]
      %v1189 = vld [vmem:[%s223 + $0x1de8] sm:$0xff]
      %v1190 = vld [vmem:[%s223 + $0x1df0] sm:$0xff]
      %v1191 = vld [vmem:[%s223 + $0x1df8] sm:$0xff]
      %v1192 = vld [vmem:[%s223 + $0x1e00] sm:$0xff]
      %v1193 = vld [vmem:[%s223 + $0x1e08] sm:$0xff]
      %v1194 = vld [vmem:[%s223 + $0x1e10] sm:$0xff]
      %v1195 = vld [vmem:[%s223 + $0x1e18] sm:$0xff]
      %v1196 = vld [vmem:[%s223 + $0x1e20] sm:$0xff]
      %v1197 = vld [vmem:[%s223 + $0x1e28] sm:$0xff]
      %v1198 = vld [vmem:[%s223 + $0x1e30] sm:$0xff]
      %v1199 = vld [vmem:[%s223 + $0x1e38] sm:$0xff]
      %v1200 = vld [vmem:[%s223 + $0x1e40] sm:$0xff]
      %v1201 = vld [vmem:[%s223 + $0x1e48] sm:$0xff]
      %v1202 = vld [vmem:[%s223 + $0x1e50] sm:$0xff]
      %v1203 = vld [vmem:[%s223 + $0x1e58] sm:$0xff]
      %v1204 = vld [vmem:[%s223 + $0x1e60] sm:$0xff]
      %v1205 = vld [vmem:[%s223 + $0x1e68] sm:$0xff]
      %v1206 = vld [vmem:[%s223 + $0x1e70] sm:$0xff]
      %v1207 = vld [vmem:[%s223 + $0x1e78] sm:$0xff]
      %v1208 = vld [vmem:[%s223 + $0x1e80] sm:$0xff]
      %v1209 = vld [vmem:[%s223 + $0x1e88] sm:$0xff]
      %v1210 = vld [vmem:[%s223 + $0x1e90] sm:$0xff]
      %v1211 = vld [vmem:[%s223 + $0x1e98] sm:$0xff]
      %v1212 = vld [vmem:[%s223 + $0x1ea0] sm:$0xff]
      %v1213 = vld [vmem:[%s223 + $0x1ea8] sm:$0xff]
      %v1214 = vld [vmem:[%s223 + $0x1eb0] sm:$0xff]
      %v1215 = vld [vmem:[%s223 + $0x1eb8] sm:$0xff]
      %v1216 = vld [vmem:[%s223 + $0x1ec0] sm:$0xff]
      %v1217 = vld [vmem:[%s223 + $0x1ec8] sm:$0xff]
      %v1218 = vld [vmem:[%s223 + $0x1ed0] sm:$0xff]
      %v1219 = vld [vmem:[%s223 + $0x1ed8] sm:$0xff]
      %v1220 = vld [vmem:[%s223 + $0x1ee0] sm:$0xff]
      %v1221 = vld [vmem:[%s223 + $0x1ee8] sm:$0xff]
      %v1222 = vld [vmem:[%s223 + $0x1ef0] sm:$0xff]
      %v1223 = vld [vmem:[%s223 + $0x1ef8] sm:$0xff]
      %v1224 = vld [vmem:[%s223 + $0x1f00] sm:$0xff]
      %v1225 = vld [vmem:[%s223 + $0x1f08] sm:$0xff]
      %v1226 = vld [vmem:[%s223 + $0x1f10] sm:$0xff]
      %v1227 = vld [vmem:[%s223 + $0x1f18] sm:$0xff]
      %v1228 = vld [vmem:[%s223 + $0x1f20] sm:$0xff]
      %v1229 = vld [vmem:[%s223 + $0x1f28] sm:$0xff]
      %v1230 = vld [vmem:[%s223 + $0x1f30] sm:$0xff]
      %v1231 = vld [vmem:[%s223 + $0x1f38] sm:$0xff]
      %v1232 = vld [vmem:[%s223 + $0x1f40] sm:$0xff]
      %v1233 = vld [vmem:[%s223 + $0x1f48] sm:$0xff]
      %v1234 = vld [vmem:[%s223 + $0x1f50] sm:$0xff]
      %v1235 = vld [vmem:[%s223 + $0x1f58] sm:$0xff]
      %v1236 = vld [vmem:[%s223 + $0x1f60] sm:$0xff]
      %v1237 = vld [vmem:[%s223 + $0x1f68] sm:$0xff]
      %v1238 = vld [vmem:[%s223 + $0x1f70] sm:$0xff]
      %v1239 = vld [vmem:[%s223 + $0x1f78] sm:$0xff]
      %v1240 = vld [vmem:[%s223 + $0x1f80] sm:$0xff]
      %v1241 = vld [vmem:[%s223 + $0x1f88] sm:$0xff]
      %v1242 = vld [vmem:[%s223 + $0x1f90] sm:$0xff]
      %v1243 = vld [vmem:[%s223 + $0x1f98] sm:$0xff]
      %v1244 = vld [vmem:[%s223 + $0x1fa0] sm:$0xff]
      %v1245 = vld [vmem:[%s223 + $0x1fa8] sm:$0xff]
      %v1246 = vld [vmem:[%s223 + $0x1fb0] sm:$0xff]
      %v1247 = vld [vmem:[%s223 + $0x1fb8] sm:$0xff]
      %v1248 = vld [vmem:[%s223 + $0x1fc0] sm:$0xff]
      %v1249 = vld [vmem:[%s223 + $0x1fc8] sm:$0xff]
      %v1250 = vld [vmem:[%s223 + $0x1fd0] sm:$0xff]
      %v1251 = vld [vmem:[%s223 + $0x1fd8] sm:$0xff]
      %v1252 = vld [vmem:[%s223 + $0x1fe0] sm:$0xff]
      %v1253 = vld [vmem:[%s223 + $0x1fe8] sm:$0xff]
      %v1254 = vld [vmem:[%s223 + $0x1ff0] sm:$0xff]
      %v1255 = vld [vmem:[%s223 + $0x1ff8] sm:$0xff]
      %v1256 = vld [vmem:[%s223 + $0x2000] sm:$0xff]
      %v1257 = vld [vmem:[%s223 + $0x2008] sm:$0xff]
      %v1258 = vld [vmem:[%s223 + $0x2010] sm:$0xff]
      %v1259 = vld [vmem:[%s223 + $0x2018] sm:$0xff]
      %v1260 = vld [vmem:[%s223 + $0x2020] sm:$0xff]
      %v1261 = vld [vmem:[%s223 + $0x2028] sm:$0xff]
      %v1262 = vld [vmem:[%s223 + $0x2030] sm:$0xff]
      %v1263 = vld [vmem:[%s223 + $0x2038] sm:$0xff]
      %v1264 = vld [vmem:[%s223 + $0x2040] sm:$0xff]
      %v1265 = vld [vmem:[%s223 + $0x2048] sm:$0xff]
      %v1266 = vld [vmem:[%s223 + $0x2050] sm:$0xff]
      %v1267 = vld [vmem:[%s223 + $0x2058] sm:$0xff]
      %v1268 = vld [vmem:[%s223 + $0x2060] sm:$0xff]
      %v1269 = vld [vmem:[%s223 + $0x2068] sm:$0xff]
      %v1270 = vld [vmem:[%s223 + $0x2070] sm:$0xff]
      %v1271 = vld [vmem:[%s223 + $0x2078] sm:$0xff]
      %v1272 = vld [vmem:[%s223 + $0x2080] sm:$0xff]
      %v1273 = vld [vmem:[%s223 + $0x2088] sm:$0xff]
      %v1274 = vld [vmem:[%s223 + $0x2090] sm:$0xff]
      %v1275 = vld [vmem:[%s223 + $0x2098] sm:$0xff]
      %v1276 = vld [vmem:[%s223 + $0x20a0] sm:$0xff]
      %v1277 = vld [vmem:[%s223 + $0x20a8] sm:$0xff]
      %v1278 = vld [vmem:[%s223 + $0x20b0] sm:$0xff]
      %v1279 = vld [vmem:[%s223 + $0x20b8] sm:$0xff]
      %v1280 = vld [vmem:[%s223 + $0x20c0] sm:$0xff]
      %v1281 = vld [vmem:[%s223 + $0x20c8] sm:$0xff]
      %v1282 = vld [vmem:[%s223 + $0x20d0] sm:$0xff]
      %v1283 = vld [vmem:[%s223 + $0x20d8] sm:$0xff]
      %v1284 = vld [vmem:[%s223 + $0x20e0] sm:$0xff]
      %v1285 = vld [vmem:[%s223 + $0x20e8] sm:$0xff]
      %v1286 = vld [vmem:[%s223 + $0x20f0] sm:$0xff]
      %v1287 = vld [vmem:[%s223 + $0x20f8] sm:$0xff]
      %v1288 = vld [vmem:[%s223 + $0x2100] sm:$0xff]
      %v1289 = vld [vmem:[%s223 + $0x2108] sm:$0xff]
      %v1290 = vld [vmem:[%s223 + $0x2110] sm:$0xff]
      %v1291 = vld [vmem:[%s223 + $0x2118] sm:$0xff]
      %v1292 = vld [vmem:[%s223 + $0x2120] sm:$0xff]
      %v1293 = vld [vmem:[%s223 + $0x2128] sm:$0xff]
      %v1294 = vld [vmem:[%s223 + $0x2130] sm:$0xff]
      %v1295 = vld [vmem:[%s223 + $0x2138] sm:$0xff]
      %v1296 = vld [vmem:[%s223 + $0x2140] sm:$0xff]
      %v1297 = vld [vmem:[%s223 + $0x2148] sm:$0xff]
      %v1298 = vld [vmem:[%s223 + $0x2150] sm:$0xff]
      %v1299 = vld [vmem:[%s223 + $0x2158] sm:$0xff]
      %v1300 = vld [vmem:[%s223 + $0x2160] sm:$0xff]
      %v1301 = vld [vmem:[%s223 + $0x2168] sm:$0xff]
      %v1302 = vld [vmem:[%s223 + $0x2170] sm:$0xff]
      %v1303 = vld [vmem:[%s223 + $0x2178] sm:$0xff]
      %v1304 = vld [vmem:[%s223 + $0x2180] sm:$0xff]
      %v1305 = vld [vmem:[%s223 + $0x2188] sm:$0xff]
      %v1306 = vld [vmem:[%s223 + $0x2190] sm:$0xff]
      %v1307 = vld [vmem:[%s223 + $0x2198] sm:$0xff]
      %v1308 = vld [vmem:[%s223 + $0x21a0] sm:$0xff]
      %v1309 = vld [vmem:[%s223 + $0x21a8] sm:$0xff]
      %v1310 = vld [vmem:[%s223 + $0x21b0] sm:$0xff]
      %v1311 = vld [vmem:[%s223 + $0x21b8] sm:$0xff]
      %v1312 = vld [vmem:[%s223 + $0x21c0] sm:$0xff]
      %v1313 = vld [vmem:[%s223 + $0x21c8] sm:$0xff]
      %v1314 = vld [vmem:[%s223 + $0x21d0] sm:$0xff]
      %v1315 = vld [vmem:[%s223 + $0x21d8] sm:$0xff]
      %v1316 = vld [vmem:[%s223 + $0x21e0] sm:$0xff]
      %v1317 = vld [vmem:[%s223 + $0x21e8] sm:$0xff]
      %v1318 = vld [vmem:[%s223 + $0x21f0] sm:$0xff]
      %v1319 = vld [vmem:[%s223 + $0x21f8] sm:$0xff]
      %v1320 = vld [vmem:[%s223 + $0x2200] sm:$0xff]
      %v1321 = vld [vmem:[%s223 + $0x2208] sm:$0xff]
      %v1322 = vld [vmem:[%s223 + $0x2210] sm:$0xff]
      %v1323 = vld [vmem:[%s223 + $0x2218] sm:$0xff]
      %v1324 = vld [vmem:[%s223 + $0x2220] sm:$0xff]
      %v1325 = vld [vmem:[%s223 + $0x2228] sm:$0xff]
      %v1326 = vld [vmem:[%s223 + $0x2230] sm:$0xff]
      %v1327 = vld [vmem:[%s223 + $0x2238] sm:$0xff]
      %v1328 = vld [vmem:[%s223 + $0x2240] sm:$0xff]
      %v1329 = vld [vmem:[%s223 + $0x2248] sm:$0xff]
      %v1330 = vld [vmem:[%s223 + $0x2250] sm:$0xff]
      %v1331 = vld [vmem:[%s223 + $0x2258] sm:$0xff]
      %v1332 = vld [vmem:[%s223 + $0x2260] sm:$0xff]
      %v1333 = vld [vmem:[%s223 + $0x2268] sm:$0xff]
      %v1334 = vld [vmem:[%s223 + $0x2270] sm:$0xff]
      %v1335 = vld [vmem:[%s223 + $0x2278] sm:$0xff]
      %v1336 = vld [vmem:[%s223 + $0x2280] sm:$0xff]
      %v1337 = vld [vmem:[%s223 + $0x2288] sm:$0xff]
      %v1338 = vld [vmem:[%s223 + $0x2290] sm:$0xff]
      %v1339 = vld [vmem:[%s223 + $0x2298] sm:$0xff]
      %v1340 = vld [vmem:[%s223 + $0x22a0] sm:$0xff]
      %v1341 = vld [vmem:[%s223 + $0x22a8] sm:$0xff]
      %v1342 = vld [vmem:[%s223 + $0x22b0] sm:$0xff]
      %v1343 = vld [vmem:[%s223 + $0x22b8] sm:$0xff]
      %v1344 = vld [vmem:[%s223 + $0x22c0] sm:$0xff]
      %v1345 = vld [vmem:[%s223 + $0x22c8] sm:$0xff]
      %v1346 = vld [vmem:[%s223 + $0x22d0] sm:$0xff]
      %v1347 = vld [vmem:[%s223 + $0x22d8] sm:$0xff]
      %v1348 = vld [vmem:[%s223 + $0x22e0] sm:$0xff]
      %v1349 = vld [vmem:[%s223 + $0x22e8] sm:$0xff]
      %v1350 = vld [vmem:[%s223 + $0x22f0] sm:$0xff]
      %v1351 = vld [vmem:[%s223 + $0x22f8] sm:$0xff]
      %v1352 = vld [vmem:[%s223 + $0x2300] sm:$0xff]
      %v1353 = vld [vmem:[%s223 + $0x2308] sm:$0xff]
      %v1354 = vld [vmem:[%s223 + $0x2310] sm:$0xff]
      %v1355 = vld [vmem:[%s223 + $0x2318] sm:$0xff]
      %v1356 = vld [vmem:[%s223 + $0x2320] sm:$0xff]
      %v1357 = vld [vmem:[%s223 + $0x2328] sm:$0xff]
      %v1358 = vld [vmem:[%s223 + $0x2330] sm:$0xff]
      %v1359 = vld [vmem:[%s223 + $0x2338] sm:$0xff]
      %v1360 = vld [vmem:[%s223 + $0x2340] sm:$0xff]
      %v1361 = vld [vmem:[%s223 + $0x2348] sm:$0xff]
      %v1362 = vld [vmem:[%s223 + $0x2350] sm:$0xff]
      %v1363 = vld [vmem:[%s223 + $0x2358] sm:$0xff]
      %v1364 = vld [vmem:[%s223 + $0x2360] sm:$0xff]
      %v1365 = vld [vmem:[%s223 + $0x2368] sm:$0xff]
      %v1366 = vld [vmem:[%s223 + $0x2370] sm:$0xff]
      %v1367 = vld [vmem:[%s223 + $0x2378] sm:$0xff]
      %v1368 = vld [vmem:[%s223 + $0x2380] sm:$0xff]
      %v1369 = vld [vmem:[%s223 + $0x2388] sm:$0xff]
      %v1370 = vld [vmem:[%s223 + $0x2390] sm:$0xff]
      %v1371 = vld [vmem:[%s223 + $0x2398] sm:$0xff]
      %v1372 = vld [vmem:[%s223 + $0x23a0] sm:$0xff]
      %v1373 = vld [vmem:[%s223 + $0x23a8] sm:$0xff]
      %v1374 = vld [vmem:[%s223 + $0x23b0] sm:$0xff]
      %v1375 = vld [vmem:[%s223 + $0x23b8] sm:$0xff]
      %v1376 = vld [vmem:[%s223 + $0x23c0] sm:$0xff]
      %v1377 = vld [vmem:[%s223 + $0x23c8] sm:$0xff]
      %v1378 = vld [vmem:[%s223 + $0x23d0] sm:$0xff]
      %v1379 = vld [vmem:[%s223 + $0x23d8] sm:$0xff]
      %v1380 = vld [vmem:[%s223 + $0x23e0] sm:$0xff]
      %v1381 = vld [vmem:[%s223 + $0x23e8] sm:$0xff]
      %v1382 = vld [vmem:[%s223 + $0x23f0] sm:$0xff]
      %v1383 = vld [vmem:[%s223 + $0x23f8] sm:$0xff]
      %v1384 = vld [vmem:[%s223 + $0x2400] sm:$0xff]
      %v1385 = vld [vmem:[%s223 + $0x2408] sm:$0xff]
      %v1386 = vld [vmem:[%s223 + $0x2410] sm:$0xff]
      %v1387 = vld [vmem:[%s223 + $0x2418] sm:$0xff]
      %v1388 = vld [vmem:[%s223 + $0x2420] sm:$0xff]
      %v1389 = vld [vmem:[%s223 + $0x2428] sm:$0xff]
      %v1390 = vld [vmem:[%s223 + $0x2430] sm:$0xff]
      %v1391 = vld [vmem:[%s223 + $0x2438] sm:$0xff]
      %v1392 = vld [vmem:[%s223 + $0x2440] sm:$0xff]
      %v1393 = vld [vmem:[%s223 + $0x2448] sm:$0xff]
      %v1394 = vld [vmem:[%s223 + $0x2450] sm:$0xff]
      %v1395 = vld [vmem:[%s223 + $0x2458] sm:$0xff]
      %v1396 = vld [vmem:[%s223 + $0x2460] sm:$0xff]
      %v1397 = vld [vmem:[%s223 + $0x2468] sm:$0xff]
      %v1398 = vld [vmem:[%s223 + $0x2470] sm:$0xff]
      %v1399 = vld [vmem:[%s223 + $0x2478] sm:$0xff]
      %v1400 = vld [vmem:[%s223 + $0x2480] sm:$0xff]
      %v1401 = vld [vmem:[%s223 + $0x2488] sm:$0xff]
      %v1402 = vld [vmem:[%s223 + $0x2490] sm:$0xff]
      %v1403 = vld [vmem:[%s223 + $0x2498] sm:$0xff]
      %v1404 = vld [vmem:[%s223 + $0x24a0] sm:$0xff]
      %v1405 = vld [vmem:[%s223 + $0x24a8] sm:$0xff]
      %v1406 = vld [vmem:[%s223 + $0x24b0] sm:$0xff]
      %v1407 = vld [vmem:[%s223 + $0x24b8] sm:$0xff]
      %v1408 = vld [vmem:[%s223 + $0x24c0] sm:$0xff]
      %v1409 = vld [vmem:[%s223 + $0x24c8] sm:$0xff]
      %v1410 = vld [vmem:[%s223 + $0x24d0] sm:$0xff]
      %v1411 = vld [vmem:[%s223 + $0x24d8] sm:$0xff]
      %v1412 = vld [vmem:[%s223 + $0x24e0] sm:$0xff]
      %v1413 = vld [vmem:[%s223 + $0x24e8] sm:$0xff]
      %v1414 = vld [vmem:[%s223 + $0x24f0] sm:$0xff]
      %v1415 = vld [vmem:[%s223 + $0x24f8] sm:$0xff]
      %v1416 = vld [vmem:[%s223 + $0x2500] sm:$0xff]
      %v1417 = vld [vmem:[%s223 + $0x2508] sm:$0xff]
      %v1418 = vld [vmem:[%s223 + $0x2510] sm:$0xff]
      %v1419 = vld [vmem:[%s223 + $0x2518] sm:$0xff]
      %v1420 = vld [vmem:[%s223 + $0x2520] sm:$0xff]
      %v1421 = vld [vmem:[%s223 + $0x2528] sm:$0xff]
      %v1422 = vld [vmem:[%s223 + $0x2530] sm:$0xff]
      %v1423 = vld [vmem:[%s223 + $0x2538] sm:$0xff]
      %v1424 = vld [vmem:[%s223 + $0x2540] sm:$0xff]
      %v1425 = vld [vmem:[%s223 + $0x2548] sm:$0xff]
      %v1426 = vld [vmem:[%s223 + $0x2550] sm:$0xff]
      %v1427 = vld [vmem:[%s223 + $0x2558] sm:$0xff]
      %v1428 = vld [vmem:[%s223 + $0x2560] sm:$0xff]
      %v1429 = vld [vmem:[%s223 + $0x2568] sm:$0xff]
      %v1430 = vld [vmem:[%s223 + $0x2570] sm:$0xff]
      %v1431 = vld [vmem:[%s223 + $0x2578] sm:$0xff]
      %v1432 = vld [vmem:[%s223 + $0x2580] sm:$0xff]
      %v1433 = vld [vmem:[%s223 + $0x2588] sm:$0xff]
      %v1434 = vld [vmem:[%s223 + $0x2590] sm:$0xff]
      %v1435 = vld [vmem:[%s223 + $0x2598] sm:$0xff]
      %v1436 = vld [vmem:[%s223 + $0x25a0] sm:$0xff]
      %v1437 = vld [vmem:[%s223 + $0x25a8] sm:$0xff]
      %v1438 = vld [vmem:[%s223 + $0x25b0] sm:$0xff]
      %v1439 = vld [vmem:[%s223 + $0x25b8] sm:$0xff]
      %v1440 = vld [vmem:[%s223 + $0x25c0] sm:$0xff]
      %v1441 = vld [vmem:[%s223 + $0x25c8] sm:$0xff]
      %v1442 = vld [vmem:[%s223 + $0x25d0] sm:$0xff]
      %v1443 = vld [vmem:[%s223 + $0x25d8] sm:$0xff]
      %v1444 = vld [vmem:[%s223 + $0x25e0] sm:$0xff]
      %v1445 = vld [vmem:[%s223 + $0x25e8] sm:$0xff]
      %v1446 = vld [vmem:[%s223 + $0x25f0] sm:$0xff]
      %v1447 = vld [vmem:[%s223 + $0x25f8] sm:$0xff]
      %v1448 = vld [vmem:[%s223 + $0x2600] sm:$0xff]
      %v1449 = vld [vmem:[%s223 + $0x2608] sm:$0xff]
      %v1450 = vld [vmem:[%s223 + $0x2610] sm:$0xff]
      %v1451 = vld [vmem:[%s223 + $0x2618] sm:$0xff]
      %v1452 = vld [vmem:[%s223 + $0x2620] sm:$0xff]
      %v1453 = vld [vmem:[%s223 + $0x2628] sm:$0xff]
      %v1454 = vld [vmem:[%s223 + $0x2630] sm:$0xff]
      %v1455 = vld [vmem:[%s223 + $0x2638] sm:$0xff]
      %v1456 = vld [vmem:[%s223 + $0x2640] sm:$0xff]
      %v1457 = vld [vmem:[%s223 + $0x2648] sm:$0xff]
      %v1458 = vld [vmem:[%s223 + $0x2650] sm:$0xff]
      %v1459 = vld [vmem:[%s223 + $0x2658] sm:$0xff]
      %v1460 = vld [vmem:[%s223 + $0x2660] sm:$0xff]
      %v1461 = vld [vmem:[%s223 + $0x2668] sm:$0xff]
      %v1462 = vld [vmem:[%s223 + $0x2670] sm:$0xff]
      %v1463 = vld [vmem:[%s223 + $0x2678] sm:$0xff]
      %v1464 = vld [vmem:[%s223 + $0x2680] sm:$0xff]
      %v1465 = vld [vmem:[%s223 + $0x2688] sm:$0xff]
      %v1466 = vld [vmem:[%s223 + $0x2690] sm:$0xff]
      %v1467 = vld [vmem:[%s223 + $0x2698] sm:$0xff]
      %v1468 = vld [vmem:[%s223 + $0x26a0] sm:$0xff]
      %v1469 = vld [vmem:[%s223 + $0x26a8] sm:$0xff]
      %v1470 = vld [vmem:[%s223 + $0x26b0] sm:$0xff]
      %v1471 = vld [vmem:[%s223 + $0x26b8] sm:$0xff]
      %v1472 = vld [vmem:[%s223 + $0x26c0] sm:$0xff]
      %v1473 = vld [vmem:[%s223 + $0x26c8] sm:$0xff]
      %v1474 = vld [vmem:[%s223 + $0x26d0] sm:$0xff]
      %v1475 = vld [vmem:[%s223 + $0x26d8] sm:$0xff]
      %v1476 = vld [vmem:[%s223 + $0x26e0] sm:$0xff]
      %v1477 = vld [vmem:[%s223 + $0x26e8] sm:$0xff]
      %v1478 = vld [vmem:[%s223 + $0x26f0] sm:$0xff]
      %v1479 = vld [vmem:[%s223 + $0x26f8] sm:$0xff]
      %v1480 = vld [vmem:[%s223 + $0x2700] sm:$0xff]
      %v1481 = vld [vmem:[%s223 + $0x2708] sm:$0xff]
      %v1482 = vld [vmem:[%s223 + $0x2710] sm:$0xff]
      %v1483 = vld [vmem:[%s223 + $0x2718] sm:$0xff]
      %v1484 = vld [vmem:[%s223 + $0x2720] sm:$0xff]
      %v1485 = vld [vmem:[%s223 + $0x2728] sm:$0xff]
      %v1486 = vld [vmem:[%s223 + $0x2730] sm:$0xff]
      %v1487 = vld [vmem:[%s223 + $0x2738] sm:$0xff]
      %v1488 = vld [vmem:[%s223 + $0x2740] sm:$0xff]
      %v1489 = vld [vmem:[%s223 + $0x2748] sm:$0xff]
      %v1490 = vld [vmem:[%s223 + $0x2750] sm:$0xff]
      %v1491 = vld [vmem:[%s223 + $0x2758] sm:$0xff]
      %v1492 = vld [vmem:[%s223 + $0x2760] sm:$0xff]
      %v1493 = vld [vmem:[%s223 + $0x2768] sm:$0xff]
      %v1494 = vld [vmem:[%s223 + $0x2770] sm:$0xff]
      %v1495 = vld [vmem:[%s223 + $0x2778] sm:$0xff]
      %v1496 = vld [vmem:[%s223 + $0x2780] sm:$0xff]
      %v1497 = vld [vmem:[%s223 + $0x2788] sm:$0xff]
      %v1498 = vld [vmem:[%s223 + $0x2790] sm:$0xff]
      %v1499 = vld [vmem:[%s223 + $0x2798] sm:$0xff]
      %v1500 = vld [vmem:[%s223 + $0x27a0] sm:$0xff]
      %v1501 = vld [vmem:[%s223 + $0x27a8] sm:$0xff]
      %v1502 = vld [vmem:[%s223 + $0x27b0] sm:$0xff]
      %v1503 = vld [vmem:[%s223 + $0x27b8] sm:$0xff]
      %v1504 = vld [vmem:[%s223 + $0x27c0] sm:$0xff]
      %v1505 = vld [vmem:[%s223 + $0x27c8] sm:$0xff]
      %v1506 = vld [vmem:[%s223 + $0x27d0] sm:$0xff]
      %v1507 = vld [vmem:[%s223 + $0x27d8] sm:$0xff]
      %v1508 = vld [vmem:[%s223 + $0x27e0] sm:$0xff]
      %v1509 = vld [vmem:[%s223 + $0x27e8] sm:$0xff]
      %v1510 = vld [vmem:[%s223 + $0x27f0] sm:$0xff]
      %v1511 = vld [vmem:[%s223 + $0x27f8] sm:$0xff]
      %v1512 = vpack.c.bf16 %v272, %v232
      %v1513 = vpack.c.bf16 %v273, %v233
      %v1514 = vpack.c.bf16 %v274, %v234
      %v1515 = vpack.c.bf16 %v275, %v235
      %v1516 = vpack.c.bf16 %v276, %v236
      %v1517 = vpack.c.bf16 %v277, %v237
      %v1518 = vpack.c.bf16 %v278, %v238
      %v1519 = vpack.c.bf16 %v279, %v239
      %v1520 = vpack.c.bf16 %v280, %v240
      %v1521 = vpack.c.bf16 %v281, %v241
      %v1522 = vpack.c.bf16 %v282, %v242
      %v1523 = vpack.c.bf16 %v283, %v243
      %v1524 = vpack.c.bf16 %v284, %v244
      %v1525 = vpack.c.bf16 %v285, %v245
      %v1526 = vpack.c.bf16 %v286, %v246
      %v1527 = vpack.c.bf16 %v287, %v247
      %v1528 = vpack.c.bf16 %v288, %v248
      %v1529 = vpack.c.bf16 %v289, %v249
      %v1530 = vpack.c.bf16 %v290, %v250
      %v1531 = vpack.c.bf16 %v291, %v251
      %v1532 = vpack.c.bf16 %v292, %v252
      %v1533 = vpack.c.bf16 %v293, %v253
      %v1534 = vpack.c.bf16 %v294, %v254
      %v1535 = vpack.c.bf16 %v295, %v255
      %v1536 = vpack.c.bf16 %v296, %v256
      %v1537 = vpack.c.bf16 %v297, %v257
      %v1538 = vpack.c.bf16 %v298, %v258
      %v1539 = vpack.c.bf16 %v299, %v259
      %v1540 = vpack.c.bf16 %v300, %v260
      %v1541 = vpack.c.bf16 %v301, %v261
      %v1542 = vpack.c.bf16 %v302, %v262
      %v1543 = vpack.c.bf16 %v303, %v263
      %v1544 = vpack.c.bf16 %v304, %v264
      %v1545 = vpack.c.bf16 %v305, %v265
      %v1546 = vpack.c.bf16 %v306, %v266
      %v1547 = vpack.c.bf16 %v307, %v267
      %v1548 = vpack.c.bf16 %v308, %v268
      %v1549 = vpack.c.bf16 %v309, %v269
      %v1550 = vpack.c.bf16 %v310, %v270
      %v1551 = vpack.c.bf16 %v311, %v271
      %v1552 = vpack.c.bf16 %v352, %v312
      %v1553 = vpack.c.bf16 %v353, %v313
      %v1554 = vpack.c.bf16 %v354, %v314
      %v1555 = vpack.c.bf16 %v355, %v315
      %v1556 = vpack.c.bf16 %v356, %v316
      %v1557 = vpack.c.bf16 %v357, %v317
      %v1558 = vpack.c.bf16 %v358, %v318
      %v1559 = vpack.c.bf16 %v359, %v319
      %v1560 = vpack.c.bf16 %v360, %v320
      %v1561 = vpack.c.bf16 %v361, %v321
      %v1562 = vpack.c.bf16 %v362, %v322
      %v1563 = vpack.c.bf16 %v363, %v323
      %v1564 = vpack.c.bf16 %v364, %v324
      %v1565 = vpack.c.bf16 %v365, %v325
      %v1566 = vpack.c.bf16 %v366, %v326
      %v1567 = vpack.c.bf16 %v367, %v327
      %v1568 = vpack.c.bf16 %v368, %v328
      %v1569 = vpack.c.bf16 %v369, %v329
      %v1570 = vpack.c.bf16 %v370, %v330
      %v1571 = vpack.c.bf16 %v371, %v331
      %v1572 = vpack.c.bf16 %v372, %v332
      %v1573 = vpack.c.bf16 %v373, %v333
      %v1574 = vpack.c.bf16 %v374, %v334
      %v1575 = vpack.c.bf16 %v375, %v335
      %v1576 = vpack.c.bf16 %v376, %v336
      %v1577 = vpack.c.bf16 %v377, %v337
      %v1578 = vpack.c.bf16 %v378, %v338
      %v1579 = vpack.c.bf16 %v379, %v339
      %v1580 = vpack.c.bf16 %v380, %v340
      %v1581 = vpack.c.bf16 %v381, %v341
      %v1582 = vpack.c.bf16 %v382, %v342
      %v1583 = vpack.c.bf16 %v383, %v343
      %v1584 = vpack.c.bf16 %v384, %v344
      %v1585 = vpack.c.bf16 %v385, %v345
      %v1586 = vpack.c.bf16 %v386, %v346
      %v1587 = vpack.c.bf16 %v387, %v347
      %v1588 = vpack.c.bf16 %v388, %v348
      %v1589 = vpack.c.bf16 %v389, %v349
      %v1590 = vpack.c.bf16 %v390, %v350
      %v1591 = vpack.c.bf16 %v391, %v351
      %v1592 = vpack.c.bf16 %v432, %v392
      %v1593 = vpack.c.bf16 %v433, %v393
      %v1594 = vpack.c.bf16 %v434, %v394
      %v1595 = vpack.c.bf16 %v435, %v395
      %v1596 = vpack.c.bf16 %v436, %v396
      %v1597 = vpack.c.bf16 %v437, %v397
      %v1598 = vpack.c.bf16 %v438, %v398
      %v1599 = vpack.c.bf16 %v439, %v399
      %v1600 = vpack.c.bf16 %v440, %v400
      %v1601 = vpack.c.bf16 %v441, %v401
      %v1602 = vpack.c.bf16 %v442, %v402
      %v1603 = vpack.c.bf16 %v443, %v403
      %v1604 = vpack.c.bf16 %v444, %v404
      %v1605 = vpack.c.bf16 %v445, %v405
      %v1606 = vpack.c.bf16 %v446, %v406
      %v1607 = vpack.c.bf16 %v447, %v407
      %v1608 = vpack.c.bf16 %v448, %v408
      %v1609 = vpack.c.bf16 %v449, %v409
      %v1610 = vpack.c.bf16 %v450, %v410
      %v1611 = vpack.c.bf16 %v451, %v411
      %v1612 = vpack.c.bf16 %v452, %v412
      %v1613 = vpack.c.bf16 %v453, %v413
      %v1614 = vpack.c.bf16 %v454, %v414
      %v1615 = vpack.c.bf16 %v455, %v415
      %v1616 = vpack.c.bf16 %v456, %v416
      %v1617 = vpack.c.bf16 %v457, %v417
      %v1618 = vpack.c.bf16 %v458, %v418
      %v1619 = vpack.c.bf16 %v459, %v419
      %v1620 = vpack.c.bf16 %v460, %v420
      %v1621 = vpack.c.bf16 %v461, %v421
      %v1622 = vpack.c.bf16 %v462, %v422
      %v1623 = vpack.c.bf16 %v463, %v423
      %v1624 = vpack.c.bf16 %v464, %v424
      %v1625 = vpack.c.bf16 %v465, %v425
      %v1626 = vpack.c.bf16 %v466, %v426
      %v1627 = vpack.c.bf16 %v467, %v427
      %v1628 = vpack.c.bf16 %v468, %v428
      %v1629 = vpack.c.bf16 %v469, %v429
      %v1630 = vpack.c.bf16 %v470, %v430
      %v1631 = vpack.c.bf16 %v471, %v431
      %v1632 = vpack.c.bf16 %v512, %v472
      %v1633 = vpack.c.bf16 %v513, %v473
      %v1634 = vpack.c.bf16 %v514, %v474
      %v1635 = vpack.c.bf16 %v515, %v475
      %v1636 = vpack.c.bf16 %v516, %v476
      %v1637 = vpack.c.bf16 %v517, %v477
      %v1638 = vpack.c.bf16 %v518, %v478
      %v1639 = vpack.c.bf16 %v519, %v479
      %v1640 = vpack.c.bf16 %v520, %v480
      %v1641 = vpack.c.bf16 %v521, %v481
      %v1642 = vpack.c.bf16 %v522, %v482
      %v1643 = vpack.c.bf16 %v523, %v483
      %v1644 = vpack.c.bf16 %v524, %v484
      %v1645 = vpack.c.bf16 %v525, %v485
      %v1646 = vpack.c.bf16 %v526, %v486
      %v1647 = vpack.c.bf16 %v527, %v487
      %v1648 = vpack.c.bf16 %v528, %v488
      %v1649 = vpack.c.bf16 %v529, %v489
      %v1650 = vpack.c.bf16 %v530, %v490
      %v1651 = vpack.c.bf16 %v531, %v491
      %v1652 = vpack.c.bf16 %v532, %v492
      %v1653 = vpack.c.bf16 %v533, %v493
      %v1654 = vpack.c.bf16 %v534, %v494
      %v1655 = vpack.c.bf16 %v535, %v495
      %v1656 = vpack.c.bf16 %v536, %v496
      %v1657 = vpack.c.bf16 %v537, %v497
      %v1658 = vpack.c.bf16 %v538, %v498
      %v1659 = vpack.c.bf16 %v539, %v499
      %v1660 = vpack.c.bf16 %v540, %v500
      %v1661 = vpack.c.bf16 %v541, %v501
      %v1662 = vpack.c.bf16 %v542, %v502
      %v1663 = vpack.c.bf16 %v543, %v503
      %v1664 = vpack.c.bf16 %v544, %v504
      %v1665 = vpack.c.bf16 %v545, %v505
      %v1666 = vpack.c.bf16 %v546, %v506
      %v1667 = vpack.c.bf16 %v547, %v507
      %v1668 = vpack.c.bf16 %v548, %v508
      %v1669 = vpack.c.bf16 %v549, %v509
      %v1670 = vpack.c.bf16 %v550, %v510
      %v1671 = vpack.c.bf16 %v551, %v511
      %v1672 = vpack.c.bf16 %v592, %v552
      %v1673 = vpack.c.bf16 %v593, %v553
      %v1674 = vpack.c.bf16 %v594, %v554
      %v1675 = vpack.c.bf16 %v595, %v555
      %v1676 = vpack.c.bf16 %v596, %v556
      %v1677 = vpack.c.bf16 %v597, %v557
      %v1678 = vpack.c.bf16 %v598, %v558
      %v1679 = vpack.c.bf16 %v599, %v559
      %v1680 = vpack.c.bf16 %v600, %v560
      %v1681 = vpack.c.bf16 %v601, %v561
      %v1682 = vpack.c.bf16 %v602, %v562
      %v1683 = vpack.c.bf16 %v603, %v563
      %v1684 = vpack.c.bf16 %v604, %v564
      %v1685 = vpack.c.bf16 %v605, %v565
      %v1686 = vpack.c.bf16 %v606, %v566
      %v1687 = vpack.c.bf16 %v607, %v567
      %v1688 = vpack.c.bf16 %v608, %v568
      %v1689 = vpack.c.bf16 %v609, %v569
      %v1690 = vpack.c.bf16 %v610, %v570
      %v1691 = vpack.c.bf16 %v611, %v571
      %v1692 = vpack.c.bf16 %v612, %v572
      %v1693 = vpack.c.bf16 %v613, %v573
      %v1694 = vpack.c.bf16 %v614, %v574
      %v1695 = vpack.c.bf16 %v615, %v575
      %v1696 = vpack.c.bf16 %v616, %v576
      %v1697 = vpack.c.bf16 %v617, %v577
      %v1698 = vpack.c.bf16 %v618, %v578
      %v1699 = vpack.c.bf16 %v619, %v579
      %v1700 = vpack.c.bf16 %v620, %v580
      %v1701 = vpack.c.bf16 %v621, %v581
      %v1702 = vpack.c.bf16 %v622, %v582
      %v1703 = vpack.c.bf16 %v623, %v583
      %v1704 = vpack.c.bf16 %v624, %v584
      %v1705 = vpack.c.bf16 %v625, %v585
      %v1706 = vpack.c.bf16 %v626, %v586
      %v1707 = vpack.c.bf16 %v627, %v587
      %v1708 = vpack.c.bf16 %v628, %v588
      %v1709 = vpack.c.bf16 %v629, %v589
      %v1710 = vpack.c.bf16 %v630, %v590
      %v1711 = vpack.c.bf16 %v631, %v591
      %v1712 = vpack.c.bf16 %v672, %v632
      %v1713 = vpack.c.bf16 %v673, %v633
      %v1714 = vpack.c.bf16 %v674, %v634
      %v1715 = vpack.c.bf16 %v675, %v635
      %v1716 = vpack.c.bf16 %v676, %v636
      %v1717 = vpack.c.bf16 %v677, %v637
      %v1718 = vpack.c.bf16 %v678, %v638
      %v1719 = vpack.c.bf16 %v679, %v639
      %v1720 = vpack.c.bf16 %v680, %v640
      %v1721 = vpack.c.bf16 %v681, %v641
      %v1722 = vpack.c.bf16 %v682, %v642
      %v1723 = vpack.c.bf16 %v683, %v643
      %v1724 = vpack.c.bf16 %v684, %v644
      %v1725 = vpack.c.bf16 %v685, %v645
      %v1726 = vpack.c.bf16 %v686, %v646
      %v1727 = vpack.c.bf16 %v687, %v647
      %v1728 = vpack.c.bf16 %v688, %v648
      %v1729 = vpack.c.bf16 %v689, %v649
      %v1730 = vpack.c.bf16 %v690, %v650
      %v1731 = vpack.c.bf16 %v691, %v651
      %v1732 = vpack.c.bf16 %v692, %v652
      %v1733 = vpack.c.bf16 %v693, %v653
      %v1734 = vpack.c.bf16 %v694, %v654
      %v1735 = vpack.c.bf16 %v695, %v655
      %v1736 = vpack.c.bf16 %v696, %v656
      %v1737 = vpack.c.bf16 %v697, %v657
      %v1738 = vpack.c.bf16 %v698, %v658
      %v1739 = vpack.c.bf16 %v699, %v659
      %v1740 = vpack.c.bf16 %v700, %v660
      %v1741 = vpack.c.bf16 %v701, %v661
      %v1742 = vpack.c.bf16 %v702, %v662
      %v1743 = vpack.c.bf16 %v703, %v663
      %v1744 = vpack.c.bf16 %v704, %v664
      %v1745 = vpack.c.bf16 %v705, %v665
      %v1746 = vpack.c.bf16 %v706, %v666
      %v1747 = vpack.c.bf16 %v707, %v667
      %v1748 = vpack.c.bf16 %v708, %v668
      %v1749 = vpack.c.bf16 %v709, %v669
      %v1750 = vpack.c.bf16 %v710, %v670
      %v1751 = vpack.c.bf16 %v711, %v671
      %v1752 = vpack.c.bf16 %v752, %v712
      %v1753 = vpack.c.bf16 %v753, %v713
      %v1754 = vpack.c.bf16 %v754, %v714
      %v1755 = vpack.c.bf16 %v755, %v715
      %v1756 = vpack.c.bf16 %v756, %v716
      %v1757 = vpack.c.bf16 %v757, %v717
      %v1758 = vpack.c.bf16 %v758, %v718
      %v1759 = vpack.c.bf16 %v759, %v719
      %v1760 = vpack.c.bf16 %v760, %v720
      %v1761 = vpack.c.bf16 %v761, %v721
      %v1762 = vpack.c.bf16 %v762, %v722
      %v1763 = vpack.c.bf16 %v763, %v723
      %v1764 = vpack.c.bf16 %v764, %v724
      %v1765 = vpack.c.bf16 %v765, %v725
      %v1766 = vpack.c.bf16 %v766, %v726
      %v1767 = vpack.c.bf16 %v767, %v727
      %v1768 = vpack.c.bf16 %v768, %v728
      %v1769 = vpack.c.bf16 %v769, %v729
      %v1770 = vpack.c.bf16 %v770, %v730
      %v1771 = vpack.c.bf16 %v771, %v731
      %v1772 = vpack.c.bf16 %v772, %v732
      %v1773 = vpack.c.bf16 %v773, %v733
      %v1774 = vpack.c.bf16 %v774, %v734
      %v1775 = vpack.c.bf16 %v775, %v735
      %v1776 = vpack.c.bf16 %v776, %v736
      %v1777 = vpack.c.bf16 %v777, %v737
      %v1778 = vpack.c.bf16 %v778, %v738
      %v1779 = vpack.c.bf16 %v779, %v739
      %v1780 = vpack.c.bf16 %v780, %v740
      %v1781 = vpack.c.bf16 %v781, %v741
      %v1782 = vpack.c.bf16 %v782, %v742
      %v1783 = vpack.c.bf16 %v783, %v743
      %v1784 = vpack.c.bf16 %v784, %v744
      %v1785 = vpack.c.bf16 %v785, %v745
      %v1786 = vpack.c.bf16 %v786, %v746
      %v1787 = vpack.c.bf16 %v787, %v747
      %v1788 = vpack.c.bf16 %v788, %v748
      %v1789 = vpack.c.bf16 %v789, %v749
      %v1790 = vpack.c.bf16 %v790, %v750
      %v1791 = vpack.c.bf16 %v791, %v751
      %v1792 = vpack.c.bf16 %v832, %v792
      %v1793 = vpack.c.bf16 %v833, %v793
      %v1794 = vpack.c.bf16 %v834, %v794
      %v1795 = vpack.c.bf16 %v835, %v795
      %v1796 = vpack.c.bf16 %v836, %v796
      %v1797 = vpack.c.bf16 %v837, %v797
      %v1798 = vpack.c.bf16 %v838, %v798
      %v1799 = vpack.c.bf16 %v839, %v799
      %v1800 = vpack.c.bf16 %v840, %v800
      %v1801 = vpack.c.bf16 %v841, %v801
      %v1802 = vpack.c.bf16 %v842, %v802
      %v1803 = vpack.c.bf16 %v843, %v803
      %v1804 = vpack.c.bf16 %v844, %v804
      %v1805 = vpack.c.bf16 %v845, %v805
      %v1806 = vpack.c.bf16 %v846, %v806
      %v1807 = vpack.c.bf16 %v847, %v807
      %v1808 = vpack.c.bf16 %v848, %v808
      %v1809 = vpack.c.bf16 %v849, %v809
      %v1810 = vpack.c.bf16 %v850, %v810
      %v1811 = vpack.c.bf16 %v851, %v811
      %v1812 = vpack.c.bf16 %v852, %v812
      %v1813 = vpack.c.bf16 %v853, %v813
      %v1814 = vpack.c.bf16 %v854, %v814
      %v1815 = vpack.c.bf16 %v855, %v815
      %v1816 = vpack.c.bf16 %v856, %v816
      %v1817 = vpack.c.bf16 %v857, %v817
      %v1818 = vpack.c.bf16 %v858, %v818
      %v1819 = vpack.c.bf16 %v859, %v819
      %v1820 = vpack.c.bf16 %v860, %v820
      %v1821 = vpack.c.bf16 %v861, %v821
      %v1822 = vpack.c.bf16 %v862, %v822
      %v1823 = vpack.c.bf16 %v863, %v823
      %v1824 = vpack.c.bf16 %v864, %v824
      %v1825 = vpack.c.bf16 %v865, %v825
      %v1826 = vpack.c.bf16 %v866, %v826
      %v1827 = vpack.c.bf16 %v867, %v827
      %v1828 = vpack.c.bf16 %v868, %v828
      %v1829 = vpack.c.bf16 %v869, %v829
      %v1830 = vpack.c.bf16 %v870, %v830
      %v1831 = vpack.c.bf16 %v871, %v831
      %v1832 = vpack.c.bf16 %v912, %v872
      %v1833 = vpack.c.bf16 %v913, %v873
      %v1834 = vpack.c.bf16 %v914, %v874
      %v1835 = vpack.c.bf16 %v915, %v875
      %v1836 = vpack.c.bf16 %v916, %v876
      %v1837 = vpack.c.bf16 %v917, %v877
      %v1838 = vpack.c.bf16 %v918, %v878
      %v1839 = vpack.c.bf16 %v919, %v879
      %v1840 = vpack.c.bf16 %v920, %v880
      %v1841 = vpack.c.bf16 %v921, %v881
      %v1842 = vpack.c.bf16 %v922, %v882
      %v1843 = vpack.c.bf16 %v923, %v883
      %v1844 = vpack.c.bf16 %v924, %v884
      %v1845 = vpack.c.bf16 %v925, %v885
      %v1846 = vpack.c.bf16 %v926, %v886
      %v1847 = vpack.c.bf16 %v927, %v887
      %v1848 = vpack.c.bf16 %v928, %v888
      %v1849 = vpack.c.bf16 %v929, %v889
      %v1850 = vpack.c.bf16 %v930, %v890
      %v1851 = vpack.c.bf16 %v931, %v891
      %v1852 = vpack.c.bf16 %v932, %v892
      %v1853 = vpack.c.bf16 %v933, %v893
      %v1854 = vpack.c.bf16 %v934, %v894
      %v1855 = vpack.c.bf16 %v935, %v895
      %v1856 = vpack.c.bf16 %v936, %v896
      %v1857 = vpack.c.bf16 %v937, %v897
      %v1858 = vpack.c.bf16 %v938, %v898
      %v1859 = vpack.c.bf16 %v939, %v899
      %v1860 = vpack.c.bf16 %v940, %v900
      %v1861 = vpack.c.bf16 %v941, %v901
      %v1862 = vpack.c.bf16 %v942, %v902
      %v1863 = vpack.c.bf16 %v943, %v903
      %v1864 = vpack.c.bf16 %v944, %v904
      %v1865 = vpack.c.bf16 %v945, %v905
      %v1866 = vpack.c.bf16 %v946, %v906
      %v1867 = vpack.c.bf16 %v947, %v907
      %v1868 = vpack.c.bf16 %v948, %v908
      %v1869 = vpack.c.bf16 %v949, %v909
      %v1870 = vpack.c.bf16 %v950, %v910
      %v1871 = vpack.c.bf16 %v951, %v911
      %v1872 = vpack.c.bf16 %v992, %v952
      %v1873 = vpack.c.bf16 %v993, %v953
      %v1874 = vpack.c.bf16 %v994, %v954
      %v1875 = vpack.c.bf16 %v995, %v955
      %v1876 = vpack.c.bf16 %v996, %v956
      %v1877 = vpack.c.bf16 %v997, %v957
      %v1878 = vpack.c.bf16 %v998, %v958
      %v1879 = vpack.c.bf16 %v999, %v959
      %v1880 = vpack.c.bf16 %v1000, %v960
      %v1881 = vpack.c.bf16 %v1001, %v961
      %v1882 = vpack.c.bf16 %v1002, %v962
      %v1883 = vpack.c.bf16 %v1003, %v963
      %v1884 = vpack.c.bf16 %v1004, %v964
      %v1885 = vpack.c.bf16 %v1005, %v965
      %v1886 = vpack.c.bf16 %v1006, %v966
      %v1887 = vpack.c.bf16 %v1007, %v967
      %v1888 = vpack.c.bf16 %v1008, %v968
      %v1889 = vpack.c.bf16 %v1009, %v969
      %v1890 = vpack.c.bf16 %v1010, %v970
      %v1891 = vpack.c.bf16 %v1011, %v971
      %v1892 = vpack.c.bf16 %v1012, %v972
      %v1893 = vpack.c.bf16 %v1013, %v973
      %v1894 = vpack.c.bf16 %v1014, %v974
      %v1895 = vpack.c.bf16 %v1015, %v975
      %v1896 = vpack.c.bf16 %v1016, %v976
      %v1897 = vpack.c.bf16 %v1017, %v977
      %v1898 = vpack.c.bf16 %v1018, %v978
      %v1899 = vpack.c.bf16 %v1019, %v979
      %v1900 = vpack.c.bf16 %v1020, %v980
      %v1901 = vpack.c.bf16 %v1021, %v981
      %v1902 = vpack.c.bf16 %v1022, %v982
      %v1903 = vpack.c.bf16 %v1023, %v983
      %v1904 = vpack.c.bf16 %v1024, %v984
      %v1905 = vpack.c.bf16 %v1025, %v985
      %v1906 = vpack.c.bf16 %v1026, %v986
      %v1907 = vpack.c.bf16 %v1027, %v987
      %v1908 = vpack.c.bf16 %v1028, %v988
      %v1909 = vpack.c.bf16 %v1029, %v989
      %v1910 = vpack.c.bf16 %v1030, %v990
      %v1911 = vpack.c.bf16 %v1031, %v991
      %v1912 = vpack.c.bf16 %v1072, %v1032
      %v1913 = vpack.c.bf16 %v1073, %v1033
      %v1914 = vpack.c.bf16 %v1074, %v1034
      %v1915 = vpack.c.bf16 %v1075, %v1035
      %v1916 = vpack.c.bf16 %v1076, %v1036
      %v1917 = vpack.c.bf16 %v1077, %v1037
      %v1918 = vpack.c.bf16 %v1078, %v1038
      %v1919 = vpack.c.bf16 %v1079, %v1039
      %v1920 = vpack.c.bf16 %v1080, %v1040
      %v1921 = vpack.c.bf16 %v1081, %v1041
      %v1922 = vpack.c.bf16 %v1082, %v1042
      %v1923 = vpack.c.bf16 %v1083, %v1043
      %v1924 = vpack.c.bf16 %v1084, %v1044
      %v1925 = vpack.c.bf16 %v1085, %v1045
      %v1926 = vpack.c.bf16 %v1086, %v1046
      %v1927 = vpack.c.bf16 %v1087, %v1047
      %v1928 = vpack.c.bf16 %v1088, %v1048
      %v1929 = vpack.c.bf16 %v1089, %v1049
      %v1930 = vpack.c.bf16 %v1090, %v1050
      %v1931 = vpack.c.bf16 %v1091, %v1051
      %v1932 = vpack.c.bf16 %v1092, %v1052
      %v1933 = vpack.c.bf16 %v1093, %v1053
      %v1934 = vpack.c.bf16 %v1094, %v1054
      %v1935 = vpack.c.bf16 %v1095, %v1055
      %v1936 = vpack.c.bf16 %v1096, %v1056
      %v1937 = vpack.c.bf16 %v1097, %v1057
      %v1938 = vpack.c.bf16 %v1098, %v1058
      %v1939 = vpack.c.bf16 %v1099, %v1059
      %v1940 = vpack.c.bf16 %v1100, %v1060
      %v1941 = vpack.c.bf16 %v1101, %v1061
      %v1942 = vpack.c.bf16 %v1102, %v1062
      %v1943 = vpack.c.bf16 %v1103, %v1063
      %v1944 = vpack.c.bf16 %v1104, %v1064
      %v1945 = vpack.c.bf16 %v1105, %v1065
      %v1946 = vpack.c.bf16 %v1106, %v1066
      %v1947 = vpack.c.bf16 %v1107, %v1067
      %v1948 = vpack.c.bf16 %v1108, %v1068
      %v1949 = vpack.c.bf16 %v1109, %v1069
      %v1950 = vpack.c.bf16 %v1110, %v1070
      %v1951 = vpack.c.bf16 %v1111, %v1071
      %v1952 = vpack.c.bf16 %v1152, %v1112
      %v1953 = vpack.c.bf16 %v1153, %v1113
      %v1954 = vpack.c.bf16 %v1154, %v1114
      %v1955 = vpack.c.bf16 %v1155, %v1115
      %v1956 = vpack.c.bf16 %v1156, %v1116
      %v1957 = vpack.c.bf16 %v1157, %v1117
      %v1958 = vpack.c.bf16 %v1158, %v1118
      %v1959 = vpack.c.bf16 %v1159, %v1119
      %v1960 = vpack.c.bf16 %v1160, %v1120
      %v1961 = vpack.c.bf16 %v1161, %v1121
      %v1962 = vpack.c.bf16 %v1162, %v1122
      %v1963 = vpack.c.bf16 %v1163, %v1123
      %v1964 = vpack.c.bf16 %v1164, %v1124
      %v1965 = vpack.c.bf16 %v1165, %v1125
      %v1966 = vpack.c.bf16 %v1166, %v1126
      %v1967 = vpack.c.bf16 %v1167, %v1127
      %v1968 = vpack.c.bf16 %v1168, %v1128
      %v1969 = vpack.c.bf16 %v1169, %v1129
      %v1970 = vpack.c.bf16 %v1170, %v1130
      %v1971 = vpack.c.bf16 %v1171, %v1131
      %v1972 = vpack.c.bf16 %v1172, %v1132
      %v1973 = vpack.c.bf16 %v1173, %v1133
      %v1974 = vpack.c.bf16 %v1174, %v1134
      %v1975 = vpack.c.bf16 %v1175, %v1135
      %v1976 = vpack.c.bf16 %v1176, %v1136
      %v1977 = vpack.c.bf16 %v1177, %v1137
      %v1978 = vpack.c.bf16 %v1178, %v1138
      %v1979 = vpack.c.bf16 %v1179, %v1139
      %v1980 = vpack.c.bf16 %v1180, %v1140
      %v1981 = vpack.c.bf16 %v1181, %v1141
      %v1982 = vpack.c.bf16 %v1182, %v1142
      %v1983 = vpack.c.bf16 %v1183, %v1143
      %v1984 = vpack.c.bf16 %v1184, %v1144
      %v1985 = vpack.c.bf16 %v1185, %v1145
      %v1986 = vpack.c.bf16 %v1186, %v1146
      %v1987 = vpack.c.bf16 %v1187, %v1147
      %v1988 = vpack.c.bf16 %v1188, %v1148
      %v1989 = vpack.c.bf16 %v1189, %v1149
      %v1990 = vpack.c.bf16 %v1190, %v1150
      %v1991 = vpack.c.bf16 %v1191, %v1151
      %v1992 = vpack.c.bf16 %v1232, %v1192
      %v1993 = vpack.c.bf16 %v1233, %v1193
      %v1994 = vpack.c.bf16 %v1234, %v1194
      %v1995 = vpack.c.bf16 %v1235, %v1195
      %v1996 = vpack.c.bf16 %v1236, %v1196
      %v1997 = vpack.c.bf16 %v1237, %v1197
      %v1998 = vpack.c.bf16 %v1238, %v1198
      %v1999 = vpack.c.bf16 %v1239, %v1199
      %v2000 = vpack.c.bf16 %v1240, %v1200
      %v2001 = vpack.c.bf16 %v1241, %v1201
      %v2002 = vpack.c.bf16 %v1242, %v1202
      %v2003 = vpack.c.bf16 %v1243, %v1203
      %v2004 = vpack.c.bf16 %v1244, %v1204
      %v2005 = vpack.c.bf16 %v1245, %v1205
      %v2006 = vpack.c.bf16 %v1246, %v1206
      %v2007 = vpack.c.bf16 %v1247, %v1207
      %v2008 = vpack.c.bf16 %v1248, %v1208
      %v2009 = vpack.c.bf16 %v1249, %v1209
      %v2010 = vpack.c.bf16 %v1250, %v1210
      %v2011 = vpack.c.bf16 %v1251, %v1211
      %v2012 = vpack.c.bf16 %v1252, %v1212
      %v2013 = vpack.c.bf16 %v1253, %v1213
      %v2014 = vpack.c.bf16 %v1254, %v1214
      %v2015 = vpack.c.bf16 %v1255, %v1215
      %v2016 = vpack.c.bf16 %v1256, %v1216
      %v2017 = vpack.c.bf16 %v1257, %v1217
      %v2018 = vpack.c.bf16 %v1258, %v1218
      %v2019 = vpack.c.bf16 %v1259, %v1219
      %v2020 = vpack.c.bf16 %v1260, %v1220
      %v2021 = vpack.c.bf16 %v1261, %v1221
      %v2022 = vpack.c.bf16 %v1262, %v1222
      %v2023 = vpack.c.bf16 %v1263, %v1223
      %v2024 = vpack.c.bf16 %v1264, %v1224
      %v2025 = vpack.c.bf16 %v1265, %v1225
      %v2026 = vpack.c.bf16 %v1266, %v1226
      %v2027 = vpack.c.bf16 %v1267, %v1227
      %v2028 = vpack.c.bf16 %v1268, %v1228
      %v2029 = vpack.c.bf16 %v1269, %v1229
      %v2030 = vpack.c.bf16 %v1270, %v1230
      %v2031 = vpack.c.bf16 %v1271, %v1231
      %v2032 = vpack.c.bf16 %v1312, %v1272
      %v2033 = vpack.c.bf16 %v1313, %v1273
      %v2034 = vpack.c.bf16 %v1314, %v1274
      %v2035 = vpack.c.bf16 %v1315, %v1275
      %v2036 = vpack.c.bf16 %v1316, %v1276
      %v2037 = vpack.c.bf16 %v1317, %v1277
      %v2038 = vpack.c.bf16 %v1318, %v1278
      %v2039 = vpack.c.bf16 %v1319, %v1279
      %v2040 = vpack.c.bf16 %v1320, %v1280
      %v2041 = vpack.c.bf16 %v1321, %v1281
      %v2042 = vpack.c.bf16 %v1322, %v1282
      %v2043 = vpack.c.bf16 %v1323, %v1283
      %v2044 = vpack.c.bf16 %v1324, %v1284
      %v2045 = vpack.c.bf16 %v1325, %v1285
      %v2046 = vpack.c.bf16 %v1326, %v1286
      %v2047 = vpack.c.bf16 %v1327, %v1287
      %v2048 = vpack.c.bf16 %v1328, %v1288
      %v2049 = vpack.c.bf16 %v1329, %v1289
      %v2050 = vpack.c.bf16 %v1330, %v1290
      %v2051 = vpack.c.bf16 %v1331, %v1291
      %v2052 = vpack.c.bf16 %v1332, %v1292
      %v2053 = vpack.c.bf16 %v1333, %v1293
      %v2054 = vpack.c.bf16 %v1334, %v1294
      %v2055 = vpack.c.bf16 %v1335, %v1295
      %v2056 = vpack.c.bf16 %v1336, %v1296
      %v2057 = vpack.c.bf16 %v1337, %v1297
      %v2058 = vpack.c.bf16 %v1338, %v1298
      %v2059 = vpack.c.bf16 %v1339, %v1299
      %v2060 = vpack.c.bf16 %v1340, %v1300
      %v2061 = vpack.c.bf16 %v1341, %v1301
      %v2062 = vpack.c.bf16 %v1342, %v1302
      %v2063 = vpack.c.bf16 %v1343, %v1303
      %v2064 = vpack.c.bf16 %v1344, %v1304
      %v2065 = vpack.c.bf16 %v1345, %v1305
      %v2066 = vpack.c.bf16 %v1346, %v1306
      %v2067 = vpack.c.bf16 %v1347, %v1307
      %v2068 = vpack.c.bf16 %v1348, %v1308
      %v2069 = vpack.c.bf16 %v1349, %v1309
      %v2070 = vpack.c.bf16 %v1350, %v1310
      %v2071 = vpack.c.bf16 %v1351, %v1311
      %v2072 = vpack.c.bf16 %v1392, %v1352
      %v2073 = vpack.c.bf16 %v1393, %v1353
      %v2074 = vpack.c.bf16 %v1394, %v1354
      %v2075 = vpack.c.bf16 %v1395, %v1355
      %v2076 = vpack.c.bf16 %v1396, %v1356
      %v2077 = vpack.c.bf16 %v1397, %v1357
      %v2078 = vpack.c.bf16 %v1398, %v1358
      %v2079 = vpack.c.bf16 %v1399, %v1359
      %v2080 = vpack.c.bf16 %v1400, %v1360
      %v2081 = vpack.c.bf16 %v1401, %v1361
      %v2082 = vpack.c.bf16 %v1402, %v1362
      %v2083 = vpack.c.bf16 %v1403, %v1363
      %v2084 = vpack.c.bf16 %v1404, %v1364
      %v2085 = vpack.c.bf16 %v1405, %v1365
      %v2086 = vpack.c.bf16 %v1406, %v1366
      %v2087 = vpack.c.bf16 %v1407, %v1367
      %v2088 = vpack.c.bf16 %v1408, %v1368
      %v2089 = vpack.c.bf16 %v1409, %v1369
      %v2090 = vpack.c.bf16 %v1410, %v1370
      %v2091 = vpack.c.bf16 %v1411, %v1371
      %v2092 = vpack.c.bf16 %v1412, %v1372
      %v2093 = vpack.c.bf16 %v1413, %v1373
      %v2094 = vpack.c.bf16 %v1414, %v1374
      %v2095 = vpack.c.bf16 %v1415, %v1375
      %v2096 = vpack.c.bf16 %v1416, %v1376
      %v2097 = vpack.c.bf16 %v1417, %v1377
      %v2098 = vpack.c.bf16 %v1418, %v1378
      %v2099 = vpack.c.bf16 %v1419, %v1379
      %v2100 = vpack.c.bf16 %v1420, %v1380
      %v2101 = vpack.c.bf16 %v1421, %v1381
      %v2102 = vpack.c.bf16 %v1422, %v1382
      %v2103 = vpack.c.bf16 %v1423, %v1383
      %v2104 = vpack.c.bf16 %v1424, %v1384
      %v2105 = vpack.c.bf16 %v1425, %v1385
      %v2106 = vpack.c.bf16 %v1426, %v1386
      %v2107 = vpack.c.bf16 %v1427, %v1387
      %v2108 = vpack.c.bf16 %v1428, %v1388
      %v2109 = vpack.c.bf16 %v1429, %v1389
      %v2110 = vpack.c.bf16 %v1430, %v1390
      %v2111 = vpack.c.bf16 %v1431, %v1391
      %v2112 = vpack.c.bf16 %v1472, %v1432
      %v2113 = vpack.c.bf16 %v1473, %v1433
      %v2114 = vpack.c.bf16 %v1474, %v1434
      %v2115 = vpack.c.bf16 %v1475, %v1435
      %v2116 = vpack.c.bf16 %v1476, %v1436
      %v2117 = vpack.c.bf16 %v1477, %v1437
      %v2118 = vpack.c.bf16 %v1478, %v1438
      %v2119 = vpack.c.bf16 %v1479, %v1439
      %v2120 = vpack.c.bf16 %v1480, %v1440
      %v2121 = vpack.c.bf16 %v1481, %v1441
      %v2122 = vpack.c.bf16 %v1482, %v1442
      %v2123 = vpack.c.bf16 %v1483, %v1443
      %v2124 = vpack.c.bf16 %v1484, %v1444
      %v2125 = vpack.c.bf16 %v1485, %v1445
      %v2126 = vpack.c.bf16 %v1486, %v1446
      %v2127 = vpack.c.bf16 %v1487, %v1447
      %v2128 = vpack.c.bf16 %v1488, %v1448
      %v2129 = vpack.c.bf16 %v1489, %v1449
      %v2130 = vpack.c.bf16 %v1490, %v1450
      %v2131 = vpack.c.bf16 %v1491, %v1451
      %v2132 = vpack.c.bf16 %v1492, %v1452
      %v2133 = vpack.c.bf16 %v1493, %v1453
      %v2134 = vpack.c.bf16 %v1494, %v1454
      %v2135 = vpack.c.bf16 %v1495, %v1455
      %v2136 = vpack.c.bf16 %v1496, %v1456
      %v2137 = vpack.c.bf16 %v1497, %v1457
      %v2138 = vpack.c.bf16 %v1498, %v1458
      %v2139 = vpack.c.bf16 %v1499, %v1459
      %v2140 = vpack.c.bf16 %v1500, %v1460
      %v2141 = vpack.c.bf16 %v1501, %v1461
      %v2142 = vpack.c.bf16 %v1502, %v1462
      %v2143 = vpack.c.bf16 %v1503, %v1463
      %v2144 = vpack.c.bf16 %v1504, %v1464
      %v2145 = vpack.c.bf16 %v1505, %v1465
      %v2146 = vpack.c.bf16 %v1506, %v1466
      %v2147 = vpack.c.bf16 %v1507, %v1467
      %v2148 = vpack.c.bf16 %v1508, %v1468
      %v2149 = vpack.c.bf16 %v1509, %v1469
      %v2150 = vpack.c.bf16 %v1510, %v1470
      %v2151 = vpack.c.bf16 %v1511, %v1471
      %v2152 = vld [vmem:[%s1] sm:$0xf]
      %v2153 = vld [vmem:[%s1 + $0x4] sm:$0xf]
      %v2154 = vld [vmem:[%s1 + $0x8] sm:$0xf]
      %v2155 = vld [vmem:[%s1 + $0xc] sm:$0xf]
      %v2156 = vld [vmem:[%s1 + $0x10] sm:$0xf]
      %v2157 = vld [vmem:[%s1 + $0x14] sm:$0xf]
      %v2158 = vld [vmem:[%s1 + $0x18] sm:$0xf]
      %v2159 = vld [vmem:[%s1 + $0x1c] sm:$0xf]
      %v2160 = vld [vmem:[%s1 + $0x20] sm:$0xf]
      %v2161 = vld [vmem:[%s1 + $0x24] sm:$0xf]
      %v2162 = vld [vmem:[%s1 + $0x28] sm:$0xf]
      %v2163 = vld [vmem:[%s1 + $0x2c] sm:$0xf]
      %v2164 = vld [vmem:[%s1 + $0x30] sm:$0xf]
      %v2165 = vld [vmem:[%s1 + $0x34] sm:$0xf]
      %v2166 = vld [vmem:[%s1 + $0x38] sm:$0xf]
      %v2167 = vld [vmem:[%s1 + $0x3c] sm:$0xf]
      %v2168 = vld [vmem:[%s1 + $0x40] sm:$0xf]
      %v2169 = vld [vmem:[%s1 + $0x44] sm:$0xf]
      %v2170 = vld [vmem:[%s1 + $0x48] sm:$0xf]
      %v2171 = vld [vmem:[%s1 + $0x4c] sm:$0xf]
      %v2172 = vld [vmem:[%s1 + $0x50] sm:$0xf]
      %v2173 = vld [vmem:[%s1 + $0x54] sm:$0xf]
      %v2174 = vld [vmem:[%s1 + $0x58] sm:$0xf]
      %v2175 = vld [vmem:[%s1 + $0x5c] sm:$0xf]
      %v2176 = vld [vmem:[%s1 + $0x60] sm:$0xf]
      %v2177 = vld [vmem:[%s1 + $0x64] sm:$0xf]
      %v2178 = vld [vmem:[%s1 + $0x68] sm:$0xf]
      %v2179 = vld [vmem:[%s1 + $0x6c] sm:$0xf]
      %v2180 = vld [vmem:[%s1 + $0x70] sm:$0xf]
      %v2181 = vld [vmem:[%s1 + $0x74] sm:$0xf]
      %v2182 = vld [vmem:[%s1 + $0x78] sm:$0xf]
      %v2183 = vld [vmem:[%s1 + $0x7c] sm:$0xf]
      %v2184 = vld [vmem:[%s1 + $0x80] sm:$0xf]
      %v2185 = vld [vmem:[%s1 + $0x84] sm:$0xf]
      %v2186 = vld [vmem:[%s1 + $0x88] sm:$0xf]
      %v2187 = vld [vmem:[%s1 + $0x8c] sm:$0xf]
      %v2188 = vld [vmem:[%s1 + $0x90] sm:$0xf]
      %v2189 = vld [vmem:[%s1 + $0x94] sm:$0xf]
      %v2190 = vld [vmem:[%s1 + $0x98] sm:$0xf]
      %v2191 = vld [vmem:[%s1 + $0x9c] sm:$0xf]
      %v2192 = vld [vmem:[%s1 + $0xa0] sm:$0xf]
      %v2193 = vld [vmem:[%s1 + $0xa4] sm:$0xf]
      %v2194 = vld [vmem:[%s1 + $0xa8] sm:$0xf]
      %v2195 = vld [vmem:[%s1 + $0xac] sm:$0xf]
      %v2196 = vld [vmem:[%s1 + $0xb0] sm:$0xf]
      %v2197 = vld [vmem:[%s1 + $0xb4] sm:$0xf]
      %v2198 = vld [vmem:[%s1 + $0xb8] sm:$0xf]
      %v2199 = vld [vmem:[%s1 + $0xbc] sm:$0xf]
      %v2200 = vld [vmem:[%s1 + $0xc0] sm:$0xf]
      %v2201 = vld [vmem:[%s1 + $0xc4] sm:$0xf]
      %v2202 = vld [vmem:[%s1 + $0xc8] sm:$0xf]
      %v2203 = vld [vmem:[%s1 + $0xcc] sm:$0xf]
      %v2204 = vld [vmem:[%s1 + $0xd0] sm:$0xf]
      %v2205 = vld [vmem:[%s1 + $0xd4] sm:$0xf]
      %v2206 = vld [vmem:[%s1 + $0xd8] sm:$0xf]
      %v2207 = vld [vmem:[%s1 + $0xdc] sm:$0xf]
      %v2208 = vld [vmem:[%s1 + $0xe0] sm:$0xf]
      %v2209 = vld [vmem:[%s1 + $0xe4] sm:$0xf]
      %v2210 = vld [vmem:[%s1 + $0xe8] sm:$0xf]
      %v2211 = vld [vmem:[%s1 + $0xec] sm:$0xf]
      %v2212 = vld [vmem:[%s1 + $0xf0] sm:$0xf]
      %v2213 = vld [vmem:[%s1 + $0xf4] sm:$0xf]
      %v2214 = vld [vmem:[%s1 + $0xf8] sm:$0xf]
      %v2215 = vld [vmem:[%s1 + $0xfc] sm:$0xf]
      %v2216 = vld [vmem:[%s1 + $0x100] sm:$0xf]
      %v2217 = vld [vmem:[%s1 + $0x104] sm:$0xf]
      %v2218 = vld [vmem:[%s1 + $0x108] sm:$0xf]
      %v2219 = vld [vmem:[%s1 + $0x10c] sm:$0xf]
      %v2220 = vld [vmem:[%s1 + $0x110] sm:$0xf]
      %v2221 = vld [vmem:[%s1 + $0x114] sm:$0xf]
      %v2222 = vld [vmem:[%s1 + $0x118] sm:$0xf]
      %v2223 = vld [vmem:[%s1 + $0x11c] sm:$0xf]
      %v2224 = vld [vmem:[%s1 + $0x120] sm:$0xf]
      %v2225 = vld [vmem:[%s1 + $0x124] sm:$0xf]
      %v2226 = vld [vmem:[%s1 + $0x128] sm:$0xf]
      %v2227 = vld [vmem:[%s1 + $0x12c] sm:$0xf]
      %v2228 = vld [vmem:[%s1 + $0x130] sm:$0xf]
      %v2229 = vld [vmem:[%s1 + $0x134] sm:$0xf]
      %v2230 = vld [vmem:[%s1 + $0x138] sm:$0xf]
      %v2231 = vld [vmem:[%s1 + $0x13c] sm:$0xf]
      %v2232 = vld [vmem:[%s1 + $0x140] sm:$0xf]
      %v2233 = vld [vmem:[%s1 + $0x144] sm:$0xf]
      %v2234 = vld [vmem:[%s1 + $0x148] sm:$0xf]
      %v2235 = vld [vmem:[%s1 + $0x14c] sm:$0xf]
      %v2236 = vld [vmem:[%s1 + $0x150] sm:$0xf]
      %v2237 = vld [vmem:[%s1 + $0x154] sm:$0xf]
      %v2238 = vld [vmem:[%s1 + $0x158] sm:$0xf]
      %v2239 = vld [vmem:[%s1 + $0x15c] sm:$0xf]
      %v2240 = vld [vmem:[%s1 + $0x160] sm:$0xf]
      %v2241 = vld [vmem:[%s1 + $0x164] sm:$0xf]
      %v2242 = vld [vmem:[%s1 + $0x168] sm:$0xf]
      %v2243 = vld [vmem:[%s1 + $0x16c] sm:$0xf]
      %v2244 = vld [vmem:[%s1 + $0x170] sm:$0xf]
      %v2245 = vld [vmem:[%s1 + $0x174] sm:$0xf]
      %v2246 = vld [vmem:[%s1 + $0x178] sm:$0xf]
      %v2247 = vld [vmem:[%s1 + $0x17c] sm:$0xf]
      %v2248 = vld [vmem:[%s1 + $0x180] sm:$0xf]
      %v2249 = vld [vmem:[%s1 + $0x184] sm:$0xf]
      %v2250 = vld [vmem:[%s1 + $0x188] sm:$0xf]
      %v2251 = vld [vmem:[%s1 + $0x18c] sm:$0xf]
      %v2252 = vld [vmem:[%s1 + $0x190] sm:$0xf]
      %v2253 = vld [vmem:[%s1 + $0x194] sm:$0xf]
      %v2254 = vld [vmem:[%s1 + $0x198] sm:$0xf]
      %v2255 = vld [vmem:[%s1 + $0x19c] sm:$0xf]
      %v2256 = vld [vmem:[%s1 + $0x1a0] sm:$0xf]
      %v2257 = vld [vmem:[%s1 + $0x1a4] sm:$0xf]
      %v2258 = vld [vmem:[%s1 + $0x1a8] sm:$0xf]
      %v2259 = vld [vmem:[%s1 + $0x1ac] sm:$0xf]
      %v2260 = vld [vmem:[%s1 + $0x1b0] sm:$0xf]
      %v2261 = vld [vmem:[%s1 + $0x1b4] sm:$0xf]
      %v2262 = vld [vmem:[%s1 + $0x1b8] sm:$0xf]
      %v2263 = vld [vmem:[%s1 + $0x1bc] sm:$0xf]
      %v2264 = vld [vmem:[%s1 + $0x1c0] sm:$0xf]
      %v2265 = vld [vmem:[%s1 + $0x1c4] sm:$0xf]
      %v2266 = vld [vmem:[%s1 + $0x1c8] sm:$0xf]
      %v2267 = vld [vmem:[%s1 + $0x1cc] sm:$0xf]
      %v2268 = vld [vmem:[%s1 + $0x1d0] sm:$0xf]
      %v2269 = vld [vmem:[%s1 + $0x1d4] sm:$0xf]
      %v2270 = vld [vmem:[%s1 + $0x1d8] sm:$0xf]
      %v2271 = vld [vmem:[%s1 + $0x1dc] sm:$0xf]
      %v2272 = vld [vmem:[%s1 + $0x1e0] sm:$0xf]
      %v2273 = vld [vmem:[%s1 + $0x1e4] sm:$0xf]
      %v2274 = vld [vmem:[%s1 + $0x1e8] sm:$0xf]
      %v2275 = vld [vmem:[%s1 + $0x1ec] sm:$0xf]
      %v2276 = vld [vmem:[%s1 + $0x1f0] sm:$0xf]
      %v2277 = vld [vmem:[%s1 + $0x1f4] sm:$0xf]
      %v2278 = vld [vmem:[%s1 + $0x1f8] sm:$0xf]
      %v2279 = vld [vmem:[%s1 + $0x1fc] sm:$0xf]
      %v2280 = vld [vmem:[%s1 + $0x200] sm:$0xf]
      %v2281 = vld [vmem:[%s1 + $0x204] sm:$0xf]
      %v2282 = vld [vmem:[%s1 + $0x208] sm:$0xf]
      %v2283 = vld [vmem:[%s1 + $0x20c] sm:$0xf]
      %v2284 = vld [vmem:[%s1 + $0x210] sm:$0xf]
      %v2285 = vld [vmem:[%s1 + $0x214] sm:$0xf]
      %v2286 = vld [vmem:[%s1 + $0x218] sm:$0xf]
      %v2287 = vld [vmem:[%s1 + $0x21c] sm:$0xf]
      %v2288 = vld [vmem:[%s1 + $0x220] sm:$0xf]
      %v2289 = vld [vmem:[%s1 + $0x224] sm:$0xf]
      %v2290 = vld [vmem:[%s1 + $0x228] sm:$0xf]
      %v2291 = vld [vmem:[%s1 + $0x22c] sm:$0xf]
      %v2292 = vld [vmem:[%s1 + $0x230] sm:$0xf]
      %v2293 = vld [vmem:[%s1 + $0x234] sm:$0xf]
      %v2294 = vld [vmem:[%s1 + $0x238] sm:$0xf]
      %v2295 = vld [vmem:[%s1 + $0x23c] sm:$0xf]
      %v2296 = vld [vmem:[%s1 + $0x240] sm:$0xf]
      %v2297 = vld [vmem:[%s1 + $0x244] sm:$0xf]
      %v2298 = vld [vmem:[%s1 + $0x248] sm:$0xf]
      %v2299 = vld [vmem:[%s1 + $0x24c] sm:$0xf]
      %v2300 = vld [vmem:[%s1 + $0x250] sm:$0xf]
      %v2301 = vld [vmem:[%s1 + $0x254] sm:$0xf]
      %v2302 = vld [vmem:[%s1 + $0x258] sm:$0xf]
      %v2303 = vld [vmem:[%s1 + $0x25c] sm:$0xf]
      %v2304 = vld [vmem:[%s1 + $0x260] sm:$0xf]
      %v2305 = vld [vmem:[%s1 + $0x264] sm:$0xf]
      %v2306 = vld [vmem:[%s1 + $0x268] sm:$0xf]
      %v2307 = vld [vmem:[%s1 + $0x26c] sm:$0xf]
      %v2308 = vld [vmem:[%s1 + $0x270] sm:$0xf]
      %v2309 = vld [vmem:[%s1 + $0x274] sm:$0xf]
      %v2310 = vld [vmem:[%s1 + $0x278] sm:$0xf]
      %v2311 = vld [vmem:[%s1 + $0x27c] sm:$0xf]
      %v2312 = vld [vmem:[%s1 + $0x280] sm:$0xf]
      %v2313 = vld [vmem:[%s1 + $0x284] sm:$0xf]
      %v2314 = vld [vmem:[%s1 + $0x288] sm:$0xf]
      %v2315 = vld [vmem:[%s1 + $0x28c] sm:$0xf]
      %v2316 = vld [vmem:[%s1 + $0x290] sm:$0xf]
      %v2317 = vld [vmem:[%s1 + $0x294] sm:$0xf]
      %v2318 = vld [vmem:[%s1 + $0x298] sm:$0xf]
      %v2319 = vld [vmem:[%s1 + $0x29c] sm:$0xf]
      %v2320 = vld [vmem:[%s1 + $0x2a0] sm:$0xf]
      %v2321 = vld [vmem:[%s1 + $0x2a4] sm:$0xf]
      %v2322 = vld [vmem:[%s1 + $0x2a8] sm:$0xf]
      %v2323 = vld [vmem:[%s1 + $0x2ac] sm:$0xf]
      %v2324 = vld [vmem:[%s1 + $0x2b0] sm:$0xf]
      %v2325 = vld [vmem:[%s1 + $0x2b4] sm:$0xf]
      %v2326 = vld [vmem:[%s1 + $0x2b8] sm:$0xf]
      %v2327 = vld [vmem:[%s1 + $0x2bc] sm:$0xf]
      %v2328 = vld [vmem:[%s1 + $0x2c0] sm:$0xf]
      %v2329 = vld [vmem:[%s1 + $0x2c4] sm:$0xf]
      %v2330 = vld [vmem:[%s1 + $0x2c8] sm:$0xf]
      %v2331 = vld [vmem:[%s1 + $0x2cc] sm:$0xf]
      %v2332 = vld [vmem:[%s1 + $0x2d0] sm:$0xf]
      %v2333 = vld [vmem:[%s1 + $0x2d4] sm:$0xf]
      %v2334 = vld [vmem:[%s1 + $0x2d8] sm:$0xf]
      %v2335 = vld [vmem:[%s1 + $0x2dc] sm:$0xf]
      %v2336 = vld [vmem:[%s1 + $0x2e0] sm:$0xf]
      %v2337 = vld [vmem:[%s1 + $0x2e4] sm:$0xf]
      %v2338 = vld [vmem:[%s1 + $0x2e8] sm:$0xf]
      %v2339 = vld [vmem:[%s1 + $0x2ec] sm:$0xf]
      %v2340 = vld [vmem:[%s1 + $0x2f0] sm:$0xf]
      %v2341 = vld [vmem:[%s1 + $0x2f4] sm:$0xf]
      %v2342 = vld [vmem:[%s1 + $0x2f8] sm:$0xf]
      %v2343 = vld [vmem:[%s1 + $0x2fc] sm:$0xf]
      %v2344 = vld [vmem:[%s1 + $0x300] sm:$0xf]
      %v2345 = vld [vmem:[%s1 + $0x304] sm:$0xf]
      %v2346 = vld [vmem:[%s1 + $0x308] sm:$0xf]
      %v2347 = vld [vmem:[%s1 + $0x30c] sm:$0xf]
      %v2348 = vld [vmem:[%s1 + $0x310] sm:$0xf]
      %v2349 = vld [vmem:[%s1 + $0x314] sm:$0xf]
      %v2350 = vld [vmem:[%s1 + $0x318] sm:$0xf]
      %v2351 = vld [vmem:[%s1 + $0x31c] sm:$0xf]
      %v2352 = vld [vmem:[%s1 + $0x320] sm:$0xf]
      %v2353 = vld [vmem:[%s1 + $0x324] sm:$0xf]
      %v2354 = vld [vmem:[%s1 + $0x328] sm:$0xf]
      %v2355 = vld [vmem:[%s1 + $0x32c] sm:$0xf]
      %v2356 = vld [vmem:[%s1 + $0x330] sm:$0xf]
      %v2357 = vld [vmem:[%s1 + $0x334] sm:$0xf]
      %v2358 = vld [vmem:[%s1 + $0x338] sm:$0xf]
      %v2359 = vld [vmem:[%s1 + $0x33c] sm:$0xf]
      %v2360 = vld [vmem:[%s1 + $0x340] sm:$0xf]
      %v2361 = vld [vmem:[%s1 + $0x344] sm:$0xf]
      %v2362 = vld [vmem:[%s1 + $0x348] sm:$0xf]
      %v2363 = vld [vmem:[%s1 + $0x34c] sm:$0xf]
      %v2364 = vld [vmem:[%s1 + $0x350] sm:$0xf]
      %v2365 = vld [vmem:[%s1 + $0x354] sm:$0xf]
      %v2366 = vld [vmem:[%s1 + $0x358] sm:$0xf]
      %v2367 = vld [vmem:[%s1 + $0x35c] sm:$0xf]
      %v2368 = vld [vmem:[%s1 + $0x360] sm:$0xf]
      %v2369 = vld [vmem:[%s1 + $0x364] sm:$0xf]
      %v2370 = vld [vmem:[%s1 + $0x368] sm:$0xf]
      %v2371 = vld [vmem:[%s1 + $0x36c] sm:$0xf]
      %v2372 = vld [vmem:[%s1 + $0x370] sm:$0xf]
      %v2373 = vld [vmem:[%s1 + $0x374] sm:$0xf]
      %v2374 = vld [vmem:[%s1 + $0x378] sm:$0xf]
      %v2375 = vld [vmem:[%s1 + $0x37c] sm:$0xf]
      %v2376 = vld [vmem:[%s1 + $0x380] sm:$0xf]
      %v2377 = vld [vmem:[%s1 + $0x384] sm:$0xf]
      %v2378 = vld [vmem:[%s1 + $0x388] sm:$0xf]
      %v2379 = vld [vmem:[%s1 + $0x38c] sm:$0xf]
      %v2380 = vld [vmem:[%s1 + $0x390] sm:$0xf]
      %v2381 = vld [vmem:[%s1 + $0x394] sm:$0xf]
      %v2382 = vld [vmem:[%s1 + $0x398] sm:$0xf]
      %v2383 = vld [vmem:[%s1 + $0x39c] sm:$0xf]
      %v2384 = vld [vmem:[%s1 + $0x3a0] sm:$0xf]
      %v2385 = vld [vmem:[%s1 + $0x3a4] sm:$0xf]
      %v2386 = vld [vmem:[%s1 + $0x3a8] sm:$0xf]
      %v2387 = vld [vmem:[%s1 + $0x3ac] sm:$0xf]
      %v2388 = vld [vmem:[%s1 + $0x3b0] sm:$0xf]
      %v2389 = vld [vmem:[%s1 + $0x3b4] sm:$0xf]
      %v2390 = vld [vmem:[%s1 + $0x3b8] sm:$0xf]
      %v2391 = vld [vmem:[%s1 + $0x3bc] sm:$0xf]
      %v2392 = vld [vmem:[%s1 + $0x3c0] sm:$0xf]
      %v2393 = vld [vmem:[%s1 + $0x3c4] sm:$0xf]
      %v2394 = vld [vmem:[%s1 + $0x3c8] sm:$0xf]
      %v2395 = vld [vmem:[%s1 + $0x3cc] sm:$0xf]
      %v2396 = vld [vmem:[%s1 + $0x3d0] sm:$0xf]
      %v2397 = vld [vmem:[%s1 + $0x3d4] sm:$0xf]
      %v2398 = vld [vmem:[%s1 + $0x3d8] sm:$0xf]
      %v2399 = vld [vmem:[%s1 + $0x3dc] sm:$0xf]
      %v2400 = vld [vmem:[%s1 + $0x3e0] sm:$0xf]
      %v2401 = vld [vmem:[%s1 + $0x3e4] sm:$0xf]
      %v2402 = vld [vmem:[%s1 + $0x3e8] sm:$0xf]
      %v2403 = vld [vmem:[%s1 + $0x3ec] sm:$0xf]
      %v2404 = vld [vmem:[%s1 + $0x3f0] sm:$0xf]
      %v2405 = vld [vmem:[%s1 + $0x3f4] sm:$0xf]
      %v2406 = vld [vmem:[%s1 + $0x3f8] sm:$0xf]
      %v2407 = vld [vmem:[%s1 + $0x3fc] sm:$0xf]
      %v2408 = vld [vmem:[%s1 + $0x400] sm:$0xf]
      %v2409 = vld [vmem:[%s1 + $0x404] sm:$0xf]
      %v2410 = vld [vmem:[%s1 + $0x408] sm:$0xf]
      %v2411 = vld [vmem:[%s1 + $0x40c] sm:$0xf]
      %v2412 = vld [vmem:[%s1 + $0x410] sm:$0xf]
      %v2413 = vld [vmem:[%s1 + $0x414] sm:$0xf]
      %v2414 = vld [vmem:[%s1 + $0x418] sm:$0xf]
      %v2415 = vld [vmem:[%s1 + $0x41c] sm:$0xf]
      %v2416 = vld [vmem:[%s1 + $0x420] sm:$0xf]
      %v2417 = vld [vmem:[%s1 + $0x424] sm:$0xf]
      %v2418 = vld [vmem:[%s1 + $0x428] sm:$0xf]
      %v2419 = vld [vmem:[%s1 + $0x42c] sm:$0xf]
      %v2420 = vld [vmem:[%s1 + $0x430] sm:$0xf]
      %v2421 = vld [vmem:[%s1 + $0x434] sm:$0xf]
      %v2422 = vld [vmem:[%s1 + $0x438] sm:$0xf]
      %v2423 = vld [vmem:[%s1 + $0x43c] sm:$0xf]
      %v2424 = vld [vmem:[%s1 + $0x440] sm:$0xf]
      %v2425 = vld [vmem:[%s1 + $0x444] sm:$0xf]
      %v2426 = vld [vmem:[%s1 + $0x448] sm:$0xf]
      %v2427 = vld [vmem:[%s1 + $0x44c] sm:$0xf]
      %v2428 = vld [vmem:[%s1 + $0x450] sm:$0xf]
      %v2429 = vld [vmem:[%s1 + $0x454] sm:$0xf]
      %v2430 = vld [vmem:[%s1 + $0x458] sm:$0xf]
      %v2431 = vld [vmem:[%s1 + $0x45c] sm:$0xf]
      %v2432 = vld [vmem:[%s1 + $0x460] sm:$0xf]
      %v2433 = vld [vmem:[%s1 + $0x464] sm:$0xf]
      %v2434 = vld [vmem:[%s1 + $0x468] sm:$0xf]
      %v2435 = vld [vmem:[%s1 + $0x46c] sm:$0xf]
      %v2436 = vld [vmem:[%s1 + $0x470] sm:$0xf]
      %v2437 = vld [vmem:[%s1 + $0x474] sm:$0xf]
      %v2438 = vld [vmem:[%s1 + $0x478] sm:$0xf]
      %v2439 = vld [vmem:[%s1 + $0x47c] sm:$0xf]
      %v2440 = vld [vmem:[%s1 + $0x480] sm:$0xf]
      %v2441 = vld [vmem:[%s1 + $0x484] sm:$0xf]
      %v2442 = vld [vmem:[%s1 + $0x488] sm:$0xf]
      %v2443 = vld [vmem:[%s1 + $0x48c] sm:$0xf]
      %v2444 = vld [vmem:[%s1 + $0x490] sm:$0xf]
      %v2445 = vld [vmem:[%s1 + $0x494] sm:$0xf]
      %v2446 = vld [vmem:[%s1 + $0x498] sm:$0xf]
      %v2447 = vld [vmem:[%s1 + $0x49c] sm:$0xf]
      %v2448 = vld [vmem:[%s1 + $0x4a0] sm:$0xf]
      %v2449 = vld [vmem:[%s1 + $0x4a4] sm:$0xf]
      %v2450 = vld [vmem:[%s1 + $0x4a8] sm:$0xf]
      %v2451 = vld [vmem:[%s1 + $0x4ac] sm:$0xf]
      %v2452 = vld [vmem:[%s1 + $0x4b0] sm:$0xf]
      %v2453 = vld [vmem:[%s1 + $0x4b4] sm:$0xf]
      %v2454 = vld [vmem:[%s1 + $0x4b8] sm:$0xf]
      %v2455 = vld [vmem:[%s1 + $0x4bc] sm:$0xf]
      %v2456 = vld [vmem:[%s1 + $0x4c0] sm:$0xf]
      %v2457 = vld [vmem:[%s1 + $0x4c4] sm:$0xf]
      %v2458 = vld [vmem:[%s1 + $0x4c8] sm:$0xf]
      %v2459 = vld [vmem:[%s1 + $0x4cc] sm:$0xf]
      %v2460 = vld [vmem:[%s1 + $0x4d0] sm:$0xf]
      %v2461 = vld [vmem:[%s1 + $0x4d4] sm:$0xf]
      %v2462 = vld [vmem:[%s1 + $0x4d8] sm:$0xf]
      %v2463 = vld [vmem:[%s1 + $0x4dc] sm:$0xf]
      %v2464 = vld [vmem:[%s1 + $0x4e0] sm:$0xf]
      %v2465 = vld [vmem:[%s1 + $0x4e4] sm:$0xf]
      %v2466 = vld [vmem:[%s1 + $0x4e8] sm:$0xf]
      %v2467 = vld [vmem:[%s1 + $0x4ec] sm:$0xf]
      %v2468 = vld [vmem:[%s1 + $0x4f0] sm:$0xf]
      %v2469 = vld [vmem:[%s1 + $0x4f4] sm:$0xf]
      %v2470 = vld [vmem:[%s1 + $0x4f8] sm:$0xf]
      %v2471 = vld [vmem:[%s1 + $0x4fc] sm:$0xf]
      %v2472 = vld [vmem:[%s1 + $0x500] sm:$0xf]
      %v2473 = vld [vmem:[%s1 + $0x504] sm:$0xf]
      %v2474 = vld [vmem:[%s1 + $0x508] sm:$0xf]
      %v2475 = vld [vmem:[%s1 + $0x50c] sm:$0xf]
      %v2476 = vld [vmem:[%s1 + $0x510] sm:$0xf]
      %v2477 = vld [vmem:[%s1 + $0x514] sm:$0xf]
      %v2478 = vld [vmem:[%s1 + $0x518] sm:$0xf]
      %v2479 = vld [vmem:[%s1 + $0x51c] sm:$0xf]
      %v2480 = vld [vmem:[%s1 + $0x520] sm:$0xf]
      %v2481 = vld [vmem:[%s1 + $0x524] sm:$0xf]
      %v2482 = vld [vmem:[%s1 + $0x528] sm:$0xf]
      %v2483 = vld [vmem:[%s1 + $0x52c] sm:$0xf]
      %v2484 = vld [vmem:[%s1 + $0x530] sm:$0xf]
      %v2485 = vld [vmem:[%s1 + $0x534] sm:$0xf]
      %v2486 = vld [vmem:[%s1 + $0x538] sm:$0xf]
      %v2487 = vld [vmem:[%s1 + $0x53c] sm:$0xf]
      %v2488 = vld [vmem:[%s1 + $0x540] sm:$0xf]
      %v2489 = vld [vmem:[%s1 + $0x544] sm:$0xf]
      %v2490 = vld [vmem:[%s1 + $0x548] sm:$0xf]
      %v2491 = vld [vmem:[%s1 + $0x54c] sm:$0xf]
      %v2492 = vld [vmem:[%s1 + $0x550] sm:$0xf]
      %v2493 = vld [vmem:[%s1 + $0x554] sm:$0xf]
      %v2494 = vld [vmem:[%s1 + $0x558] sm:$0xf]
      %v2495 = vld [vmem:[%s1 + $0x55c] sm:$0xf]
      %v2496 = vld [vmem:[%s1 + $0x560] sm:$0xf]
      %v2497 = vld [vmem:[%s1 + $0x564] sm:$0xf]
      %v2498 = vld [vmem:[%s1 + $0x568] sm:$0xf]
      %v2499 = vld [vmem:[%s1 + $0x56c] sm:$0xf]
      %v2500 = vld [vmem:[%s1 + $0x570] sm:$0xf]
      %v2501 = vld [vmem:[%s1 + $0x574] sm:$0xf]
      %v2502 = vld [vmem:[%s1 + $0x578] sm:$0xf]
      %v2503 = vld [vmem:[%s1 + $0x57c] sm:$0xf]
      %v2504 = vld [vmem:[%s1 + $0x580] sm:$0xf]
      %v2505 = vld [vmem:[%s1 + $0x584] sm:$0xf]
      %v2506 = vld [vmem:[%s1 + $0x588] sm:$0xf]
      %v2507 = vld [vmem:[%s1 + $0x58c] sm:$0xf]
      %v2508 = vld [vmem:[%s1 + $0x590] sm:$0xf]
      %v2509 = vld [vmem:[%s1 + $0x594] sm:$0xf]
      %v2510 = vld [vmem:[%s1 + $0x598] sm:$0xf]
      %v2511 = vld [vmem:[%s1 + $0x59c] sm:$0xf]
      %v2512 = vld [vmem:[%s1 + $0x5a0] sm:$0xf]
      %v2513 = vld [vmem:[%s1 + $0x5a4] sm:$0xf]
      %v2514 = vld [vmem:[%s1 + $0x5a8] sm:$0xf]
      %v2515 = vld [vmem:[%s1 + $0x5ac] sm:$0xf]
      %v2516 = vld [vmem:[%s1 + $0x5b0] sm:$0xf]
      %v2517 = vld [vmem:[%s1 + $0x5b4] sm:$0xf]
      %v2518 = vld [vmem:[%s1 + $0x5b8] sm:$0xf]
      %v2519 = vld [vmem:[%s1 + $0x5bc] sm:$0xf]
      %v2520 = vld [vmem:[%s1 + $0x5c0] sm:$0xf]
      %v2521 = vld [vmem:[%s1 + $0x5c4] sm:$0xf]
      %v2522 = vld [vmem:[%s1 + $0x5c8] sm:$0xf]
      %v2523 = vld [vmem:[%s1 + $0x5cc] sm:$0xf]
      %v2524 = vld [vmem:[%s1 + $0x5d0] sm:$0xf]
      %v2525 = vld [vmem:[%s1 + $0x5d4] sm:$0xf]
      %v2526 = vld [vmem:[%s1 + $0x5d8] sm:$0xf]
      %v2527 = vld [vmem:[%s1 + $0x5dc] sm:$0xf]
      %v2528 = vld [vmem:[%s1 + $0x5e0] sm:$0xf]
      %v2529 = vld [vmem:[%s1 + $0x5e4] sm:$0xf]
      %v2530 = vld [vmem:[%s1 + $0x5e8] sm:$0xf]
      %v2531 = vld [vmem:[%s1 + $0x5ec] sm:$0xf]
      %v2532 = vld [vmem:[%s1 + $0x5f0] sm:$0xf]
      %v2533 = vld [vmem:[%s1 + $0x5f4] sm:$0xf]
      %v2534 = vld [vmem:[%s1 + $0x5f8] sm:$0xf]
      %v2535 = vld [vmem:[%s1 + $0x5fc] sm:$0xf]
      %v2536 = vld [vmem:[%s1 + $0x600] sm:$0xf]
      %v2537 = vld [vmem:[%s1 + $0x604] sm:$0xf]
      %v2538 = vld [vmem:[%s1 + $0x608] sm:$0xf]
      %v2539 = vld [vmem:[%s1 + $0x60c] sm:$0xf]
      %v2540 = vld [vmem:[%s1 + $0x610] sm:$0xf]
      %v2541 = vld [vmem:[%s1 + $0x614] sm:$0xf]
      %v2542 = vld [vmem:[%s1 + $0x618] sm:$0xf]
      %v2543 = vld [vmem:[%s1 + $0x61c] sm:$0xf]
      %v2544 = vld [vmem:[%s1 + $0x620] sm:$0xf]
      %v2545 = vld [vmem:[%s1 + $0x624] sm:$0xf]
      %v2546 = vld [vmem:[%s1 + $0x628] sm:$0xf]
      %v2547 = vld [vmem:[%s1 + $0x62c] sm:$0xf]
      %v2548 = vld [vmem:[%s1 + $0x630] sm:$0xf]
      %v2549 = vld [vmem:[%s1 + $0x634] sm:$0xf]
      %v2550 = vld [vmem:[%s1 + $0x638] sm:$0xf]
      %v2551 = vld [vmem:[%s1 + $0x63c] sm:$0xf]
      %v2552 = vld [vmem:[%s1 + $0x640] sm:$0xf]
      %v2553 = vld [vmem:[%s1 + $0x644] sm:$0xf]
      %v2554 = vld [vmem:[%s1 + $0x648] sm:$0xf]
      %v2555 = vld [vmem:[%s1 + $0x64c] sm:$0xf]
      %v2556 = vld [vmem:[%s1 + $0x650] sm:$0xf]
      %v2557 = vld [vmem:[%s1 + $0x654] sm:$0xf]
      %v2558 = vld [vmem:[%s1 + $0x658] sm:$0xf]
      %v2559 = vld [vmem:[%s1 + $0x65c] sm:$0xf]
      %v2560 = vld [vmem:[%s1 + $0x660] sm:$0xf]
      %v2561 = vld [vmem:[%s1 + $0x664] sm:$0xf]
      %v2562 = vld [vmem:[%s1 + $0x668] sm:$0xf]
      %v2563 = vld [vmem:[%s1 + $0x66c] sm:$0xf]
      %v2564 = vld [vmem:[%s1 + $0x670] sm:$0xf]
      %v2565 = vld [vmem:[%s1 + $0x674] sm:$0xf]
      %v2566 = vld [vmem:[%s1 + $0x678] sm:$0xf]
      %v2567 = vld [vmem:[%s1 + $0x67c] sm:$0xf]
      %v2568 = vld [vmem:[%s1 + $0x680] sm:$0xf]
      %v2569 = vld [vmem:[%s1 + $0x684] sm:$0xf]
      %v2570 = vld [vmem:[%s1 + $0x688] sm:$0xf]
      %v2571 = vld [vmem:[%s1 + $0x68c] sm:$0xf]
      %v2572 = vld [vmem:[%s1 + $0x690] sm:$0xf]
      %v2573 = vld [vmem:[%s1 + $0x694] sm:$0xf]
      %v2574 = vld [vmem:[%s1 + $0x698] sm:$0xf]
      %v2575 = vld [vmem:[%s1 + $0x69c] sm:$0xf]
      %v2576 = vld [vmem:[%s1 + $0x6a0] sm:$0xf]
      %v2577 = vld [vmem:[%s1 + $0x6a4] sm:$0xf]
      %v2578 = vld [vmem:[%s1 + $0x6a8] sm:$0xf]
      %v2579 = vld [vmem:[%s1 + $0x6ac] sm:$0xf]
      %v2580 = vld [vmem:[%s1 + $0x6b0] sm:$0xf]
      %v2581 = vld [vmem:[%s1 + $0x6b4] sm:$0xf]
      %v2582 = vld [vmem:[%s1 + $0x6b8] sm:$0xf]
      %v2583 = vld [vmem:[%s1 + $0x6bc] sm:$0xf]
      %v2584 = vld [vmem:[%s1 + $0x6c0] sm:$0xf]
      %v2585 = vld [vmem:[%s1 + $0x6c4] sm:$0xf]
      %v2586 = vld [vmem:[%s1 + $0x6c8] sm:$0xf]
      %v2587 = vld [vmem:[%s1 + $0x6cc] sm:$0xf]
      %v2588 = vld [vmem:[%s1 + $0x6d0] sm:$0xf]
      %v2589 = vld [vmem:[%s1 + $0x6d4] sm:$0xf]
      %v2590 = vld [vmem:[%s1 + $0x6d8] sm:$0xf]
      %v2591 = vld [vmem:[%s1 + $0x6dc] sm:$0xf]
      %v2592 = vld [vmem:[%s1 + $0x6e0] sm:$0xf]
      %v2593 = vld [vmem:[%s1 + $0x6e4] sm:$0xf]
      %v2594 = vld [vmem:[%s1 + $0x6e8] sm:$0xf]
      %v2595 = vld [vmem:[%s1 + $0x6ec] sm:$0xf]
      %v2596 = vld [vmem:[%s1 + $0x6f0] sm:$0xf]
      %v2597 = vld [vmem:[%s1 + $0x6f4] sm:$0xf]
      %v2598 = vld [vmem:[%s1 + $0x6f8] sm:$0xf]
      %v2599 = vld [vmem:[%s1 + $0x6fc] sm:$0xf]
      %v2600 = vld [vmem:[%s1 + $0x700] sm:$0xf]
      %v2601 = vld [vmem:[%s1 + $0x704] sm:$0xf]
      %v2602 = vld [vmem:[%s1 + $0x708] sm:$0xf]
      %v2603 = vld [vmem:[%s1 + $0x70c] sm:$0xf]
      %v2604 = vld [vmem:[%s1 + $0x710] sm:$0xf]
      %v2605 = vld [vmem:[%s1 + $0x714] sm:$0xf]
      %v2606 = vld [vmem:[%s1 + $0x718] sm:$0xf]
      %v2607 = vld [vmem:[%s1 + $0x71c] sm:$0xf]
      %v2608 = vld [vmem:[%s1 + $0x720] sm:$0xf]
      %v2609 = vld [vmem:[%s1 + $0x724] sm:$0xf]
      %v2610 = vld [vmem:[%s1 + $0x728] sm:$0xf]
      %v2611 = vld [vmem:[%s1 + $0x72c] sm:$0xf]
      %v2612 = vld [vmem:[%s1 + $0x730] sm:$0xf]
      %v2613 = vld [vmem:[%s1 + $0x734] sm:$0xf]
      %v2614 = vld [vmem:[%s1 + $0x738] sm:$0xf]
      %v2615 = vld [vmem:[%s1 + $0x73c] sm:$0xf]
      %v2616 = vld [vmem:[%s1 + $0x740] sm:$0xf]
      %v2617 = vld [vmem:[%s1 + $0x744] sm:$0xf]
      %v2618 = vld [vmem:[%s1 + $0x748] sm:$0xf]
      %v2619 = vld [vmem:[%s1 + $0x74c] sm:$0xf]
      %v2620 = vld [vmem:[%s1 + $0x750] sm:$0xf]
      %v2621 = vld [vmem:[%s1 + $0x754] sm:$0xf]
      %v2622 = vld [vmem:[%s1 + $0x758] sm:$0xf]
      %v2623 = vld [vmem:[%s1 + $0x75c] sm:$0xf]
      %v2624 = vld [vmem:[%s1 + $0x760] sm:$0xf]
      %v2625 = vld [vmem:[%s1 + $0x764] sm:$0xf]
      %v2626 = vld [vmem:[%s1 + $0x768] sm:$0xf]
      %v2627 = vld [vmem:[%s1 + $0x76c] sm:$0xf]
      %v2628 = vld [vmem:[%s1 + $0x770] sm:$0xf]
      %v2629 = vld [vmem:[%s1 + $0x774] sm:$0xf]
      %v2630 = vld [vmem:[%s1 + $0x778] sm:$0xf]
      %v2631 = vld [vmem:[%s1 + $0x77c] sm:$0xf]
      %v2632 = vld [vmem:[%s1 + $0x780] sm:$0xf]
      %v2633 = vld [vmem:[%s1 + $0x784] sm:$0xf]
      %v2634 = vld [vmem:[%s1 + $0x788] sm:$0xf]
      %v2635 = vld [vmem:[%s1 + $0x78c] sm:$0xf]
      %v2636 = vld [vmem:[%s1 + $0x790] sm:$0xf]
      %v2637 = vld [vmem:[%s1 + $0x794] sm:$0xf]
      %v2638 = vld [vmem:[%s1 + $0x798] sm:$0xf]
      %v2639 = vld [vmem:[%s1 + $0x79c] sm:$0xf]
      %v2640 = vld [vmem:[%s1 + $0x7a0] sm:$0xf]
      %v2641 = vld [vmem:[%s1 + $0x7a4] sm:$0xf]
      %v2642 = vld [vmem:[%s1 + $0x7a8] sm:$0xf]
      %v2643 = vld [vmem:[%s1 + $0x7ac] sm:$0xf]
      %v2644 = vld [vmem:[%s1 + $0x7b0] sm:$0xf]
      %v2645 = vld [vmem:[%s1 + $0x7b4] sm:$0xf]
      %v2646 = vld [vmem:[%s1 + $0x7b8] sm:$0xf]
      %v2647 = vld [vmem:[%s1 + $0x7bc] sm:$0xf]
      %v2648 = vld [vmem:[%s1 + $0x7c0] sm:$0xf]
      %v2649 = vld [vmem:[%s1 + $0x7c4] sm:$0xf]
      %v2650 = vld [vmem:[%s1 + $0x7c8] sm:$0xf]
      %v2651 = vld [vmem:[%s1 + $0x7cc] sm:$0xf]
      %v2652 = vld [vmem:[%s1 + $0x7d0] sm:$0xf]
      %v2653 = vld [vmem:[%s1 + $0x7d4] sm:$0xf]
      %v2654 = vld [vmem:[%s1 + $0x7d8] sm:$0xf]
      %v2655 = vld [vmem:[%s1 + $0x7dc] sm:$0xf]
      %v2656 = vld [vmem:[%s1 + $0x7e0] sm:$0xf]
      %v2657 = vld [vmem:[%s1 + $0x7e4] sm:$0xf]
      %v2658 = vld [vmem:[%s1 + $0x7e8] sm:$0xf]
      %v2659 = vld [vmem:[%s1 + $0x7ec] sm:$0xf]
      %v2660 = vld [vmem:[%s1 + $0x7f0] sm:$0xf]
      %v2661 = vld [vmem:[%s1 + $0x7f4] sm:$0xf]
      %v2662 = vld [vmem:[%s1 + $0x7f8] sm:$0xf]
      %v2663 = vld [vmem:[%s1 + $0x7fc] sm:$0xf]
      %v2664 = vld [vmem:[%s1 + $0x800] sm:$0xf]
      %v2665 = vld [vmem:[%s1 + $0x804] sm:$0xf]
      %v2666 = vld [vmem:[%s1 + $0x808] sm:$0xf]
      %v2667 = vld [vmem:[%s1 + $0x80c] sm:$0xf]
      %v2668 = vld [vmem:[%s1 + $0x810] sm:$0xf]
      %v2669 = vld [vmem:[%s1 + $0x814] sm:$0xf]
      %v2670 = vld [vmem:[%s1 + $0x818] sm:$0xf]
      %v2671 = vld [vmem:[%s1 + $0x81c] sm:$0xf]
      %v2672 = vld [vmem:[%s1 + $0x820] sm:$0xf]
      %v2673 = vld [vmem:[%s1 + $0x824] sm:$0xf]
      %v2674 = vld [vmem:[%s1 + $0x828] sm:$0xf]
      %v2675 = vld [vmem:[%s1 + $0x82c] sm:$0xf]
      %v2676 = vld [vmem:[%s1 + $0x830] sm:$0xf]
      %v2677 = vld [vmem:[%s1 + $0x834] sm:$0xf]
      %v2678 = vld [vmem:[%s1 + $0x838] sm:$0xf]
      %v2679 = vld [vmem:[%s1 + $0x83c] sm:$0xf]
      %v2680 = vld [vmem:[%s1 + $0x840] sm:$0xf]
      %v2681 = vld [vmem:[%s1 + $0x844] sm:$0xf]
      %v2682 = vld [vmem:[%s1 + $0x848] sm:$0xf]
      %v2683 = vld [vmem:[%s1 + $0x84c] sm:$0xf]
      %v2684 = vld [vmem:[%s1 + $0x850] sm:$0xf]
      %v2685 = vld [vmem:[%s1 + $0x854] sm:$0xf]
      %v2686 = vld [vmem:[%s1 + $0x858] sm:$0xf]
      %v2687 = vld [vmem:[%s1 + $0x85c] sm:$0xf]
      %v2688 = vld [vmem:[%s1 + $0x860] sm:$0xf]
      %v2689 = vld [vmem:[%s1 + $0x864] sm:$0xf]
      %v2690 = vld [vmem:[%s1 + $0x868] sm:$0xf]
      %v2691 = vld [vmem:[%s1 + $0x86c] sm:$0xf]
      %v2692 = vld [vmem:[%s1 + $0x870] sm:$0xf]
      %v2693 = vld [vmem:[%s1 + $0x874] sm:$0xf]
      %v2694 = vld [vmem:[%s1 + $0x878] sm:$0xf]
      %v2695 = vld [vmem:[%s1 + $0x87c] sm:$0xf]
      %v2696 = vld [vmem:[%s1 + $0x880] sm:$0xf]
      %v2697 = vld [vmem:[%s1 + $0x884] sm:$0xf]
      %v2698 = vld [vmem:[%s1 + $0x888] sm:$0xf]
      %v2699 = vld [vmem:[%s1 + $0x88c] sm:$0xf]
      %v2700 = vld [vmem:[%s1 + $0x890] sm:$0xf]
      %v2701 = vld [vmem:[%s1 + $0x894] sm:$0xf]
      %v2702 = vld [vmem:[%s1 + $0x898] sm:$0xf]
      %v2703 = vld [vmem:[%s1 + $0x89c] sm:$0xf]
      %v2704 = vld [vmem:[%s1 + $0x8a0] sm:$0xf]
      %v2705 = vld [vmem:[%s1 + $0x8a4] sm:$0xf]
      %v2706 = vld [vmem:[%s1 + $0x8a8] sm:$0xf]
      %v2707 = vld [vmem:[%s1 + $0x8ac] sm:$0xf]
      %v2708 = vld [vmem:[%s1 + $0x8b0] sm:$0xf]
      %v2709 = vld [vmem:[%s1 + $0x8b4] sm:$0xf]
      %v2710 = vld [vmem:[%s1 + $0x8b8] sm:$0xf]
      %v2711 = vld [vmem:[%s1 + $0x8bc] sm:$0xf]
      %v2712 = vld [vmem:[%s1 + $0x8c0] sm:$0xf]
      %v2713 = vld [vmem:[%s1 + $0x8c4] sm:$0xf]
      %v2714 = vld [vmem:[%s1 + $0x8c8] sm:$0xf]
      %v2715 = vld [vmem:[%s1 + $0x8cc] sm:$0xf]
      %v2716 = vld [vmem:[%s1 + $0x8d0] sm:$0xf]
      %v2717 = vld [vmem:[%s1 + $0x8d4] sm:$0xf]
      %v2718 = vld [vmem:[%s1 + $0x8d8] sm:$0xf]
      %v2719 = vld [vmem:[%s1 + $0x8dc] sm:$0xf]
      %v2720 = vld [vmem:[%s1 + $0x8e0] sm:$0xf]
      %v2721 = vld [vmem:[%s1 + $0x8e4] sm:$0xf]
      %v2722 = vld [vmem:[%s1 + $0x8e8] sm:$0xf]
      %v2723 = vld [vmem:[%s1 + $0x8ec] sm:$0xf]
      %v2724 = vld [vmem:[%s1 + $0x8f0] sm:$0xf]
      %v2725 = vld [vmem:[%s1 + $0x8f4] sm:$0xf]
      %v2726 = vld [vmem:[%s1 + $0x8f8] sm:$0xf]
      %v2727 = vld [vmem:[%s1 + $0x8fc] sm:$0xf]
      %v2728 = vld [vmem:[%s1 + $0x900] sm:$0xf]
      %v2729 = vld [vmem:[%s1 + $0x904] sm:$0xf]
      %v2730 = vld [vmem:[%s1 + $0x908] sm:$0xf]
      %v2731 = vld [vmem:[%s1 + $0x90c] sm:$0xf]
      %v2732 = vld [vmem:[%s1 + $0x910] sm:$0xf]
      %v2733 = vld [vmem:[%s1 + $0x914] sm:$0xf]
      %v2734 = vld [vmem:[%s1 + $0x918] sm:$0xf]
      %v2735 = vld [vmem:[%s1 + $0x91c] sm:$0xf]
      %v2736 = vld [vmem:[%s1 + $0x920] sm:$0xf]
      %v2737 = vld [vmem:[%s1 + $0x924] sm:$0xf]
      %v2738 = vld [vmem:[%s1 + $0x928] sm:$0xf]
      %v2739 = vld [vmem:[%s1 + $0x92c] sm:$0xf]
      %v2740 = vld [vmem:[%s1 + $0x930] sm:$0xf]
      %v2741 = vld [vmem:[%s1 + $0x934] sm:$0xf]
      %v2742 = vld [vmem:[%s1 + $0x938] sm:$0xf]
      %v2743 = vld [vmem:[%s1 + $0x93c] sm:$0xf]
      %v2744 = vld [vmem:[%s1 + $0x940] sm:$0xf]
      %v2745 = vld [vmem:[%s1 + $0x944] sm:$0xf]
      %v2746 = vld [vmem:[%s1 + $0x948] sm:$0xf]
      %v2747 = vld [vmem:[%s1 + $0x94c] sm:$0xf]
      %v2748 = vld [vmem:[%s1 + $0x950] sm:$0xf]
      %v2749 = vld [vmem:[%s1 + $0x954] sm:$0xf]
      %v2750 = vld [vmem:[%s1 + $0x958] sm:$0xf]
      %v2751 = vld [vmem:[%s1 + $0x95c] sm:$0xf]
      %v2752 = vld [vmem:[%s1 + $0x960] sm:$0xf]
      %v2753 = vld [vmem:[%s1 + $0x964] sm:$0xf]
      %v2754 = vld [vmem:[%s1 + $0x968] sm:$0xf]
      %v2755 = vld [vmem:[%s1 + $0x96c] sm:$0xf]
      %v2756 = vld [vmem:[%s1 + $0x970] sm:$0xf]
      %v2757 = vld [vmem:[%s1 + $0x974] sm:$0xf]
      %v2758 = vld [vmem:[%s1 + $0x978] sm:$0xf]
      %v2759 = vld [vmem:[%s1 + $0x97c] sm:$0xf]
      %v2760 = vld [vmem:[%s1 + $0x980] sm:$0xf]
      %v2761 = vld [vmem:[%s1 + $0x984] sm:$0xf]
      %v2762 = vld [vmem:[%s1 + $0x988] sm:$0xf]
      %v2763 = vld [vmem:[%s1 + $0x98c] sm:$0xf]
      %v2764 = vld [vmem:[%s1 + $0x990] sm:$0xf]
      %v2765 = vld [vmem:[%s1 + $0x994] sm:$0xf]
      %v2766 = vld [vmem:[%s1 + $0x998] sm:$0xf]
      %v2767 = vld [vmem:[%s1 + $0x99c] sm:$0xf]
      %v2768 = vld [vmem:[%s1 + $0x9a0] sm:$0xf]
      %v2769 = vld [vmem:[%s1 + $0x9a4] sm:$0xf]
      %v2770 = vld [vmem:[%s1 + $0x9a8] sm:$0xf]
      %v2771 = vld [vmem:[%s1 + $0x9ac] sm:$0xf]
      %v2772 = vld [vmem:[%s1 + $0x9b0] sm:$0xf]
      %v2773 = vld [vmem:[%s1 + $0x9b4] sm:$0xf]
      %v2774 = vld [vmem:[%s1 + $0x9b8] sm:$0xf]
      %v2775 = vld [vmem:[%s1 + $0x9bc] sm:$0xf]
      %v2776 = vld [vmem:[%s1 + $0x9c0] sm:$0xf]
      %v2777 = vld [vmem:[%s2] sm:$0x1]
      %v2779 = vperm.slane %v2777, 0
      %v3406 = vunpack.c.l.b16 %v2152
      %v3407 = vunpack.c.l.b16 %v2153
      %v3408 = vunpack.c.l.b16 %v2154
      %v3409 = vunpack.c.l.b16 %v2155
      %v3410 = vunpack.c.l.b16 %v2156
      %v3411 = vunpack.c.l.b16 %v2157
      %v3412 = vunpack.c.l.b16 %v2158
      %v3413 = vunpack.c.l.b16 %v2159
      %v3414 = vunpack.c.l.b16 %v2160
      %v3415 = vunpack.c.l.b16 %v2161
      %v3416 = vunpack.c.l.b16 %v2162
      %v3417 = vunpack.c.l.b16 %v2163
      %v3418 = vunpack.c.l.b16 %v2164
      %v3419 = vunpack.c.l.b16 %v2165
      %v3420 = vunpack.c.l.b16 %v2166
      %v3421 = vunpack.c.l.b16 %v2167
      %v3422 = vunpack.c.l.b16 %v2168
      %v3423 = vunpack.c.l.b16 %v2169
      %v3424 = vunpack.c.l.b16 %v2170
      %v3425 = vunpack.c.l.b16 %v2171
      %v3426 = vunpack.c.l.b16 %v2172
      %v3427 = vunpack.c.l.b16 %v2173
      %v3428 = vunpack.c.l.b16 %v2174
      %v3429 = vunpack.c.l.b16 %v2175
      %v3430 = vunpack.c.l.b16 %v2176
      %v3431 = vunpack.c.l.b16 %v2177
      %v3432 = vunpack.c.l.b16 %v2178
      %v3433 = vunpack.c.l.b16 %v2179
      %v3434 = vunpack.c.l.b16 %v2180
      %v3435 = vunpack.c.l.b16 %v2181
      %v3436 = vunpack.c.l.b16 %v2182
      %v3437 = vunpack.c.l.b16 %v2183
      %v3438 = vunpack.c.l.b16 %v2184
      %v3439 = vunpack.c.l.b16 %v2185
      %v3440 = vunpack.c.l.b16 %v2186
      %v3441 = vunpack.c.l.b16 %v2187
      %v3442 = vunpack.c.l.b16 %v2188
      %v3443 = vunpack.c.l.b16 %v2189
      %v3444 = vunpack.c.l.b16 %v2190
      %v3445 = vunpack.c.l.b16 %v2191
      %v3446 = vunpack.c.l.b16 %v2192
      %v3447 = vunpack.c.l.b16 %v2193
      %v3448 = vunpack.c.l.b16 %v2194
      %v3449 = vunpack.c.l.b16 %v2195
      %v3450 = vunpack.c.l.b16 %v2196
      %v3451 = vunpack.c.l.b16 %v2197
      %v3452 = vunpack.c.l.b16 %v2198
      %v3453 = vunpack.c.l.b16 %v2199
      %v3454 = vunpack.c.l.b16 %v2200
      %v3455 = vunpack.c.l.b16 %v2201
      %v3456 = vunpack.c.l.b16 %v2202
      %v3457 = vunpack.c.l.b16 %v2203
      %v3458 = vunpack.c.l.b16 %v2204
      %v3459 = vunpack.c.l.b16 %v2205
      %v3460 = vunpack.c.l.b16 %v2206
      %v3461 = vunpack.c.l.b16 %v2207
      %v3462 = vunpack.c.l.b16 %v2208
      %v3463 = vunpack.c.l.b16 %v2209
      %v3464 = vunpack.c.l.b16 %v2210
      %v3465 = vunpack.c.l.b16 %v2211
      %v3466 = vunpack.c.l.b16 %v2212
      %v3467 = vunpack.c.l.b16 %v2213
      %v3468 = vunpack.c.l.b16 %v2214
      %v3469 = vunpack.c.l.b16 %v2215
      %v3470 = vunpack.c.l.b16 %v2216
      %v3471 = vunpack.c.l.b16 %v2217
      %v3472 = vunpack.c.l.b16 %v2218
      %v3473 = vunpack.c.l.b16 %v2219
      %v3474 = vunpack.c.l.b16 %v2220
      %v3475 = vunpack.c.l.b16 %v2221
      %v3476 = vunpack.c.l.b16 %v2222
      %v3477 = vunpack.c.l.b16 %v2223
      %v3478 = vunpack.c.l.b16 %v2224
      %v3479 = vunpack.c.l.b16 %v2225
      %v3480 = vunpack.c.l.b16 %v2226
      %v3481 = vunpack.c.l.b16 %v2227
      %v3482 = vunpack.c.l.b16 %v2228
      %v3483 = vunpack.c.l.b16 %v2229
      %v3484 = vunpack.c.l.b16 %v2230
      %v3485 = vunpack.c.l.b16 %v2231
      %v3486 = vunpack.c.l.b16 %v2232
      %v3487 = vunpack.c.l.b16 %v2233
      %v3488 = vunpack.c.l.b16 %v2234
      %v3489 = vunpack.c.l.b16 %v2235
      %v3490 = vunpack.c.l.b16 %v2236
      %v3491 = vunpack.c.l.b16 %v2237
      %v3492 = vunpack.c.l.b16 %v2238
      %v3493 = vunpack.c.l.b16 %v2239
      %v3494 = vunpack.c.l.b16 %v2240
      %v3495 = vunpack.c.l.b16 %v2241
      %v3496 = vunpack.c.l.b16 %v2242
      %v3497 = vunpack.c.l.b16 %v2243
      %v3498 = vunpack.c.l.b16 %v2244
      %v3499 = vunpack.c.l.b16 %v2245
      %v3500 = vunpack.c.l.b16 %v2246
      %v3501 = vunpack.c.l.b16 %v2247
      %v3502 = vunpack.c.l.b16 %v2248
      %v3503 = vunpack.c.l.b16 %v2249
      %v3504 = vunpack.c.l.b16 %v2250
      %v3505 = vunpack.c.l.b16 %v2251
      %v3506 = vunpack.c.l.b16 %v2252
      %v3507 = vunpack.c.l.b16 %v2253
      %v3508 = vunpack.c.l.b16 %v2254
      %v3509 = vunpack.c.l.b16 %v2255
      %v3510 = vunpack.c.l.b16 %v2256
      %v3511 = vunpack.c.l.b16 %v2257
      %v3512 = vunpack.c.l.b16 %v2258
      %v3513 = vunpack.c.l.b16 %v2259
      %v3514 = vunpack.c.l.b16 %v2260
      %v3515 = vunpack.c.l.b16 %v2261
      %v3516 = vunpack.c.l.b16 %v2262
      %v3517 = vunpack.c.l.b16 %v2263
      %v3518 = vunpack.c.l.b16 %v2264
      %v3519 = vunpack.c.l.b16 %v2265
      %v3520 = vunpack.c.l.b16 %v2266
      %v3521 = vunpack.c.l.b16 %v2267
      %v3522 = vunpack.c.l.b16 %v2268
      %v3523 = vunpack.c.l.b16 %v2269
      %v3524 = vunpack.c.l.b16 %v2270
      %v3525 = vunpack.c.l.b16 %v2271
      %v3526 = vunpack.c.l.b16 %v2272
      %v3527 = vunpack.c.l.b16 %v2273
      %v3528 = vunpack.c.l.b16 %v2274
      %v3529 = vunpack.c.l.b16 %v2275
      %v3530 = vunpack.c.l.b16 %v2276
      %v3531 = vunpack.c.l.b16 %v2277
      %v3532 = vunpack.c.l.b16 %v2278
      %v3533 = vunpack.c.l.b16 %v2279
      %v3534 = vunpack.c.l.b16 %v2280
      %v3535 = vunpack.c.l.b16 %v2281
      %v3536 = vunpack.c.l.b16 %v2282
      %v3537 = vunpack.c.l.b16 %v2283
      %v3538 = vunpack.c.l.b16 %v2284
      %v3539 = vunpack.c.l.b16 %v2285
      %v3540 = vunpack.c.l.b16 %v2286
      %v3541 = vunpack.c.l.b16 %v2287
      %v3542 = vunpack.c.l.b16 %v2288
      %v3543 = vunpack.c.l.b16 %v2289
      %v3544 = vunpack.c.l.b16 %v2290
      %v3545 = vunpack.c.l.b16 %v2291
      %v3546 = vunpack.c.l.b16 %v2292
      %v3547 = vunpack.c.l.b16 %v2293
      %v3548 = vunpack.c.l.b16 %v2294
      %v3549 = vunpack.c.l.b16 %v2295
      %v3550 = vunpack.c.l.b16 %v2296
      %v3551 = vunpack.c.l.b16 %v2297
      %v3552 = vunpack.c.l.b16 %v2298
      %v3553 = vunpack.c.l.b16 %v2299
      %v3554 = vunpack.c.l.b16 %v2300
      %v3555 = vunpack.c.l.b16 %v2301
      %v3556 = vunpack.c.l.b16 %v2302
      %v3557 = vunpack.c.l.b16 %v2303
      %v3558 = vunpack.c.l.b16 %v2304
      %v3559 = vunpack.c.l.b16 %v2305
      %v3560 = vunpack.c.l.b16 %v2306
      %v3561 = vunpack.c.l.b16 %v2307
      %v3562 = vunpack.c.l.b16 %v2308
      %v3563 = vunpack.c.l.b16 %v2309
      %v3564 = vunpack.c.l.b16 %v2310
      %v3565 = vunpack.c.l.b16 %v2311
      %v3566 = vunpack.c.l.b16 %v2312
      %v3567 = vunpack.c.l.b16 %v2313
      %v3568 = vunpack.c.l.b16 %v2314
      %v3569 = vunpack.c.l.b16 %v2315
      %v3570 = vunpack.c.l.b16 %v2316
      %v3571 = vunpack.c.l.b16 %v2317
      %v3572 = vunpack.c.l.b16 %v2318
      %v3573 = vunpack.c.l.b16 %v2319
      %v3574 = vunpack.c.l.b16 %v2320
      %v3575 = vunpack.c.l.b16 %v2321
      %v3576 = vunpack.c.l.b16 %v2322
      %v3577 = vunpack.c.l.b16 %v2323
      %v3578 = vunpack.c.l.b16 %v2324
      %v3579 = vunpack.c.l.b16 %v2325
      %v3580 = vunpack.c.l.b16 %v2326
      %v3581 = vunpack.c.l.b16 %v2327
      %v3582 = vunpack.c.l.b16 %v2328
      %v3583 = vunpack.c.l.b16 %v2329
      %v3584 = vunpack.c.l.b16 %v2330
      %v3585 = vunpack.c.l.b16 %v2331
      %v3586 = vunpack.c.l.b16 %v2332
      %v3587 = vunpack.c.l.b16 %v2333
      %v3588 = vunpack.c.l.b16 %v2334
      %v3589 = vunpack.c.l.b16 %v2335
      %v3590 = vunpack.c.l.b16 %v2336
      %v3591 = vunpack.c.l.b16 %v2337
      %v3592 = vunpack.c.l.b16 %v2338
      %v3593 = vunpack.c.l.b16 %v2339
      %v3594 = vunpack.c.l.b16 %v2340
      %v3595 = vunpack.c.l.b16 %v2341
      %v3596 = vunpack.c.l.b16 %v2342
      %v3597 = vunpack.c.l.b16 %v2343
      %v3598 = vunpack.c.l.b16 %v2344
      %v3599 = vunpack.c.l.b16 %v2345
      %v3600 = vunpack.c.l.b16 %v2346
      %v3601 = vunpack.c.l.b16 %v2347
      %v3602 = vunpack.c.l.b16 %v2348
      %v3603 = vunpack.c.l.b16 %v2349
      %v3604 = vunpack.c.l.b16 %v2350
      %v3605 = vunpack.c.l.b16 %v2351
      %v3606 = vunpack.c.l.b16 %v2352
      %v3607 = vunpack.c.l.b16 %v2353
      %v3608 = vunpack.c.l.b16 %v2354
      %v3609 = vunpack.c.l.b16 %v2355
      %v3610 = vunpack.c.l.b16 %v2356
      %v3611 = vunpack.c.l.b16 %v2357
      %v3612 = vunpack.c.l.b16 %v2358
      %v3613 = vunpack.c.l.b16 %v2359
      %v3614 = vunpack.c.l.b16 %v2360
      %v3615 = vunpack.c.l.b16 %v2361
      %v3616 = vunpack.c.l.b16 %v2362
      %v3617 = vunpack.c.l.b16 %v2363
      %v3618 = vunpack.c.l.b16 %v2364
      %v3619 = vunpack.c.l.b16 %v2365
      %v3620 = vunpack.c.l.b16 %v2366
      %v3621 = vunpack.c.l.b16 %v2367
      %v3622 = vunpack.c.l.b16 %v2368
      %v3623 = vunpack.c.l.b16 %v2369
      %v3624 = vunpack.c.l.b16 %v2370
      %v3625 = vunpack.c.l.b16 %v2371
      %v3626 = vunpack.c.l.b16 %v2372
      %v3627 = vunpack.c.l.b16 %v2373
      %v3628 = vunpack.c.l.b16 %v2374
      %v3629 = vunpack.c.l.b16 %v2375
      %v3630 = vunpack.c.l.b16 %v2376
      %v3631 = vunpack.c.l.b16 %v2377
      %v3632 = vunpack.c.l.b16 %v2378
      %v3633 = vunpack.c.l.b16 %v2379
      %v3634 = vunpack.c.l.b16 %v2380
      %v3635 = vunpack.c.l.b16 %v2381
      %v3636 = vunpack.c.l.b16 %v2382
      %v3637 = vunpack.c.l.b16 %v2383
      %v3638 = vunpack.c.l.b16 %v2384
      %v3639 = vunpack.c.l.b16 %v2385
      %v3640 = vunpack.c.l.b16 %v2386
      %v3641 = vunpack.c.l.b16 %v2387
      %v3642 = vunpack.c.l.b16 %v2388
      %v3643 = vunpack.c.l.b16 %v2389
      %v3644 = vunpack.c.l.b16 %v2390
      %v3645 = vunpack.c.l.b16 %v2391
      %v3646 = vunpack.c.l.b16 %v2392
      %v3647 = vunpack.c.l.b16 %v2393
      %v3648 = vunpack.c.l.b16 %v2394
      %v3649 = vunpack.c.l.b16 %v2395
      %v3650 = vunpack.c.l.b16 %v2396
      %v3651 = vunpack.c.l.b16 %v2397
      %v3652 = vunpack.c.l.b16 %v2398
      %v3653 = vunpack.c.l.b16 %v2399
      %v3654 = vunpack.c.l.b16 %v2400
      %v3655 = vunpack.c.l.b16 %v2401
      %v3656 = vunpack.c.l.b16 %v2402
      %v3657 = vunpack.c.l.b16 %v2403
      %v3658 = vunpack.c.l.b16 %v2404
      %v3659 = vunpack.c.l.b16 %v2405
      %v3660 = vunpack.c.l.b16 %v2406
      %v3661 = vunpack.c.l.b16 %v2407
      %v3662 = vunpack.c.l.b16 %v2408
      %v3663 = vunpack.c.l.b16 %v2409
      %v3664 = vunpack.c.l.b16 %v2410
      %v3665 = vunpack.c.l.b16 %v2411
      %v3666 = vunpack.c.l.b16 %v2412
      %v3667 = vunpack.c.l.b16 %v2413
      %v3668 = vunpack.c.l.b16 %v2414
      %v3669 = vunpack.c.l.b16 %v2415
      %v3670 = vunpack.c.l.b16 %v2416
      %v3671 = vunpack.c.l.b16 %v2417
      %v3672 = vunpack.c.l.b16 %v2418
      %v3673 = vunpack.c.l.b16 %v2419
      %v3674 = vunpack.c.l.b16 %v2420
      %v3675 = vunpack.c.l.b16 %v2421
      %v3676 = vunpack.c.l.b16 %v2422
      %v3677 = vunpack.c.l.b16 %v2423
      %v3678 = vunpack.c.l.b16 %v2424
      %v3679 = vunpack.c.l.b16 %v2425
      %v3680 = vunpack.c.l.b16 %v2426
      %v3681 = vunpack.c.l.b16 %v2427
      %v3682 = vunpack.c.l.b16 %v2428
      %v3683 = vunpack.c.l.b16 %v2429
      %v3684 = vunpack.c.l.b16 %v2430
      %v3685 = vunpack.c.l.b16 %v2431
      %v3686 = vunpack.c.l.b16 %v2432
      %v3687 = vunpack.c.l.b16 %v2433
      %v3688 = vunpack.c.l.b16 %v2434
      %v3689 = vunpack.c.l.b16 %v2435
      %v3690 = vunpack.c.l.b16 %v2436
      %v3691 = vunpack.c.l.b16 %v2437
      %v3692 = vunpack.c.l.b16 %v2438
      %v3693 = vunpack.c.l.b16 %v2439
      %v3694 = vunpack.c.l.b16 %v2440
      %v3695 = vunpack.c.l.b16 %v2441
      %v3696 = vunpack.c.l.b16 %v2442
      %v3697 = vunpack.c.l.b16 %v2443
      %v3698 = vunpack.c.l.b16 %v2444
      %v3699 = vunpack.c.l.b16 %v2445
      %v3700 = vunpack.c.l.b16 %v2446
      %v3701 = vunpack.c.l.b16 %v2447
      %v3702 = vunpack.c.l.b16 %v2448
      %v3703 = vunpack.c.l.b16 %v2449
      %v3704 = vunpack.c.l.b16 %v2450
      %v3705 = vunpack.c.l.b16 %v2451
      %v3706 = vunpack.c.l.b16 %v2452
      %v3707 = vunpack.c.l.b16 %v2453
      %v3708 = vunpack.c.l.b16 %v2454
      %v3709 = vunpack.c.l.b16 %v2455
      %v3710 = vunpack.c.l.b16 %v2456
      %v3711 = vunpack.c.l.b16 %v2457
      %v3712 = vunpack.c.l.b16 %v2458
      %v3713 = vunpack.c.l.b16 %v2459
      %v3714 = vunpack.c.l.b16 %v2460
      %v3715 = vunpack.c.l.b16 %v2461
      %v3716 = vunpack.c.l.b16 %v2462
      %v3717 = vunpack.c.l.b16 %v2463
      %v3718 = vunpack.c.l.b16 %v2464
      %v3719 = vunpack.c.l.b16 %v2465
      %v3720 = vunpack.c.l.b16 %v2466
      %v3721 = vunpack.c.l.b16 %v2467
      %v3722 = vunpack.c.l.b16 %v2468
      %v3723 = vunpack.c.l.b16 %v2469
      %v3724 = vunpack.c.l.b16 %v2470
      %v3725 = vunpack.c.l.b16 %v2471
      %v3726 = vunpack.c.l.b16 %v2472
      %v3727 = vunpack.c.l.b16 %v2473
      %v3728 = vunpack.c.l.b16 %v2474
      %v3729 = vunpack.c.l.b16 %v2475
      %v3730 = vunpack.c.l.b16 %v2476
      %v3731 = vunpack.c.l.b16 %v2477
      %v3732 = vunpack.c.l.b16 %v2478
      %v3733 = vunpack.c.l.b16 %v2479
      %v3734 = vunpack.c.l.b16 %v2480
      %v3735 = vunpack.c.l.b16 %v2481
      %v3736 = vunpack.c.l.b16 %v2482
      %v3737 = vunpack.c.l.b16 %v2483
      %v3738 = vunpack.c.l.b16 %v2484
      %v3739 = vunpack.c.l.b16 %v2485
      %v3740 = vunpack.c.l.b16 %v2486
      %v3741 = vunpack.c.l.b16 %v2487
      %v3742 = vunpack.c.l.b16 %v2488
      %v3743 = vunpack.c.l.b16 %v2489
      %v3744 = vunpack.c.l.b16 %v2490
      %v3745 = vunpack.c.l.b16 %v2491
      %v3746 = vunpack.c.l.b16 %v2492
      %v3747 = vunpack.c.l.b16 %v2493
      %v3748 = vunpack.c.l.b16 %v2494
      %v3749 = vunpack.c.l.b16 %v2495
      %v3750 = vunpack.c.l.b16 %v2496
      %v3751 = vunpack.c.l.b16 %v2497
      %v3752 = vunpack.c.l.b16 %v2498
      %v3753 = vunpack.c.l.b16 %v2499
      %v3754 = vunpack.c.l.b16 %v2500
      %v3755 = vunpack.c.l.b16 %v2501
      %v3756 = vunpack.c.l.b16 %v2502
      %v3757 = vunpack.c.l.b16 %v2503
      %v3758 = vunpack.c.l.b16 %v2504
      %v3759 = vunpack.c.l.b16 %v2505
      %v3760 = vunpack.c.l.b16 %v2506
      %v3761 = vunpack.c.l.b16 %v2507
      %v3762 = vunpack.c.l.b16 %v2508
      %v3763 = vunpack.c.l.b16 %v2509
      %v3764 = vunpack.c.l.b16 %v2510
      %v3765 = vunpack.c.l.b16 %v2511
      %v3766 = vunpack.c.l.b16 %v2512
      %v3767 = vunpack.c.l.b16 %v2513
      %v3768 = vunpack.c.l.b16 %v2514
      %v3769 = vunpack.c.l.b16 %v2515
      %v3770 = vunpack.c.l.b16 %v2516
      %v3771 = vunpack.c.l.b16 %v2517
      %v3772 = vunpack.c.l.b16 %v2518
      %v3773 = vunpack.c.l.b16 %v2519
      %v3774 = vunpack.c.l.b16 %v2520
      %v3775 = vunpack.c.l.b16 %v2521
      %v3776 = vunpack.c.l.b16 %v2522
      %v3777 = vunpack.c.l.b16 %v2523
      %v3778 = vunpack.c.l.b16 %v2524
      %v3779 = vunpack.c.l.b16 %v2525
      %v3780 = vunpack.c.l.b16 %v2526
      %v3781 = vunpack.c.l.b16 %v2527
      %v3782 = vunpack.c.l.b16 %v2528
      %v3783 = vunpack.c.l.b16 %v2529
      %v3784 = vunpack.c.l.b16 %v2530
      %v3785 = vunpack.c.l.b16 %v2531
      %v3786 = vunpack.c.l.b16 %v2532
      %v3787 = vunpack.c.l.b16 %v2533
      %v3788 = vunpack.c.l.b16 %v2534
      %v3789 = vunpack.c.l.b16 %v2535
      %v3790 = vunpack.c.l.b16 %v2536
      %v3791 = vunpack.c.l.b16 %v2537
      %v3792 = vunpack.c.l.b16 %v2538
      %v3793 = vunpack.c.l.b16 %v2539
      %v3794 = vunpack.c.l.b16 %v2540
      %v3795 = vunpack.c.l.b16 %v2541
      %v3796 = vunpack.c.l.b16 %v2542
      %v3797 = vunpack.c.l.b16 %v2543
      %v3798 = vunpack.c.l.b16 %v2544
      %v3799 = vunpack.c.l.b16 %v2545
      %v3800 = vunpack.c.l.b16 %v2546
      %v3801 = vunpack.c.l.b16 %v2547
      %v3802 = vunpack.c.l.b16 %v2548
      %v3803 = vunpack.c.l.b16 %v2549
      %v3804 = vunpack.c.l.b16 %v2550
      %v3805 = vunpack.c.l.b16 %v2551
      %v3806 = vunpack.c.l.b16 %v2552
      %v3807 = vunpack.c.l.b16 %v2553
      %v3808 = vunpack.c.l.b16 %v2554
      %v3809 = vunpack.c.l.b16 %v2555
      %v3810 = vunpack.c.l.b16 %v2556
      %v3811 = vunpack.c.l.b16 %v2557
      %v3812 = vunpack.c.l.b16 %v2558
      %v3813 = vunpack.c.l.b16 %v2559
      %v3814 = vunpack.c.l.b16 %v2560
      %v3815 = vunpack.c.l.b16 %v2561
      %v3816 = vunpack.c.l.b16 %v2562
      %v3817 = vunpack.c.l.b16 %v2563
      %v3818 = vunpack.c.l.b16 %v2564
      %v3819 = vunpack.c.l.b16 %v2565
      %v3820 = vunpack.c.l.b16 %v2566
      %v3821 = vunpack.c.l.b16 %v2567
      %v3822 = vunpack.c.l.b16 %v2568
      %v3823 = vunpack.c.l.b16 %v2569
      %v3824 = vunpack.c.l.b16 %v2570
      %v3825 = vunpack.c.l.b16 %v2571
      %v3826 = vunpack.c.l.b16 %v2572
      %v3827 = vunpack.c.l.b16 %v2573
      %v3828 = vunpack.c.l.b16 %v2574
      %v3829 = vunpack.c.l.b16 %v2575
      %v3830 = vunpack.c.l.b16 %v2576
      %v3831 = vunpack.c.l.b16 %v2577
      %v3832 = vunpack.c.l.b16 %v2578
      %v3833 = vunpack.c.l.b16 %v2579
      %v3834 = vunpack.c.l.b16 %v2580
      %v3835 = vunpack.c.l.b16 %v2581
      %v3836 = vunpack.c.l.b16 %v2582
      %v3837 = vunpack.c.l.b16 %v2583
      %v3838 = vunpack.c.l.b16 %v2584
      %v3839 = vunpack.c.l.b16 %v2585
      %v3840 = vunpack.c.l.b16 %v2586
      %v3841 = vunpack.c.l.b16 %v2587
      %v3842 = vunpack.c.l.b16 %v2588
      %v3843 = vunpack.c.l.b16 %v2589
      %v3844 = vunpack.c.l.b16 %v2590
      %v3845 = vunpack.c.l.b16 %v2591
      %v3846 = vunpack.c.l.b16 %v2592
      %v3847 = vunpack.c.l.b16 %v2593
      %v3848 = vunpack.c.l.b16 %v2594
      %v3849 = vunpack.c.l.b16 %v2595
      %v3850 = vunpack.c.l.b16 %v2596
      %v3851 = vunpack.c.l.b16 %v2597
      %v3852 = vunpack.c.l.b16 %v2598
      %v3853 = vunpack.c.l.b16 %v2599
      %v3854 = vunpack.c.l.b16 %v2600
      %v3855 = vunpack.c.l.b16 %v2601
      %v3856 = vunpack.c.l.b16 %v2602
      %v3857 = vunpack.c.l.b16 %v2603
      %v3858 = vunpack.c.l.b16 %v2604
      %v3859 = vunpack.c.l.b16 %v2605
      %v3860 = vunpack.c.l.b16 %v2606
      %v3861 = vunpack.c.l.b16 %v2607
      %v3862 = vunpack.c.l.b16 %v2608
      %v3863 = vunpack.c.l.b16 %v2609
      %v3864 = vunpack.c.l.b16 %v2610
      %v3865 = vunpack.c.l.b16 %v2611
      %v3866 = vunpack.c.l.b16 %v2612
      %v3867 = vunpack.c.l.b16 %v2613
      %v3868 = vunpack.c.l.b16 %v2614
      %v3869 = vunpack.c.l.b16 %v2615
      %v3870 = vunpack.c.l.b16 %v2616
      %v3871 = vunpack.c.l.b16 %v2617
      %v3872 = vunpack.c.l.b16 %v2618
      %v3873 = vunpack.c.l.b16 %v2619
      %v3874 = vunpack.c.l.b16 %v2620
      %v3875 = vunpack.c.l.b16 %v2621
      %v3876 = vunpack.c.l.b16 %v2622
      %v3877 = vunpack.c.l.b16 %v2623
      %v3878 = vunpack.c.l.b16 %v2624
      %v3879 = vunpack.c.l.b16 %v2625
      %v3880 = vunpack.c.l.b16 %v2626
      %v3881 = vunpack.c.l.b16 %v2627
      %v3882 = vunpack.c.l.b16 %v2628
      %v3883 = vunpack.c.l.b16 %v2629
      %v3884 = vunpack.c.l.b16 %v2630
      %v3885 = vunpack.c.l.b16 %v2631
      %v3886 = vunpack.c.l.b16 %v2632
      %v3887 = vunpack.c.l.b16 %v2633
      %v3888 = vunpack.c.l.b16 %v2634
      %v3889 = vunpack.c.l.b16 %v2635
      %v3890 = vunpack.c.l.b16 %v2636
      %v3891 = vunpack.c.l.b16 %v2637
      %v3892 = vunpack.c.l.b16 %v2638
      %v3893 = vunpack.c.l.b16 %v2639
      %v3894 = vunpack.c.l.b16 %v2640
      %v3895 = vunpack.c.l.b16 %v2641
      %v3896 = vunpack.c.l.b16 %v2642
      %v3897 = vunpack.c.l.b16 %v2643
      %v3898 = vunpack.c.l.b16 %v2644
      %v3899 = vunpack.c.l.b16 %v2645
      %v3900 = vunpack.c.l.b16 %v2646
      %v3901 = vunpack.c.l.b16 %v2647
      %v3902 = vunpack.c.l.b16 %v2648
      %v3903 = vunpack.c.l.b16 %v2649
      %v3904 = vunpack.c.l.b16 %v2650
      %v3905 = vunpack.c.l.b16 %v2651
      %v3906 = vunpack.c.l.b16 %v2652
      %v3907 = vunpack.c.l.b16 %v2653
      %v3908 = vunpack.c.l.b16 %v2654
      %v3909 = vunpack.c.l.b16 %v2655
      %v3910 = vunpack.c.l.b16 %v2656
      %v3911 = vunpack.c.l.b16 %v2657
      %v3912 = vunpack.c.l.b16 %v2658
      %v3913 = vunpack.c.l.b16 %v2659
      %v3914 = vunpack.c.l.b16 %v2660
      %v3915 = vunpack.c.l.b16 %v2661
      %v3916 = vunpack.c.l.b16 %v2662
      %v3917 = vunpack.c.l.b16 %v2663
      %v3918 = vunpack.c.l.b16 %v2664
      %v3919 = vunpack.c.l.b16 %v2665
      %v3920 = vunpack.c.l.b16 %v2666
      %v3921 = vunpack.c.l.b16 %v2667
      %v3922 = vunpack.c.l.b16 %v2668
      %v3923 = vunpack.c.l.b16 %v2669
      %v3924 = vunpack.c.l.b16 %v2670
      %v3925 = vunpack.c.l.b16 %v2671
      %v3926 = vunpack.c.l.b16 %v2672
      %v3927 = vunpack.c.l.b16 %v2673
      %v3928 = vunpack.c.l.b16 %v2674
      %v3929 = vunpack.c.l.b16 %v2675
      %v3930 = vunpack.c.l.b16 %v2676
      %v3931 = vunpack.c.l.b16 %v2677
      %v3932 = vunpack.c.l.b16 %v2678
      %v3933 = vunpack.c.l.b16 %v2679
      %v3934 = vunpack.c.l.b16 %v2680
      %v3935 = vunpack.c.l.b16 %v2681
      %v3936 = vunpack.c.l.b16 %v2682
      %v3937 = vunpack.c.l.b16 %v2683
      %v3938 = vunpack.c.l.b16 %v2684
      %v3939 = vunpack.c.l.b16 %v2685
      %v3940 = vunpack.c.l.b16 %v2686
      %v3941 = vunpack.c.l.b16 %v2687
      %v3942 = vunpack.c.l.b16 %v2688
      %v3943 = vunpack.c.l.b16 %v2689
      %v3944 = vunpack.c.l.b16 %v2690
      %v3945 = vunpack.c.l.b16 %v2691
      %v3946 = vunpack.c.l.b16 %v2692
      %v3947 = vunpack.c.l.b16 %v2693
      %v3948 = vunpack.c.l.b16 %v2694
      %v3949 = vunpack.c.l.b16 %v2695
      %v3950 = vunpack.c.l.b16 %v2696
      %v3951 = vunpack.c.l.b16 %v2697
      %v3952 = vunpack.c.l.b16 %v2698
      %v3953 = vunpack.c.l.b16 %v2699
      %v3954 = vunpack.c.l.b16 %v2700
      %v3955 = vunpack.c.l.b16 %v2701
      %v3956 = vunpack.c.l.b16 %v2702
      %v3957 = vunpack.c.l.b16 %v2703
      %v3958 = vunpack.c.l.b16 %v2704
      %v3959 = vunpack.c.l.b16 %v2705
      %v3960 = vunpack.c.l.b16 %v2706
      %v3961 = vunpack.c.l.b16 %v2707
      %v3962 = vunpack.c.l.b16 %v2708
      %v3963 = vunpack.c.l.b16 %v2709
      %v3964 = vunpack.c.l.b16 %v2710
      %v3965 = vunpack.c.l.b16 %v2711
      %v3966 = vunpack.c.l.b16 %v2712
      %v3967 = vunpack.c.l.b16 %v2713
      %v3968 = vunpack.c.l.b16 %v2714
      %v3969 = vunpack.c.l.b16 %v2715
      %v3970 = vunpack.c.l.b16 %v2716
      %v3971 = vunpack.c.l.b16 %v2717
      %v3972 = vunpack.c.l.b16 %v2718
      %v3973 = vunpack.c.l.b16 %v2719
      %v3974 = vunpack.c.l.b16 %v2720
      %v3975 = vunpack.c.l.b16 %v2721
      %v3976 = vunpack.c.l.b16 %v2722
      %v3977 = vunpack.c.l.b16 %v2723
      %v3978 = vunpack.c.l.b16 %v2724
      %v3979 = vunpack.c.l.b16 %v2725
      %v3980 = vunpack.c.l.b16 %v2726
      %v3981 = vunpack.c.l.b16 %v2727
      %v3982 = vunpack.c.l.b16 %v2728
      %v3983 = vunpack.c.l.b16 %v2729
      %v3984 = vunpack.c.l.b16 %v2730
      %v3985 = vunpack.c.l.b16 %v2731
      %v3986 = vunpack.c.l.b16 %v2732
      %v3987 = vunpack.c.l.b16 %v2733
      %v3988 = vunpack.c.l.b16 %v2734
      %v3989 = vunpack.c.l.b16 %v2735
      %v3990 = vunpack.c.l.b16 %v2736
      %v3991 = vunpack.c.l.b16 %v2737
      %v3992 = vunpack.c.l.b16 %v2738
      %v3993 = vunpack.c.l.b16 %v2739
      %v3994 = vunpack.c.l.b16 %v2740
      %v3995 = vunpack.c.l.b16 %v2741
      %v3996 = vunpack.c.l.b16 %v2742
      %v3997 = vunpack.c.l.b16 %v2743
      %v3998 = vunpack.c.l.b16 %v2744
      %v3999 = vunpack.c.l.b16 %v2745
      %v4000 = vunpack.c.l.b16 %v2746
      %v4001 = vunpack.c.l.b16 %v2747
      %v4002 = vunpack.c.l.b16 %v2748
      %v4003 = vunpack.c.l.b16 %v2749
      %v4004 = vunpack.c.l.b16 %v2750
      %v4005 = vunpack.c.l.b16 %v2751
      %v4006 = vunpack.c.l.b16 %v2752
      %v4007 = vunpack.c.l.b16 %v2753
      %v4008 = vunpack.c.l.b16 %v2754
      %v4009 = vunpack.c.l.b16 %v2755
      %v4010 = vunpack.c.l.b16 %v2756
      %v4011 = vunpack.c.l.b16 %v2757
      %v4012 = vunpack.c.l.b16 %v2758
      %v4013 = vunpack.c.l.b16 %v2759
      %v4014 = vunpack.c.l.b16 %v2760
      %v4015 = vunpack.c.l.b16 %v2761
      %v4016 = vunpack.c.l.b16 %v2762
      %v4017 = vunpack.c.l.b16 %v2763
      %v4018 = vunpack.c.l.b16 %v2764
      %v4019 = vunpack.c.l.b16 %v2765
      %v4020 = vunpack.c.l.b16 %v2766
      %v4021 = vunpack.c.l.b16 %v2767
      %v4022 = vunpack.c.l.b16 %v2768
      %v4023 = vunpack.c.l.b16 %v2769
      %v4024 = vunpack.c.l.b16 %v2770
      %v4025 = vunpack.c.l.b16 %v2771
      %v4026 = vunpack.c.l.b16 %v2772
      %v4027 = vunpack.c.l.b16 %v2773
      %v4028 = vunpack.c.l.b16 %v2774
      %v4029 = vunpack.c.l.b16 %v2775
      %v4030 = vunpack.c.l.b16 %v2776
      %v4031 = vpack.c.b16 %v3407, %v3406
      %v4032 = vpack.c.b16 %v3409, %v3408
      %v4033 = vpack.c.b16 %v3411, %v3410
      %v4034 = vpack.c.b16 %v3413, %v3412
      %v4035 = vpack.c.b16 %v3415, %v3414
      %v4036 = vpack.c.b16 %v3417, %v3416
      %v4037 = vpack.c.b16 %v3419, %v3418
      %v4038 = vpack.c.b16 %v3421, %v3420
      %v4039 = vpack.c.b16 %v3423, %v3422
      %v4040 = vpack.c.b16 %v3425, %v3424
      %v4041 = vpack.c.b16 %v3427, %v3426
      %v4042 = vpack.c.b16 %v3429, %v3428
      %v4043 = vpack.c.b16 %v3431, %v3430
      %v4044 = vpack.c.b16 %v3433, %v3432
      %v4045 = vpack.c.b16 %v3435, %v3434
      %v4046 = vpack.c.b16 %v3437, %v3436
      %v4047 = vpack.c.b16 %v3439, %v3438
      %v4048 = vpack.c.b16 %v3441, %v3440
      %v4049 = vpack.c.b16 %v3443, %v3442
      %v4050 = vpack.c.b16 %v3445, %v3444
      %v4051 = vpack.c.b16 %v3447, %v3446
      %v4052 = vpack.c.b16 %v3449, %v3448
      %v4053 = vpack.c.b16 %v3451, %v3450
      %v4054 = vpack.c.b16 %v3453, %v3452
      %v4055 = vpack.c.b16 %v3455, %v3454
      %v4056 = vpack.c.b16 %v3457, %v3456
      %v4057 = vpack.c.b16 %v3459, %v3458
      %v4058 = vpack.c.b16 %v3461, %v3460
      %v4059 = vpack.c.b16 %v3463, %v3462
      %v4060 = vpack.c.b16 %v3465, %v3464
      %v4061 = vpack.c.b16 %v3467, %v3466
      %v4062 = vpack.c.b16 %v3469, %v3468
      %v4063 = vpack.c.b16 %v3471, %v3470
      %v4064 = vpack.c.b16 %v3473, %v3472
      %v4065 = vpack.c.b16 %v3475, %v3474
      %v4066 = vpack.c.b16 %v3477, %v3476
      %v4067 = vpack.c.b16 %v3479, %v3478
      %v4068 = vpack.c.b16 %v3481, %v3480
      %v4069 = vpack.c.b16 %v3483, %v3482
      %v4070 = vpack.c.b16 %v3485, %v3484
      %v4071 = vpack.c.b16 %v3487, %v3486
      %v4072 = vpack.c.b16 %v3489, %v3488
      %v4073 = vpack.c.b16 %v3491, %v3490
      %v4074 = vpack.c.b16 %v3493, %v3492
      %v4075 = vpack.c.b16 %v3495, %v3494
      %v4076 = vpack.c.b16 %v3497, %v3496
      %v4077 = vpack.c.b16 %v3499, %v3498
      %v4078 = vpack.c.b16 %v3501, %v3500
      %v4079 = vpack.c.b16 %v3503, %v3502
      %v4080 = vpack.c.b16 %v3505, %v3504
      %v4081 = vpack.c.b16 %v3507, %v3506
      %v4082 = vpack.c.b16 %v3509, %v3508
      %v4083 = vpack.c.b16 %v3511, %v3510
      %v4084 = vpack.c.b16 %v3513, %v3512
      %v4085 = vpack.c.b16 %v3515, %v3514
      %v4086 = vpack.c.b16 %v3517, %v3516
      %v4087 = vpack.c.b16 %v3519, %v3518
      %v4088 = vpack.c.b16 %v3521, %v3520
      %v4089 = vpack.c.b16 %v3523, %v3522
      %v4090 = vpack.c.b16 %v3525, %v3524
      %v4091 = vpack.c.b16 %v3527, %v3526
      %v4092 = vpack.c.b16 %v3529, %v3528
      %v4093 = vpack.c.b16 %v3531, %v3530
      %v4094 = vpack.c.b16 %v3533, %v3532
      %v4095 = vpack.c.b16 %v3535, %v3534
      %v4096 = vpack.c.b16 %v3537, %v3536
      %v4097 = vpack.c.b16 %v3539, %v3538
      %v4098 = vpack.c.b16 %v3541, %v3540
      %v4099 = vpack.c.b16 %v3543, %v3542
      %v4100 = vpack.c.b16 %v3545, %v3544
      %v4101 = vpack.c.b16 %v3547, %v3546
      %v4102 = vpack.c.b16 %v3549, %v3548
      %v4103 = vpack.c.b16 %v3551, %v3550
      %v4104 = vpack.c.b16 %v3553, %v3552
      %v4105 = vpack.c.b16 %v3555, %v3554
      %v4106 = vpack.c.b16 %v3557, %v3556
      %v4107 = vpack.c.b16 %v3559, %v3558
      %v4108 = vpack.c.b16 %v3561, %v3560
      %v4109 = vpack.c.b16 %v3563, %v3562
      %v4110 = vpack.c.b16 %v3565, %v3564
      %v4111 = vpack.c.b16 %v3567, %v3566
      %v4112 = vpack.c.b16 %v3569, %v3568
      %v4113 = vpack.c.b16 %v3571, %v3570
      %v4114 = vpack.c.b16 %v3573, %v3572
      %v4115 = vpack.c.b16 %v3575, %v3574
      %v4116 = vpack.c.b16 %v3577, %v3576
      %v4117 = vpack.c.b16 %v3579, %v3578
      %v4118 = vpack.c.b16 %v3581, %v3580
      %v4119 = vpack.c.b16 %v3583, %v3582
      %v4120 = vpack.c.b16 %v3585, %v3584
      %v4121 = vpack.c.b16 %v3587, %v3586
      %v4122 = vpack.c.b16 %v3589, %v3588
      %v4123 = vpack.c.b16 %v3591, %v3590
      %v4124 = vpack.c.b16 %v3593, %v3592
      %v4125 = vpack.c.b16 %v3595, %v3594
      %v4126 = vpack.c.b16 %v3597, %v3596
      %v4127 = vpack.c.b16 %v3599, %v3598
      %v4128 = vpack.c.b16 %v3601, %v3600
      %v4129 = vpack.c.b16 %v3603, %v3602
      %v4130 = vpack.c.b16 %v3605, %v3604
      %v4131 = vpack.c.b16 %v3607, %v3606
      %v4132 = vpack.c.b16 %v3609, %v3608
      %v4133 = vpack.c.b16 %v3611, %v3610
      %v4134 = vpack.c.b16 %v3613, %v3612
      %v4135 = vpack.c.b16 %v3615, %v3614
      %v4136 = vpack.c.b16 %v3617, %v3616
      %v4137 = vpack.c.b16 %v3619, %v3618
      %v4138 = vpack.c.b16 %v3621, %v3620
      %v4139 = vpack.c.b16 %v3623, %v3622
      %v4140 = vpack.c.b16 %v3625, %v3624
      %v4141 = vpack.c.b16 %v3627, %v3626
      %v4142 = vpack.c.b16 %v3629, %v3628
      %v4143 = vpack.c.b16 %v3631, %v3630
      %v4144 = vpack.c.b16 %v3633, %v3632
      %v4145 = vpack.c.b16 %v3635, %v3634
      %v4146 = vpack.c.b16 %v3637, %v3636
      %v4147 = vpack.c.b16 %v3639, %v3638
      %v4148 = vpack.c.b16 %v3641, %v3640
      %v4149 = vpack.c.b16 %v3643, %v3642
      %v4150 = vpack.c.b16 %v3645, %v3644
      %v4151 = vpack.c.b16 %v3647, %v3646
      %v4152 = vpack.c.b16 %v3649, %v3648
      %v4153 = vpack.c.b16 %v3651, %v3650
      %v4154 = vpack.c.b16 %v3653, %v3652
      %v4155 = vpack.c.b16 %v3655, %v3654
      %v4156 = vpack.c.b16 %v3657, %v3656
      %v4157 = vpack.c.b16 %v3659, %v3658
      %v4158 = vpack.c.b16 %v3661, %v3660
      %v4159 = vpack.c.b16 %v3663, %v3662
      %v4160 = vpack.c.b16 %v3665, %v3664
      %v4161 = vpack.c.b16 %v3667, %v3666
      %v4162 = vpack.c.b16 %v3669, %v3668
      %v4163 = vpack.c.b16 %v3671, %v3670
      %v4164 = vpack.c.b16 %v3673, %v3672
      %v4165 = vpack.c.b16 %v3675, %v3674
      %v4166 = vpack.c.b16 %v3677, %v3676
      %v4167 = vpack.c.b16 %v3679, %v3678
      %v4168 = vpack.c.b16 %v3681, %v3680
      %v4169 = vpack.c.b16 %v3683, %v3682
      %v4170 = vpack.c.b16 %v3685, %v3684
      %v4171 = vpack.c.b16 %v3687, %v3686
      %v4172 = vpack.c.b16 %v3689, %v3688
      %v4173 = vpack.c.b16 %v3691, %v3690
      %v4174 = vpack.c.b16 %v3693, %v3692
      %v4175 = vpack.c.b16 %v3695, %v3694
      %v4176 = vpack.c.b16 %v3697, %v3696
      %v4177 = vpack.c.b16 %v3699, %v3698
      %v4178 = vpack.c.b16 %v3701, %v3700
      %v4179 = vpack.c.b16 %v3703, %v3702
      %v4180 = vpack.c.b16 %v3705, %v3704
      %v4181 = vpack.c.b16 %v3707, %v3706
      %v4182 = vpack.c.b16 %v3709, %v3708
      %v4183 = vpack.c.b16 %v3711, %v3710
      %v4184 = vpack.c.b16 %v3713, %v3712
      %v4185 = vpack.c.b16 %v3715, %v3714
      %v4186 = vpack.c.b16 %v3717, %v3716
      %v4187 = vpack.c.b16 %v3719, %v3718
      %v4188 = vpack.c.b16 %v3721, %v3720
      %v4189 = vpack.c.b16 %v3723, %v3722
      %v4190 = vpack.c.b16 %v3725, %v3724
      %v4191 = vpack.c.b16 %v3727, %v3726
      %v4192 = vpack.c.b16 %v3729, %v3728
      %v4193 = vpack.c.b16 %v3731, %v3730
      %v4194 = vpack.c.b16 %v3733, %v3732
      %v4195 = vpack.c.b16 %v3735, %v3734
      %v4196 = vpack.c.b16 %v3737, %v3736
      %v4197 = vpack.c.b16 %v3739, %v3738
      %v4198 = vpack.c.b16 %v3741, %v3740
      %v4199 = vpack.c.b16 %v3743, %v3742
      %v4200 = vpack.c.b16 %v3745, %v3744
      %v4201 = vpack.c.b16 %v3747, %v3746
      %v4202 = vpack.c.b16 %v3749, %v3748
      %v4203 = vpack.c.b16 %v3751, %v3750
      %v4204 = vpack.c.b16 %v3753, %v3752
      %v4205 = vpack.c.b16 %v3755, %v3754
      %v4206 = vpack.c.b16 %v3757, %v3756
      %v4207 = vpack.c.b16 %v3759, %v3758
      %v4208 = vpack.c.b16 %v3761, %v3760
      %v4209 = vpack.c.b16 %v3763, %v3762
      %v4210 = vpack.c.b16 %v3765, %v3764
      %v4211 = vpack.c.b16 %v3767, %v3766
      %v4212 = vpack.c.b16 %v3769, %v3768
      %v4213 = vpack.c.b16 %v3771, %v3770
      %v4214 = vpack.c.b16 %v3773, %v3772
      %v4215 = vpack.c.b16 %v3775, %v3774
      %v4216 = vpack.c.b16 %v3777, %v3776
      %v4217 = vpack.c.b16 %v3779, %v3778
      %v4218 = vpack.c.b16 %v3781, %v3780
      %v4219 = vpack.c.b16 %v3783, %v3782
      %v4220 = vpack.c.b16 %v3785, %v3784
      %v4221 = vpack.c.b16 %v3787, %v3786
      %v4222 = vpack.c.b16 %v3789, %v3788
      %v4223 = vpack.c.b16 %v3791, %v3790
      %v4224 = vpack.c.b16 %v3793, %v3792
      %v4225 = vpack.c.b16 %v3795, %v3794
      %v4226 = vpack.c.b16 %v3797, %v3796
      %v4227 = vpack.c.b16 %v3799, %v3798
      %v4228 = vpack.c.b16 %v3801, %v3800
      %v4229 = vpack.c.b16 %v3803, %v3802
      %v4230 = vpack.c.b16 %v3805, %v3804
      %v4231 = vpack.c.b16 %v3807, %v3806
      %v4232 = vpack.c.b16 %v3809, %v3808
      %v4233 = vpack.c.b16 %v3811, %v3810
      %v4234 = vpack.c.b16 %v3813, %v3812
      %v4235 = vpack.c.b16 %v3815, %v3814
      %v4236 = vpack.c.b16 %v3817, %v3816
      %v4237 = vpack.c.b16 %v3819, %v3818
      %v4238 = vpack.c.b16 %v3821, %v3820
      %v4239 = vpack.c.b16 %v3823, %v3822
      %v4240 = vpack.c.b16 %v3825, %v3824
      %v4241 = vpack.c.b16 %v3827, %v3826
      %v4242 = vpack.c.b16 %v3829, %v3828
      %v4243 = vpack.c.b16 %v3831, %v3830
      %v4244 = vpack.c.b16 %v3833, %v3832
      %v4245 = vpack.c.b16 %v3835, %v3834
      %v4246 = vpack.c.b16 %v3837, %v3836
      %v4247 = vpack.c.b16 %v3839, %v3838
      %v4248 = vpack.c.b16 %v3841, %v3840
      %v4249 = vpack.c.b16 %v3843, %v3842
      %v4250 = vpack.c.b16 %v3845, %v3844
      %v4251 = vpack.c.b16 %v3847, %v3846
      %v4252 = vpack.c.b16 %v3849, %v3848
      %v4253 = vpack.c.b16 %v3851, %v3850
      %v4254 = vpack.c.b16 %v3853, %v3852
      %v4255 = vpack.c.b16 %v3855, %v3854
      %v4256 = vpack.c.b16 %v3857, %v3856
      %v4257 = vpack.c.b16 %v3859, %v3858
      %v4258 = vpack.c.b16 %v3861, %v3860
      %v4259 = vpack.c.b16 %v3863, %v3862
      %v4260 = vpack.c.b16 %v3865, %v3864
      %v4261 = vpack.c.b16 %v3867, %v3866
      %v4262 = vpack.c.b16 %v3869, %v3868
      %v4263 = vpack.c.b16 %v3871, %v3870
      %v4264 = vpack.c.b16 %v3873, %v3872
      %v4265 = vpack.c.b16 %v3875, %v3874
      %v4266 = vpack.c.b16 %v3877, %v3876
      %v4267 = vpack.c.b16 %v3879, %v3878
      %v4268 = vpack.c.b16 %v3881, %v3880
      %v4269 = vpack.c.b16 %v3883, %v3882
      %v4270 = vpack.c.b16 %v3885, %v3884
      %v4271 = vpack.c.b16 %v3887, %v3886
      %v4272 = vpack.c.b16 %v3889, %v3888
      %v4273 = vpack.c.b16 %v3891, %v3890
      %v4274 = vpack.c.b16 %v3893, %v3892
      %v4275 = vpack.c.b16 %v3895, %v3894
      %v4276 = vpack.c.b16 %v3897, %v3896
      %v4277 = vpack.c.b16 %v3899, %v3898
      %v4278 = vpack.c.b16 %v3901, %v3900
      %v4279 = vpack.c.b16 %v3903, %v3902
      %v4280 = vpack.c.b16 %v3905, %v3904
      %v4281 = vpack.c.b16 %v3907, %v3906
      %v4282 = vpack.c.b16 %v3909, %v3908
      %v4283 = vpack.c.b16 %v3911, %v3910
      %v4284 = vpack.c.b16 %v3913, %v3912
      %v4285 = vpack.c.b16 %v3915, %v3914
      %v4286 = vpack.c.b16 %v3917, %v3916
      %v4287 = vpack.c.b16 %v3919, %v3918
      %v4288 = vpack.c.b16 %v3921, %v3920
      %v4289 = vpack.c.b16 %v3923, %v3922
      %v4290 = vpack.c.b16 %v3925, %v3924
      %v4291 = vpack.c.b16 %v3927, %v3926
      %v4292 = vpack.c.b16 %v3929, %v3928
      %v4293 = vpack.c.b16 %v3931, %v3930
      %v4294 = vpack.c.b16 %v3933, %v3932
      %v4295 = vpack.c.b16 %v3935, %v3934
      %v4296 = vpack.c.b16 %v3937, %v3936
      %v4297 = vpack.c.b16 %v3939, %v3938
      %v4298 = vpack.c.b16 %v3941, %v3940
      %v4299 = vpack.c.b16 %v3943, %v3942
      %v4300 = vpack.c.b16 %v3945, %v3944
      %v4301 = vpack.c.b16 %v3947, %v3946
      %v4302 = vpack.c.b16 %v3949, %v3948
      %v4303 = vpack.c.b16 %v3951, %v3950
      %v4304 = vpack.c.b16 %v3953, %v3952
      %v4305 = vpack.c.b16 %v3955, %v3954
      %v4306 = vpack.c.b16 %v3957, %v3956
      %v4307 = vpack.c.b16 %v3959, %v3958
      %v4308 = vpack.c.b16 %v3961, %v3960
      %v4309 = vpack.c.b16 %v3963, %v3962
      %v4310 = vpack.c.b16 %v3965, %v3964
      %v4311 = vpack.c.b16 %v3967, %v3966
      %v4312 = vpack.c.b16 %v3969, %v3968
      %v4313 = vpack.c.b16 %v3971, %v3970
      %v4314 = vpack.c.b16 %v3973, %v3972
      %v4315 = vpack.c.b16 %v3975, %v3974
      %v4316 = vpack.c.b16 %v3977, %v3976
      %v4317 = vpack.c.b16 %v3979, %v3978
      %v4318 = vpack.c.b16 %v3981, %v3980
      %v4319 = vpack.c.b16 %v3983, %v3982
      %v4320 = vpack.c.b16 %v3985, %v3984
      %v4321 = vpack.c.b16 %v3987, %v3986
      %v4322 = vpack.c.b16 %v3989, %v3988
      %v4323 = vpack.c.b16 %v3991, %v3990
      %v4324 = vpack.c.b16 %v3993, %v3992
      %v4325 = vpack.c.b16 %v3995, %v3994
      %v4326 = vpack.c.b16 %v3997, %v3996
      %v4327 = vpack.c.b16 %v3999, %v3998
      %v4328 = vpack.c.b16 %v4001, %v4000
      %v4329 = vpack.c.b16 %v4003, %v4002
      %v4330 = vpack.c.b16 %v4005, %v4004
      %v4331 = vpack.c.b16 %v4007, %v4006
      %v4332 = vpack.c.b16 %v4009, %v4008
      %v4333 = vpack.c.b16 %v4011, %v4010
      %v4334 = vpack.c.b16 %v4013, %v4012
      %v4335 = vpack.c.b16 %v4015, %v4014
      %v4336 = vpack.c.b16 %v4017, %v4016
      %v4337 = vpack.c.b16 %v4019, %v4018
      %v4338 = vpack.c.b16 %v4021, %v4020
      %v4339 = vpack.c.b16 %v4023, %v4022
      %v4340 = vpack.c.b16 %v4025, %v4024
      %v4341 = vpack.c.b16 %v4027, %v4026
      %v4342 = vpack.c.b16 %v4029, %v4028
      %v4343 = vpack.c.b16 %v4030, %v4030
      %vm4656 = vcmask 64512
      %v4658 = vsel %vm4656, %v1551, 0
      %v4661 = vsel %vm4656, %v1591, 0
      %v4664 = vsel %vm4656, %v1631, 0
      %v4667 = vsel %vm4656, %v1671, 0
      %v4670 = vsel %vm4656, %v1711, 0
      %v4673 = vsel %vm4656, %v1751, 0
      %v4676 = vsel %vm4656, %v1791, 0
      %v4679 = vsel %vm4656, %v1831, 0
      %v4682 = vsel %vm4656, %v1871, 0
      %v4685 = vsel %vm4656, %v1911, 0
      %v4688 = vsel %vm4656, %v1951, 0
      %v4691 = vsel %vm4656, %v1991, 0
      %v4694 = vsel %vm4656, %v2031, 0
      %v4697 = vsel %vm4656, %v2071, 0
      %v4700 = vsel %vm4656, %v2111, 0
      %v4703 = vsel %vm4656, %v2151, 0
      %vm4705 = vcmask 1043456
      %v4707 = vsel %vm4705, %v4343, 0
      %4709 = vmatpush.bf16.msra.mxu0 %v4038
      %4710 = vmatpush.bf16.msra.mxu0 %v4037
      %4711 = vmatpush.bf16.msra.mxu0 %v4036
      %4712 = vmatpush.bf16.msra.mxu0 %v4035
      %4713 = vmatpush.bf16.msra.mxu0 %v4034
      %4714 = vmatpush.bf16.msra.mxu0 %v4033
      %4715 = vmatpush.bf16.msra.mxu0 %v4032
      %4716 = vmatpush.bf16.msra.mxu0 %v4031
      %4717 = vmatmul.bf16.gmra.mxu0 %v1512
      %v4718 = vpop.f32.mrf.mxu0
      %v4719 = vadd.f32 %v2779, %v4718
      %v4720 = vpop.f32.mrf.mxu0
      %v4721 = vadd.f32 %v2779, %v4720
      %4722 = vmatmul.bf16.gmra.mxu0 %v1552
      %v4723 = vpop.f32.mrf.mxu0
      %v4724 = vadd.f32 %v2779, %v4723
      %v4725 = vpop.f32.mrf.mxu0
      %v4726 = vadd.f32 %v2779, %v4725
      %4727 = vmatmul.bf16.gmra.mxu0 %v1592
      %v4728 = vpop.f32.mrf.mxu0
      %v4729 = vadd.f32 %v2779, %v4728
      %v4730 = vpop.f32.mrf.mxu0
      %v4731 = vadd.f32 %v2779, %v4730
      %4732 = vmatmul.bf16.gmra.mxu0 %v1632
      %v4733 = vpop.f32.mrf.mxu0
      %v4734 = vadd.f32 %v2779, %v4733
      %v4735 = vpop.f32.mrf.mxu0
      %v4736 = vadd.f32 %v2779, %v4735
      %4737 = vmatmul.bf16.gmra.mxu0 %v1672
      %v4738 = vpop.f32.mrf.mxu0
      %v4739 = vadd.f32 %v2779, %v4738
      %v4740 = vpop.f32.mrf.mxu0
      %v4741 = vadd.f32 %v2779, %v4740
      %4742 = vmatmul.bf16.gmra.mxu0 %v1712
      %v4743 = vpop.f32.mrf.mxu0
      %v4744 = vadd.f32 %v2779, %v4743
      %v4745 = vpop.f32.mrf.mxu0
      %v4746 = vadd.f32 %v2779, %v4745
      %4747 = vmatmul.bf16.gmra.mxu0 %v1752
      %v4748 = vpop.f32.mrf.mxu0
      %v4749 = vadd.f32 %v2779, %v4748
      %v4750 = vpop.f32.mrf.mxu0
      %v4751 = vadd.f32 %v2779, %v4750
      %4752 = vmatmul.bf16.gmra.mxu0 %v1792
      %v4753 = vpop.f32.mrf.mxu0
      %v4754 = vadd.f32 %v2779, %v4753
      %v4755 = vpop.f32.mrf.mxu0
      %v4756 = vadd.f32 %v2779, %v4755
      %4757 = vmatmul.bf16.gmra.mxu0 %v1832
      %v4758 = vpop.f32.mrf.mxu0
      %v4759 = vadd.f32 %v2779, %v4758
      %v4760 = vpop.f32.mrf.mxu0
      %v4761 = vadd.f32 %v2779, %v4760
      %4762 = vmatmul.bf16.gmra.mxu0 %v1872
      %v4763 = vpop.f32.mrf.mxu0
      %v4764 = vadd.f32 %v2779, %v4763
      %v4765 = vpop.f32.mrf.mxu0
      %v4766 = vadd.f32 %v2779, %v4765
      %4767 = vmatmul.bf16.gmra.mxu0 %v1912
      %v4768 = vpop.f32.mrf.mxu0
      %v4769 = vadd.f32 %v2779, %v4768
      %v4770 = vpop.f32.mrf.mxu0
      %v4771 = vadd.f32 %v2779, %v4770
      %4772 = vmatmul.bf16.gmra.mxu0 %v1952
      %v4773 = vpop.f32.mrf.mxu0
      %v4774 = vadd.f32 %v2779, %v4773
      %v4775 = vpop.f32.mrf.mxu0
      %v4776 = vadd.f32 %v2779, %v4775
      %4777 = vmatmul.bf16.gmra.mxu0 %v1992
      %v4778 = vpop.f32.mrf.mxu0
      %v4779 = vadd.f32 %v2779, %v4778
      %v4780 = vpop.f32.mrf.mxu0
      %v4781 = vadd.f32 %v2779, %v4780
      %4782 = vmatmul.bf16.gmra.mxu0 %v2032
      %v4783 = vpop.f32.mrf.mxu0
      %v4784 = vadd.f32 %v2779, %v4783
      %v4785 = vpop.f32.mrf.mxu0
      %v4786 = vadd.f32 %v2779, %v4785
      %4787 = vmatmul.bf16.gmra.mxu0 %v2072
      %v4788 = vpop.f32.mrf.mxu0
      %v4789 = vadd.f32 %v2779, %v4788
      %v4790 = vpop.f32.mrf.mxu0
      %v4791 = vadd.f32 %v2779, %v4790
      %4792 = vmatmul.bf16.gmra.mxu0 %v2112
      %v4793 = vpop.f32.mrf.mxu0
      %v4794 = vadd.f32 %v2779, %v4793
      %v4795 = vpop.f32.mrf.mxu0
      %v4796 = vadd.f32 %v2779, %v4795
      %4797 = vdwg.mxu0
      %4798 = vmatpush.bf16.msra.mxu0 %v4046
      %4799 = vmatpush.bf16.msra.mxu0 %v4045
      %4800 = vmatpush.bf16.msra.mxu0 %v4044
      %4801 = vmatpush.bf16.msra.mxu0 %v4043
      %4802 = vmatpush.bf16.msra.mxu0 %v4042
      %4803 = vmatpush.bf16.msra.mxu0 %v4041
      %4804 = vmatpush.bf16.msra.mxu0 %v4040
      %4805 = vmatpush.bf16.msra.mxu0 %v4039
      %4806 = vmatmul.bf16.gmra.mxu0 %v1513
      %v4807 = vpop.f32.mrf.mxu0
      %v4808 = vadd.f32 %v4719, %v4807
      %v4809 = vpop.f32.mrf.mxu0
      %v4810 = vadd.f32 %v4721, %v4809
      %4811 = vmatmul.bf16.gmra.mxu0 %v1553
      %v4812 = vpop.f32.mrf.mxu0
      %v4813 = vadd.f32 %v4724, %v4812
      %v4814 = vpop.f32.mrf.mxu0
      %v4815 = vadd.f32 %v4726, %v4814
      %4816 = vmatmul.bf16.gmra.mxu0 %v1593
      %v4817 = vpop.f32.mrf.mxu0
      %v4818 = vadd.f32 %v4729, %v4817
      %v4819 = vpop.f32.mrf.mxu0
      %v4820 = vadd.f32 %v4731, %v4819
      %4821 = vmatmul.bf16.gmra.mxu0 %v1633
      %v4822 = vpop.f32.mrf.mxu0
      %v4823 = vadd.f32 %v4734, %v4822
      %v4824 = vpop.f32.mrf.mxu0
      %v4825 = vadd.f32 %v4736, %v4824
      %4826 = vmatmul.bf16.gmra.mxu0 %v1673
      %v4827 = vpop.f32.mrf.mxu0
      %v4828 = vadd.f32 %v4739, %v4827
      %v4829 = vpop.f32.mrf.mxu0
      %v4830 = vadd.f32 %v4741, %v4829
      %4831 = vmatmul.bf16.gmra.mxu0 %v1713
      %v4832 = vpop.f32.mrf.mxu0
      %v4833 = vadd.f32 %v4744, %v4832
      %v4834 = vpop.f32.mrf.mxu0
      %v4835 = vadd.f32 %v4746, %v4834
      %4836 = vmatmul.bf16.gmra.mxu0 %v1753
      %v4837 = vpop.f32.mrf.mxu0
      %v4838 = vadd.f32 %v4749, %v4837
      %v4839 = vpop.f32.mrf.mxu0
      %v4840 = vadd.f32 %v4751, %v4839
      %4841 = vmatmul.bf16.gmra.mxu0 %v1793
      %v4842 = vpop.f32.mrf.mxu0
      %v4843 = vadd.f32 %v4754, %v4842
      %v4844 = vpop.f32.mrf.mxu0
      %v4845 = vadd.f32 %v4756, %v4844
      %4846 = vmatmul.bf16.gmra.mxu0 %v1833
      %v4847 = vpop.f32.mrf.mxu0
      %v4848 = vadd.f32 %v4759, %v4847
      %v4849 = vpop.f32.mrf.mxu0
      %v4850 = vadd.f32 %v4761, %v4849
      %4851 = vmatmul.bf16.gmra.mxu0 %v1873
      %v4852 = vpop.f32.mrf.mxu0
      %v4853 = vadd.f32 %v4764, %v4852
      %v4854 = vpop.f32.mrf.mxu0
      %v4855 = vadd.f32 %v4766, %v4854
      %4856 = vmatmul.bf16.gmra.mxu0 %v1913
      %v4857 = vpop.f32.mrf.mxu0
      %v4858 = vadd.f32 %v4769, %v4857
      %v4859 = vpop.f32.mrf.mxu0
      %v4860 = vadd.f32 %v4771, %v4859
      %4861 = vmatmul.bf16.gmra.mxu0 %v1953
      %v4862 = vpop.f32.mrf.mxu0
      %v4863 = vadd.f32 %v4774, %v4862
      %v4864 = vpop.f32.mrf.mxu0
      %v4865 = vadd.f32 %v4776, %v4864
      %4866 = vmatmul.bf16.gmra.mxu0 %v1993
      %v4867 = vpop.f32.mrf.mxu0
      %v4868 = vadd.f32 %v4779, %v4867
      %v4869 = vpop.f32.mrf.mxu0
      %v4870 = vadd.f32 %v4781, %v4869
      %4871 = vmatmul.bf16.gmra.mxu0 %v2033
      %v4872 = vpop.f32.mrf.mxu0
      %v4873 = vadd.f32 %v4784, %v4872
      %v4874 = vpop.f32.mrf.mxu0
      %v4875 = vadd.f32 %v4786, %v4874
      %4876 = vmatmul.bf16.gmra.mxu0 %v2073
      %v4877 = vpop.f32.mrf.mxu0
      %v4878 = vadd.f32 %v4789, %v4877
      %v4879 = vpop.f32.mrf.mxu0
      %v4880 = vadd.f32 %v4791, %v4879
      %4881 = vmatmul.bf16.gmra.mxu0 %v2113
      %v4882 = vpop.f32.mrf.mxu0
      %v4883 = vadd.f32 %v4794, %v4882
      %v4884 = vpop.f32.mrf.mxu0
      %v4885 = vadd.f32 %v4796, %v4884
      %4886 = vdwg.mxu0
      %4887 = vmatpush.bf16.msra.mxu0 %v4054
      %4888 = vmatpush.bf16.msra.mxu0 %v4053
      %4889 = vmatpush.bf16.msra.mxu0 %v4052
      %4890 = vmatpush.bf16.msra.mxu0 %v4051
      %4891 = vmatpush.bf16.msra.mxu0 %v4050
      %4892 = vmatpush.bf16.msra.mxu0 %v4049
      %4893 = vmatpush.bf16.msra.mxu0 %v4048
      %4894 = vmatpush.bf16.msra.mxu0 %v4047
      %4895 = vmatmul.bf16.gmra.mxu0 %v1514
      %v4896 = vpop.f32.mrf.mxu0
      %v4897 = vadd.f32 %v4808, %v4896
      %v4898 = vpop.f32.mrf.mxu0
      %v4899 = vadd.f32 %v4810, %v4898
      %4900 = vmatmul.bf16.gmra.mxu0 %v1554
      %v4901 = vpop.f32.mrf.mxu0
      %v4902 = vadd.f32 %v4813, %v4901
      %v4903 = vpop.f32.mrf.mxu0
      %v4904 = vadd.f32 %v4815, %v4903
      %4905 = vmatmul.bf16.gmra.mxu0 %v1594
      %v4906 = vpop.f32.mrf.mxu0
      %v4907 = vadd.f32 %v4818, %v4906
      %v4908 = vpop.f32.mrf.mxu0
      %v4909 = vadd.f32 %v4820, %v4908
      %4910 = vmatmul.bf16.gmra.mxu0 %v1634
      %v4911 = vpop.f32.mrf.mxu0
      %v4912 = vadd.f32 %v4823, %v4911
      %v4913 = vpop.f32.mrf.mxu0
      %v4914 = vadd.f32 %v4825, %v4913
      %4915 = vmatmul.bf16.gmra.mxu0 %v1674
      %v4916 = vpop.f32.mrf.mxu0
      %v4917 = vadd.f32 %v4828, %v4916
      %v4918 = vpop.f32.mrf.mxu0
      %v4919 = vadd.f32 %v4830, %v4918
      %4920 = vmatmul.bf16.gmra.mxu0 %v1714
      %v4921 = vpop.f32.mrf.mxu0
      %v4922 = vadd.f32 %v4833, %v4921
      %v4923 = vpop.f32.mrf.mxu0
      %v4924 = vadd.f32 %v4835, %v4923
      %4925 = vmatmul.bf16.gmra.mxu0 %v1754
      %v4926 = vpop.f32.mrf.mxu0
      %v4927 = vadd.f32 %v4838, %v4926
      %v4928 = vpop.f32.mrf.mxu0
      %v4929 = vadd.f32 %v4840, %v4928
      %4930 = vmatmul.bf16.gmra.mxu0 %v1794
      %v4931 = vpop.f32.mrf.mxu0
      %v4932 = vadd.f32 %v4843, %v4931
      %v4933 = vpop.f32.mrf.mxu0
      %v4934 = vadd.f32 %v4845, %v4933
      %4935 = vmatmul.bf16.gmra.mxu0 %v1834
      %v4936 = vpop.f32.mrf.mxu0
      %v4937 = vadd.f32 %v4848, %v4936
      %v4938 = vpop.f32.mrf.mxu0
      %v4939 = vadd.f32 %v4850, %v4938
      %4940 = vmatmul.bf16.gmra.mxu0 %v1874
      %v4941 = vpop.f32.mrf.mxu0
      %v4942 = vadd.f32 %v4853, %v4941
      %v4943 = vpop.f32.mrf.mxu0
      %v4944 = vadd.f32 %v4855, %v4943
      %4945 = vmatmul.bf16.gmra.mxu0 %v1914
      %v4946 = vpop.f32.mrf.mxu0
      %v4947 = vadd.f32 %v4858, %v4946
      %v4948 = vpop.f32.mrf.mxu0
      %v4949 = vadd.f32 %v4860, %v4948
      %4950 = vmatmul.bf16.gmra.mxu0 %v1954
      %v4951 = vpop.f32.mrf.mxu0
      %v4952 = vadd.f32 %v4863, %v4951
      %v4953 = vpop.f32.mrf.mxu0
      %v4954 = vadd.f32 %v4865, %v4953
      %4955 = vmatmul.bf16.gmra.mxu0 %v1994
      %v4956 = vpop.f32.mrf.mxu0
      %v4957 = vadd.f32 %v4868, %v4956
      %v4958 = vpop.f32.mrf.mxu0
      %v4959 = vadd.f32 %v4870, %v4958
      %4960 = vmatmul.bf16.gmra.mxu0 %v2034
      %v4961 = vpop.f32.mrf.mxu0
      %v4962 = vadd.f32 %v4873, %v4961
      %v4963 = vpop.f32.mrf.mxu0
      %v4964 = vadd.f32 %v4875, %v4963
      %4965 = vmatmul.bf16.gmra.mxu0 %v2074
      %v4966 = vpop.f32.mrf.mxu0
      %v4967 = vadd.f32 %v4878, %v4966
      %v4968 = vpop.f32.mrf.mxu0
      %v4969 = vadd.f32 %v4880, %v4968
      %4970 = vmatmul.bf16.gmra.mxu0 %v2114
      %v4971 = vpop.f32.mrf.mxu0
      %v4972 = vadd.f32 %v4883, %v4971
      %v4973 = vpop.f32.mrf.mxu0
      %v4974 = vadd.f32 %v4885, %v4973
      %4975 = vdwg.mxu0
      %4976 = vmatpush.bf16.msra.mxu0 %v4062
      %4977 = vmatpush.bf16.msra.mxu0 %v4061
      %4978 = vmatpush.bf16.msra.mxu0 %v4060
      %4979 = vmatpush.bf16.msra.mxu0 %v4059
      %4980 = vmatpush.bf16.msra.mxu0 %v4058
      %4981 = vmatpush.bf16.msra.mxu0 %v4057
      %4982 = vmatpush.bf16.msra.mxu0 %v4056
      %4983 = vmatpush.bf16.msra.mxu0 %v4055
      %4984 = vmatmul.bf16.gmra.mxu0 %v1515
      %v4985 = vpop.f32.mrf.mxu0
      %v4986 = vadd.f32 %v4897, %v4985
      %v4987 = vpop.f32.mrf.mxu0
      %v4988 = vadd.f32 %v4899, %v4987
      %4989 = vmatmul.bf16.gmra.mxu0 %v1555
      %v4990 = vpop.f32.mrf.mxu0
      %v4991 = vadd.f32 %v4902, %v4990
      %v4992 = vpop.f32.mrf.mxu0
      %v4993 = vadd.f32 %v4904, %v4992
      %4994 = vmatmul.bf16.gmra.mxu0 %v1595
      %v4995 = vpop.f32.mrf.mxu0
      %v4996 = vadd.f32 %v4907, %v4995
      %v4997 = vpop.f32.mrf.mxu0
      %v4998 = vadd.f32 %v4909, %v4997
      %4999 = vmatmul.bf16.gmra.mxu0 %v1635
      %v5000 = vpop.f32.mrf.mxu0
      %v5001 = vadd.f32 %v4912, %v5000
      %v5002 = vpop.f32.mrf.mxu0
      %v5003 = vadd.f32 %v4914, %v5002
      %5004 = vmatmul.bf16.gmra.mxu0 %v1675
      %v5005 = vpop.f32.mrf.mxu0
      %v5006 = vadd.f32 %v4917, %v5005
      %v5007 = vpop.f32.mrf.mxu0
      %v5008 = vadd.f32 %v4919, %v5007
      %5009 = vmatmul.bf16.gmra.mxu0 %v1715
      %v5010 = vpop.f32.mrf.mxu0
      %v5011 = vadd.f32 %v4922, %v5010
      %v5012 = vpop.f32.mrf.mxu0
      %v5013 = vadd.f32 %v4924, %v5012
      %5014 = vmatmul.bf16.gmra.mxu0 %v1755
      %v5015 = vpop.f32.mrf.mxu0
      %v5016 = vadd.f32 %v4927, %v5015
      %v5017 = vpop.f32.mrf.mxu0
      %v5018 = vadd.f32 %v4929, %v5017
      %5019 = vmatmul.bf16.gmra.mxu0 %v1795
      %v5020 = vpop.f32.mrf.mxu0
      %v5021 = vadd.f32 %v4932, %v5020
      %v5022 = vpop.f32.mrf.mxu0
      %v5023 = vadd.f32 %v4934, %v5022
      %5024 = vmatmul.bf16.gmra.mxu0 %v1835
      %v5025 = vpop.f32.mrf.mxu0
      %v5026 = vadd.f32 %v4937, %v5025
      %v5027 = vpop.f32.mrf.mxu0
      %v5028 = vadd.f32 %v4939, %v5027
      %5029 = vmatmul.bf16.gmra.mxu0 %v1875
      %v5030 = vpop.f32.mrf.mxu0
      %v5031 = vadd.f32 %v4942, %v5030
      %v5032 = vpop.f32.mrf.mxu0
      %v5033 = vadd.f32 %v4944, %v5032
      %5034 = vmatmul.bf16.gmra.mxu0 %v1915
      %v5035 = vpop.f32.mrf.mxu0
      %v5036 = vadd.f32 %v4947, %v5035
      %v5037 = vpop.f32.mrf.mxu0
      %v5038 = vadd.f32 %v4949, %v5037
      %5039 = vmatmul.bf16.gmra.mxu0 %v1955
      %v5040 = vpop.f32.mrf.mxu0
      %v5041 = vadd.f32 %v4952, %v5040
      %v5042 = vpop.f32.mrf.mxu0
      %v5043 = vadd.f32 %v4954, %v5042
      %5044 = vmatmul.bf16.gmra.mxu0 %v1995
      %v5045 = vpop.f32.mrf.mxu0
      %v5046 = vadd.f32 %v4957, %v5045
      %v5047 = vpop.f32.mrf.mxu0
      %v5048 = vadd.f32 %v4959, %v5047
      %5049 = vmatmul.bf16.gmra.mxu0 %v2035
      %v5050 = vpop.f32.mrf.mxu0
      %v5051 = vadd.f32 %v4962, %v5050
      %v5052 = vpop.f32.mrf.mxu0
      %v5053 = vadd.f32 %v4964, %v5052
      %5054 = vmatmul.bf16.gmra.mxu0 %v2075
      %v5055 = vpop.f32.mrf.mxu0
      %v5056 = vadd.f32 %v4967, %v5055
      %v5057 = vpop.f32.mrf.mxu0
      %v5058 = vadd.f32 %v4969, %v5057
      %5059 = vmatmul.bf16.gmra.mxu0 %v2115
      %v5060 = vpop.f32.mrf.mxu0
      %v5061 = vadd.f32 %v4972, %v5060
      %v5062 = vpop.f32.mrf.mxu0
      %v5063 = vadd.f32 %v4974, %v5062
      %5064 = vdwg.mxu0
      %5065 = vmatpush.bf16.msra.mxu0 %v4070
      %5066 = vmatpush.bf16.msra.mxu0 %v4069
      %5067 = vmatpush.bf16.msra.mxu0 %v4068
      %5068 = vmatpush.bf16.msra.mxu0 %v4067
      %5069 = vmatpush.bf16.msra.mxu0 %v4066
      %5070 = vmatpush.bf16.msra.mxu0 %v4065
      %5071 = vmatpush.bf16.msra.mxu0 %v4064
      %5072 = vmatpush.bf16.msra.mxu0 %v4063
      %5073 = vmatmul.bf16.gmra.mxu0 %v1516
      %v5074 = vpop.f32.mrf.mxu0
      %v5075 = vadd.f32 %v4986, %v5074
      %v5076 = vpop.f32.mrf.mxu0
      %v5077 = vadd.f32 %v4988, %v5076
      %5078 = vmatmul.bf16.gmra.mxu0 %v1556
      %v5079 = vpop.f32.mrf.mxu0
      %v5080 = vadd.f32 %v4991, %v5079
      %v5081 = vpop.f32.mrf.mxu0
      %v5082 = vadd.f32 %v4993, %v5081
      %5083 = vmatmul.bf16.gmra.mxu0 %v1596
      %v5084 = vpop.f32.mrf.mxu0
      %v5085 = vadd.f32 %v4996, %v5084
      %v5086 = vpop.f32.mrf.mxu0
      %v5087 = vadd.f32 %v4998, %v5086
      %5088 = vmatmul.bf16.gmra.mxu0 %v1636
      %v5089 = vpop.f32.mrf.mxu0
      %v5090 = vadd.f32 %v5001, %v5089
      %v5091 = vpop.f32.mrf.mxu0
      %v5092 = vadd.f32 %v5003, %v5091
      %5093 = vmatmul.bf16.gmra.mxu0 %v1676
      %v5094 = vpop.f32.mrf.mxu0
      %v5095 = vadd.f32 %v5006, %v5094
      %v5096 = vpop.f32.mrf.mxu0
      %v5097 = vadd.f32 %v5008, %v5096
      %5098 = vmatmul.bf16.gmra.mxu0 %v1716
      %v5099 = vpop.f32.mrf.mxu0
      %v5100 = vadd.f32 %v5011, %v5099
      %v5101 = vpop.f32.mrf.mxu0
      %v5102 = vadd.f32 %v5013, %v5101
      %5103 = vmatmul.bf16.gmra.mxu0 %v1756
      %v5104 = vpop.f32.mrf.mxu0
      %v5105 = vadd.f32 %v5016, %v5104
      %v5106 = vpop.f32.mrf.mxu0
      %v5107 = vadd.f32 %v5018, %v5106
      %5108 = vmatmul.bf16.gmra.mxu0 %v1796
      %v5109 = vpop.f32.mrf.mxu0
      %v5110 = vadd.f32 %v5021, %v5109
      %v5111 = vpop.f32.mrf.mxu0
      %v5112 = vadd.f32 %v5023, %v5111
      %5113 = vmatmul.bf16.gmra.mxu0 %v1836
      %v5114 = vpop.f32.mrf.mxu0
      %v5115 = vadd.f32 %v5026, %v5114
      %v5116 = vpop.f32.mrf.mxu0
      %v5117 = vadd.f32 %v5028, %v5116
      %5118 = vmatmul.bf16.gmra.mxu0 %v1876
      %v5119 = vpop.f32.mrf.mxu0
      %v5120 = vadd.f32 %v5031, %v5119
      %v5121 = vpop.f32.mrf.mxu0
      %v5122 = vadd.f32 %v5033, %v5121
      %5123 = vmatmul.bf16.gmra.mxu0 %v1916
      %v5124 = vpop.f32.mrf.mxu0
      %v5125 = vadd.f32 %v5036, %v5124
      %v5126 = vpop.f32.mrf.mxu0
      %v5127 = vadd.f32 %v5038, %v5126
      %5128 = vmatmul.bf16.gmra.mxu0 %v1956
      %v5129 = vpop.f32.mrf.mxu0
      %v5130 = vadd.f32 %v5041, %v5129
      %v5131 = vpop.f32.mrf.mxu0
      %v5132 = vadd.f32 %v5043, %v5131
      %5133 = vmatmul.bf16.gmra.mxu0 %v1996
      %v5134 = vpop.f32.mrf.mxu0
      %v5135 = vadd.f32 %v5046, %v5134
      %v5136 = vpop.f32.mrf.mxu0
      %v5137 = vadd.f32 %v5048, %v5136
      %5138 = vmatmul.bf16.gmra.mxu0 %v2036
      %v5139 = vpop.f32.mrf.mxu0
      %v5140 = vadd.f32 %v5051, %v5139
      %v5141 = vpop.f32.mrf.mxu0
      %v5142 = vadd.f32 %v5053, %v5141
      %5143 = vmatmul.bf16.gmra.mxu0 %v2076
      %v5144 = vpop.f32.mrf.mxu0
      %v5145 = vadd.f32 %v5056, %v5144
      %v5146 = vpop.f32.mrf.mxu0
      %v5147 = vadd.f32 %v5058, %v5146
      %5148 = vmatmul.bf16.gmra.mxu0 %v2116
      %v5149 = vpop.f32.mrf.mxu0
      %v5150 = vadd.f32 %v5061, %v5149
      %v5151 = vpop.f32.mrf.mxu0
      %v5152 = vadd.f32 %v5063, %v5151
      %5153 = vdwg.mxu0
      %5154 = vmatpush.bf16.msra.mxu0 %v4078
      %5155 = vmatpush.bf16.msra.mxu0 %v4077
      %5156 = vmatpush.bf16.msra.mxu0 %v4076
      %5157 = vmatpush.bf16.msra.mxu0 %v4075
      %5158 = vmatpush.bf16.msra.mxu0 %v4074
      %5159 = vmatpush.bf16.msra.mxu0 %v4073
      %5160 = vmatpush.bf16.msra.mxu0 %v4072
      %5161 = vmatpush.bf16.msra.mxu0 %v4071
      %5162 = vmatmul.bf16.gmra.mxu0 %v1517
      %v5163 = vpop.f32.mrf.mxu0
      %v5164 = vadd.f32 %v5075, %v5163
      %v5165 = vpop.f32.mrf.mxu0
      %v5166 = vadd.f32 %v5077, %v5165
      %5167 = vmatmul.bf16.gmra.mxu0 %v1557
      %v5168 = vpop.f32.mrf.mxu0
      %v5169 = vadd.f32 %v5080, %v5168
      %v5170 = vpop.f32.mrf.mxu0
      %v5171 = vadd.f32 %v5082, %v5170
      %5172 = vmatmul.bf16.gmra.mxu0 %v1597
      %v5173 = vpop.f32.mrf.mxu0
      %v5174 = vadd.f32 %v5085, %v5173
      %v5175 = vpop.f32.mrf.mxu0
      %v5176 = vadd.f32 %v5087, %v5175
      %5177 = vmatmul.bf16.gmra.mxu0 %v1637
      %v5178 = vpop.f32.mrf.mxu0
      %v5179 = vadd.f32 %v5090, %v5178
      %v5180 = vpop.f32.mrf.mxu0
      %v5181 = vadd.f32 %v5092, %v5180
      %5182 = vmatmul.bf16.gmra.mxu0 %v1677
      %v5183 = vpop.f32.mrf.mxu0
      %v5184 = vadd.f32 %v5095, %v5183
      %v5185 = vpop.f32.mrf.mxu0
      %v5186 = vadd.f32 %v5097, %v5185
      %5187 = vmatmul.bf16.gmra.mxu0 %v1717
      %v5188 = vpop.f32.mrf.mxu0
      %v5189 = vadd.f32 %v5100, %v5188
      %v5190 = vpop.f32.mrf.mxu0
      %v5191 = vadd.f32 %v5102, %v5190
      %5192 = vmatmul.bf16.gmra.mxu0 %v1757
      %v5193 = vpop.f32.mrf.mxu0
      %v5194 = vadd.f32 %v5105, %v5193
      %v5195 = vpop.f32.mrf.mxu0
      %v5196 = vadd.f32 %v5107, %v5195
      %5197 = vmatmul.bf16.gmra.mxu0 %v1797
      %v5198 = vpop.f32.mrf.mxu0
      %v5199 = vadd.f32 %v5110, %v5198
      %v5200 = vpop.f32.mrf.mxu0
      %v5201 = vadd.f32 %v5112, %v5200
      %5202 = vmatmul.bf16.gmra.mxu0 %v1837
      %v5203 = vpop.f32.mrf.mxu0
      %v5204 = vadd.f32 %v5115, %v5203
      %v5205 = vpop.f32.mrf.mxu0
      %v5206 = vadd.f32 %v5117, %v5205
      %5207 = vmatmul.bf16.gmra.mxu0 %v1877
      %v5208 = vpop.f32.mrf.mxu0
      %v5209 = vadd.f32 %v5120, %v5208
      %v5210 = vpop.f32.mrf.mxu0
      %v5211 = vadd.f32 %v5122, %v5210
      %5212 = vmatmul.bf16.gmra.mxu0 %v1917
      %v5213 = vpop.f32.mrf.mxu0
      %v5214 = vadd.f32 %v5125, %v5213
      %v5215 = vpop.f32.mrf.mxu0
      %v5216 = vadd.f32 %v5127, %v5215
      %5217 = vmatmul.bf16.gmra.mxu0 %v1957
      %v5218 = vpop.f32.mrf.mxu0
      %v5219 = vadd.f32 %v5130, %v5218
      %v5220 = vpop.f32.mrf.mxu0
      %v5221 = vadd.f32 %v5132, %v5220
      %5222 = vmatmul.bf16.gmra.mxu0 %v1997
      %v5223 = vpop.f32.mrf.mxu0
      %v5224 = vadd.f32 %v5135, %v5223
      %v5225 = vpop.f32.mrf.mxu0
      %v5226 = vadd.f32 %v5137, %v5225
      %5227 = vmatmul.bf16.gmra.mxu0 %v2037
      %v5228 = vpop.f32.mrf.mxu0
      %v5229 = vadd.f32 %v5140, %v5228
      %v5230 = vpop.f32.mrf.mxu0
      %v5231 = vadd.f32 %v5142, %v5230
      %5232 = vmatmul.bf16.gmra.mxu0 %v2077
      %v5233 = vpop.f32.mrf.mxu0
      %v5234 = vadd.f32 %v5145, %v5233
      %v5235 = vpop.f32.mrf.mxu0
      %v5236 = vadd.f32 %v5147, %v5235
      %5237 = vmatmul.bf16.gmra.mxu0 %v2117
      %v5238 = vpop.f32.mrf.mxu0
      %v5239 = vadd.f32 %v5150, %v5238
      %v5240 = vpop.f32.mrf.mxu0
      %v5241 = vadd.f32 %v5152, %v5240
      %5242 = vdwg.mxu0
      %5243 = vmatpush.bf16.msra.mxu0 %v4086
      %5244 = vmatpush.bf16.msra.mxu0 %v4085
      %5245 = vmatpush.bf16.msra.mxu0 %v4084
      %5246 = vmatpush.bf16.msra.mxu0 %v4083
      %5247 = vmatpush.bf16.msra.mxu0 %v4082
      %5248 = vmatpush.bf16.msra.mxu0 %v4081
      %5249 = vmatpush.bf16.msra.mxu0 %v4080
      %5250 = vmatpush.bf16.msra.mxu0 %v4079
      %5251 = vmatmul.bf16.gmra.mxu0 %v1518
      %v5252 = vpop.f32.mrf.mxu0
      %v5253 = vadd.f32 %v5164, %v5252
      %v5254 = vpop.f32.mrf.mxu0
      %v5255 = vadd.f32 %v5166, %v5254
      %5256 = vmatmul.bf16.gmra.mxu0 %v1558
      %v5257 = vpop.f32.mrf.mxu0
      %v5258 = vadd.f32 %v5169, %v5257
      %v5259 = vpop.f32.mrf.mxu0
      %v5260 = vadd.f32 %v5171, %v5259
      %5261 = vmatmul.bf16.gmra.mxu0 %v1598
      %v5262 = vpop.f32.mrf.mxu0
      %v5263 = vadd.f32 %v5174, %v5262
      %v5264 = vpop.f32.mrf.mxu0
      %v5265 = vadd.f32 %v5176, %v5264
      %5266 = vmatmul.bf16.gmra.mxu0 %v1638
      %v5267 = vpop.f32.mrf.mxu0
      %v5268 = vadd.f32 %v5179, %v5267
      %v5269 = vpop.f32.mrf.mxu0
      %v5270 = vadd.f32 %v5181, %v5269
      %5271 = vmatmul.bf16.gmra.mxu0 %v1678
      %v5272 = vpop.f32.mrf.mxu0
      %v5273 = vadd.f32 %v5184, %v5272
      %v5274 = vpop.f32.mrf.mxu0
      %v5275 = vadd.f32 %v5186, %v5274
      %5276 = vmatmul.bf16.gmra.mxu0 %v1718
      %v5277 = vpop.f32.mrf.mxu0
      %v5278 = vadd.f32 %v5189, %v5277
      %v5279 = vpop.f32.mrf.mxu0
      %v5280 = vadd.f32 %v5191, %v5279
      %5281 = vmatmul.bf16.gmra.mxu0 %v1758
      %v5282 = vpop.f32.mrf.mxu0
      %v5283 = vadd.f32 %v5194, %v5282
      %v5284 = vpop.f32.mrf.mxu0
      %v5285 = vadd.f32 %v5196, %v5284
      %5286 = vmatmul.bf16.gmra.mxu0 %v1798
      %v5287 = vpop.f32.mrf.mxu0
      %v5288 = vadd.f32 %v5199, %v5287
      %v5289 = vpop.f32.mrf.mxu0
      %v5290 = vadd.f32 %v5201, %v5289
      %5291 = vmatmul.bf16.gmra.mxu0 %v1838
      %v5292 = vpop.f32.mrf.mxu0
      %v5293 = vadd.f32 %v5204, %v5292
      %v5294 = vpop.f32.mrf.mxu0
      %v5295 = vadd.f32 %v5206, %v5294
      %5296 = vmatmul.bf16.gmra.mxu0 %v1878
      %v5297 = vpop.f32.mrf.mxu0
      %v5298 = vadd.f32 %v5209, %v5297
      %v5299 = vpop.f32.mrf.mxu0
      %v5300 = vadd.f32 %v5211, %v5299
      %5301 = vmatmul.bf16.gmra.mxu0 %v1918
      %v5302 = vpop.f32.mrf.mxu0
      %v5303 = vadd.f32 %v5214, %v5302
      %v5304 = vpop.f32.mrf.mxu0
      %v5305 = vadd.f32 %v5216, %v5304
      %5306 = vmatmul.bf16.gmra.mxu0 %v1958
      %v5307 = vpop.f32.mrf.mxu0
      %v5308 = vadd.f32 %v5219, %v5307
      %v5309 = vpop.f32.mrf.mxu0
      %v5310 = vadd.f32 %v5221, %v5309
      %5311 = vmatmul.bf16.gmra.mxu0 %v1998
      %v5312 = vpop.f32.mrf.mxu0
      %v5313 = vadd.f32 %v5224, %v5312
      %v5314 = vpop.f32.mrf.mxu0
      %v5315 = vadd.f32 %v5226, %v5314
      %5316 = vmatmul.bf16.gmra.mxu0 %v2038
      %v5317 = vpop.f32.mrf.mxu0
      %v5318 = vadd.f32 %v5229, %v5317
      %v5319 = vpop.f32.mrf.mxu0
      %v5320 = vadd.f32 %v5231, %v5319
      %5321 = vmatmul.bf16.gmra.mxu0 %v2078
      %v5322 = vpop.f32.mrf.mxu0
      %v5323 = vadd.f32 %v5234, %v5322
      %v5324 = vpop.f32.mrf.mxu0
      %v5325 = vadd.f32 %v5236, %v5324
      %5326 = vmatmul.bf16.gmra.mxu0 %v2118
      %v5327 = vpop.f32.mrf.mxu0
      %v5328 = vadd.f32 %v5239, %v5327
      %v5329 = vpop.f32.mrf.mxu0
      %v5330 = vadd.f32 %v5241, %v5329
      %5331 = vdwg.mxu0
      %5332 = vmatpush.bf16.msra.mxu0 %v4094
      %5333 = vmatpush.bf16.msra.mxu0 %v4093
      %5334 = vmatpush.bf16.msra.mxu0 %v4092
      %5335 = vmatpush.bf16.msra.mxu0 %v4091
      %5336 = vmatpush.bf16.msra.mxu0 %v4090
      %5337 = vmatpush.bf16.msra.mxu0 %v4089
      %5338 = vmatpush.bf16.msra.mxu0 %v4088
      %5339 = vmatpush.bf16.msra.mxu0 %v4087
      %5340 = vmatmul.bf16.gmra.mxu0 %v1519
      %v5341 = vpop.f32.mrf.mxu0
      %v5342 = vadd.f32 %v5253, %v5341
      %v5343 = vpop.f32.mrf.mxu0
      %v5344 = vadd.f32 %v5255, %v5343
      %5345 = vmatmul.bf16.gmra.mxu0 %v1559
      %v5346 = vpop.f32.mrf.mxu0
      %v5347 = vadd.f32 %v5258, %v5346
      %v5348 = vpop.f32.mrf.mxu0
      %v5349 = vadd.f32 %v5260, %v5348
      %5350 = vmatmul.bf16.gmra.mxu0 %v1599
      %v5351 = vpop.f32.mrf.mxu0
      %v5352 = vadd.f32 %v5263, %v5351
      %v5353 = vpop.f32.mrf.mxu0
      %v5354 = vadd.f32 %v5265, %v5353
      %5355 = vmatmul.bf16.gmra.mxu0 %v1639
      %v5356 = vpop.f32.mrf.mxu0
      %v5357 = vadd.f32 %v5268, %v5356
      %v5358 = vpop.f32.mrf.mxu0
      %v5359 = vadd.f32 %v5270, %v5358
      %5360 = vmatmul.bf16.gmra.mxu0 %v1679
      %v5361 = vpop.f32.mrf.mxu0
      %v5362 = vadd.f32 %v5273, %v5361
      %v5363 = vpop.f32.mrf.mxu0
      %v5364 = vadd.f32 %v5275, %v5363
      %5365 = vmatmul.bf16.gmra.mxu0 %v1719
      %v5366 = vpop.f32.mrf.mxu0
      %v5367 = vadd.f32 %v5278, %v5366
      %v5368 = vpop.f32.mrf.mxu0
      %v5369 = vadd.f32 %v5280, %v5368
      %5370 = vmatmul.bf16.gmra.mxu0 %v1759
      %v5371 = vpop.f32.mrf.mxu0
      %v5372 = vadd.f32 %v5283, %v5371
      %v5373 = vpop.f32.mrf.mxu0
      %v5374 = vadd.f32 %v5285, %v5373
      %5375 = vmatmul.bf16.gmra.mxu0 %v1799
      %v5376 = vpop.f32.mrf.mxu0
      %v5377 = vadd.f32 %v5288, %v5376
      %v5378 = vpop.f32.mrf.mxu0
      %v5379 = vadd.f32 %v5290, %v5378
      %5380 = vmatmul.bf16.gmra.mxu0 %v1839
      %v5381 = vpop.f32.mrf.mxu0
      %v5382 = vadd.f32 %v5293, %v5381
      %v5383 = vpop.f32.mrf.mxu0
      %v5384 = vadd.f32 %v5295, %v5383
      %5385 = vmatmul.bf16.gmra.mxu0 %v1879
      %v5386 = vpop.f32.mrf.mxu0
      %v5387 = vadd.f32 %v5298, %v5386
      %v5388 = vpop.f32.mrf.mxu0
      %v5389 = vadd.f32 %v5300, %v5388
      %5390 = vmatmul.bf16.gmra.mxu0 %v1919
      %v5391 = vpop.f32.mrf.mxu0
      %v5392 = vadd.f32 %v5303, %v5391
      %v5393 = vpop.f32.mrf.mxu0
      %v5394 = vadd.f32 %v5305, %v5393
      %5395 = vmatmul.bf16.gmra.mxu0 %v1959
      %v5396 = vpop.f32.mrf.mxu0
      %v5397 = vadd.f32 %v5308, %v5396
      %v5398 = vpop.f32.mrf.mxu0
      %v5399 = vadd.f32 %v5310, %v5398
      %5400 = vmatmul.bf16.gmra.mxu0 %v1999
      %v5401 = vpop.f32.mrf.mxu0
      %v5402 = vadd.f32 %v5313, %v5401
      %v5403 = vpop.f32.mrf.mxu0
      %v5404 = vadd.f32 %v5315, %v5403
      %5405 = vmatmul.bf16.gmra.mxu0 %v2039
      %v5406 = vpop.f32.mrf.mxu0
      %v5407 = vadd.f32 %v5318, %v5406
      %v5408 = vpop.f32.mrf.mxu0
      %v5409 = vadd.f32 %v5320, %v5408
      %5410 = vmatmul.bf16.gmra.mxu0 %v2079
      %v5411 = vpop.f32.mrf.mxu0
      %v5412 = vadd.f32 %v5323, %v5411
      %v5413 = vpop.f32.mrf.mxu0
      %v5414 = vadd.f32 %v5325, %v5413
      %5415 = vmatmul.bf16.gmra.mxu0 %v2119
      %v5416 = vpop.f32.mrf.mxu0
      %v5417 = vadd.f32 %v5328, %v5416
      %v5418 = vpop.f32.mrf.mxu0
      %v5419 = vadd.f32 %v5330, %v5418
      %5420 = vdwg.mxu0
      %5421 = vmatpush.bf16.msra.mxu0 %v4102
      %5422 = vmatpush.bf16.msra.mxu0 %v4101
      %5423 = vmatpush.bf16.msra.mxu0 %v4100
      %5424 = vmatpush.bf16.msra.mxu0 %v4099
      %5425 = vmatpush.bf16.msra.mxu0 %v4098
      %5426 = vmatpush.bf16.msra.mxu0 %v4097
      %5427 = vmatpush.bf16.msra.mxu0 %v4096
      %5428 = vmatpush.bf16.msra.mxu0 %v4095
      %5429 = vmatmul.bf16.gmra.mxu0 %v1520
      %v5430 = vpop.f32.mrf.mxu0
      %v5431 = vadd.f32 %v5342, %v5430
      %v5432 = vpop.f32.mrf.mxu0
      %v5433 = vadd.f32 %v5344, %v5432
      %5434 = vmatmul.bf16.gmra.mxu0 %v1560
      %v5435 = vpop.f32.mrf.mxu0
      %v5436 = vadd.f32 %v5347, %v5435
      %v5437 = vpop.f32.mrf.mxu0
      %v5438 = vadd.f32 %v5349, %v5437
      %5439 = vmatmul.bf16.gmra.mxu0 %v1600
      %v5440 = vpop.f32.mrf.mxu0
      %v5441 = vadd.f32 %v5352, %v5440
      %v5442 = vpop.f32.mrf.mxu0
      %v5443 = vadd.f32 %v5354, %v5442
      %5444 = vmatmul.bf16.gmra.mxu0 %v1640
      %v5445 = vpop.f32.mrf.mxu0
      %v5446 = vadd.f32 %v5357, %v5445
      %v5447 = vpop.f32.mrf.mxu0
      %v5448 = vadd.f32 %v5359, %v5447
      %5449 = vmatmul.bf16.gmra.mxu0 %v1680
      %v5450 = vpop.f32.mrf.mxu0
      %v5451 = vadd.f32 %v5362, %v5450
      %v5452 = vpop.f32.mrf.mxu0
      %v5453 = vadd.f32 %v5364, %v5452
      %5454 = vmatmul.bf16.gmra.mxu0 %v1720
      %v5455 = vpop.f32.mrf.mxu0
      %v5456 = vadd.f32 %v5367, %v5455
      %v5457 = vpop.f32.mrf.mxu0
      %v5458 = vadd.f32 %v5369, %v5457
      %5459 = vmatmul.bf16.gmra.mxu0 %v1760
      %v5460 = vpop.f32.mrf.mxu0
      %v5461 = vadd.f32 %v5372, %v5460
      %v5462 = vpop.f32.mrf.mxu0
      %v5463 = vadd.f32 %v5374, %v5462
      %5464 = vmatmul.bf16.gmra.mxu0 %v1800
      %v5465 = vpop.f32.mrf.mxu0
      %v5466 = vadd.f32 %v5377, %v5465
      %v5467 = vpop.f32.mrf.mxu0
      %v5468 = vadd.f32 %v5379, %v5467
      %5469 = vmatmul.bf16.gmra.mxu0 %v1840
      %v5470 = vpop.f32.mrf.mxu0
      %v5471 = vadd.f32 %v5382, %v5470
      %v5472 = vpop.f32.mrf.mxu0
      %v5473 = vadd.f32 %v5384, %v5472
      %5474 = vmatmul.bf16.gmra.mxu0 %v1880
      %v5475 = vpop.f32.mrf.mxu0
      %v5476 = vadd.f32 %v5387, %v5475
      %v5477 = vpop.f32.mrf.mxu0
      %v5478 = vadd.f32 %v5389, %v5477
      %5479 = vmatmul.bf16.gmra.mxu0 %v1920
      %v5480 = vpop.f32.mrf.mxu0
      %v5481 = vadd.f32 %v5392, %v5480
      %v5482 = vpop.f32.mrf.mxu0
      %v5483 = vadd.f32 %v5394, %v5482
      %5484 = vmatmul.bf16.gmra.mxu0 %v1960
      %v5485 = vpop.f32.mrf.mxu0
      %v5486 = vadd.f32 %v5397, %v5485
      %v5487 = vpop.f32.mrf.mxu0
      %v5488 = vadd.f32 %v5399, %v5487
      %5489 = vmatmul.bf16.gmra.mxu0 %v2000
      %v5490 = vpop.f32.mrf.mxu0
      %v5491 = vadd.f32 %v5402, %v5490
      %v5492 = vpop.f32.mrf.mxu0
      %v5493 = vadd.f32 %v5404, %v5492
      %5494 = vmatmul.bf16.gmra.mxu0 %v2040
      %v5495 = vpop.f32.mrf.mxu0
      %v5496 = vadd.f32 %v5407, %v5495
      %v5497 = vpop.f32.mrf.mxu0
      %v5498 = vadd.f32 %v5409, %v5497
      %5499 = vmatmul.bf16.gmra.mxu0 %v2080
      %v5500 = vpop.f32.mrf.mxu0
      %v5501 = vadd.f32 %v5412, %v5500
      %v5502 = vpop.f32.mrf.mxu0
      %v5503 = vadd.f32 %v5414, %v5502
      %5504 = vmatmul.bf16.gmra.mxu0 %v2120
      %v5505 = vpop.f32.mrf.mxu0
      %v5506 = vadd.f32 %v5417, %v5505
      %v5507 = vpop.f32.mrf.mxu0
      %v5508 = vadd.f32 %v5419, %v5507
      %5509 = vdwg.mxu0
      %5510 = vmatpush.bf16.msra.mxu0 %v4110
      %5511 = vmatpush.bf16.msra.mxu0 %v4109
      %5512 = vmatpush.bf16.msra.mxu0 %v4108
      %5513 = vmatpush.bf16.msra.mxu0 %v4107
      %5514 = vmatpush.bf16.msra.mxu0 %v4106
      %5515 = vmatpush.bf16.msra.mxu0 %v4105
      %5516 = vmatpush.bf16.msra.mxu0 %v4104
      %5517 = vmatpush.bf16.msra.mxu0 %v4103
      %5518 = vmatmul.bf16.gmra.mxu0 %v1521
      %v5519 = vpop.f32.mrf.mxu0
      %v5520 = vadd.f32 %v5431, %v5519
      %v5521 = vpop.f32.mrf.mxu0
      %v5522 = vadd.f32 %v5433, %v5521
      %5523 = vmatmul.bf16.gmra.mxu0 %v1561
      %v5524 = vpop.f32.mrf.mxu0
      %v5525 = vadd.f32 %v5436, %v5524
      %v5526 = vpop.f32.mrf.mxu0
      %v5527 = vadd.f32 %v5438, %v5526
      %5528 = vmatmul.bf16.gmra.mxu0 %v1601
      %v5529 = vpop.f32.mrf.mxu0
      %v5530 = vadd.f32 %v5441, %v5529
      %v5531 = vpop.f32.mrf.mxu0
      %v5532 = vadd.f32 %v5443, %v5531
      %5533 = vmatmul.bf16.gmra.mxu0 %v1641
      %v5534 = vpop.f32.mrf.mxu0
      %v5535 = vadd.f32 %v5446, %v5534
      %v5536 = vpop.f32.mrf.mxu0
      %v5537 = vadd.f32 %v5448, %v5536
      %5538 = vmatmul.bf16.gmra.mxu0 %v1681
      %v5539 = vpop.f32.mrf.mxu0
      %v5540 = vadd.f32 %v5451, %v5539
      %v5541 = vpop.f32.mrf.mxu0
      %v5542 = vadd.f32 %v5453, %v5541
      %5543 = vmatmul.bf16.gmra.mxu0 %v1721
      %v5544 = vpop.f32.mrf.mxu0
      %v5545 = vadd.f32 %v5456, %v5544
      %v5546 = vpop.f32.mrf.mxu0
      %v5547 = vadd.f32 %v5458, %v5546
      %5548 = vmatmul.bf16.gmra.mxu0 %v1761
      %v5549 = vpop.f32.mrf.mxu0
      %v5550 = vadd.f32 %v5461, %v5549
      %v5551 = vpop.f32.mrf.mxu0
      %v5552 = vadd.f32 %v5463, %v5551
      %5553 = vmatmul.bf16.gmra.mxu0 %v1801
      %v5554 = vpop.f32.mrf.mxu0
      %v5555 = vadd.f32 %v5466, %v5554
      %v5556 = vpop.f32.mrf.mxu0
      %v5557 = vadd.f32 %v5468, %v5556
      %5558 = vmatmul.bf16.gmra.mxu0 %v1841
      %v5559 = vpop.f32.mrf.mxu0
      %v5560 = vadd.f32 %v5471, %v5559
      %v5561 = vpop.f32.mrf.mxu0
      %v5562 = vadd.f32 %v5473, %v5561
      %5563 = vmatmul.bf16.gmra.mxu0 %v1881
      %v5564 = vpop.f32.mrf.mxu0
      %v5565 = vadd.f32 %v5476, %v5564
      %v5566 = vpop.f32.mrf.mxu0
      %v5567 = vadd.f32 %v5478, %v5566
      %5568 = vmatmul.bf16.gmra.mxu0 %v1921
      %v5569 = vpop.f32.mrf.mxu0
      %v5570 = vadd.f32 %v5481, %v5569
      %v5571 = vpop.f32.mrf.mxu0
      %v5572 = vadd.f32 %v5483, %v5571
      %5573 = vmatmul.bf16.gmra.mxu0 %v1961
      %v5574 = vpop.f32.mrf.mxu0
      %v5575 = vadd.f32 %v5486, %v5574
      %v5576 = vpop.f32.mrf.mxu0
      %v5577 = vadd.f32 %v5488, %v5576
      %5578 = vmatmul.bf16.gmra.mxu0 %v2001
      %v5579 = vpop.f32.mrf.mxu0
      %v5580 = vadd.f32 %v5491, %v5579
      %v5581 = vpop.f32.mrf.mxu0
      %v5582 = vadd.f32 %v5493, %v5581
      %5583 = vmatmul.bf16.gmra.mxu0 %v2041
      %v5584 = vpop.f32.mrf.mxu0
      %v5585 = vadd.f32 %v5496, %v5584
      %v5586 = vpop.f32.mrf.mxu0
      %v5587 = vadd.f32 %v5498, %v5586
      %5588 = vmatmul.bf16.gmra.mxu0 %v2081
      %v5589 = vpop.f32.mrf.mxu0
      %v5590 = vadd.f32 %v5501, %v5589
      %v5591 = vpop.f32.mrf.mxu0
      %v5592 = vadd.f32 %v5503, %v5591
      %5593 = vmatmul.bf16.gmra.mxu0 %v2121
      %v5594 = vpop.f32.mrf.mxu0
      %v5595 = vadd.f32 %v5506, %v5594
      %v5596 = vpop.f32.mrf.mxu0
      %v5597 = vadd.f32 %v5508, %v5596
      %5598 = vdwg.mxu0
      %5599 = vmatpush.bf16.msra.mxu0 %v4118
      %5600 = vmatpush.bf16.msra.mxu0 %v4117
      %5601 = vmatpush.bf16.msra.mxu0 %v4116
      %5602 = vmatpush.bf16.msra.mxu0 %v4115
      %5603 = vmatpush.bf16.msra.mxu0 %v4114
      %5604 = vmatpush.bf16.msra.mxu0 %v4113
      %5605 = vmatpush.bf16.msra.mxu0 %v4112
      %5606 = vmatpush.bf16.msra.mxu0 %v4111
      %5607 = vmatmul.bf16.gmra.mxu0 %v1522
      %v5608 = vpop.f32.mrf.mxu0
      %v5609 = vadd.f32 %v5520, %v5608
      %v5610 = vpop.f32.mrf.mxu0
      %v5611 = vadd.f32 %v5522, %v5610
      %5612 = vmatmul.bf16.gmra.mxu0 %v1562
      %v5613 = vpop.f32.mrf.mxu0
      %v5614 = vadd.f32 %v5525, %v5613
      %v5615 = vpop.f32.mrf.mxu0
      %v5616 = vadd.f32 %v5527, %v5615
      %5617 = vmatmul.bf16.gmra.mxu0 %v1602
      %v5618 = vpop.f32.mrf.mxu0
      %v5619 = vadd.f32 %v5530, %v5618
      %v5620 = vpop.f32.mrf.mxu0
      %v5621 = vadd.f32 %v5532, %v5620
      %5622 = vmatmul.bf16.gmra.mxu0 %v1642
      %v5623 = vpop.f32.mrf.mxu0
      %v5624 = vadd.f32 %v5535, %v5623
      %v5625 = vpop.f32.mrf.mxu0
      %v5626 = vadd.f32 %v5537, %v5625
      %5627 = vmatmul.bf16.gmra.mxu0 %v1682
      %v5628 = vpop.f32.mrf.mxu0
      %v5629 = vadd.f32 %v5540, %v5628
      %v5630 = vpop.f32.mrf.mxu0
      %v5631 = vadd.f32 %v5542, %v5630
      %5632 = vmatmul.bf16.gmra.mxu0 %v1722
      %v5633 = vpop.f32.mrf.mxu0
      %v5634 = vadd.f32 %v5545, %v5633
      %v5635 = vpop.f32.mrf.mxu0
      %v5636 = vadd.f32 %v5547, %v5635
      %5637 = vmatmul.bf16.gmra.mxu0 %v1762
      %v5638 = vpop.f32.mrf.mxu0
      %v5639 = vadd.f32 %v5550, %v5638
      %v5640 = vpop.f32.mrf.mxu0
      %v5641 = vadd.f32 %v5552, %v5640
      %5642 = vmatmul.bf16.gmra.mxu0 %v1802
      %v5643 = vpop.f32.mrf.mxu0
      %v5644 = vadd.f32 %v5555, %v5643
      %v5645 = vpop.f32.mrf.mxu0
      %v5646 = vadd.f32 %v5557, %v5645
      %5647 = vmatmul.bf16.gmra.mxu0 %v1842
      %v5648 = vpop.f32.mrf.mxu0
      %v5649 = vadd.f32 %v5560, %v5648
      %v5650 = vpop.f32.mrf.mxu0
      %v5651 = vadd.f32 %v5562, %v5650
      %5652 = vmatmul.bf16.gmra.mxu0 %v1882
      %v5653 = vpop.f32.mrf.mxu0
      %v5654 = vadd.f32 %v5565, %v5653
      %v5655 = vpop.f32.mrf.mxu0
      %v5656 = vadd.f32 %v5567, %v5655
      %5657 = vmatmul.bf16.gmra.mxu0 %v1922
      %v5658 = vpop.f32.mrf.mxu0
      %v5659 = vadd.f32 %v5570, %v5658
      %v5660 = vpop.f32.mrf.mxu0
      %v5661 = vadd.f32 %v5572, %v5660
      %5662 = vmatmul.bf16.gmra.mxu0 %v1962
      %v5663 = vpop.f32.mrf.mxu0
      %v5664 = vadd.f32 %v5575, %v5663
      %v5665 = vpop.f32.mrf.mxu0
      %v5666 = vadd.f32 %v5577, %v5665
      %5667 = vmatmul.bf16.gmra.mxu0 %v2002
      %v5668 = vpop.f32.mrf.mxu0
      %v5669 = vadd.f32 %v5580, %v5668
      %v5670 = vpop.f32.mrf.mxu0
      %v5671 = vadd.f32 %v5582, %v5670
      %5672 = vmatmul.bf16.gmra.mxu0 %v2042
      %v5673 = vpop.f32.mrf.mxu0
      %v5674 = vadd.f32 %v5585, %v5673
      %v5675 = vpop.f32.mrf.mxu0
      %v5676 = vadd.f32 %v5587, %v5675
      %5677 = vmatmul.bf16.gmra.mxu0 %v2082
      %v5678 = vpop.f32.mrf.mxu0
      %v5679 = vadd.f32 %v5590, %v5678
      %v5680 = vpop.f32.mrf.mxu0
      %v5681 = vadd.f32 %v5592, %v5680
      %5682 = vmatmul.bf16.gmra.mxu0 %v2122
      %v5683 = vpop.f32.mrf.mxu0
      %v5684 = vadd.f32 %v5595, %v5683
      %v5685 = vpop.f32.mrf.mxu0
      %v5686 = vadd.f32 %v5597, %v5685
      %5687 = vdwg.mxu0
      %5688 = vmatpush.bf16.msra.mxu0 %v4126
      %5689 = vmatpush.bf16.msra.mxu0 %v4125
      %5690 = vmatpush.bf16.msra.mxu0 %v4124
      %5691 = vmatpush.bf16.msra.mxu0 %v4123
      %5692 = vmatpush.bf16.msra.mxu0 %v4122
      %5693 = vmatpush.bf16.msra.mxu0 %v4121
      %5694 = vmatpush.bf16.msra.mxu0 %v4120
      %5695 = vmatpush.bf16.msra.mxu0 %v4119
      %5696 = vmatmul.bf16.gmra.mxu0 %v1523
      %v5697 = vpop.f32.mrf.mxu0
      %v5698 = vadd.f32 %v5609, %v5697
      %v5699 = vpop.f32.mrf.mxu0
      %v5700 = vadd.f32 %v5611, %v5699
      %5701 = vmatmul.bf16.gmra.mxu0 %v1563
      %v5702 = vpop.f32.mrf.mxu0
      %v5703 = vadd.f32 %v5614, %v5702
      %v5704 = vpop.f32.mrf.mxu0
      %v5705 = vadd.f32 %v5616, %v5704
      %5706 = vmatmul.bf16.gmra.mxu0 %v1603
      %v5707 = vpop.f32.mrf.mxu0
      %v5708 = vadd.f32 %v5619, %v5707
      %v5709 = vpop.f32.mrf.mxu0
      %v5710 = vadd.f32 %v5621, %v5709
      %5711 = vmatmul.bf16.gmra.mxu0 %v1643
      %v5712 = vpop.f32.mrf.mxu0
      %v5713 = vadd.f32 %v5624, %v5712
      %v5714 = vpop.f32.mrf.mxu0
      %v5715 = vadd.f32 %v5626, %v5714
      %5716 = vmatmul.bf16.gmra.mxu0 %v1683
      %v5717 = vpop.f32.mrf.mxu0
      %v5718 = vadd.f32 %v5629, %v5717
      %v5719 = vpop.f32.mrf.mxu0
      %v5720 = vadd.f32 %v5631, %v5719
      %5721 = vmatmul.bf16.gmra.mxu0 %v1723
      %v5722 = vpop.f32.mrf.mxu0
      %v5723 = vadd.f32 %v5634, %v5722
      %v5724 = vpop.f32.mrf.mxu0
      %v5725 = vadd.f32 %v5636, %v5724
      %5726 = vmatmul.bf16.gmra.mxu0 %v1763
      %v5727 = vpop.f32.mrf.mxu0
      %v5728 = vadd.f32 %v5639, %v5727
      %v5729 = vpop.f32.mrf.mxu0
      %v5730 = vadd.f32 %v5641, %v5729
      %5731 = vmatmul.bf16.gmra.mxu0 %v1803
      %v5732 = vpop.f32.mrf.mxu0
      %v5733 = vadd.f32 %v5644, %v5732
      %v5734 = vpop.f32.mrf.mxu0
      %v5735 = vadd.f32 %v5646, %v5734
      %5736 = vmatmul.bf16.gmra.mxu0 %v1843
      %v5737 = vpop.f32.mrf.mxu0
      %v5738 = vadd.f32 %v5649, %v5737
      %v5739 = vpop.f32.mrf.mxu0
      %v5740 = vadd.f32 %v5651, %v5739
      %5741 = vmatmul.bf16.gmra.mxu0 %v1883
      %v5742 = vpop.f32.mrf.mxu0
      %v5743 = vadd.f32 %v5654, %v5742
      %v5744 = vpop.f32.mrf.mxu0
      %v5745 = vadd.f32 %v5656, %v5744
      %5746 = vmatmul.bf16.gmra.mxu0 %v1923
      %v5747 = vpop.f32.mrf.mxu0
      %v5748 = vadd.f32 %v5659, %v5747
      %v5749 = vpop.f32.mrf.mxu0
      %v5750 = vadd.f32 %v5661, %v5749
      %5751 = vmatmul.bf16.gmra.mxu0 %v1963
      %v5752 = vpop.f32.mrf.mxu0
      %v5753 = vadd.f32 %v5664, %v5752
      %v5754 = vpop.f32.mrf.mxu0
      %v5755 = vadd.f32 %v5666, %v5754
      %5756 = vmatmul.bf16.gmra.mxu0 %v2003
      %v5757 = vpop.f32.mrf.mxu0
      %v5758 = vadd.f32 %v5669, %v5757
      %v5759 = vpop.f32.mrf.mxu0
      %v5760 = vadd.f32 %v5671, %v5759
      %5761 = vmatmul.bf16.gmra.mxu0 %v2043
      %v5762 = vpop.f32.mrf.mxu0
      %v5763 = vadd.f32 %v5674, %v5762
      %v5764 = vpop.f32.mrf.mxu0
      %v5765 = vadd.f32 %v5676, %v5764
      %5766 = vmatmul.bf16.gmra.mxu0 %v2083
      %v5767 = vpop.f32.mrf.mxu0
      %v5768 = vadd.f32 %v5679, %v5767
      %v5769 = vpop.f32.mrf.mxu0
      %v5770 = vadd.f32 %v5681, %v5769
      %5771 = vmatmul.bf16.gmra.mxu0 %v2123
      %v5772 = vpop.f32.mrf.mxu0
      %v5773 = vadd.f32 %v5684, %v5772
      %v5774 = vpop.f32.mrf.mxu0
      %v5775 = vadd.f32 %v5686, %v5774
      %5776 = vdwg.mxu0
      %5777 = vmatpush.bf16.msra.mxu0 %v4134
      %5778 = vmatpush.bf16.msra.mxu0 %v4133
      %5779 = vmatpush.bf16.msra.mxu0 %v4132
      %5780 = vmatpush.bf16.msra.mxu0 %v4131
      %5781 = vmatpush.bf16.msra.mxu0 %v4130
      %5782 = vmatpush.bf16.msra.mxu0 %v4129
      %5783 = vmatpush.bf16.msra.mxu0 %v4128
      %5784 = vmatpush.bf16.msra.mxu0 %v4127
      %5785 = vmatmul.bf16.gmra.mxu0 %v1524
      %v5786 = vpop.f32.mrf.mxu0
      %v5787 = vadd.f32 %v5698, %v5786
      %v5788 = vpop.f32.mrf.mxu0
      %v5789 = vadd.f32 %v5700, %v5788
      %5790 = vmatmul.bf16.gmra.mxu0 %v1564
      %v5791 = vpop.f32.mrf.mxu0
      %v5792 = vadd.f32 %v5703, %v5791
      %v5793 = vpop.f32.mrf.mxu0
      %v5794 = vadd.f32 %v5705, %v5793
      %5795 = vmatmul.bf16.gmra.mxu0 %v1604
      %v5796 = vpop.f32.mrf.mxu0
      %v5797 = vadd.f32 %v5708, %v5796
      %v5798 = vpop.f32.mrf.mxu0
      %v5799 = vadd.f32 %v5710, %v5798
      %5800 = vmatmul.bf16.gmra.mxu0 %v1644
      %v5801 = vpop.f32.mrf.mxu0
      %v5802 = vadd.f32 %v5713, %v5801
      %v5803 = vpop.f32.mrf.mxu0
      %v5804 = vadd.f32 %v5715, %v5803
      %5805 = vmatmul.bf16.gmra.mxu0 %v1684
      %v5806 = vpop.f32.mrf.mxu0
      %v5807 = vadd.f32 %v5718, %v5806
      %v5808 = vpop.f32.mrf.mxu0
      %v5809 = vadd.f32 %v5720, %v5808
      %5810 = vmatmul.bf16.gmra.mxu0 %v1724
      %v5811 = vpop.f32.mrf.mxu0
      %v5812 = vadd.f32 %v5723, %v5811
      %v5813 = vpop.f32.mrf.mxu0
      %v5814 = vadd.f32 %v5725, %v5813
      %5815 = vmatmul.bf16.gmra.mxu0 %v1764
      %v5816 = vpop.f32.mrf.mxu0
      %v5817 = vadd.f32 %v5728, %v5816
      %v5818 = vpop.f32.mrf.mxu0
      %v5819 = vadd.f32 %v5730, %v5818
      %5820 = vmatmul.bf16.gmra.mxu0 %v1804
      %v5821 = vpop.f32.mrf.mxu0
      %v5822 = vadd.f32 %v5733, %v5821
      %v5823 = vpop.f32.mrf.mxu0
      %v5824 = vadd.f32 %v5735, %v5823
      %5825 = vmatmul.bf16.gmra.mxu0 %v1844
      %v5826 = vpop.f32.mrf.mxu0
      %v5827 = vadd.f32 %v5738, %v5826
      %v5828 = vpop.f32.mrf.mxu0
      %v5829 = vadd.f32 %v5740, %v5828
      %5830 = vmatmul.bf16.gmra.mxu0 %v1884
      %v5831 = vpop.f32.mrf.mxu0
      %v5832 = vadd.f32 %v5743, %v5831
      %v5833 = vpop.f32.mrf.mxu0
      %v5834 = vadd.f32 %v5745, %v5833
      %5835 = vmatmul.bf16.gmra.mxu0 %v1924
      %v5836 = vpop.f32.mrf.mxu0
      %v5837 = vadd.f32 %v5748, %v5836
      %v5838 = vpop.f32.mrf.mxu0
      %v5839 = vadd.f32 %v5750, %v5838
      %5840 = vmatmul.bf16.gmra.mxu0 %v1964
      %v5841 = vpop.f32.mrf.mxu0
      %v5842 = vadd.f32 %v5753, %v5841
      %v5843 = vpop.f32.mrf.mxu0
      %v5844 = vadd.f32 %v5755, %v5843
      %5845 = vmatmul.bf16.gmra.mxu0 %v2004
      %v5846 = vpop.f32.mrf.mxu0
      %v5847 = vadd.f32 %v5758, %v5846
      %v5848 = vpop.f32.mrf.mxu0
      %v5849 = vadd.f32 %v5760, %v5848
      %5850 = vmatmul.bf16.gmra.mxu0 %v2044
      %v5851 = vpop.f32.mrf.mxu0
      %v5852 = vadd.f32 %v5763, %v5851
      %v5853 = vpop.f32.mrf.mxu0
      %v5854 = vadd.f32 %v5765, %v5853
      %5855 = vmatmul.bf16.gmra.mxu0 %v2084
      %v5856 = vpop.f32.mrf.mxu0
      %v5857 = vadd.f32 %v5768, %v5856
      %v5858 = vpop.f32.mrf.mxu0
      %v5859 = vadd.f32 %v5770, %v5858
      %5860 = vmatmul.bf16.gmra.mxu0 %v2124
      %v5861 = vpop.f32.mrf.mxu0
      %v5862 = vadd.f32 %v5773, %v5861
      %v5863 = vpop.f32.mrf.mxu0
      %v5864 = vadd.f32 %v5775, %v5863
      %5865 = vdwg.mxu0
      %5866 = vmatpush.bf16.msra.mxu0 %v4142
      %5867 = vmatpush.bf16.msra.mxu0 %v4141
      %5868 = vmatpush.bf16.msra.mxu0 %v4140
      %5869 = vmatpush.bf16.msra.mxu0 %v4139
      %5870 = vmatpush.bf16.msra.mxu0 %v4138
      %5871 = vmatpush.bf16.msra.mxu0 %v4137
      %5872 = vmatpush.bf16.msra.mxu0 %v4136
      %5873 = vmatpush.bf16.msra.mxu0 %v4135
      %5874 = vmatmul.bf16.gmra.mxu0 %v1525
      %v5875 = vpop.f32.mrf.mxu0
      %v5876 = vadd.f32 %v5787, %v5875
      %v5877 = vpop.f32.mrf.mxu0
      %v5878 = vadd.f32 %v5789, %v5877
      %5879 = vmatmul.bf16.gmra.mxu0 %v1565
      %v5880 = vpop.f32.mrf.mxu0
      %v5881 = vadd.f32 %v5792, %v5880
      %v5882 = vpop.f32.mrf.mxu0
      %v5883 = vadd.f32 %v5794, %v5882
      %5884 = vmatmul.bf16.gmra.mxu0 %v1605
      %v5885 = vpop.f32.mrf.mxu0
      %v5886 = vadd.f32 %v5797, %v5885
      %v5887 = vpop.f32.mrf.mxu0
      %v5888 = vadd.f32 %v5799, %v5887
      %5889 = vmatmul.bf16.gmra.mxu0 %v1645
      %v5890 = vpop.f32.mrf.mxu0
      %v5891 = vadd.f32 %v5802, %v5890
      %v5892 = vpop.f32.mrf.mxu0
      %v5893 = vadd.f32 %v5804, %v5892
      %5894 = vmatmul.bf16.gmra.mxu0 %v1685
      %v5895 = vpop.f32.mrf.mxu0
      %v5896 = vadd.f32 %v5807, %v5895
      %v5897 = vpop.f32.mrf.mxu0
      %v5898 = vadd.f32 %v5809, %v5897
      %5899 = vmatmul.bf16.gmra.mxu0 %v1725
      %v5900 = vpop.f32.mrf.mxu0
      %v5901 = vadd.f32 %v5812, %v5900
      %v5902 = vpop.f32.mrf.mxu0
      %v5903 = vadd.f32 %v5814, %v5902
      %5904 = vmatmul.bf16.gmra.mxu0 %v1765
      %v5905 = vpop.f32.mrf.mxu0
      %v5906 = vadd.f32 %v5817, %v5905
      %v5907 = vpop.f32.mrf.mxu0
      %v5908 = vadd.f32 %v5819, %v5907
      %5909 = vmatmul.bf16.gmra.mxu0 %v1805
      %v5910 = vpop.f32.mrf.mxu0
      %v5911 = vadd.f32 %v5822, %v5910
      %v5912 = vpop.f32.mrf.mxu0
      %v5913 = vadd.f32 %v5824, %v5912
      %5914 = vmatmul.bf16.gmra.mxu0 %v1845
      %v5915 = vpop.f32.mrf.mxu0
      %v5916 = vadd.f32 %v5827, %v5915
      %v5917 = vpop.f32.mrf.mxu0
      %v5918 = vadd.f32 %v5829, %v5917
      %5919 = vmatmul.bf16.gmra.mxu0 %v1885
      %v5920 = vpop.f32.mrf.mxu0
      %v5921 = vadd.f32 %v5832, %v5920
      %v5922 = vpop.f32.mrf.mxu0
      %v5923 = vadd.f32 %v5834, %v5922
      %5924 = vmatmul.bf16.gmra.mxu0 %v1925
      %v5925 = vpop.f32.mrf.mxu0
      %v5926 = vadd.f32 %v5837, %v5925
      %v5927 = vpop.f32.mrf.mxu0
      %v5928 = vadd.f32 %v5839, %v5927
      %5929 = vmatmul.bf16.gmra.mxu0 %v1965
      %v5930 = vpop.f32.mrf.mxu0
      %v5931 = vadd.f32 %v5842, %v5930
      %v5932 = vpop.f32.mrf.mxu0
      %v5933 = vadd.f32 %v5844, %v5932
      %5934 = vmatmul.bf16.gmra.mxu0 %v2005
      %v5935 = vpop.f32.mrf.mxu0
      %v5936 = vadd.f32 %v5847, %v5935
      %v5937 = vpop.f32.mrf.mxu0
      %v5938 = vadd.f32 %v5849, %v5937
      %5939 = vmatmul.bf16.gmra.mxu0 %v2045
      %v5940 = vpop.f32.mrf.mxu0
      %v5941 = vadd.f32 %v5852, %v5940
      %v5942 = vpop.f32.mrf.mxu0
      %v5943 = vadd.f32 %v5854, %v5942
      %5944 = vmatmul.bf16.gmra.mxu0 %v2085
      %v5945 = vpop.f32.mrf.mxu0
      %v5946 = vadd.f32 %v5857, %v5945
      %v5947 = vpop.f32.mrf.mxu0
      %v5948 = vadd.f32 %v5859, %v5947
      %5949 = vmatmul.bf16.gmra.mxu0 %v2125
      %v5950 = vpop.f32.mrf.mxu0
      %v5951 = vadd.f32 %v5862, %v5950
      %v5952 = vpop.f32.mrf.mxu0
      %v5953 = vadd.f32 %v5864, %v5952
      %5954 = vdwg.mxu0
      %5955 = vmatpush.bf16.msra.mxu0 %v4150
      %5956 = vmatpush.bf16.msra.mxu0 %v4149
      %5957 = vmatpush.bf16.msra.mxu0 %v4148
      %5958 = vmatpush.bf16.msra.mxu0 %v4147
      %5959 = vmatpush.bf16.msra.mxu0 %v4146
      %5960 = vmatpush.bf16.msra.mxu0 %v4145
      %5961 = vmatpush.bf16.msra.mxu0 %v4144
      %5962 = vmatpush.bf16.msra.mxu0 %v4143
      %5963 = vmatmul.bf16.gmra.mxu0 %v1526
      %v5964 = vpop.f32.mrf.mxu0
      %v5965 = vadd.f32 %v5876, %v5964
      %v5966 = vpop.f32.mrf.mxu0
      %v5967 = vadd.f32 %v5878, %v5966
      %5968 = vmatmul.bf16.gmra.mxu0 %v1566
      %v5969 = vpop.f32.mrf.mxu0
      %v5970 = vadd.f32 %v5881, %v5969
      %v5971 = vpop.f32.mrf.mxu0
      %v5972 = vadd.f32 %v5883, %v5971
      %5973 = vmatmul.bf16.gmra.mxu0 %v1606
      %v5974 = vpop.f32.mrf.mxu0
      %v5975 = vadd.f32 %v5886, %v5974
      %v5976 = vpop.f32.mrf.mxu0
      %v5977 = vadd.f32 %v5888, %v5976
      %5978 = vmatmul.bf16.gmra.mxu0 %v1646
      %v5979 = vpop.f32.mrf.mxu0
      %v5980 = vadd.f32 %v5891, %v5979
      %v5981 = vpop.f32.mrf.mxu0
      %v5982 = vadd.f32 %v5893, %v5981
      %5983 = vmatmul.bf16.gmra.mxu0 %v1686
      %v5984 = vpop.f32.mrf.mxu0
      %v5985 = vadd.f32 %v5896, %v5984
      %v5986 = vpop.f32.mrf.mxu0
      %v5987 = vadd.f32 %v5898, %v5986
      %5988 = vmatmul.bf16.gmra.mxu0 %v1726
      %v5989 = vpop.f32.mrf.mxu0
      %v5990 = vadd.f32 %v5901, %v5989
      %v5991 = vpop.f32.mrf.mxu0
      %v5992 = vadd.f32 %v5903, %v5991
      %5993 = vmatmul.bf16.gmra.mxu0 %v1766
      %v5994 = vpop.f32.mrf.mxu0
      %v5995 = vadd.f32 %v5906, %v5994
      %v5996 = vpop.f32.mrf.mxu0
      %v5997 = vadd.f32 %v5908, %v5996
      %5998 = vmatmul.bf16.gmra.mxu0 %v1806
      %v5999 = vpop.f32.mrf.mxu0
      %v6000 = vadd.f32 %v5911, %v5999
      %v6001 = vpop.f32.mrf.mxu0
      %v6002 = vadd.f32 %v5913, %v6001
      %6003 = vmatmul.bf16.gmra.mxu0 %v1846
      %v6004 = vpop.f32.mrf.mxu0
      %v6005 = vadd.f32 %v5916, %v6004
      %v6006 = vpop.f32.mrf.mxu0
      %v6007 = vadd.f32 %v5918, %v6006
      %6008 = vmatmul.bf16.gmra.mxu0 %v1886
      %v6009 = vpop.f32.mrf.mxu0
      %v6010 = vadd.f32 %v5921, %v6009
      %v6011 = vpop.f32.mrf.mxu0
      %v6012 = vadd.f32 %v5923, %v6011
      %6013 = vmatmul.bf16.gmra.mxu0 %v1926
      %v6014 = vpop.f32.mrf.mxu0
      %v6015 = vadd.f32 %v5926, %v6014
      %v6016 = vpop.f32.mrf.mxu0
      %v6017 = vadd.f32 %v5928, %v6016
      %6018 = vmatmul.bf16.gmra.mxu0 %v1966
      %v6019 = vpop.f32.mrf.mxu0
      %v6020 = vadd.f32 %v5931, %v6019
      %v6021 = vpop.f32.mrf.mxu0
      %v6022 = vadd.f32 %v5933, %v6021
      %6023 = vmatmul.bf16.gmra.mxu0 %v2006
      %v6024 = vpop.f32.mrf.mxu0
      %v6025 = vadd.f32 %v5936, %v6024
      %v6026 = vpop.f32.mrf.mxu0
      %v6027 = vadd.f32 %v5938, %v6026
      %6028 = vmatmul.bf16.gmra.mxu0 %v2046
      %v6029 = vpop.f32.mrf.mxu0
      %v6030 = vadd.f32 %v5941, %v6029
      %v6031 = vpop.f32.mrf.mxu0
      %v6032 = vadd.f32 %v5943, %v6031
      %6033 = vmatmul.bf16.gmra.mxu0 %v2086
      %v6034 = vpop.f32.mrf.mxu0
      %v6035 = vadd.f32 %v5946, %v6034
      %v6036 = vpop.f32.mrf.mxu0
      %v6037 = vadd.f32 %v5948, %v6036
      %6038 = vmatmul.bf16.gmra.mxu0 %v2126
      %v6039 = vpop.f32.mrf.mxu0
      %v6040 = vadd.f32 %v5951, %v6039
      %v6041 = vpop.f32.mrf.mxu0
      %v6042 = vadd.f32 %v5953, %v6041
      %6043 = vdwg.mxu0
      %6044 = vmatpush.bf16.msra.mxu0 %v4158
      %6045 = vmatpush.bf16.msra.mxu0 %v4157
      %6046 = vmatpush.bf16.msra.mxu0 %v4156
      %6047 = vmatpush.bf16.msra.mxu0 %v4155
      %6048 = vmatpush.bf16.msra.mxu0 %v4154
      %6049 = vmatpush.bf16.msra.mxu0 %v4153
      %6050 = vmatpush.bf16.msra.mxu0 %v4152
      %6051 = vmatpush.bf16.msra.mxu0 %v4151
      %6052 = vmatmul.bf16.gmra.mxu0 %v1527
      %v6053 = vpop.f32.mrf.mxu0
      %v6054 = vadd.f32 %v5965, %v6053
      %v6055 = vpop.f32.mrf.mxu0
      %v6056 = vadd.f32 %v5967, %v6055
      %6057 = vmatmul.bf16.gmra.mxu0 %v1567
      %v6058 = vpop.f32.mrf.mxu0
      %v6059 = vadd.f32 %v5970, %v6058
      %v6060 = vpop.f32.mrf.mxu0
      %v6061 = vadd.f32 %v5972, %v6060
      %6062 = vmatmul.bf16.gmra.mxu0 %v1607
      %v6063 = vpop.f32.mrf.mxu0
      %v6064 = vadd.f32 %v5975, %v6063
      %v6065 = vpop.f32.mrf.mxu0
      %v6066 = vadd.f32 %v5977, %v6065
      %6067 = vmatmul.bf16.gmra.mxu0 %v1647
      %v6068 = vpop.f32.mrf.mxu0
      %v6069 = vadd.f32 %v5980, %v6068
      %v6070 = vpop.f32.mrf.mxu0
      %v6071 = vadd.f32 %v5982, %v6070
      %6072 = vmatmul.bf16.gmra.mxu0 %v1687
      %v6073 = vpop.f32.mrf.mxu0
      %v6074 = vadd.f32 %v5985, %v6073
      %v6075 = vpop.f32.mrf.mxu0
      %v6076 = vadd.f32 %v5987, %v6075
      %6077 = vmatmul.bf16.gmra.mxu0 %v1727
      %v6078 = vpop.f32.mrf.mxu0
      %v6079 = vadd.f32 %v5990, %v6078
      %v6080 = vpop.f32.mrf.mxu0
      %v6081 = vadd.f32 %v5992, %v6080
      %6082 = vmatmul.bf16.gmra.mxu0 %v1767
      %v6083 = vpop.f32.mrf.mxu0
      %v6084 = vadd.f32 %v5995, %v6083
      %v6085 = vpop.f32.mrf.mxu0
      %v6086 = vadd.f32 %v5997, %v6085
      %6087 = vmatmul.bf16.gmra.mxu0 %v1807
      %v6088 = vpop.f32.mrf.mxu0
      %v6089 = vadd.f32 %v6000, %v6088
      %v6090 = vpop.f32.mrf.mxu0
      %v6091 = vadd.f32 %v6002, %v6090
      %6092 = vmatmul.bf16.gmra.mxu0 %v1847
      %v6093 = vpop.f32.mrf.mxu0
      %v6094 = vadd.f32 %v6005, %v6093
      %v6095 = vpop.f32.mrf.mxu0
      %v6096 = vadd.f32 %v6007, %v6095
      %6097 = vmatmul.bf16.gmra.mxu0 %v1887
      %v6098 = vpop.f32.mrf.mxu0
      %v6099 = vadd.f32 %v6010, %v6098
      %v6100 = vpop.f32.mrf.mxu0
      %v6101 = vadd.f32 %v6012, %v6100
      %6102 = vmatmul.bf16.gmra.mxu0 %v1927
      %v6103 = vpop.f32.mrf.mxu0
      %v6104 = vadd.f32 %v6015, %v6103
      %v6105 = vpop.f32.mrf.mxu0
      %v6106 = vadd.f32 %v6017, %v6105
      %6107 = vmatmul.bf16.gmra.mxu0 %v1967
      %v6108 = vpop.f32.mrf.mxu0
      %v6109 = vadd.f32 %v6020, %v6108
      %v6110 = vpop.f32.mrf.mxu0
      %v6111 = vadd.f32 %v6022, %v6110
      %6112 = vmatmul.bf16.gmra.mxu0 %v2007
      %v6113 = vpop.f32.mrf.mxu0
      %v6114 = vadd.f32 %v6025, %v6113
      %v6115 = vpop.f32.mrf.mxu0
      %v6116 = vadd.f32 %v6027, %v6115
      %6117 = vmatmul.bf16.gmra.mxu0 %v2047
      %v6118 = vpop.f32.mrf.mxu0
      %v6119 = vadd.f32 %v6030, %v6118
      %v6120 = vpop.f32.mrf.mxu0
      %v6121 = vadd.f32 %v6032, %v6120
      %6122 = vmatmul.bf16.gmra.mxu0 %v2087
      %v6123 = vpop.f32.mrf.mxu0
      %v6124 = vadd.f32 %v6035, %v6123
      %v6125 = vpop.f32.mrf.mxu0
      %v6126 = vadd.f32 %v6037, %v6125
      %6127 = vmatmul.bf16.gmra.mxu0 %v2127
      %v6128 = vpop.f32.mrf.mxu0
      %v6129 = vadd.f32 %v6040, %v6128
      %v6130 = vpop.f32.mrf.mxu0
      %v6131 = vadd.f32 %v6042, %v6130
      %6132 = vdwg.mxu0
      %6133 = vmatpush.bf16.msra.mxu0 %v4166
      %6134 = vmatpush.bf16.msra.mxu0 %v4165
      %6135 = vmatpush.bf16.msra.mxu0 %v4164
      %6136 = vmatpush.bf16.msra.mxu0 %v4163
      %6137 = vmatpush.bf16.msra.mxu0 %v4162
      %6138 = vmatpush.bf16.msra.mxu0 %v4161
      %6139 = vmatpush.bf16.msra.mxu0 %v4160
      %6140 = vmatpush.bf16.msra.mxu0 %v4159
      %6141 = vmatmul.bf16.gmra.mxu0 %v1528
      %v6142 = vpop.f32.mrf.mxu0
      %v6143 = vadd.f32 %v6054, %v6142
      %v6144 = vpop.f32.mrf.mxu0
      %v6145 = vadd.f32 %v6056, %v6144
      %6146 = vmatmul.bf16.gmra.mxu0 %v1568
      %v6147 = vpop.f32.mrf.mxu0
      %v6148 = vadd.f32 %v6059, %v6147
      %v6149 = vpop.f32.mrf.mxu0
      %v6150 = vadd.f32 %v6061, %v6149
      %6151 = vmatmul.bf16.gmra.mxu0 %v1608
      %v6152 = vpop.f32.mrf.mxu0
      %v6153 = vadd.f32 %v6064, %v6152
      %v6154 = vpop.f32.mrf.mxu0
      %v6155 = vadd.f32 %v6066, %v6154
      %6156 = vmatmul.bf16.gmra.mxu0 %v1648
      %v6157 = vpop.f32.mrf.mxu0
      %v6158 = vadd.f32 %v6069, %v6157
      %v6159 = vpop.f32.mrf.mxu0
      %v6160 = vadd.f32 %v6071, %v6159
      %6161 = vmatmul.bf16.gmra.mxu0 %v1688
      %v6162 = vpop.f32.mrf.mxu0
      %v6163 = vadd.f32 %v6074, %v6162
      %v6164 = vpop.f32.mrf.mxu0
      %v6165 = vadd.f32 %v6076, %v6164
      %6166 = vmatmul.bf16.gmra.mxu0 %v1728
      %v6167 = vpop.f32.mrf.mxu0
      %v6168 = vadd.f32 %v6079, %v6167
      %v6169 = vpop.f32.mrf.mxu0
      %v6170 = vadd.f32 %v6081, %v6169
      %6171 = vmatmul.bf16.gmra.mxu0 %v1768
      %v6172 = vpop.f32.mrf.mxu0
      %v6173 = vadd.f32 %v6084, %v6172
      %v6174 = vpop.f32.mrf.mxu0
      %v6175 = vadd.f32 %v6086, %v6174
      %6176 = vmatmul.bf16.gmra.mxu0 %v1808
      %v6177 = vpop.f32.mrf.mxu0
      %v6178 = vadd.f32 %v6089, %v6177
      %v6179 = vpop.f32.mrf.mxu0
      %v6180 = vadd.f32 %v6091, %v6179
      %6181 = vmatmul.bf16.gmra.mxu0 %v1848
      %v6182 = vpop.f32.mrf.mxu0
      %v6183 = vadd.f32 %v6094, %v6182
      %v6184 = vpop.f32.mrf.mxu0
      %v6185 = vadd.f32 %v6096, %v6184
      %6186 = vmatmul.bf16.gmra.mxu0 %v1888
      %v6187 = vpop.f32.mrf.mxu0
      %v6188 = vadd.f32 %v6099, %v6187
      %v6189 = vpop.f32.mrf.mxu0
      %v6190 = vadd.f32 %v6101, %v6189
      %6191 = vmatmul.bf16.gmra.mxu0 %v1928
      %v6192 = vpop.f32.mrf.mxu0
      %v6193 = vadd.f32 %v6104, %v6192
      %v6194 = vpop.f32.mrf.mxu0
      %v6195 = vadd.f32 %v6106, %v6194
      %6196 = vmatmul.bf16.gmra.mxu0 %v1968
      %v6197 = vpop.f32.mrf.mxu0
      %v6198 = vadd.f32 %v6109, %v6197
      %v6199 = vpop.f32.mrf.mxu0
      %v6200 = vadd.f32 %v6111, %v6199
      %6201 = vmatmul.bf16.gmra.mxu0 %v2008
      %v6202 = vpop.f32.mrf.mxu0
      %v6203 = vadd.f32 %v6114, %v6202
      %v6204 = vpop.f32.mrf.mxu0
      %v6205 = vadd.f32 %v6116, %v6204
      %6206 = vmatmul.bf16.gmra.mxu0 %v2048
      %v6207 = vpop.f32.mrf.mxu0
      %v6208 = vadd.f32 %v6119, %v6207
      %v6209 = vpop.f32.mrf.mxu0
      %v6210 = vadd.f32 %v6121, %v6209
      %6211 = vmatmul.bf16.gmra.mxu0 %v2088
      %v6212 = vpop.f32.mrf.mxu0
      %v6213 = vadd.f32 %v6124, %v6212
      %v6214 = vpop.f32.mrf.mxu0
      %v6215 = vadd.f32 %v6126, %v6214
      %6216 = vmatmul.bf16.gmra.mxu0 %v2128
      %v6217 = vpop.f32.mrf.mxu0
      %v6218 = vadd.f32 %v6129, %v6217
      %v6219 = vpop.f32.mrf.mxu0
      %v6220 = vadd.f32 %v6131, %v6219
      %6221 = vdwg.mxu0
      %6222 = vmatpush.bf16.msra.mxu0 %v4174
      %6223 = vmatpush.bf16.msra.mxu0 %v4173
      %6224 = vmatpush.bf16.msra.mxu0 %v4172
      %6225 = vmatpush.bf16.msra.mxu0 %v4171
      %6226 = vmatpush.bf16.msra.mxu0 %v4170
      %6227 = vmatpush.bf16.msra.mxu0 %v4169
      %6228 = vmatpush.bf16.msra.mxu0 %v4168
      %6229 = vmatpush.bf16.msra.mxu0 %v4167
      %6230 = vmatmul.bf16.gmra.mxu0 %v1529
      %v6231 = vpop.f32.mrf.mxu0
      %v6232 = vadd.f32 %v6143, %v6231
      %v6233 = vpop.f32.mrf.mxu0
      %v6234 = vadd.f32 %v6145, %v6233
      %6235 = vmatmul.bf16.gmra.mxu0 %v1569
      %v6236 = vpop.f32.mrf.mxu0
      %v6237 = vadd.f32 %v6148, %v6236
      %v6238 = vpop.f32.mrf.mxu0
      %v6239 = vadd.f32 %v6150, %v6238
      %6240 = vmatmul.bf16.gmra.mxu0 %v1609
      %v6241 = vpop.f32.mrf.mxu0
      %v6242 = vadd.f32 %v6153, %v6241
      %v6243 = vpop.f32.mrf.mxu0
      %v6244 = vadd.f32 %v6155, %v6243
      %6245 = vmatmul.bf16.gmra.mxu0 %v1649
      %v6246 = vpop.f32.mrf.mxu0
      %v6247 = vadd.f32 %v6158, %v6246
      %v6248 = vpop.f32.mrf.mxu0
      %v6249 = vadd.f32 %v6160, %v6248
      %6250 = vmatmul.bf16.gmra.mxu0 %v1689
      %v6251 = vpop.f32.mrf.mxu0
      %v6252 = vadd.f32 %v6163, %v6251
      %v6253 = vpop.f32.mrf.mxu0
      %v6254 = vadd.f32 %v6165, %v6253
      %6255 = vmatmul.bf16.gmra.mxu0 %v1729
      %v6256 = vpop.f32.mrf.mxu0
      %v6257 = vadd.f32 %v6168, %v6256
      %v6258 = vpop.f32.mrf.mxu0
      %v6259 = vadd.f32 %v6170, %v6258
      %6260 = vmatmul.bf16.gmra.mxu0 %v1769
      %v6261 = vpop.f32.mrf.mxu0
      %v6262 = vadd.f32 %v6173, %v6261
      %v6263 = vpop.f32.mrf.mxu0
      %v6264 = vadd.f32 %v6175, %v6263
      %6265 = vmatmul.bf16.gmra.mxu0 %v1809
      %v6266 = vpop.f32.mrf.mxu0
      %v6267 = vadd.f32 %v6178, %v6266
      %v6268 = vpop.f32.mrf.mxu0
      %v6269 = vadd.f32 %v6180, %v6268
      %6270 = vmatmul.bf16.gmra.mxu0 %v1849
      %v6271 = vpop.f32.mrf.mxu0
      %v6272 = vadd.f32 %v6183, %v6271
      %v6273 = vpop.f32.mrf.mxu0
      %v6274 = vadd.f32 %v6185, %v6273
      %6275 = vmatmul.bf16.gmra.mxu0 %v1889
      %v6276 = vpop.f32.mrf.mxu0
      %v6277 = vadd.f32 %v6188, %v6276
      %v6278 = vpop.f32.mrf.mxu0
      %v6279 = vadd.f32 %v6190, %v6278
      %6280 = vmatmul.bf16.gmra.mxu0 %v1929
      %v6281 = vpop.f32.mrf.mxu0
      %v6282 = vadd.f32 %v6193, %v6281
      %v6283 = vpop.f32.mrf.mxu0
      %v6284 = vadd.f32 %v6195, %v6283
      %6285 = vmatmul.bf16.gmra.mxu0 %v1969
      %v6286 = vpop.f32.mrf.mxu0
      %v6287 = vadd.f32 %v6198, %v6286
      %v6288 = vpop.f32.mrf.mxu0
      %v6289 = vadd.f32 %v6200, %v6288
      %6290 = vmatmul.bf16.gmra.mxu0 %v2009
      %v6291 = vpop.f32.mrf.mxu0
      %v6292 = vadd.f32 %v6203, %v6291
      %v6293 = vpop.f32.mrf.mxu0
      %v6294 = vadd.f32 %v6205, %v6293
      %6295 = vmatmul.bf16.gmra.mxu0 %v2049
      %v6296 = vpop.f32.mrf.mxu0
      %v6297 = vadd.f32 %v6208, %v6296
      %v6298 = vpop.f32.mrf.mxu0
      %v6299 = vadd.f32 %v6210, %v6298
      %6300 = vmatmul.bf16.gmra.mxu0 %v2089
      %v6301 = vpop.f32.mrf.mxu0
      %v6302 = vadd.f32 %v6213, %v6301
      %v6303 = vpop.f32.mrf.mxu0
      %v6304 = vadd.f32 %v6215, %v6303
      %6305 = vmatmul.bf16.gmra.mxu0 %v2129
      %v6306 = vpop.f32.mrf.mxu0
      %v6307 = vadd.f32 %v6218, %v6306
      %v6308 = vpop.f32.mrf.mxu0
      %v6309 = vadd.f32 %v6220, %v6308
      %6310 = vdwg.mxu0
      %6311 = vmatpush.bf16.msra.mxu0 %v4182
      %6312 = vmatpush.bf16.msra.mxu0 %v4181
      %6313 = vmatpush.bf16.msra.mxu0 %v4180
      %6314 = vmatpush.bf16.msra.mxu0 %v4179
      %6315 = vmatpush.bf16.msra.mxu0 %v4178
      %6316 = vmatpush.bf16.msra.mxu0 %v4177
      %6317 = vmatpush.bf16.msra.mxu0 %v4176
      %6318 = vmatpush.bf16.msra.mxu0 %v4175
      %6319 = vmatmul.bf16.gmra.mxu0 %v1530
      %v6320 = vpop.f32.mrf.mxu0
      %v6321 = vadd.f32 %v6232, %v6320
      %v6322 = vpop.f32.mrf.mxu0
      %v6323 = vadd.f32 %v6234, %v6322
      %6324 = vmatmul.bf16.gmra.mxu0 %v1570
      %v6325 = vpop.f32.mrf.mxu0
      %v6326 = vadd.f32 %v6237, %v6325
      %v6327 = vpop.f32.mrf.mxu0
      %v6328 = vadd.f32 %v6239, %v6327
      %6329 = vmatmul.bf16.gmra.mxu0 %v1610
      %v6330 = vpop.f32.mrf.mxu0
      %v6331 = vadd.f32 %v6242, %v6330
      %v6332 = vpop.f32.mrf.mxu0
      %v6333 = vadd.f32 %v6244, %v6332
      %6334 = vmatmul.bf16.gmra.mxu0 %v1650
      %v6335 = vpop.f32.mrf.mxu0
      %v6336 = vadd.f32 %v6247, %v6335
      %v6337 = vpop.f32.mrf.mxu0
      %v6338 = vadd.f32 %v6249, %v6337
      %6339 = vmatmul.bf16.gmra.mxu0 %v1690
      %v6340 = vpop.f32.mrf.mxu0
      %v6341 = vadd.f32 %v6252, %v6340
      %v6342 = vpop.f32.mrf.mxu0
      %v6343 = vadd.f32 %v6254, %v6342
      %6344 = vmatmul.bf16.gmra.mxu0 %v1730
      %v6345 = vpop.f32.mrf.mxu0
      %v6346 = vadd.f32 %v6257, %v6345
      %v6347 = vpop.f32.mrf.mxu0
      %v6348 = vadd.f32 %v6259, %v6347
      %6349 = vmatmul.bf16.gmra.mxu0 %v1770
      %v6350 = vpop.f32.mrf.mxu0
      %v6351 = vadd.f32 %v6262, %v6350
      %v6352 = vpop.f32.mrf.mxu0
      %v6353 = vadd.f32 %v6264, %v6352
      %6354 = vmatmul.bf16.gmra.mxu0 %v1810
      %v6355 = vpop.f32.mrf.mxu0
      %v6356 = vadd.f32 %v6267, %v6355
      %v6357 = vpop.f32.mrf.mxu0
      %v6358 = vadd.f32 %v6269, %v6357
      %6359 = vmatmul.bf16.gmra.mxu0 %v1850
      %v6360 = vpop.f32.mrf.mxu0
      %v6361 = vadd.f32 %v6272, %v6360
      %v6362 = vpop.f32.mrf.mxu0
      %v6363 = vadd.f32 %v6274, %v6362
      %6364 = vmatmul.bf16.gmra.mxu0 %v1890
      %v6365 = vpop.f32.mrf.mxu0
      %v6366 = vadd.f32 %v6277, %v6365
      %v6367 = vpop.f32.mrf.mxu0
      %v6368 = vadd.f32 %v6279, %v6367
      %6369 = vmatmul.bf16.gmra.mxu0 %v1930
      %v6370 = vpop.f32.mrf.mxu0
      %v6371 = vadd.f32 %v6282, %v6370
      %v6372 = vpop.f32.mrf.mxu0
      %v6373 = vadd.f32 %v6284, %v6372
      %6374 = vmatmul.bf16.gmra.mxu0 %v1970
      %v6375 = vpop.f32.mrf.mxu0
      %v6376 = vadd.f32 %v6287, %v6375
      %v6377 = vpop.f32.mrf.mxu0
      %v6378 = vadd.f32 %v6289, %v6377
      %6379 = vmatmul.bf16.gmra.mxu0 %v2010
      %v6380 = vpop.f32.mrf.mxu0
      %v6381 = vadd.f32 %v6292, %v6380
      %v6382 = vpop.f32.mrf.mxu0
      %v6383 = vadd.f32 %v6294, %v6382
      %6384 = vmatmul.bf16.gmra.mxu0 %v2050
      %v6385 = vpop.f32.mrf.mxu0
      %v6386 = vadd.f32 %v6297, %v6385
      %v6387 = vpop.f32.mrf.mxu0
      %v6388 = vadd.f32 %v6299, %v6387
      %6389 = vmatmul.bf16.gmra.mxu0 %v2090
      %v6390 = vpop.f32.mrf.mxu0
      %v6391 = vadd.f32 %v6302, %v6390
      %v6392 = vpop.f32.mrf.mxu0
      %v6393 = vadd.f32 %v6304, %v6392
      %6394 = vmatmul.bf16.gmra.mxu0 %v2130
      %v6395 = vpop.f32.mrf.mxu0
      %v6396 = vadd.f32 %v6307, %v6395
      %v6397 = vpop.f32.mrf.mxu0
      %v6398 = vadd.f32 %v6309, %v6397
      %6399 = vdwg.mxu0
      %6400 = vmatpush.bf16.msra.mxu0 %v4190
      %6401 = vmatpush.bf16.msra.mxu0 %v4189
      %6402 = vmatpush.bf16.msra.mxu0 %v4188
      %6403 = vmatpush.bf16.msra.mxu0 %v4187
      %6404 = vmatpush.bf16.msra.mxu0 %v4186
      %6405 = vmatpush.bf16.msra.mxu0 %v4185
      %6406 = vmatpush.bf16.msra.mxu0 %v4184
      %6407 = vmatpush.bf16.msra.mxu0 %v4183
      %6408 = vmatmul.bf16.gmra.mxu0 %v1531
      %v6409 = vpop.f32.mrf.mxu0
      %v6410 = vadd.f32 %v6321, %v6409
      %v6411 = vpop.f32.mrf.mxu0
      %v6412 = vadd.f32 %v6323, %v6411
      %6413 = vmatmul.bf16.gmra.mxu0 %v1571
      %v6414 = vpop.f32.mrf.mxu0
      %v6415 = vadd.f32 %v6326, %v6414
      %v6416 = vpop.f32.mrf.mxu0
      %v6417 = vadd.f32 %v6328, %v6416
      %6418 = vmatmul.bf16.gmra.mxu0 %v1611
      %v6419 = vpop.f32.mrf.mxu0
      %v6420 = vadd.f32 %v6331, %v6419
      %v6421 = vpop.f32.mrf.mxu0
      %v6422 = vadd.f32 %v6333, %v6421
      %6423 = vmatmul.bf16.gmra.mxu0 %v1651
      %v6424 = vpop.f32.mrf.mxu0
      %v6425 = vadd.f32 %v6336, %v6424
      %v6426 = vpop.f32.mrf.mxu0
      %v6427 = vadd.f32 %v6338, %v6426
      %6428 = vmatmul.bf16.gmra.mxu0 %v1691
      %v6429 = vpop.f32.mrf.mxu0
      %v6430 = vadd.f32 %v6341, %v6429
      %v6431 = vpop.f32.mrf.mxu0
      %v6432 = vadd.f32 %v6343, %v6431
      %6433 = vmatmul.bf16.gmra.mxu0 %v1731
      %v6434 = vpop.f32.mrf.mxu0
      %v6435 = vadd.f32 %v6346, %v6434
      %v6436 = vpop.f32.mrf.mxu0
      %v6437 = vadd.f32 %v6348, %v6436
      %6438 = vmatmul.bf16.gmra.mxu0 %v1771
      %v6439 = vpop.f32.mrf.mxu0
      %v6440 = vadd.f32 %v6351, %v6439
      %v6441 = vpop.f32.mrf.mxu0
      %v6442 = vadd.f32 %v6353, %v6441
      %6443 = vmatmul.bf16.gmra.mxu0 %v1811
      %v6444 = vpop.f32.mrf.mxu0
      %v6445 = vadd.f32 %v6356, %v6444
      %v6446 = vpop.f32.mrf.mxu0
      %v6447 = vadd.f32 %v6358, %v6446
      %6448 = vmatmul.bf16.gmra.mxu0 %v1851
      %v6449 = vpop.f32.mrf.mxu0
      %v6450 = vadd.f32 %v6361, %v6449
      %v6451 = vpop.f32.mrf.mxu0
      %v6452 = vadd.f32 %v6363, %v6451
      %6453 = vmatmul.bf16.gmra.mxu0 %v1891
      %v6454 = vpop.f32.mrf.mxu0
      %v6455 = vadd.f32 %v6366, %v6454
      %v6456 = vpop.f32.mrf.mxu0
      %v6457 = vadd.f32 %v6368, %v6456
      %6458 = vmatmul.bf16.gmra.mxu0 %v1931
      %v6459 = vpop.f32.mrf.mxu0
      %v6460 = vadd.f32 %v6371, %v6459
      %v6461 = vpop.f32.mrf.mxu0
      %v6462 = vadd.f32 %v6373, %v6461
      %6463 = vmatmul.bf16.gmra.mxu0 %v1971
      %v6464 = vpop.f32.mrf.mxu0
      %v6465 = vadd.f32 %v6376, %v6464
      %v6466 = vpop.f32.mrf.mxu0
      %v6467 = vadd.f32 %v6378, %v6466
      %6468 = vmatmul.bf16.gmra.mxu0 %v2011
      %v6469 = vpop.f32.mrf.mxu0
      %v6470 = vadd.f32 %v6381, %v6469
      %v6471 = vpop.f32.mrf.mxu0
      %v6472 = vadd.f32 %v6383, %v6471
      %6473 = vmatmul.bf16.gmra.mxu0 %v2051
      %v6474 = vpop.f32.mrf.mxu0
      %v6475 = vadd.f32 %v6386, %v6474
      %v6476 = vpop.f32.mrf.mxu0
      %v6477 = vadd.f32 %v6388, %v6476
      %6478 = vmatmul.bf16.gmra.mxu0 %v2091
      %v6479 = vpop.f32.mrf.mxu0
      %v6480 = vadd.f32 %v6391, %v6479
      %v6481 = vpop.f32.mrf.mxu0
      %v6482 = vadd.f32 %v6393, %v6481
      %6483 = vmatmul.bf16.gmra.mxu0 %v2131
      %v6484 = vpop.f32.mrf.mxu0
      %v6485 = vadd.f32 %v6396, %v6484
      %v6486 = vpop.f32.mrf.mxu0
      %v6487 = vadd.f32 %v6398, %v6486
      %6488 = vdwg.mxu0
      %6489 = vmatpush.bf16.msra.mxu0 %v4198
      %6490 = vmatpush.bf16.msra.mxu0 %v4197
      %6491 = vmatpush.bf16.msra.mxu0 %v4196
      %6492 = vmatpush.bf16.msra.mxu0 %v4195
      %6493 = vmatpush.bf16.msra.mxu0 %v4194
      %6494 = vmatpush.bf16.msra.mxu0 %v4193
      %6495 = vmatpush.bf16.msra.mxu0 %v4192
      %6496 = vmatpush.bf16.msra.mxu0 %v4191
      %6497 = vmatmul.bf16.gmra.mxu0 %v1532
      %v6498 = vpop.f32.mrf.mxu0
      %v6499 = vadd.f32 %v6410, %v6498
      %v6500 = vpop.f32.mrf.mxu0
      %v6501 = vadd.f32 %v6412, %v6500
      %6502 = vmatmul.bf16.gmra.mxu0 %v1572
      %v6503 = vpop.f32.mrf.mxu0
      %v6504 = vadd.f32 %v6415, %v6503
      %v6505 = vpop.f32.mrf.mxu0
      %v6506 = vadd.f32 %v6417, %v6505
      %6507 = vmatmul.bf16.gmra.mxu0 %v1612
      %v6508 = vpop.f32.mrf.mxu0
      %v6509 = vadd.f32 %v6420, %v6508
      %v6510 = vpop.f32.mrf.mxu0
      %v6511 = vadd.f32 %v6422, %v6510
      %6512 = vmatmul.bf16.gmra.mxu0 %v1652
      %v6513 = vpop.f32.mrf.mxu0
      %v6514 = vadd.f32 %v6425, %v6513
      %v6515 = vpop.f32.mrf.mxu0
      %v6516 = vadd.f32 %v6427, %v6515
      %6517 = vmatmul.bf16.gmra.mxu0 %v1692
      %v6518 = vpop.f32.mrf.mxu0
      %v6519 = vadd.f32 %v6430, %v6518
      %v6520 = vpop.f32.mrf.mxu0
      %v6521 = vadd.f32 %v6432, %v6520
      %6522 = vmatmul.bf16.gmra.mxu0 %v1732
      %v6523 = vpop.f32.mrf.mxu0
      %v6524 = vadd.f32 %v6435, %v6523
      %v6525 = vpop.f32.mrf.mxu0
      %v6526 = vadd.f32 %v6437, %v6525
      %6527 = vmatmul.bf16.gmra.mxu0 %v1772
      %v6528 = vpop.f32.mrf.mxu0
      %v6529 = vadd.f32 %v6440, %v6528
      %v6530 = vpop.f32.mrf.mxu0
      %v6531 = vadd.f32 %v6442, %v6530
      %6532 = vmatmul.bf16.gmra.mxu0 %v1812
      %v6533 = vpop.f32.mrf.mxu0
      %v6534 = vadd.f32 %v6445, %v6533
      %v6535 = vpop.f32.mrf.mxu0
      %v6536 = vadd.f32 %v6447, %v6535
      %6537 = vmatmul.bf16.gmra.mxu0 %v1852
      %v6538 = vpop.f32.mrf.mxu0
      %v6539 = vadd.f32 %v6450, %v6538
      %v6540 = vpop.f32.mrf.mxu0
      %v6541 = vadd.f32 %v6452, %v6540
      %6542 = vmatmul.bf16.gmra.mxu0 %v1892
      %v6543 = vpop.f32.mrf.mxu0
      %v6544 = vadd.f32 %v6455, %v6543
      %v6545 = vpop.f32.mrf.mxu0
      %v6546 = vadd.f32 %v6457, %v6545
      %6547 = vmatmul.bf16.gmra.mxu0 %v1932
      %v6548 = vpop.f32.mrf.mxu0
      %v6549 = vadd.f32 %v6460, %v6548
      %v6550 = vpop.f32.mrf.mxu0
      %v6551 = vadd.f32 %v6462, %v6550
      %6552 = vmatmul.bf16.gmra.mxu0 %v1972
      %v6553 = vpop.f32.mrf.mxu0
      %v6554 = vadd.f32 %v6465, %v6553
      %v6555 = vpop.f32.mrf.mxu0
      %v6556 = vadd.f32 %v6467, %v6555
      %6557 = vmatmul.bf16.gmra.mxu0 %v2012
      %v6558 = vpop.f32.mrf.mxu0
      %v6559 = vadd.f32 %v6470, %v6558
      %v6560 = vpop.f32.mrf.mxu0
      %v6561 = vadd.f32 %v6472, %v6560
      %6562 = vmatmul.bf16.gmra.mxu0 %v2052
      %v6563 = vpop.f32.mrf.mxu0
      %v6564 = vadd.f32 %v6475, %v6563
      %v6565 = vpop.f32.mrf.mxu0
      %v6566 = vadd.f32 %v6477, %v6565
      %6567 = vmatmul.bf16.gmra.mxu0 %v2092
      %v6568 = vpop.f32.mrf.mxu0
      %v6569 = vadd.f32 %v6480, %v6568
      %v6570 = vpop.f32.mrf.mxu0
      %v6571 = vadd.f32 %v6482, %v6570
      %6572 = vmatmul.bf16.gmra.mxu0 %v2132
      %v6573 = vpop.f32.mrf.mxu0
      %v6574 = vadd.f32 %v6485, %v6573
      %v6575 = vpop.f32.mrf.mxu0
      %v6576 = vadd.f32 %v6487, %v6575
      %6577 = vdwg.mxu0
      %6578 = vmatpush.bf16.msra.mxu0 %v4206
      %6579 = vmatpush.bf16.msra.mxu0 %v4205
      %6580 = vmatpush.bf16.msra.mxu0 %v4204
      %6581 = vmatpush.bf16.msra.mxu0 %v4203
      %6582 = vmatpush.bf16.msra.mxu0 %v4202
      %6583 = vmatpush.bf16.msra.mxu0 %v4201
      %6584 = vmatpush.bf16.msra.mxu0 %v4200
      %6585 = vmatpush.bf16.msra.mxu0 %v4199
      %6586 = vmatmul.bf16.gmra.mxu0 %v1533
      %v6587 = vpop.f32.mrf.mxu0
      %v6588 = vadd.f32 %v6499, %v6587
      %v6589 = vpop.f32.mrf.mxu0
      %v6590 = vadd.f32 %v6501, %v6589
      %6591 = vmatmul.bf16.gmra.mxu0 %v1573
      %v6592 = vpop.f32.mrf.mxu0
      %v6593 = vadd.f32 %v6504, %v6592
      %v6594 = vpop.f32.mrf.mxu0
      %v6595 = vadd.f32 %v6506, %v6594
      %6596 = vmatmul.bf16.gmra.mxu0 %v1613
      %v6597 = vpop.f32.mrf.mxu0
      %v6598 = vadd.f32 %v6509, %v6597
      %v6599 = vpop.f32.mrf.mxu0
      %v6600 = vadd.f32 %v6511, %v6599
      %6601 = vmatmul.bf16.gmra.mxu0 %v1653
      %v6602 = vpop.f32.mrf.mxu0
      %v6603 = vadd.f32 %v6514, %v6602
      %v6604 = vpop.f32.mrf.mxu0
      %v6605 = vadd.f32 %v6516, %v6604
      %6606 = vmatmul.bf16.gmra.mxu0 %v1693
      %v6607 = vpop.f32.mrf.mxu0
      %v6608 = vadd.f32 %v6519, %v6607
      %v6609 = vpop.f32.mrf.mxu0
      %v6610 = vadd.f32 %v6521, %v6609
      %6611 = vmatmul.bf16.gmra.mxu0 %v1733
      %v6612 = vpop.f32.mrf.mxu0
      %v6613 = vadd.f32 %v6524, %v6612
      %v6614 = vpop.f32.mrf.mxu0
      %v6615 = vadd.f32 %v6526, %v6614
      %6616 = vmatmul.bf16.gmra.mxu0 %v1773
      %v6617 = vpop.f32.mrf.mxu0
      %v6618 = vadd.f32 %v6529, %v6617
      %v6619 = vpop.f32.mrf.mxu0
      %v6620 = vadd.f32 %v6531, %v6619
      %6621 = vmatmul.bf16.gmra.mxu0 %v1813
      %v6622 = vpop.f32.mrf.mxu0
      %v6623 = vadd.f32 %v6534, %v6622
      %v6624 = vpop.f32.mrf.mxu0
      %v6625 = vadd.f32 %v6536, %v6624
      %6626 = vmatmul.bf16.gmra.mxu0 %v1853
      %v6627 = vpop.f32.mrf.mxu0
      %v6628 = vadd.f32 %v6539, %v6627
      %v6629 = vpop.f32.mrf.mxu0
      %v6630 = vadd.f32 %v6541, %v6629
      %6631 = vmatmul.bf16.gmra.mxu0 %v1893
      %v6632 = vpop.f32.mrf.mxu0
      %v6633 = vadd.f32 %v6544, %v6632
      %v6634 = vpop.f32.mrf.mxu0
      %v6635 = vadd.f32 %v6546, %v6634
      %6636 = vmatmul.bf16.gmra.mxu0 %v1933
      %v6637 = vpop.f32.mrf.mxu0
      %v6638 = vadd.f32 %v6549, %v6637
      %v6639 = vpop.f32.mrf.mxu0
      %v6640 = vadd.f32 %v6551, %v6639
      %6641 = vmatmul.bf16.gmra.mxu0 %v1973
      %v6642 = vpop.f32.mrf.mxu0
      %v6643 = vadd.f32 %v6554, %v6642
      %v6644 = vpop.f32.mrf.mxu0
      %v6645 = vadd.f32 %v6556, %v6644
      %6646 = vmatmul.bf16.gmra.mxu0 %v2013
      %v6647 = vpop.f32.mrf.mxu0
      %v6648 = vadd.f32 %v6559, %v6647
      %v6649 = vpop.f32.mrf.mxu0
      %v6650 = vadd.f32 %v6561, %v6649
      %6651 = vmatmul.bf16.gmra.mxu0 %v2053
      %v6652 = vpop.f32.mrf.mxu0
      %v6653 = vadd.f32 %v6564, %v6652
      %v6654 = vpop.f32.mrf.mxu0
      %v6655 = vadd.f32 %v6566, %v6654
      %6656 = vmatmul.bf16.gmra.mxu0 %v2093
      %v6657 = vpop.f32.mrf.mxu0
      %v6658 = vadd.f32 %v6569, %v6657
      %v6659 = vpop.f32.mrf.mxu0
      %v6660 = vadd.f32 %v6571, %v6659
      %6661 = vmatmul.bf16.gmra.mxu0 %v2133
      %v6662 = vpop.f32.mrf.mxu0
      %v6663 = vadd.f32 %v6574, %v6662
      %v6664 = vpop.f32.mrf.mxu0
      %v6665 = vadd.f32 %v6576, %v6664
      %6666 = vdwg.mxu0
      %6667 = vmatpush.bf16.msra.mxu0 %v4214
      %6668 = vmatpush.bf16.msra.mxu0 %v4213
      %6669 = vmatpush.bf16.msra.mxu0 %v4212
      %6670 = vmatpush.bf16.msra.mxu0 %v4211
      %6671 = vmatpush.bf16.msra.mxu0 %v4210
      %6672 = vmatpush.bf16.msra.mxu0 %v4209
      %6673 = vmatpush.bf16.msra.mxu0 %v4208
      %6674 = vmatpush.bf16.msra.mxu0 %v4207
      %6675 = vmatmul.bf16.gmra.mxu0 %v1534
      %v6676 = vpop.f32.mrf.mxu0
      %v6677 = vadd.f32 %v6588, %v6676
      %v6678 = vpop.f32.mrf.mxu0
      %v6679 = vadd.f32 %v6590, %v6678
      %6680 = vmatmul.bf16.gmra.mxu0 %v1574
      %v6681 = vpop.f32.mrf.mxu0
      %v6682 = vadd.f32 %v6593, %v6681
      %v6683 = vpop.f32.mrf.mxu0
      %v6684 = vadd.f32 %v6595, %v6683
      %6685 = vmatmul.bf16.gmra.mxu0 %v1614
      %v6686 = vpop.f32.mrf.mxu0
      %v6687 = vadd.f32 %v6598, %v6686
      %v6688 = vpop.f32.mrf.mxu0
      %v6689 = vadd.f32 %v6600, %v6688
      %6690 = vmatmul.bf16.gmra.mxu0 %v1654
      %v6691 = vpop.f32.mrf.mxu0
      %v6692 = vadd.f32 %v6603, %v6691
      %v6693 = vpop.f32.mrf.mxu0
      %v6694 = vadd.f32 %v6605, %v6693
      %6695 = vmatmul.bf16.gmra.mxu0 %v1694
      %v6696 = vpop.f32.mrf.mxu0
      %v6697 = vadd.f32 %v6608, %v6696
      %v6698 = vpop.f32.mrf.mxu0
      %v6699 = vadd.f32 %v6610, %v6698
      %6700 = vmatmul.bf16.gmra.mxu0 %v1734
      %v6701 = vpop.f32.mrf.mxu0
      %v6702 = vadd.f32 %v6613, %v6701
      %v6703 = vpop.f32.mrf.mxu0
      %v6704 = vadd.f32 %v6615, %v6703
      %6705 = vmatmul.bf16.gmra.mxu0 %v1774
      %v6706 = vpop.f32.mrf.mxu0
      %v6707 = vadd.f32 %v6618, %v6706
      %v6708 = vpop.f32.mrf.mxu0
      %v6709 = vadd.f32 %v6620, %v6708
      %6710 = vmatmul.bf16.gmra.mxu0 %v1814
      %v6711 = vpop.f32.mrf.mxu0
      %v6712 = vadd.f32 %v6623, %v6711
      %v6713 = vpop.f32.mrf.mxu0
      %v6714 = vadd.f32 %v6625, %v6713
      %6715 = vmatmul.bf16.gmra.mxu0 %v1854
      %v6716 = vpop.f32.mrf.mxu0
      %v6717 = vadd.f32 %v6628, %v6716
      %v6718 = vpop.f32.mrf.mxu0
      %v6719 = vadd.f32 %v6630, %v6718
      %6720 = vmatmul.bf16.gmra.mxu0 %v1894
      %v6721 = vpop.f32.mrf.mxu0
      %v6722 = vadd.f32 %v6633, %v6721
      %v6723 = vpop.f32.mrf.mxu0
      %v6724 = vadd.f32 %v6635, %v6723
      %6725 = vmatmul.bf16.gmra.mxu0 %v1934
      %v6726 = vpop.f32.mrf.mxu0
      %v6727 = vadd.f32 %v6638, %v6726
      %v6728 = vpop.f32.mrf.mxu0
      %v6729 = vadd.f32 %v6640, %v6728
      %6730 = vmatmul.bf16.gmra.mxu0 %v1974
      %v6731 = vpop.f32.mrf.mxu0
      %v6732 = vadd.f32 %v6643, %v6731
      %v6733 = vpop.f32.mrf.mxu0
      %v6734 = vadd.f32 %v6645, %v6733
      %6735 = vmatmul.bf16.gmra.mxu0 %v2014
      %v6736 = vpop.f32.mrf.mxu0
      %v6737 = vadd.f32 %v6648, %v6736
      %v6738 = vpop.f32.mrf.mxu0
      %v6739 = vadd.f32 %v6650, %v6738
      %6740 = vmatmul.bf16.gmra.mxu0 %v2054
      %v6741 = vpop.f32.mrf.mxu0
      %v6742 = vadd.f32 %v6653, %v6741
      %v6743 = vpop.f32.mrf.mxu0
      %v6744 = vadd.f32 %v6655, %v6743
      %6745 = vmatmul.bf16.gmra.mxu0 %v2094
      %v6746 = vpop.f32.mrf.mxu0
      %v6747 = vadd.f32 %v6658, %v6746
      %v6748 = vpop.f32.mrf.mxu0
      %v6749 = vadd.f32 %v6660, %v6748
      %6750 = vmatmul.bf16.gmra.mxu0 %v2134
      %v6751 = vpop.f32.mrf.mxu0
      %v6752 = vadd.f32 %v6663, %v6751
      %v6753 = vpop.f32.mrf.mxu0
      %v6754 = vadd.f32 %v6665, %v6753
      %6755 = vdwg.mxu0
      %6756 = vmatpush.bf16.msra.mxu0 %v4222
      %6757 = vmatpush.bf16.msra.mxu0 %v4221
      %6758 = vmatpush.bf16.msra.mxu0 %v4220
      %6759 = vmatpush.bf16.msra.mxu0 %v4219
      %6760 = vmatpush.bf16.msra.mxu0 %v4218
      %6761 = vmatpush.bf16.msra.mxu0 %v4217
      %6762 = vmatpush.bf16.msra.mxu0 %v4216
      %6763 = vmatpush.bf16.msra.mxu0 %v4215
      %6764 = vmatmul.bf16.gmra.mxu0 %v1535
      %v6765 = vpop.f32.mrf.mxu0
      %v6766 = vadd.f32 %v6677, %v6765
      %v6767 = vpop.f32.mrf.mxu0
      %v6768 = vadd.f32 %v6679, %v6767
      %6769 = vmatmul.bf16.gmra.mxu0 %v1575
      %v6770 = vpop.f32.mrf.mxu0
      %v6771 = vadd.f32 %v6682, %v6770
      %v6772 = vpop.f32.mrf.mxu0
      %v6773 = vadd.f32 %v6684, %v6772
      %6774 = vmatmul.bf16.gmra.mxu0 %v1615
      %v6775 = vpop.f32.mrf.mxu0
      %v6776 = vadd.f32 %v6687, %v6775
      %v6777 = vpop.f32.mrf.mxu0
      %v6778 = vadd.f32 %v6689, %v6777
      %6779 = vmatmul.bf16.gmra.mxu0 %v1655
      %v6780 = vpop.f32.mrf.mxu0
      %v6781 = vadd.f32 %v6692, %v6780
      %v6782 = vpop.f32.mrf.mxu0
      %v6783 = vadd.f32 %v6694, %v6782
      %6784 = vmatmul.bf16.gmra.mxu0 %v1695
      %v6785 = vpop.f32.mrf.mxu0
      %v6786 = vadd.f32 %v6697, %v6785
      %v6787 = vpop.f32.mrf.mxu0
      %v6788 = vadd.f32 %v6699, %v6787
      %6789 = vmatmul.bf16.gmra.mxu0 %v1735
      %v6790 = vpop.f32.mrf.mxu0
      %v6791 = vadd.f32 %v6702, %v6790
      %v6792 = vpop.f32.mrf.mxu0
      %v6793 = vadd.f32 %v6704, %v6792
      %6794 = vmatmul.bf16.gmra.mxu0 %v1775
      %v6795 = vpop.f32.mrf.mxu0
      %v6796 = vadd.f32 %v6707, %v6795
      %v6797 = vpop.f32.mrf.mxu0
      %v6798 = vadd.f32 %v6709, %v6797
      %6799 = vmatmul.bf16.gmra.mxu0 %v1815
      %v6800 = vpop.f32.mrf.mxu0
      %v6801 = vadd.f32 %v6712, %v6800
      %v6802 = vpop.f32.mrf.mxu0
      %v6803 = vadd.f32 %v6714, %v6802
      %6804 = vmatmul.bf16.gmra.mxu0 %v1855
      %v6805 = vpop.f32.mrf.mxu0
      %v6806 = vadd.f32 %v6717, %v6805
      %v6807 = vpop.f32.mrf.mxu0
      %v6808 = vadd.f32 %v6719, %v6807
      %6809 = vmatmul.bf16.gmra.mxu0 %v1895
      %v6810 = vpop.f32.mrf.mxu0
      %v6811 = vadd.f32 %v6722, %v6810
      %v6812 = vpop.f32.mrf.mxu0
      %v6813 = vadd.f32 %v6724, %v6812
      %6814 = vmatmul.bf16.gmra.mxu0 %v1935
      %v6815 = vpop.f32.mrf.mxu0
      %v6816 = vadd.f32 %v6727, %v6815
      %v6817 = vpop.f32.mrf.mxu0
      %v6818 = vadd.f32 %v6729, %v6817
      %6819 = vmatmul.bf16.gmra.mxu0 %v1975
      %v6820 = vpop.f32.mrf.mxu0
      %v6821 = vadd.f32 %v6732, %v6820
      %v6822 = vpop.f32.mrf.mxu0
      %v6823 = vadd.f32 %v6734, %v6822
      %6824 = vmatmul.bf16.gmra.mxu0 %v2015
      %v6825 = vpop.f32.mrf.mxu0
      %v6826 = vadd.f32 %v6737, %v6825
      %v6827 = vpop.f32.mrf.mxu0
      %v6828 = vadd.f32 %v6739, %v6827
      %6829 = vmatmul.bf16.gmra.mxu0 %v2055
      %v6830 = vpop.f32.mrf.mxu0
      %v6831 = vadd.f32 %v6742, %v6830
      %v6832 = vpop.f32.mrf.mxu0
      %v6833 = vadd.f32 %v6744, %v6832
      %6834 = vmatmul.bf16.gmra.mxu0 %v2095
      %v6835 = vpop.f32.mrf.mxu0
      %v6836 = vadd.f32 %v6747, %v6835
      %v6837 = vpop.f32.mrf.mxu0
      %v6838 = vadd.f32 %v6749, %v6837
      %6839 = vmatmul.bf16.gmra.mxu0 %v2135
      %v6840 = vpop.f32.mrf.mxu0
      %v6841 = vadd.f32 %v6752, %v6840
      %v6842 = vpop.f32.mrf.mxu0
      %v6843 = vadd.f32 %v6754, %v6842
      %6844 = vdwg.mxu0
      %6845 = vmatpush.bf16.msra.mxu0 %v4230
      %6846 = vmatpush.bf16.msra.mxu0 %v4229
      %6847 = vmatpush.bf16.msra.mxu0 %v4228
      %6848 = vmatpush.bf16.msra.mxu0 %v4227
      %6849 = vmatpush.bf16.msra.mxu0 %v4226
      %6850 = vmatpush.bf16.msra.mxu0 %v4225
      %6851 = vmatpush.bf16.msra.mxu0 %v4224
      %6852 = vmatpush.bf16.msra.mxu0 %v4223
      %6853 = vmatmul.bf16.gmra.mxu0 %v1536
      %v6854 = vpop.f32.mrf.mxu0
      %v6855 = vadd.f32 %v6766, %v6854
      %v6856 = vpop.f32.mrf.mxu0
      %v6857 = vadd.f32 %v6768, %v6856
      %6858 = vmatmul.bf16.gmra.mxu0 %v1576
      %v6859 = vpop.f32.mrf.mxu0
      %v6860 = vadd.f32 %v6771, %v6859
      %v6861 = vpop.f32.mrf.mxu0
      %v6862 = vadd.f32 %v6773, %v6861
      %6863 = vmatmul.bf16.gmra.mxu0 %v1616
      %v6864 = vpop.f32.mrf.mxu0
      %v6865 = vadd.f32 %v6776, %v6864
      %v6866 = vpop.f32.mrf.mxu0
      %v6867 = vadd.f32 %v6778, %v6866
      %6868 = vmatmul.bf16.gmra.mxu0 %v1656
      %v6869 = vpop.f32.mrf.mxu0
      %v6870 = vadd.f32 %v6781, %v6869
      %v6871 = vpop.f32.mrf.mxu0
      %v6872 = vadd.f32 %v6783, %v6871
      %6873 = vmatmul.bf16.gmra.mxu0 %v1696
      %v6874 = vpop.f32.mrf.mxu0
      %v6875 = vadd.f32 %v6786, %v6874
      %v6876 = vpop.f32.mrf.mxu0
      %v6877 = vadd.f32 %v6788, %v6876
      %6878 = vmatmul.bf16.gmra.mxu0 %v1736
      %v6879 = vpop.f32.mrf.mxu0
      %v6880 = vadd.f32 %v6791, %v6879
      %v6881 = vpop.f32.mrf.mxu0
      %v6882 = vadd.f32 %v6793, %v6881
      %6883 = vmatmul.bf16.gmra.mxu0 %v1776
      %v6884 = vpop.f32.mrf.mxu0
      %v6885 = vadd.f32 %v6796, %v6884
      %v6886 = vpop.f32.mrf.mxu0
      %v6887 = vadd.f32 %v6798, %v6886
      %6888 = vmatmul.bf16.gmra.mxu0 %v1816
      %v6889 = vpop.f32.mrf.mxu0
      %v6890 = vadd.f32 %v6801, %v6889
      %v6891 = vpop.f32.mrf.mxu0
      %v6892 = vadd.f32 %v6803, %v6891
      %6893 = vmatmul.bf16.gmra.mxu0 %v1856
      %v6894 = vpop.f32.mrf.mxu0
      %v6895 = vadd.f32 %v6806, %v6894
      %v6896 = vpop.f32.mrf.mxu0
      %v6897 = vadd.f32 %v6808, %v6896
      %6898 = vmatmul.bf16.gmra.mxu0 %v1896
      %v6899 = vpop.f32.mrf.mxu0
      %v6900 = vadd.f32 %v6811, %v6899
      %v6901 = vpop.f32.mrf.mxu0
      %v6902 = vadd.f32 %v6813, %v6901
      %6903 = vmatmul.bf16.gmra.mxu0 %v1936
      %v6904 = vpop.f32.mrf.mxu0
      %v6905 = vadd.f32 %v6816, %v6904
      %v6906 = vpop.f32.mrf.mxu0
      %v6907 = vadd.f32 %v6818, %v6906
      %6908 = vmatmul.bf16.gmra.mxu0 %v1976
      %v6909 = vpop.f32.mrf.mxu0
      %v6910 = vadd.f32 %v6821, %v6909
      %v6911 = vpop.f32.mrf.mxu0
      %v6912 = vadd.f32 %v6823, %v6911
      %6913 = vmatmul.bf16.gmra.mxu0 %v2016
      %v6914 = vpop.f32.mrf.mxu0
      %v6915 = vadd.f32 %v6826, %v6914
      %v6916 = vpop.f32.mrf.mxu0
      %v6917 = vadd.f32 %v6828, %v6916
      %6918 = vmatmul.bf16.gmra.mxu0 %v2056
      %v6919 = vpop.f32.mrf.mxu0
      %v6920 = vadd.f32 %v6831, %v6919
      %v6921 = vpop.f32.mrf.mxu0
      %v6922 = vadd.f32 %v6833, %v6921
      %6923 = vmatmul.bf16.gmra.mxu0 %v2096
      %v6924 = vpop.f32.mrf.mxu0
      %v6925 = vadd.f32 %v6836, %v6924
      %v6926 = vpop.f32.mrf.mxu0
      %v6927 = vadd.f32 %v6838, %v6926
      %6928 = vmatmul.bf16.gmra.mxu0 %v2136
      %v6929 = vpop.f32.mrf.mxu0
      %v6930 = vadd.f32 %v6841, %v6929
      %v6931 = vpop.f32.mrf.mxu0
      %v6932 = vadd.f32 %v6843, %v6931
      %6933 = vdwg.mxu0
      %6934 = vmatpush.bf16.msra.mxu0 %v4238
      %6935 = vmatpush.bf16.msra.mxu0 %v4237
      %6936 = vmatpush.bf16.msra.mxu0 %v4236
      %6937 = vmatpush.bf16.msra.mxu0 %v4235
      %6938 = vmatpush.bf16.msra.mxu0 %v4234
      %6939 = vmatpush.bf16.msra.mxu0 %v4233
      %6940 = vmatpush.bf16.msra.mxu0 %v4232
      %6941 = vmatpush.bf16.msra.mxu0 %v4231
      %6942 = vmatmul.bf16.gmra.mxu0 %v1537
      %v6943 = vpop.f32.mrf.mxu0
      %v6944 = vadd.f32 %v6855, %v6943
      %v6945 = vpop.f32.mrf.mxu0
      %v6946 = vadd.f32 %v6857, %v6945
      %6947 = vmatmul.bf16.gmra.mxu0 %v1577
      %v6948 = vpop.f32.mrf.mxu0
      %v6949 = vadd.f32 %v6860, %v6948
      %v6950 = vpop.f32.mrf.mxu0
      %v6951 = vadd.f32 %v6862, %v6950
      %6952 = vmatmul.bf16.gmra.mxu0 %v1617
      %v6953 = vpop.f32.mrf.mxu0
      %v6954 = vadd.f32 %v6865, %v6953
      %v6955 = vpop.f32.mrf.mxu0
      %v6956 = vadd.f32 %v6867, %v6955
      %6957 = vmatmul.bf16.gmra.mxu0 %v1657
      %v6958 = vpop.f32.mrf.mxu0
      %v6959 = vadd.f32 %v6870, %v6958
      %v6960 = vpop.f32.mrf.mxu0
      %v6961 = vadd.f32 %v6872, %v6960
      %6962 = vmatmul.bf16.gmra.mxu0 %v1697
      %v6963 = vpop.f32.mrf.mxu0
      %v6964 = vadd.f32 %v6875, %v6963
      %v6965 = vpop.f32.mrf.mxu0
      %v6966 = vadd.f32 %v6877, %v6965
      %6967 = vmatmul.bf16.gmra.mxu0 %v1737
      %v6968 = vpop.f32.mrf.mxu0
      %v6969 = vadd.f32 %v6880, %v6968
      %v6970 = vpop.f32.mrf.mxu0
      %v6971 = vadd.f32 %v6882, %v6970
      %6972 = vmatmul.bf16.gmra.mxu0 %v1777
      %v6973 = vpop.f32.mrf.mxu0
      %v6974 = vadd.f32 %v6885, %v6973
      %v6975 = vpop.f32.mrf.mxu0
      %v6976 = vadd.f32 %v6887, %v6975
      %6977 = vmatmul.bf16.gmra.mxu0 %v1817
      %v6978 = vpop.f32.mrf.mxu0
      %v6979 = vadd.f32 %v6890, %v6978
      %v6980 = vpop.f32.mrf.mxu0
      %v6981 = vadd.f32 %v6892, %v6980
      %6982 = vmatmul.bf16.gmra.mxu0 %v1857
      %v6983 = vpop.f32.mrf.mxu0
      %v6984 = vadd.f32 %v6895, %v6983
      %v6985 = vpop.f32.mrf.mxu0
      %v6986 = vadd.f32 %v6897, %v6985
      %6987 = vmatmul.bf16.gmra.mxu0 %v1897
      %v6988 = vpop.f32.mrf.mxu0
      %v6989 = vadd.f32 %v6900, %v6988
      %v6990 = vpop.f32.mrf.mxu0
      %v6991 = vadd.f32 %v6902, %v6990
      %6992 = vmatmul.bf16.gmra.mxu0 %v1937
      %v6993 = vpop.f32.mrf.mxu0
      %v6994 = vadd.f32 %v6905, %v6993
      %v6995 = vpop.f32.mrf.mxu0
      %v6996 = vadd.f32 %v6907, %v6995
      %6997 = vmatmul.bf16.gmra.mxu0 %v1977
      %v6998 = vpop.f32.mrf.mxu0
      %v6999 = vadd.f32 %v6910, %v6998
      %v7000 = vpop.f32.mrf.mxu0
      %v7001 = vadd.f32 %v6912, %v7000
      %7002 = vmatmul.bf16.gmra.mxu0 %v2017
      %v7003 = vpop.f32.mrf.mxu0
      %v7004 = vadd.f32 %v6915, %v7003
      %v7005 = vpop.f32.mrf.mxu0
      %v7006 = vadd.f32 %v6917, %v7005
      %7007 = vmatmul.bf16.gmra.mxu0 %v2057
      %v7008 = vpop.f32.mrf.mxu0
      %v7009 = vadd.f32 %v6920, %v7008
      %v7010 = vpop.f32.mrf.mxu0
      %v7011 = vadd.f32 %v6922, %v7010
      %7012 = vmatmul.bf16.gmra.mxu0 %v2097
      %v7013 = vpop.f32.mrf.mxu0
      %v7014 = vadd.f32 %v6925, %v7013
      %v7015 = vpop.f32.mrf.mxu0
      %v7016 = vadd.f32 %v6927, %v7015
      %7017 = vmatmul.bf16.gmra.mxu0 %v2137
      %v7018 = vpop.f32.mrf.mxu0
      %v7019 = vadd.f32 %v6930, %v7018
      %v7020 = vpop.f32.mrf.mxu0
      %v7021 = vadd.f32 %v6932, %v7020
      %7022 = vdwg.mxu0
      %7023 = vmatpush.bf16.msra.mxu0 %v4246
      %7024 = vmatpush.bf16.msra.mxu0 %v4245
      %7025 = vmatpush.bf16.msra.mxu0 %v4244
      %7026 = vmatpush.bf16.msra.mxu0 %v4243
      %7027 = vmatpush.bf16.msra.mxu0 %v4242
      %7028 = vmatpush.bf16.msra.mxu0 %v4241
      %7029 = vmatpush.bf16.msra.mxu0 %v4240
      %7030 = vmatpush.bf16.msra.mxu0 %v4239
      %7031 = vmatmul.bf16.gmra.mxu0 %v1538
      %v7032 = vpop.f32.mrf.mxu0
      %v7033 = vadd.f32 %v6944, %v7032
      %v7034 = vpop.f32.mrf.mxu0
      %v7035 = vadd.f32 %v6946, %v7034
      %7036 = vmatmul.bf16.gmra.mxu0 %v1578
      %v7037 = vpop.f32.mrf.mxu0
      %v7038 = vadd.f32 %v6949, %v7037
      %v7039 = vpop.f32.mrf.mxu0
      %v7040 = vadd.f32 %v6951, %v7039
      %7041 = vmatmul.bf16.gmra.mxu0 %v1618
      %v7042 = vpop.f32.mrf.mxu0
      %v7043 = vadd.f32 %v6954, %v7042
      %v7044 = vpop.f32.mrf.mxu0
      %v7045 = vadd.f32 %v6956, %v7044
      %7046 = vmatmul.bf16.gmra.mxu0 %v1658
      %v7047 = vpop.f32.mrf.mxu0
      %v7048 = vadd.f32 %v6959, %v7047
      %v7049 = vpop.f32.mrf.mxu0
      %v7050 = vadd.f32 %v6961, %v7049
      %7051 = vmatmul.bf16.gmra.mxu0 %v1698
      %v7052 = vpop.f32.mrf.mxu0
      %v7053 = vadd.f32 %v6964, %v7052
      %v7054 = vpop.f32.mrf.mxu0
      %v7055 = vadd.f32 %v6966, %v7054
      %7056 = vmatmul.bf16.gmra.mxu0 %v1738
      %v7057 = vpop.f32.mrf.mxu0
      %v7058 = vadd.f32 %v6969, %v7057
      %v7059 = vpop.f32.mrf.mxu0
      %v7060 = vadd.f32 %v6971, %v7059
      %7061 = vmatmul.bf16.gmra.mxu0 %v1778
      %v7062 = vpop.f32.mrf.mxu0
      %v7063 = vadd.f32 %v6974, %v7062
      %v7064 = vpop.f32.mrf.mxu0
      %v7065 = vadd.f32 %v6976, %v7064
      %7066 = vmatmul.bf16.gmra.mxu0 %v1818
      %v7067 = vpop.f32.mrf.mxu0
      %v7068 = vadd.f32 %v6979, %v7067
      %v7069 = vpop.f32.mrf.mxu0
      %v7070 = vadd.f32 %v6981, %v7069
      %7071 = vmatmul.bf16.gmra.mxu0 %v1858
      %v7072 = vpop.f32.mrf.mxu0
      %v7073 = vadd.f32 %v6984, %v7072
      %v7074 = vpop.f32.mrf.mxu0
      %v7075 = vadd.f32 %v6986, %v7074
      %7076 = vmatmul.bf16.gmra.mxu0 %v1898
      %v7077 = vpop.f32.mrf.mxu0
      %v7078 = vadd.f32 %v6989, %v7077
      %v7079 = vpop.f32.mrf.mxu0
      %v7080 = vadd.f32 %v6991, %v7079
      %7081 = vmatmul.bf16.gmra.mxu0 %v1938
      %v7082 = vpop.f32.mrf.mxu0
      %v7083 = vadd.f32 %v6994, %v7082
      %v7084 = vpop.f32.mrf.mxu0
      %v7085 = vadd.f32 %v6996, %v7084
      %7086 = vmatmul.bf16.gmra.mxu0 %v1978
      %v7087 = vpop.f32.mrf.mxu0
      %v7088 = vadd.f32 %v6999, %v7087
      %v7089 = vpop.f32.mrf.mxu0
      %v7090 = vadd.f32 %v7001, %v7089
      %7091 = vmatmul.bf16.gmra.mxu0 %v2018
      %v7092 = vpop.f32.mrf.mxu0
      %v7093 = vadd.f32 %v7004, %v7092
      %v7094 = vpop.f32.mrf.mxu0
      %v7095 = vadd.f32 %v7006, %v7094
      %7096 = vmatmul.bf16.gmra.mxu0 %v2058
      %v7097 = vpop.f32.mrf.mxu0
      %v7098 = vadd.f32 %v7009, %v7097
      %v7099 = vpop.f32.mrf.mxu0
      %v7100 = vadd.f32 %v7011, %v7099
      %7101 = vmatmul.bf16.gmra.mxu0 %v2098
      %v7102 = vpop.f32.mrf.mxu0
      %v7103 = vadd.f32 %v7014, %v7102
      %v7104 = vpop.f32.mrf.mxu0
      %v7105 = vadd.f32 %v7016, %v7104
      %7106 = vmatmul.bf16.gmra.mxu0 %v2138
      %v7107 = vpop.f32.mrf.mxu0
      %v7108 = vadd.f32 %v7019, %v7107
      %v7109 = vpop.f32.mrf.mxu0
      %v7110 = vadd.f32 %v7021, %v7109
      %7111 = vdwg.mxu0
      %7112 = vmatpush.bf16.msra.mxu0 %v4254
      %7113 = vmatpush.bf16.msra.mxu0 %v4253
      %7114 = vmatpush.bf16.msra.mxu0 %v4252
      %7115 = vmatpush.bf16.msra.mxu0 %v4251
      %7116 = vmatpush.bf16.msra.mxu0 %v4250
      %7117 = vmatpush.bf16.msra.mxu0 %v4249
      %7118 = vmatpush.bf16.msra.mxu0 %v4248
      %7119 = vmatpush.bf16.msra.mxu0 %v4247
      %7120 = vmatmul.bf16.gmra.mxu0 %v1539
      %v7121 = vpop.f32.mrf.mxu0
      %v7122 = vadd.f32 %v7033, %v7121
      %v7123 = vpop.f32.mrf.mxu0
      %v7124 = vadd.f32 %v7035, %v7123
      %7125 = vmatmul.bf16.gmra.mxu0 %v1579
      %v7126 = vpop.f32.mrf.mxu0
      %v7127 = vadd.f32 %v7038, %v7126
      %v7128 = vpop.f32.mrf.mxu0
      %v7129 = vadd.f32 %v7040, %v7128
      %7130 = vmatmul.bf16.gmra.mxu0 %v1619
      %v7131 = vpop.f32.mrf.mxu0
      %v7132 = vadd.f32 %v7043, %v7131
      %v7133 = vpop.f32.mrf.mxu0
      %v7134 = vadd.f32 %v7045, %v7133
      %7135 = vmatmul.bf16.gmra.mxu0 %v1659
      %v7136 = vpop.f32.mrf.mxu0
      %v7137 = vadd.f32 %v7048, %v7136
      %v7138 = vpop.f32.mrf.mxu0
      %v7139 = vadd.f32 %v7050, %v7138
      %7140 = vmatmul.bf16.gmra.mxu0 %v1699
      %v7141 = vpop.f32.mrf.mxu0
      %v7142 = vadd.f32 %v7053, %v7141
      %v7143 = vpop.f32.mrf.mxu0
      %v7144 = vadd.f32 %v7055, %v7143
      %7145 = vmatmul.bf16.gmra.mxu0 %v1739
      %v7146 = vpop.f32.mrf.mxu0
      %v7147 = vadd.f32 %v7058, %v7146
      %v7148 = vpop.f32.mrf.mxu0
      %v7149 = vadd.f32 %v7060, %v7148
      %7150 = vmatmul.bf16.gmra.mxu0 %v1779
      %v7151 = vpop.f32.mrf.mxu0
      %v7152 = vadd.f32 %v7063, %v7151
      %v7153 = vpop.f32.mrf.mxu0
      %v7154 = vadd.f32 %v7065, %v7153
      %7155 = vmatmul.bf16.gmra.mxu0 %v1819
      %v7156 = vpop.f32.mrf.mxu0
      %v7157 = vadd.f32 %v7068, %v7156
      %v7158 = vpop.f32.mrf.mxu0
      %v7159 = vadd.f32 %v7070, %v7158
      %7160 = vmatmul.bf16.gmra.mxu0 %v1859
      %v7161 = vpop.f32.mrf.mxu0
      %v7162 = vadd.f32 %v7073, %v7161
      %v7163 = vpop.f32.mrf.mxu0
      %v7164 = vadd.f32 %v7075, %v7163
      %7165 = vmatmul.bf16.gmra.mxu0 %v1899
      %v7166 = vpop.f32.mrf.mxu0
      %v7167 = vadd.f32 %v7078, %v7166
      %v7168 = vpop.f32.mrf.mxu0
      %v7169 = vadd.f32 %v7080, %v7168
      %7170 = vmatmul.bf16.gmra.mxu0 %v1939
      %v7171 = vpop.f32.mrf.mxu0
      %v7172 = vadd.f32 %v7083, %v7171
      %v7173 = vpop.f32.mrf.mxu0
      %v7174 = vadd.f32 %v7085, %v7173
      %7175 = vmatmul.bf16.gmra.mxu0 %v1979
      %v7176 = vpop.f32.mrf.mxu0
      %v7177 = vadd.f32 %v7088, %v7176
      %v7178 = vpop.f32.mrf.mxu0
      %v7179 = vadd.f32 %v7090, %v7178
      %7180 = vmatmul.bf16.gmra.mxu0 %v2019
      %v7181 = vpop.f32.mrf.mxu0
      %v7182 = vadd.f32 %v7093, %v7181
      %v7183 = vpop.f32.mrf.mxu0
      %v7184 = vadd.f32 %v7095, %v7183
      %7185 = vmatmul.bf16.gmra.mxu0 %v2059
      %v7186 = vpop.f32.mrf.mxu0
      %v7187 = vadd.f32 %v7098, %v7186
      %v7188 = vpop.f32.mrf.mxu0
      %v7189 = vadd.f32 %v7100, %v7188
      %7190 = vmatmul.bf16.gmra.mxu0 %v2099
      %v7191 = vpop.f32.mrf.mxu0
      %v7192 = vadd.f32 %v7103, %v7191
      %v7193 = vpop.f32.mrf.mxu0
      %v7194 = vadd.f32 %v7105, %v7193
      %7195 = vmatmul.bf16.gmra.mxu0 %v2139
      %v7196 = vpop.f32.mrf.mxu0
      %v7197 = vadd.f32 %v7108, %v7196
      %v7198 = vpop.f32.mrf.mxu0
      %v7199 = vadd.f32 %v7110, %v7198
      %7200 = vdwg.mxu0
      %7201 = vmatpush.bf16.msra.mxu0 %v4262
      %7202 = vmatpush.bf16.msra.mxu0 %v4261
      %7203 = vmatpush.bf16.msra.mxu0 %v4260
      %7204 = vmatpush.bf16.msra.mxu0 %v4259
      %7205 = vmatpush.bf16.msra.mxu0 %v4258
      %7206 = vmatpush.bf16.msra.mxu0 %v4257
      %7207 = vmatpush.bf16.msra.mxu0 %v4256
      %7208 = vmatpush.bf16.msra.mxu0 %v4255
      %7209 = vmatmul.bf16.gmra.mxu0 %v1540
      %v7210 = vpop.f32.mrf.mxu0
      %v7211 = vadd.f32 %v7122, %v7210
      %v7212 = vpop.f32.mrf.mxu0
      %v7213 = vadd.f32 %v7124, %v7212
      %7214 = vmatmul.bf16.gmra.mxu0 %v1580
      %v7215 = vpop.f32.mrf.mxu0
      %v7216 = vadd.f32 %v7127, %v7215
      %v7217 = vpop.f32.mrf.mxu0
      %v7218 = vadd.f32 %v7129, %v7217
      %7219 = vmatmul.bf16.gmra.mxu0 %v1620
      %v7220 = vpop.f32.mrf.mxu0
      %v7221 = vadd.f32 %v7132, %v7220
      %v7222 = vpop.f32.mrf.mxu0
      %v7223 = vadd.f32 %v7134, %v7222
      %7224 = vmatmul.bf16.gmra.mxu0 %v1660
      %v7225 = vpop.f32.mrf.mxu0
      %v7226 = vadd.f32 %v7137, %v7225
      %v7227 = vpop.f32.mrf.mxu0
      %v7228 = vadd.f32 %v7139, %v7227
      %7229 = vmatmul.bf16.gmra.mxu0 %v1700
      %v7230 = vpop.f32.mrf.mxu0
      %v7231 = vadd.f32 %v7142, %v7230
      %v7232 = vpop.f32.mrf.mxu0
      %v7233 = vadd.f32 %v7144, %v7232
      %7234 = vmatmul.bf16.gmra.mxu0 %v1740
      %v7235 = vpop.f32.mrf.mxu0
      %v7236 = vadd.f32 %v7147, %v7235
      %v7237 = vpop.f32.mrf.mxu0
      %v7238 = vadd.f32 %v7149, %v7237
      %7239 = vmatmul.bf16.gmra.mxu0 %v1780
      %v7240 = vpop.f32.mrf.mxu0
      %v7241 = vadd.f32 %v7152, %v7240
      %v7242 = vpop.f32.mrf.mxu0
      %v7243 = vadd.f32 %v7154, %v7242
      %7244 = vmatmul.bf16.gmra.mxu0 %v1820
      %v7245 = vpop.f32.mrf.mxu0
      %v7246 = vadd.f32 %v7157, %v7245
      %v7247 = vpop.f32.mrf.mxu0
      %v7248 = vadd.f32 %v7159, %v7247
      %7249 = vmatmul.bf16.gmra.mxu0 %v1860
      %v7250 = vpop.f32.mrf.mxu0
      %v7251 = vadd.f32 %v7162, %v7250
      %v7252 = vpop.f32.mrf.mxu0
      %v7253 = vadd.f32 %v7164, %v7252
      %7254 = vmatmul.bf16.gmra.mxu0 %v1900
      %v7255 = vpop.f32.mrf.mxu0
      %v7256 = vadd.f32 %v7167, %v7255
      %v7257 = vpop.f32.mrf.mxu0
      %v7258 = vadd.f32 %v7169, %v7257
      %7259 = vmatmul.bf16.gmra.mxu0 %v1940
      %v7260 = vpop.f32.mrf.mxu0
      %v7261 = vadd.f32 %v7172, %v7260
      %v7262 = vpop.f32.mrf.mxu0
      %v7263 = vadd.f32 %v7174, %v7262
      %7264 = vmatmul.bf16.gmra.mxu0 %v1980
      %v7265 = vpop.f32.mrf.mxu0
      %v7266 = vadd.f32 %v7177, %v7265
      %v7267 = vpop.f32.mrf.mxu0
      %v7268 = vadd.f32 %v7179, %v7267
      %7269 = vmatmul.bf16.gmra.mxu0 %v2020
      %v7270 = vpop.f32.mrf.mxu0
      %v7271 = vadd.f32 %v7182, %v7270
      %v7272 = vpop.f32.mrf.mxu0
      %v7273 = vadd.f32 %v7184, %v7272
      %7274 = vmatmul.bf16.gmra.mxu0 %v2060
      %v7275 = vpop.f32.mrf.mxu0
      %v7276 = vadd.f32 %v7187, %v7275
      %v7277 = vpop.f32.mrf.mxu0
      %v7278 = vadd.f32 %v7189, %v7277
      %7279 = vmatmul.bf16.gmra.mxu0 %v2100
      %v7280 = vpop.f32.mrf.mxu0
      %v7281 = vadd.f32 %v7192, %v7280
      %v7282 = vpop.f32.mrf.mxu0
      %v7283 = vadd.f32 %v7194, %v7282
      %7284 = vmatmul.bf16.gmra.mxu0 %v2140
      %v7285 = vpop.f32.mrf.mxu0
      %v7286 = vadd.f32 %v7197, %v7285
      %v7287 = vpop.f32.mrf.mxu0
      %v7288 = vadd.f32 %v7199, %v7287
      %7289 = vdwg.mxu0
      %7290 = vmatpush.bf16.msra.mxu0 %v4270
      %7291 = vmatpush.bf16.msra.mxu0 %v4269
      %7292 = vmatpush.bf16.msra.mxu0 %v4268
      %7293 = vmatpush.bf16.msra.mxu0 %v4267
      %7294 = vmatpush.bf16.msra.mxu0 %v4266
      %7295 = vmatpush.bf16.msra.mxu0 %v4265
      %7296 = vmatpush.bf16.msra.mxu0 %v4264
      %7297 = vmatpush.bf16.msra.mxu0 %v4263
      %7298 = vmatmul.bf16.gmra.mxu0 %v1541
      %v7299 = vpop.f32.mrf.mxu0
      %v7300 = vadd.f32 %v7211, %v7299
      %v7301 = vpop.f32.mrf.mxu0
      %v7302 = vadd.f32 %v7213, %v7301
      %7303 = vmatmul.bf16.gmra.mxu0 %v1581
      %v7304 = vpop.f32.mrf.mxu0
      %v7305 = vadd.f32 %v7216, %v7304
      %v7306 = vpop.f32.mrf.mxu0
      %v7307 = vadd.f32 %v7218, %v7306
      %7308 = vmatmul.bf16.gmra.mxu0 %v1621
      %v7309 = vpop.f32.mrf.mxu0
      %v7310 = vadd.f32 %v7221, %v7309
      %v7311 = vpop.f32.mrf.mxu0
      %v7312 = vadd.f32 %v7223, %v7311
      %7313 = vmatmul.bf16.gmra.mxu0 %v1661
      %v7314 = vpop.f32.mrf.mxu0
      %v7315 = vadd.f32 %v7226, %v7314
      %v7316 = vpop.f32.mrf.mxu0
      %v7317 = vadd.f32 %v7228, %v7316
      %7318 = vmatmul.bf16.gmra.mxu0 %v1701
      %v7319 = vpop.f32.mrf.mxu0
      %v7320 = vadd.f32 %v7231, %v7319
      %v7321 = vpop.f32.mrf.mxu0
      %v7322 = vadd.f32 %v7233, %v7321
      %7323 = vmatmul.bf16.gmra.mxu0 %v1741
      %v7324 = vpop.f32.mrf.mxu0
      %v7325 = vadd.f32 %v7236, %v7324
      %v7326 = vpop.f32.mrf.mxu0
      %v7327 = vadd.f32 %v7238, %v7326
      %7328 = vmatmul.bf16.gmra.mxu0 %v1781
      %v7329 = vpop.f32.mrf.mxu0
      %v7330 = vadd.f32 %v7241, %v7329
      %v7331 = vpop.f32.mrf.mxu0
      %v7332 = vadd.f32 %v7243, %v7331
      %7333 = vmatmul.bf16.gmra.mxu0 %v1821
      %v7334 = vpop.f32.mrf.mxu0
      %v7335 = vadd.f32 %v7246, %v7334
      %v7336 = vpop.f32.mrf.mxu0
      %v7337 = vadd.f32 %v7248, %v7336
      %7338 = vmatmul.bf16.gmra.mxu0 %v1861
      %v7339 = vpop.f32.mrf.mxu0
      %v7340 = vadd.f32 %v7251, %v7339
      %v7341 = vpop.f32.mrf.mxu0
      %v7342 = vadd.f32 %v7253, %v7341
      %7343 = vmatmul.bf16.gmra.mxu0 %v1901
      %v7344 = vpop.f32.mrf.mxu0
      %v7345 = vadd.f32 %v7256, %v7344
      %v7346 = vpop.f32.mrf.mxu0
      %v7347 = vadd.f32 %v7258, %v7346
      %7348 = vmatmul.bf16.gmra.mxu0 %v1941
      %v7349 = vpop.f32.mrf.mxu0
      %v7350 = vadd.f32 %v7261, %v7349
      %v7351 = vpop.f32.mrf.mxu0
      %v7352 = vadd.f32 %v7263, %v7351
      %7353 = vmatmul.bf16.gmra.mxu0 %v1981
      %v7354 = vpop.f32.mrf.mxu0
      %v7355 = vadd.f32 %v7266, %v7354
      %v7356 = vpop.f32.mrf.mxu0
      %v7357 = vadd.f32 %v7268, %v7356
      %7358 = vmatmul.bf16.gmra.mxu0 %v2021
      %v7359 = vpop.f32.mrf.mxu0
      %v7360 = vadd.f32 %v7271, %v7359
      %v7361 = vpop.f32.mrf.mxu0
      %v7362 = vadd.f32 %v7273, %v7361
      %7363 = vmatmul.bf16.gmra.mxu0 %v2061
      %v7364 = vpop.f32.mrf.mxu0
      %v7365 = vadd.f32 %v7276, %v7364
      %v7366 = vpop.f32.mrf.mxu0
      %v7367 = vadd.f32 %v7278, %v7366
      %7368 = vmatmul.bf16.gmra.mxu0 %v2101
      %v7369 = vpop.f32.mrf.mxu0
      %v7370 = vadd.f32 %v7281, %v7369
      %v7371 = vpop.f32.mrf.mxu0
      %v7372 = vadd.f32 %v7283, %v7371
      %7373 = vmatmul.bf16.gmra.mxu0 %v2141
      %v7374 = vpop.f32.mrf.mxu0
      %v7375 = vadd.f32 %v7286, %v7374
      %v7376 = vpop.f32.mrf.mxu0
      %v7377 = vadd.f32 %v7288, %v7376
      %7378 = vdwg.mxu0
      %7379 = vmatpush.bf16.msra.mxu0 %v4278
      %7380 = vmatpush.bf16.msra.mxu0 %v4277
      %7381 = vmatpush.bf16.msra.mxu0 %v4276
      %7382 = vmatpush.bf16.msra.mxu0 %v4275
      %7383 = vmatpush.bf16.msra.mxu0 %v4274
      %7384 = vmatpush.bf16.msra.mxu0 %v4273
      %7385 = vmatpush.bf16.msra.mxu0 %v4272
      %7386 = vmatpush.bf16.msra.mxu0 %v4271
      %7387 = vmatmul.bf16.gmra.mxu0 %v1542
      %v7388 = vpop.f32.mrf.mxu0
      %v7389 = vadd.f32 %v7300, %v7388
      %v7390 = vpop.f32.mrf.mxu0
      %v7391 = vadd.f32 %v7302, %v7390
      %7392 = vmatmul.bf16.gmra.mxu0 %v1582
      %v7393 = vpop.f32.mrf.mxu0
      %v7394 = vadd.f32 %v7305, %v7393
      %v7395 = vpop.f32.mrf.mxu0
      %v7396 = vadd.f32 %v7307, %v7395
      %7397 = vmatmul.bf16.gmra.mxu0 %v1622
      %v7398 = vpop.f32.mrf.mxu0
      %v7399 = vadd.f32 %v7310, %v7398
      %v7400 = vpop.f32.mrf.mxu0
      %v7401 = vadd.f32 %v7312, %v7400
      %7402 = vmatmul.bf16.gmra.mxu0 %v1662
      %v7403 = vpop.f32.mrf.mxu0
      %v7404 = vadd.f32 %v7315, %v7403
      %v7405 = vpop.f32.mrf.mxu0
      %v7406 = vadd.f32 %v7317, %v7405
      %7407 = vmatmul.bf16.gmra.mxu0 %v1702
      %v7408 = vpop.f32.mrf.mxu0
      %v7409 = vadd.f32 %v7320, %v7408
      %v7410 = vpop.f32.mrf.mxu0
      %v7411 = vadd.f32 %v7322, %v7410
      %7412 = vmatmul.bf16.gmra.mxu0 %v1742
      %v7413 = vpop.f32.mrf.mxu0
      %v7414 = vadd.f32 %v7325, %v7413
      %v7415 = vpop.f32.mrf.mxu0
      %v7416 = vadd.f32 %v7327, %v7415
      %7417 = vmatmul.bf16.gmra.mxu0 %v1782
      %v7418 = vpop.f32.mrf.mxu0
      %v7419 = vadd.f32 %v7330, %v7418
      %v7420 = vpop.f32.mrf.mxu0
      %v7421 = vadd.f32 %v7332, %v7420
      %7422 = vmatmul.bf16.gmra.mxu0 %v1822
      %v7423 = vpop.f32.mrf.mxu0
      %v7424 = vadd.f32 %v7335, %v7423
      %v7425 = vpop.f32.mrf.mxu0
      %v7426 = vadd.f32 %v7337, %v7425
      %7427 = vmatmul.bf16.gmra.mxu0 %v1862
      %v7428 = vpop.f32.mrf.mxu0
      %v7429 = vadd.f32 %v7340, %v7428
      %v7430 = vpop.f32.mrf.mxu0
      %v7431 = vadd.f32 %v7342, %v7430
      %7432 = vmatmul.bf16.gmra.mxu0 %v1902
      %v7433 = vpop.f32.mrf.mxu0
      %v7434 = vadd.f32 %v7345, %v7433
      %v7435 = vpop.f32.mrf.mxu0
      %v7436 = vadd.f32 %v7347, %v7435
      %7437 = vmatmul.bf16.gmra.mxu0 %v1942
      %v7438 = vpop.f32.mrf.mxu0
      %v7439 = vadd.f32 %v7350, %v7438
      %v7440 = vpop.f32.mrf.mxu0
      %v7441 = vadd.f32 %v7352, %v7440
      %7442 = vmatmul.bf16.gmra.mxu0 %v1982
      %v7443 = vpop.f32.mrf.mxu0
      %v7444 = vadd.f32 %v7355, %v7443
      %v7445 = vpop.f32.mrf.mxu0
      %v7446 = vadd.f32 %v7357, %v7445
      %7447 = vmatmul.bf16.gmra.mxu0 %v2022
      %v7448 = vpop.f32.mrf.mxu0
      %v7449 = vadd.f32 %v7360, %v7448
      %v7450 = vpop.f32.mrf.mxu0
      %v7451 = vadd.f32 %v7362, %v7450
      %7452 = vmatmul.bf16.gmra.mxu0 %v2062
      %v7453 = vpop.f32.mrf.mxu0
      %v7454 = vadd.f32 %v7365, %v7453
      %v7455 = vpop.f32.mrf.mxu0
      %v7456 = vadd.f32 %v7367, %v7455
      %7457 = vmatmul.bf16.gmra.mxu0 %v2102
      %v7458 = vpop.f32.mrf.mxu0
      %v7459 = vadd.f32 %v7370, %v7458
      %v7460 = vpop.f32.mrf.mxu0
      %v7461 = vadd.f32 %v7372, %v7460
      %7462 = vmatmul.bf16.gmra.mxu0 %v2142
      %v7463 = vpop.f32.mrf.mxu0
      %v7464 = vadd.f32 %v7375, %v7463
      %v7465 = vpop.f32.mrf.mxu0
      %v7466 = vadd.f32 %v7377, %v7465
      %7467 = vdwg.mxu0
      %7468 = vmatpush.bf16.msra.mxu0 %v4286
      %7469 = vmatpush.bf16.msra.mxu0 %v4285
      %7470 = vmatpush.bf16.msra.mxu0 %v4284
      %7471 = vmatpush.bf16.msra.mxu0 %v4283
      %7472 = vmatpush.bf16.msra.mxu0 %v4282
      %7473 = vmatpush.bf16.msra.mxu0 %v4281
      %7474 = vmatpush.bf16.msra.mxu0 %v4280
      %7475 = vmatpush.bf16.msra.mxu0 %v4279
      %7476 = vmatmul.bf16.gmra.mxu0 %v1543
      %v7477 = vpop.f32.mrf.mxu0
      %v7478 = vadd.f32 %v7389, %v7477
      %v7479 = vpop.f32.mrf.mxu0
      %v7480 = vadd.f32 %v7391, %v7479
      %7481 = vmatmul.bf16.gmra.mxu0 %v1583
      %v7482 = vpop.f32.mrf.mxu0
      %v7483 = vadd.f32 %v7394, %v7482
      %v7484 = vpop.f32.mrf.mxu0
      %v7485 = vadd.f32 %v7396, %v7484
      %7486 = vmatmul.bf16.gmra.mxu0 %v1623
      %v7487 = vpop.f32.mrf.mxu0
      %v7488 = vadd.f32 %v7399, %v7487
      %v7489 = vpop.f32.mrf.mxu0
      %v7490 = vadd.f32 %v7401, %v7489
      %7491 = vmatmul.bf16.gmra.mxu0 %v1663
      %v7492 = vpop.f32.mrf.mxu0
      %v7493 = vadd.f32 %v7404, %v7492
      %v7494 = vpop.f32.mrf.mxu0
      %v7495 = vadd.f32 %v7406, %v7494
      %7496 = vmatmul.bf16.gmra.mxu0 %v1703
      %v7497 = vpop.f32.mrf.mxu0
      %v7498 = vadd.f32 %v7409, %v7497
      %v7499 = vpop.f32.mrf.mxu0
      %v7500 = vadd.f32 %v7411, %v7499
      %7501 = vmatmul.bf16.gmra.mxu0 %v1743
      %v7502 = vpop.f32.mrf.mxu0
      %v7503 = vadd.f32 %v7414, %v7502
      %v7504 = vpop.f32.mrf.mxu0
      %v7505 = vadd.f32 %v7416, %v7504
      %7506 = vmatmul.bf16.gmra.mxu0 %v1783
      %v7507 = vpop.f32.mrf.mxu0
      %v7508 = vadd.f32 %v7419, %v7507
      %v7509 = vpop.f32.mrf.mxu0
      %v7510 = vadd.f32 %v7421, %v7509
      %7511 = vmatmul.bf16.gmra.mxu0 %v1823
      %v7512 = vpop.f32.mrf.mxu0
      %v7513 = vadd.f32 %v7424, %v7512
      %v7514 = vpop.f32.mrf.mxu0
      %v7515 = vadd.f32 %v7426, %v7514
      %7516 = vmatmul.bf16.gmra.mxu0 %v1863
      %v7517 = vpop.f32.mrf.mxu0
      %v7518 = vadd.f32 %v7429, %v7517
      %v7519 = vpop.f32.mrf.mxu0
      %v7520 = vadd.f32 %v7431, %v7519
      %7521 = vmatmul.bf16.gmra.mxu0 %v1903
      %v7522 = vpop.f32.mrf.mxu0
      %v7523 = vadd.f32 %v7434, %v7522
      %v7524 = vpop.f32.mrf.mxu0
      %v7525 = vadd.f32 %v7436, %v7524
      %7526 = vmatmul.bf16.gmra.mxu0 %v1943
      %v7527 = vpop.f32.mrf.mxu0
      %v7528 = vadd.f32 %v7439, %v7527
      %v7529 = vpop.f32.mrf.mxu0
      %v7530 = vadd.f32 %v7441, %v7529
      %7531 = vmatmul.bf16.gmra.mxu0 %v1983
      %v7532 = vpop.f32.mrf.mxu0
      %v7533 = vadd.f32 %v7444, %v7532
      %v7534 = vpop.f32.mrf.mxu0
      %v7535 = vadd.f32 %v7446, %v7534
      %7536 = vmatmul.bf16.gmra.mxu0 %v2023
      %v7537 = vpop.f32.mrf.mxu0
      %v7538 = vadd.f32 %v7449, %v7537
      %v7539 = vpop.f32.mrf.mxu0
      %v7540 = vadd.f32 %v7451, %v7539
      %7541 = vmatmul.bf16.gmra.mxu0 %v2063
      %v7542 = vpop.f32.mrf.mxu0
      %v7543 = vadd.f32 %v7454, %v7542
      %v7544 = vpop.f32.mrf.mxu0
      %v7545 = vadd.f32 %v7456, %v7544
      %7546 = vmatmul.bf16.gmra.mxu0 %v2103
      %v7547 = vpop.f32.mrf.mxu0
      %v7548 = vadd.f32 %v7459, %v7547
      %v7549 = vpop.f32.mrf.mxu0
      %v7550 = vadd.f32 %v7461, %v7549
      %7551 = vmatmul.bf16.gmra.mxu0 %v2143
      %v7552 = vpop.f32.mrf.mxu0
      %v7553 = vadd.f32 %v7464, %v7552
      %v7554 = vpop.f32.mrf.mxu0
      %v7555 = vadd.f32 %v7466, %v7554
      %7556 = vdwg.mxu0
      %7557 = vmatpush.bf16.msra.mxu0 %v4294
      %7558 = vmatpush.bf16.msra.mxu0 %v4293
      %7559 = vmatpush.bf16.msra.mxu0 %v4292
      %7560 = vmatpush.bf16.msra.mxu0 %v4291
      %7561 = vmatpush.bf16.msra.mxu0 %v4290
      %7562 = vmatpush.bf16.msra.mxu0 %v4289
      %7563 = vmatpush.bf16.msra.mxu0 %v4288
      %7564 = vmatpush.bf16.msra.mxu0 %v4287
      %7565 = vmatmul.bf16.gmra.mxu0 %v1544
      %v7566 = vpop.f32.mrf.mxu0
      %v7567 = vadd.f32 %v7478, %v7566
      %v7568 = vpop.f32.mrf.mxu0
      %v7569 = vadd.f32 %v7480, %v7568
      %7570 = vmatmul.bf16.gmra.mxu0 %v1584
      %v7571 = vpop.f32.mrf.mxu0
      %v7572 = vadd.f32 %v7483, %v7571
      %v7573 = vpop.f32.mrf.mxu0
      %v7574 = vadd.f32 %v7485, %v7573
      %7575 = vmatmul.bf16.gmra.mxu0 %v1624
      %v7576 = vpop.f32.mrf.mxu0
      %v7577 = vadd.f32 %v7488, %v7576
      %v7578 = vpop.f32.mrf.mxu0
      %v7579 = vadd.f32 %v7490, %v7578
      %7580 = vmatmul.bf16.gmra.mxu0 %v1664
      %v7581 = vpop.f32.mrf.mxu0
      %v7582 = vadd.f32 %v7493, %v7581
      %v7583 = vpop.f32.mrf.mxu0
      %v7584 = vadd.f32 %v7495, %v7583
      %7585 = vmatmul.bf16.gmra.mxu0 %v1704
      %v7586 = vpop.f32.mrf.mxu0
      %v7587 = vadd.f32 %v7498, %v7586
      %v7588 = vpop.f32.mrf.mxu0
      %v7589 = vadd.f32 %v7500, %v7588
      %7590 = vmatmul.bf16.gmra.mxu0 %v1744
      %v7591 = vpop.f32.mrf.mxu0
      %v7592 = vadd.f32 %v7503, %v7591
      %v7593 = vpop.f32.mrf.mxu0
      %v7594 = vadd.f32 %v7505, %v7593
      %7595 = vmatmul.bf16.gmra.mxu0 %v1784
      %v7596 = vpop.f32.mrf.mxu0
      %v7597 = vadd.f32 %v7508, %v7596
      %v7598 = vpop.f32.mrf.mxu0
      %v7599 = vadd.f32 %v7510, %v7598
      %7600 = vmatmul.bf16.gmra.mxu0 %v1824
      %v7601 = vpop.f32.mrf.mxu0
      %v7602 = vadd.f32 %v7513, %v7601
      %v7603 = vpop.f32.mrf.mxu0
      %v7604 = vadd.f32 %v7515, %v7603
      %7605 = vmatmul.bf16.gmra.mxu0 %v1864
      %v7606 = vpop.f32.mrf.mxu0
      %v7607 = vadd.f32 %v7518, %v7606
      %v7608 = vpop.f32.mrf.mxu0
      %v7609 = vadd.f32 %v7520, %v7608
      %7610 = vmatmul.bf16.gmra.mxu0 %v1904
      %v7611 = vpop.f32.mrf.mxu0
      %v7612 = vadd.f32 %v7523, %v7611
      %v7613 = vpop.f32.mrf.mxu0
      %v7614 = vadd.f32 %v7525, %v7613
      %7615 = vmatmul.bf16.gmra.mxu0 %v1944
      %v7616 = vpop.f32.mrf.mxu0
      %v7617 = vadd.f32 %v7528, %v7616
      %v7618 = vpop.f32.mrf.mxu0
      %v7619 = vadd.f32 %v7530, %v7618
      %7620 = vmatmul.bf16.gmra.mxu0 %v1984
      %v7621 = vpop.f32.mrf.mxu0
      %v7622 = vadd.f32 %v7533, %v7621
      %v7623 = vpop.f32.mrf.mxu0
      %v7624 = vadd.f32 %v7535, %v7623
      %7625 = vmatmul.bf16.gmra.mxu0 %v2024
      %v7626 = vpop.f32.mrf.mxu0
      %v7627 = vadd.f32 %v7538, %v7626
      %v7628 = vpop.f32.mrf.mxu0
      %v7629 = vadd.f32 %v7540, %v7628
      %7630 = vmatmul.bf16.gmra.mxu0 %v2064
      %v7631 = vpop.f32.mrf.mxu0
      %v7632 = vadd.f32 %v7543, %v7631
      %v7633 = vpop.f32.mrf.mxu0
      %v7634 = vadd.f32 %v7545, %v7633
      %7635 = vmatmul.bf16.gmra.mxu0 %v2104
      %v7636 = vpop.f32.mrf.mxu0
      %v7637 = vadd.f32 %v7548, %v7636
      %v7638 = vpop.f32.mrf.mxu0
      %v7639 = vadd.f32 %v7550, %v7638
      %7640 = vmatmul.bf16.gmra.mxu0 %v2144
      %v7641 = vpop.f32.mrf.mxu0
      %v7642 = vadd.f32 %v7553, %v7641
      %v7643 = vpop.f32.mrf.mxu0
      %v7644 = vadd.f32 %v7555, %v7643
      %7645 = vdwg.mxu0
      %7646 = vmatpush.bf16.msra.mxu0 %v4302
      %7647 = vmatpush.bf16.msra.mxu0 %v4301
      %7648 = vmatpush.bf16.msra.mxu0 %v4300
      %7649 = vmatpush.bf16.msra.mxu0 %v4299
      %7650 = vmatpush.bf16.msra.mxu0 %v4298
      %7651 = vmatpush.bf16.msra.mxu0 %v4297
      %7652 = vmatpush.bf16.msra.mxu0 %v4296
      %7653 = vmatpush.bf16.msra.mxu0 %v4295
      %7654 = vmatmul.bf16.gmra.mxu0 %v1545
      %v7655 = vpop.f32.mrf.mxu0
      %v7656 = vadd.f32 %v7567, %v7655
      %v7657 = vpop.f32.mrf.mxu0
      %v7658 = vadd.f32 %v7569, %v7657
      %7659 = vmatmul.bf16.gmra.mxu0 %v1585
      %v7660 = vpop.f32.mrf.mxu0
      %v7661 = vadd.f32 %v7572, %v7660
      %v7662 = vpop.f32.mrf.mxu0
      %v7663 = vadd.f32 %v7574, %v7662
      %7664 = vmatmul.bf16.gmra.mxu0 %v1625
      %v7665 = vpop.f32.mrf.mxu0
      %v7666 = vadd.f32 %v7577, %v7665
      %v7667 = vpop.f32.mrf.mxu0
      %v7668 = vadd.f32 %v7579, %v7667
      %7669 = vmatmul.bf16.gmra.mxu0 %v1665
      %v7670 = vpop.f32.mrf.mxu0
      %v7671 = vadd.f32 %v7582, %v7670
      %v7672 = vpop.f32.mrf.mxu0
      %v7673 = vadd.f32 %v7584, %v7672
      %7674 = vmatmul.bf16.gmra.mxu0 %v1705
      %v7675 = vpop.f32.mrf.mxu0
      %v7676 = vadd.f32 %v7587, %v7675
      %v7677 = vpop.f32.mrf.mxu0
      %v7678 = vadd.f32 %v7589, %v7677
      %7679 = vmatmul.bf16.gmra.mxu0 %v1745
      %v7680 = vpop.f32.mrf.mxu0
      %v7681 = vadd.f32 %v7592, %v7680
      %v7682 = vpop.f32.mrf.mxu0
      %v7683 = vadd.f32 %v7594, %v7682
      %7684 = vmatmul.bf16.gmra.mxu0 %v1785
      %v7685 = vpop.f32.mrf.mxu0
      %v7686 = vadd.f32 %v7597, %v7685
      %v7687 = vpop.f32.mrf.mxu0
      %v7688 = vadd.f32 %v7599, %v7687
      %7689 = vmatmul.bf16.gmra.mxu0 %v1825
      %v7690 = vpop.f32.mrf.mxu0
      %v7691 = vadd.f32 %v7602, %v7690
      %v7692 = vpop.f32.mrf.mxu0
      %v7693 = vadd.f32 %v7604, %v7692
      %7694 = vmatmul.bf16.gmra.mxu0 %v1865
      %v7695 = vpop.f32.mrf.mxu0
      %v7696 = vadd.f32 %v7607, %v7695
      %v7697 = vpop.f32.mrf.mxu0
      %v7698 = vadd.f32 %v7609, %v7697
      %7699 = vmatmul.bf16.gmra.mxu0 %v1905
      %v7700 = vpop.f32.mrf.mxu0
      %v7701 = vadd.f32 %v7612, %v7700
      %v7702 = vpop.f32.mrf.mxu0
      %v7703 = vadd.f32 %v7614, %v7702
      %7704 = vmatmul.bf16.gmra.mxu0 %v1945
      %v7705 = vpop.f32.mrf.mxu0
      %v7706 = vadd.f32 %v7617, %v7705
      %v7707 = vpop.f32.mrf.mxu0
      %v7708 = vadd.f32 %v7619, %v7707
      %7709 = vmatmul.bf16.gmra.mxu0 %v1985
      %v7710 = vpop.f32.mrf.mxu0
      %v7711 = vadd.f32 %v7622, %v7710
      %v7712 = vpop.f32.mrf.mxu0
      %v7713 = vadd.f32 %v7624, %v7712
      %7714 = vmatmul.bf16.gmra.mxu0 %v2025
      %v7715 = vpop.f32.mrf.mxu0
      %v7716 = vadd.f32 %v7627, %v7715
      %v7717 = vpop.f32.mrf.mxu0
      %v7718 = vadd.f32 %v7629, %v7717
      %7719 = vmatmul.bf16.gmra.mxu0 %v2065
      %v7720 = vpop.f32.mrf.mxu0
      %v7721 = vadd.f32 %v7632, %v7720
      %v7722 = vpop.f32.mrf.mxu0
      %v7723 = vadd.f32 %v7634, %v7722
      %7724 = vmatmul.bf16.gmra.mxu0 %v2105
      %v7725 = vpop.f32.mrf.mxu0
      %v7726 = vadd.f32 %v7637, %v7725
      %v7727 = vpop.f32.mrf.mxu0
      %v7728 = vadd.f32 %v7639, %v7727
      %7729 = vmatmul.bf16.gmra.mxu0 %v2145
      %v7730 = vpop.f32.mrf.mxu0
      %v7731 = vadd.f32 %v7642, %v7730
      %v7732 = vpop.f32.mrf.mxu0
      %v7733 = vadd.f32 %v7644, %v7732
      %7734 = vdwg.mxu0
      %7735 = vmatpush.bf16.msra.mxu0 %v4310
      %7736 = vmatpush.bf16.msra.mxu0 %v4309
      %7737 = vmatpush.bf16.msra.mxu0 %v4308
      %7738 = vmatpush.bf16.msra.mxu0 %v4307
      %7739 = vmatpush.bf16.msra.mxu0 %v4306
      %7740 = vmatpush.bf16.msra.mxu0 %v4305
      %7741 = vmatpush.bf16.msra.mxu0 %v4304
      %7742 = vmatpush.bf16.msra.mxu0 %v4303
      %7743 = vmatmul.bf16.gmra.mxu0 %v1546
      %v7744 = vpop.f32.mrf.mxu0
      %v7745 = vadd.f32 %v7656, %v7744
      %v7746 = vpop.f32.mrf.mxu0
      %v7747 = vadd.f32 %v7658, %v7746
      %7748 = vmatmul.bf16.gmra.mxu0 %v1586
      %v7749 = vpop.f32.mrf.mxu0
      %v7750 = vadd.f32 %v7661, %v7749
      %v7751 = vpop.f32.mrf.mxu0
      %v7752 = vadd.f32 %v7663, %v7751
      %7753 = vmatmul.bf16.gmra.mxu0 %v1626
      %v7754 = vpop.f32.mrf.mxu0
      %v7755 = vadd.f32 %v7666, %v7754
      %v7756 = vpop.f32.mrf.mxu0
      %v7757 = vadd.f32 %v7668, %v7756
      %7758 = vmatmul.bf16.gmra.mxu0 %v1666
      %v7759 = vpop.f32.mrf.mxu0
      %v7760 = vadd.f32 %v7671, %v7759
      %v7761 = vpop.f32.mrf.mxu0
      %v7762 = vadd.f32 %v7673, %v7761
      %7763 = vmatmul.bf16.gmra.mxu0 %v1706
      %v7764 = vpop.f32.mrf.mxu0
      %v7765 = vadd.f32 %v7676, %v7764
      %v7766 = vpop.f32.mrf.mxu0
      %v7767 = vadd.f32 %v7678, %v7766
      %7768 = vmatmul.bf16.gmra.mxu0 %v1746
      %v7769 = vpop.f32.mrf.mxu0
      %v7770 = vadd.f32 %v7681, %v7769
      %v7771 = vpop.f32.mrf.mxu0
      %v7772 = vadd.f32 %v7683, %v7771
      %7773 = vmatmul.bf16.gmra.mxu0 %v1786
      %v7774 = vpop.f32.mrf.mxu0
      %v7775 = vadd.f32 %v7686, %v7774
      %v7776 = vpop.f32.mrf.mxu0
      %v7777 = vadd.f32 %v7688, %v7776
      %7778 = vmatmul.bf16.gmra.mxu0 %v1826
      %v7779 = vpop.f32.mrf.mxu0
      %v7780 = vadd.f32 %v7691, %v7779
      %v7781 = vpop.f32.mrf.mxu0
      %v7782 = vadd.f32 %v7693, %v7781
      %7783 = vmatmul.bf16.gmra.mxu0 %v1866
      %v7784 = vpop.f32.mrf.mxu0
      %v7785 = vadd.f32 %v7696, %v7784
      %v7786 = vpop.f32.mrf.mxu0
      %v7787 = vadd.f32 %v7698, %v7786
      %7788 = vmatmul.bf16.gmra.mxu0 %v1906
      %v7789 = vpop.f32.mrf.mxu0
      %v7790 = vadd.f32 %v7701, %v7789
      %v7791 = vpop.f32.mrf.mxu0
      %v7792 = vadd.f32 %v7703, %v7791
      %7793 = vmatmul.bf16.gmra.mxu0 %v1946
      %v7794 = vpop.f32.mrf.mxu0
      %v7795 = vadd.f32 %v7706, %v7794
      %v7796 = vpop.f32.mrf.mxu0
      %v7797 = vadd.f32 %v7708, %v7796
      %7798 = vmatmul.bf16.gmra.mxu0 %v1986
      %v7799 = vpop.f32.mrf.mxu0
      %v7800 = vadd.f32 %v7711, %v7799
      %v7801 = vpop.f32.mrf.mxu0
      %v7802 = vadd.f32 %v7713, %v7801
      %7803 = vmatmul.bf16.gmra.mxu0 %v2026
      %v7804 = vpop.f32.mrf.mxu0
      %v7805 = vadd.f32 %v7716, %v7804
      %v7806 = vpop.f32.mrf.mxu0
      %v7807 = vadd.f32 %v7718, %v7806
      %7808 = vmatmul.bf16.gmra.mxu0 %v2066
      %v7809 = vpop.f32.mrf.mxu0
      %v7810 = vadd.f32 %v7721, %v7809
      %v7811 = vpop.f32.mrf.mxu0
      %v7812 = vadd.f32 %v7723, %v7811
      %7813 = vmatmul.bf16.gmra.mxu0 %v2106
      %v7814 = vpop.f32.mrf.mxu0
      %v7815 = vadd.f32 %v7726, %v7814
      %v7816 = vpop.f32.mrf.mxu0
      %v7817 = vadd.f32 %v7728, %v7816
      %7818 = vmatmul.bf16.gmra.mxu0 %v2146
      %v7819 = vpop.f32.mrf.mxu0
      %v7820 = vadd.f32 %v7731, %v7819
      %v7821 = vpop.f32.mrf.mxu0
      %v7822 = vadd.f32 %v7733, %v7821
      %7823 = vdwg.mxu0
      %7824 = vmatpush.bf16.msra.mxu0 %v4318
      %7825 = vmatpush.bf16.msra.mxu0 %v4317
      %7826 = vmatpush.bf16.msra.mxu0 %v4316
      %7827 = vmatpush.bf16.msra.mxu0 %v4315
      %7828 = vmatpush.bf16.msra.mxu0 %v4314
      %7829 = vmatpush.bf16.msra.mxu0 %v4313
      %7830 = vmatpush.bf16.msra.mxu0 %v4312
      %7831 = vmatpush.bf16.msra.mxu0 %v4311
      %7832 = vmatmul.bf16.gmra.mxu0 %v1547
      %v7833 = vpop.f32.mrf.mxu0
      %v7834 = vadd.f32 %v7745, %v7833
      %v7835 = vpop.f32.mrf.mxu0
      %v7836 = vadd.f32 %v7747, %v7835
      %7837 = vmatmul.bf16.gmra.mxu0 %v1587
      %v7838 = vpop.f32.mrf.mxu0
      %v7839 = vadd.f32 %v7750, %v7838
      %v7840 = vpop.f32.mrf.mxu0
      %v7841 = vadd.f32 %v7752, %v7840
      %7842 = vmatmul.bf16.gmra.mxu0 %v1627
      %v7843 = vpop.f32.mrf.mxu0
      %v7844 = vadd.f32 %v7755, %v7843
      %v7845 = vpop.f32.mrf.mxu0
      %v7846 = vadd.f32 %v7757, %v7845
      %7847 = vmatmul.bf16.gmra.mxu0 %v1667
      %v7848 = vpop.f32.mrf.mxu0
      %v7849 = vadd.f32 %v7760, %v7848
      %v7850 = vpop.f32.mrf.mxu0
      %v7851 = vadd.f32 %v7762, %v7850
      %7852 = vmatmul.bf16.gmra.mxu0 %v1707
      %v7853 = vpop.f32.mrf.mxu0
      %v7854 = vadd.f32 %v7765, %v7853
      %v7855 = vpop.f32.mrf.mxu0
      %v7856 = vadd.f32 %v7767, %v7855
      %7857 = vmatmul.bf16.gmra.mxu0 %v1747
      %v7858 = vpop.f32.mrf.mxu0
      %v7859 = vadd.f32 %v7770, %v7858
      %v7860 = vpop.f32.mrf.mxu0
      %v7861 = vadd.f32 %v7772, %v7860
      %7862 = vmatmul.bf16.gmra.mxu0 %v1787
      %v7863 = vpop.f32.mrf.mxu0
      %v7864 = vadd.f32 %v7775, %v7863
      %v7865 = vpop.f32.mrf.mxu0
      %v7866 = vadd.f32 %v7777, %v7865
      %7867 = vmatmul.bf16.gmra.mxu0 %v1827
      %v7868 = vpop.f32.mrf.mxu0
      %v7869 = vadd.f32 %v7780, %v7868
      %v7870 = vpop.f32.mrf.mxu0
      %v7871 = vadd.f32 %v7782, %v7870
      %7872 = vmatmul.bf16.gmra.mxu0 %v1867
      %v7873 = vpop.f32.mrf.mxu0
      %v7874 = vadd.f32 %v7785, %v7873
      %v7875 = vpop.f32.mrf.mxu0
      %v7876 = vadd.f32 %v7787, %v7875
      %7877 = vmatmul.bf16.gmra.mxu0 %v1907
      %v7878 = vpop.f32.mrf.mxu0
      %v7879 = vadd.f32 %v7790, %v7878
      %v7880 = vpop.f32.mrf.mxu0
      %v7881 = vadd.f32 %v7792, %v7880
      %7882 = vmatmul.bf16.gmra.mxu0 %v1947
      %v7883 = vpop.f32.mrf.mxu0
      %v7884 = vadd.f32 %v7795, %v7883
      %v7885 = vpop.f32.mrf.mxu0
      %v7886 = vadd.f32 %v7797, %v7885
      %7887 = vmatmul.bf16.gmra.mxu0 %v1987
      %v7888 = vpop.f32.mrf.mxu0
      %v7889 = vadd.f32 %v7800, %v7888
      %v7890 = vpop.f32.mrf.mxu0
      %v7891 = vadd.f32 %v7802, %v7890
      %7892 = vmatmul.bf16.gmra.mxu0 %v2027
      %v7893 = vpop.f32.mrf.mxu0
      %v7894 = vadd.f32 %v7805, %v7893
      %v7895 = vpop.f32.mrf.mxu0
      %v7896 = vadd.f32 %v7807, %v7895
      %7897 = vmatmul.bf16.gmra.mxu0 %v2067
      %v7898 = vpop.f32.mrf.mxu0
      %v7899 = vadd.f32 %v7810, %v7898
      %v7900 = vpop.f32.mrf.mxu0
      %v7901 = vadd.f32 %v7812, %v7900
      %7902 = vmatmul.bf16.gmra.mxu0 %v2107
      %v7903 = vpop.f32.mrf.mxu0
      %v7904 = vadd.f32 %v7815, %v7903
      %v7905 = vpop.f32.mrf.mxu0
      %v7906 = vadd.f32 %v7817, %v7905
      %7907 = vmatmul.bf16.gmra.mxu0 %v2147
      %v7908 = vpop.f32.mrf.mxu0
      %v7909 = vadd.f32 %v7820, %v7908
      %v7910 = vpop.f32.mrf.mxu0
      %v7911 = vadd.f32 %v7822, %v7910
      %7912 = vdwg.mxu0
      %7913 = vmatpush.bf16.msra.mxu0 %v4326
      %7914 = vmatpush.bf16.msra.mxu0 %v4325
      %7915 = vmatpush.bf16.msra.mxu0 %v4324
      %7916 = vmatpush.bf16.msra.mxu0 %v4323
      %7917 = vmatpush.bf16.msra.mxu0 %v4322
      %7918 = vmatpush.bf16.msra.mxu0 %v4321
      %7919 = vmatpush.bf16.msra.mxu0 %v4320
      %7920 = vmatpush.bf16.msra.mxu0 %v4319
      %7921 = vmatmul.bf16.gmra.mxu0 %v1548
      %v7922 = vpop.f32.mrf.mxu0
      %v7923 = vadd.f32 %v7834, %v7922
      %v7924 = vpop.f32.mrf.mxu0
      %v7925 = vadd.f32 %v7836, %v7924
      %7926 = vmatmul.bf16.gmra.mxu0 %v1588
      %v7927 = vpop.f32.mrf.mxu0
      %v7928 = vadd.f32 %v7839, %v7927
      %v7929 = vpop.f32.mrf.mxu0
      %v7930 = vadd.f32 %v7841, %v7929
      %7931 = vmatmul.bf16.gmra.mxu0 %v1628
      %v7932 = vpop.f32.mrf.mxu0
      %v7933 = vadd.f32 %v7844, %v7932
      %v7934 = vpop.f32.mrf.mxu0
      %v7935 = vadd.f32 %v7846, %v7934
      %7936 = vmatmul.bf16.gmra.mxu0 %v1668
      %v7937 = vpop.f32.mrf.mxu0
      %v7938 = vadd.f32 %v7849, %v7937
      %v7939 = vpop.f32.mrf.mxu0
      %v7940 = vadd.f32 %v7851, %v7939
      %7941 = vmatmul.bf16.gmra.mxu0 %v1708
      %v7942 = vpop.f32.mrf.mxu0
      %v7943 = vadd.f32 %v7854, %v7942
      %v7944 = vpop.f32.mrf.mxu0
      %v7945 = vadd.f32 %v7856, %v7944
      %7946 = vmatmul.bf16.gmra.mxu0 %v1748
      %v7947 = vpop.f32.mrf.mxu0
      %v7948 = vadd.f32 %v7859, %v7947
      %v7949 = vpop.f32.mrf.mxu0
      %v7950 = vadd.f32 %v7861, %v7949
      %7951 = vmatmul.bf16.gmra.mxu0 %v1788
      %v7952 = vpop.f32.mrf.mxu0
      %v7953 = vadd.f32 %v7864, %v7952
      %v7954 = vpop.f32.mrf.mxu0
      %v7955 = vadd.f32 %v7866, %v7954
      %7956 = vmatmul.bf16.gmra.mxu0 %v1828
      %v7957 = vpop.f32.mrf.mxu0
      %v7958 = vadd.f32 %v7869, %v7957
      %v7959 = vpop.f32.mrf.mxu0
      %v7960 = vadd.f32 %v7871, %v7959
      %7961 = vmatmul.bf16.gmra.mxu0 %v1868
      %v7962 = vpop.f32.mrf.mxu0
      %v7963 = vadd.f32 %v7874, %v7962
      %v7964 = vpop.f32.mrf.mxu0
      %v7965 = vadd.f32 %v7876, %v7964
      %7966 = vmatmul.bf16.gmra.mxu0 %v1908
      %v7967 = vpop.f32.mrf.mxu0
      %v7968 = vadd.f32 %v7879, %v7967
      %v7969 = vpop.f32.mrf.mxu0
      %v7970 = vadd.f32 %v7881, %v7969
      %7971 = vmatmul.bf16.gmra.mxu0 %v1948
      %v7972 = vpop.f32.mrf.mxu0
      %v7973 = vadd.f32 %v7884, %v7972
      %v7974 = vpop.f32.mrf.mxu0
      %v7975 = vadd.f32 %v7886, %v7974
      %7976 = vmatmul.bf16.gmra.mxu0 %v1988
      %v7977 = vpop.f32.mrf.mxu0
      %v7978 = vadd.f32 %v7889, %v7977
      %v7979 = vpop.f32.mrf.mxu0
      %v7980 = vadd.f32 %v7891, %v7979
      %7981 = vmatmul.bf16.gmra.mxu0 %v2028
      %v7982 = vpop.f32.mrf.mxu0
      %v7983 = vadd.f32 %v7894, %v7982
      %v7984 = vpop.f32.mrf.mxu0
      %v7985 = vadd.f32 %v7896, %v7984
      %7986 = vmatmul.bf16.gmra.mxu0 %v2068
      %v7987 = vpop.f32.mrf.mxu0
      %v7988 = vadd.f32 %v7899, %v7987
      %v7989 = vpop.f32.mrf.mxu0
      %v7990 = vadd.f32 %v7901, %v7989
      %7991 = vmatmul.bf16.gmra.mxu0 %v2108
      %v7992 = vpop.f32.mrf.mxu0
      %v7993 = vadd.f32 %v7904, %v7992
      %v7994 = vpop.f32.mrf.mxu0
      %v7995 = vadd.f32 %v7906, %v7994
      %7996 = vmatmul.bf16.gmra.mxu0 %v2148
      %v7997 = vpop.f32.mrf.mxu0
      %v7998 = vadd.f32 %v7909, %v7997
      %v7999 = vpop.f32.mrf.mxu0
      %v8000 = vadd.f32 %v7911, %v7999
      %8001 = vdwg.mxu0
      %8002 = vmatpush.bf16.msra.mxu0 %v4334
      %8003 = vmatpush.bf16.msra.mxu0 %v4333
      %8004 = vmatpush.bf16.msra.mxu0 %v4332
      %8005 = vmatpush.bf16.msra.mxu0 %v4331
      %8006 = vmatpush.bf16.msra.mxu0 %v4330
      %8007 = vmatpush.bf16.msra.mxu0 %v4329
      %8008 = vmatpush.bf16.msra.mxu0 %v4328
      %8009 = vmatpush.bf16.msra.mxu0 %v4327
      %8010 = vmatmul.bf16.gmra.mxu0 %v1549
      %v8011 = vpop.f32.mrf.mxu0
      %v8012 = vadd.f32 %v7923, %v8011
      %v8013 = vpop.f32.mrf.mxu0
      %v8014 = vadd.f32 %v7925, %v8013
      %8015 = vmatmul.bf16.gmra.mxu0 %v1589
      %v8016 = vpop.f32.mrf.mxu0
      %v8017 = vadd.f32 %v7928, %v8016
      %v8018 = vpop.f32.mrf.mxu0
      %v8019 = vadd.f32 %v7930, %v8018
      %8020 = vmatmul.bf16.gmra.mxu0 %v1629
      %v8021 = vpop.f32.mrf.mxu0
      %v8022 = vadd.f32 %v7933, %v8021
      %v8023 = vpop.f32.mrf.mxu0
      %v8024 = vadd.f32 %v7935, %v8023
      %8025 = vmatmul.bf16.gmra.mxu0 %v1669
      %v8026 = vpop.f32.mrf.mxu0
      %v8027 = vadd.f32 %v7938, %v8026
      %v8028 = vpop.f32.mrf.mxu0
      %v8029 = vadd.f32 %v7940, %v8028
      %8030 = vmatmul.bf16.gmra.mxu0 %v1709
      %v8031 = vpop.f32.mrf.mxu0
      %v8032 = vadd.f32 %v7943, %v8031
      %v8033 = vpop.f32.mrf.mxu0
      %v8034 = vadd.f32 %v7945, %v8033
      %8035 = vmatmul.bf16.gmra.mxu0 %v1749
      %v8036 = vpop.f32.mrf.mxu0
      %v8037 = vadd.f32 %v7948, %v8036
      %v8038 = vpop.f32.mrf.mxu0
      %v8039 = vadd.f32 %v7950, %v8038
      %8040 = vmatmul.bf16.gmra.mxu0 %v1789
      %v8041 = vpop.f32.mrf.mxu0
      %v8042 = vadd.f32 %v7953, %v8041
      %v8043 = vpop.f32.mrf.mxu0
      %v8044 = vadd.f32 %v7955, %v8043
      %8045 = vmatmul.bf16.gmra.mxu0 %v1829
      %v8046 = vpop.f32.mrf.mxu0
      %v8047 = vadd.f32 %v7958, %v8046
      %v8048 = vpop.f32.mrf.mxu0
      %v8049 = vadd.f32 %v7960, %v8048
      %8050 = vmatmul.bf16.gmra.mxu0 %v1869
      %v8051 = vpop.f32.mrf.mxu0
      %v8052 = vadd.f32 %v7963, %v8051
      %v8053 = vpop.f32.mrf.mxu0
      %v8054 = vadd.f32 %v7965, %v8053
      %8055 = vmatmul.bf16.gmra.mxu0 %v1909
      %v8056 = vpop.f32.mrf.mxu0
      %v8057 = vadd.f32 %v7968, %v8056
      %v8058 = vpop.f32.mrf.mxu0
      %v8059 = vadd.f32 %v7970, %v8058
      %8060 = vmatmul.bf16.gmra.mxu0 %v1949
      %v8061 = vpop.f32.mrf.mxu0
      %v8062 = vadd.f32 %v7973, %v8061
      %v8063 = vpop.f32.mrf.mxu0
      %v8064 = vadd.f32 %v7975, %v8063
      %8065 = vmatmul.bf16.gmra.mxu0 %v1989
      %v8066 = vpop.f32.mrf.mxu0
      %v8067 = vadd.f32 %v7978, %v8066
      %v8068 = vpop.f32.mrf.mxu0
      %v8069 = vadd.f32 %v7980, %v8068
      %8070 = vmatmul.bf16.gmra.mxu0 %v2029
      %v8071 = vpop.f32.mrf.mxu0
      %v8072 = vadd.f32 %v7983, %v8071
      %v8073 = vpop.f32.mrf.mxu0
      %v8074 = vadd.f32 %v7985, %v8073
      %8075 = vmatmul.bf16.gmra.mxu0 %v2069
      %v8076 = vpop.f32.mrf.mxu0
      %v8077 = vadd.f32 %v7988, %v8076
      %v8078 = vpop.f32.mrf.mxu0
      %v8079 = vadd.f32 %v7990, %v8078
      %8080 = vmatmul.bf16.gmra.mxu0 %v2109
      %v8081 = vpop.f32.mrf.mxu0
      %v8082 = vadd.f32 %v7993, %v8081
      %v8083 = vpop.f32.mrf.mxu0
      %v8084 = vadd.f32 %v7995, %v8083
      %8085 = vmatmul.bf16.gmra.mxu0 %v2149
      %v8086 = vpop.f32.mrf.mxu0
      %v8087 = vadd.f32 %v7998, %v8086
      %v8088 = vpop.f32.mrf.mxu0
      %v8089 = vadd.f32 %v8000, %v8088
      %8090 = vdwg.mxu0
      %8091 = vmatpush.bf16.msra.mxu0 %v4342
      %8092 = vmatpush.bf16.msra.mxu0 %v4341
      %8093 = vmatpush.bf16.msra.mxu0 %v4340
      %8094 = vmatpush.bf16.msra.mxu0 %v4339
      %8095 = vmatpush.bf16.msra.mxu0 %v4338
      %8096 = vmatpush.bf16.msra.mxu0 %v4337
      %8097 = vmatpush.bf16.msra.mxu0 %v4336
      %8098 = vmatpush.bf16.msra.mxu0 %v4335
      %8099 = vmatmul.bf16.gmra.mxu0 %v1550
      %v8100 = vpop.f32.mrf.mxu0
      %v8101 = vadd.f32 %v8012, %v8100
      %v8102 = vpop.f32.mrf.mxu0
      %v8103 = vadd.f32 %v8014, %v8102
      %8104 = vmatmul.bf16.gmra.mxu0 %v1590
      %v8105 = vpop.f32.mrf.mxu0
      %v8106 = vadd.f32 %v8017, %v8105
      %v8107 = vpop.f32.mrf.mxu0
      %v8108 = vadd.f32 %v8019, %v8107
      %8109 = vmatmul.bf16.gmra.mxu0 %v1630
      %v8110 = vpop.f32.mrf.mxu0
      %v8111 = vadd.f32 %v8022, %v8110
      %v8112 = vpop.f32.mrf.mxu0
      %v8113 = vadd.f32 %v8024, %v8112
      %8114 = vmatmul.bf16.gmra.mxu0 %v1670
      %v8115 = vpop.f32.mrf.mxu0
      %v8116 = vadd.f32 %v8027, %v8115
      %v8117 = vpop.f32.mrf.mxu0
      %v8118 = vadd.f32 %v8029, %v8117
      %8119 = vmatmul.bf16.gmra.mxu0 %v1710
      %v8120 = vpop.f32.mrf.mxu0
      %v8121 = vadd.f32 %v8032, %v8120
      %v8122 = vpop.f32.mrf.mxu0
      %v8123 = vadd.f32 %v8034, %v8122
      %8124 = vmatmul.bf16.gmra.mxu0 %v1750
      %v8125 = vpop.f32.mrf.mxu0
      %v8126 = vadd.f32 %v8037, %v8125
      %v8127 = vpop.f32.mrf.mxu0
      %v8128 = vadd.f32 %v8039, %v8127
      %8129 = vmatmul.bf16.gmra.mxu0 %v1790
      %v8130 = vpop.f32.mrf.mxu0
      %v8131 = vadd.f32 %v8042, %v8130
      %v8132 = vpop.f32.mrf.mxu0
      %v8133 = vadd.f32 %v8044, %v8132
      %8134 = vmatmul.bf16.gmra.mxu0 %v1830
      %v8135 = vpop.f32.mrf.mxu0
      %v8136 = vadd.f32 %v8047, %v8135
      %v8137 = vpop.f32.mrf.mxu0
      %v8138 = vadd.f32 %v8049, %v8137
      %8139 = vmatmul.bf16.gmra.mxu0 %v1870
      %v8140 = vpop.f32.mrf.mxu0
      %v8141 = vadd.f32 %v8052, %v8140
      %v8142 = vpop.f32.mrf.mxu0
      %v8143 = vadd.f32 %v8054, %v8142
      %8144 = vmatmul.bf16.gmra.mxu0 %v1910
      %v8145 = vpop.f32.mrf.mxu0
      %v8146 = vadd.f32 %v8057, %v8145
      %v8147 = vpop.f32.mrf.mxu0
      %v8148 = vadd.f32 %v8059, %v8147
      %8149 = vmatmul.bf16.gmra.mxu0 %v1950
      %v8150 = vpop.f32.mrf.mxu0
      %v8151 = vadd.f32 %v8062, %v8150
      %v8152 = vpop.f32.mrf.mxu0
      %v8153 = vadd.f32 %v8064, %v8152
      %8154 = vmatmul.bf16.gmra.mxu0 %v1990
      %v8155 = vpop.f32.mrf.mxu0
      %v8156 = vadd.f32 %v8067, %v8155
      %v8157 = vpop.f32.mrf.mxu0
      %v8158 = vadd.f32 %v8069, %v8157
      %8159 = vmatmul.bf16.gmra.mxu0 %v2030
      %v8160 = vpop.f32.mrf.mxu0
      %v8161 = vadd.f32 %v8072, %v8160
      %v8162 = vpop.f32.mrf.mxu0
      %v8163 = vadd.f32 %v8074, %v8162
      %8164 = vmatmul.bf16.gmra.mxu0 %v2070
      %v8165 = vpop.f32.mrf.mxu0
      %v8166 = vadd.f32 %v8077, %v8165
      %v8167 = vpop.f32.mrf.mxu0
      %v8168 = vadd.f32 %v8079, %v8167
      %8169 = vmatmul.bf16.gmra.mxu0 %v2110
      %v8170 = vpop.f32.mrf.mxu0
      %v8171 = vadd.f32 %v8082, %v8170
      %v8172 = vpop.f32.mrf.mxu0
      %v8173 = vadd.f32 %v8084, %v8172
      %8174 = vmatmul.bf16.gmra.mxu0 %v2150
      %v8175 = vpop.f32.mrf.mxu0
      %v8176 = vadd.f32 %v8087, %v8175
      %v8177 = vpop.f32.mrf.mxu0
      %v8178 = vadd.f32 %v8089, %v8177
      %8179 = vdwg.mxu0
      %8180 = vmatpush.bf16.msra.mxu0 0
      %8181 = vmatpush.bf16.msra.mxu0 0
      %8182 = vmatpush.bf16.msra.mxu0 0
      %8183 = vmatpush.bf16.msra.mxu0 0
      %8184 = vmatpush.bf16.msra.mxu0 0
      %8185 = vmatpush.bf16.msra.mxu0 0
      %8186 = vmatpush.bf16.msra.mxu0 0
      %8187 = vmatpush.bf16.msra.mxu0 %v4707
      %8188 = vmatmul.bf16.gmra.mxu0 %v4658
      %v8189 = vpop.f32.mrf.mxu0
      %v8190 = vadd.f32 %v8101, %v8189
      %v8191 = vpop.f32.mrf.mxu0
      %v8192 = vadd.f32 %v8103, %v8191
      %8193 = vmatmul.bf16.gmra.mxu0 %v4661
      %v8194 = vpop.f32.mrf.mxu0
      %v8195 = vadd.f32 %v8106, %v8194
      %v8196 = vpop.f32.mrf.mxu0
      %v8197 = vadd.f32 %v8108, %v8196
      %8198 = vmatmul.bf16.gmra.mxu0 %v4664
      %v8199 = vpop.f32.mrf.mxu0
      %v8200 = vadd.f32 %v8111, %v8199
      %v8201 = vpop.f32.mrf.mxu0
      %v8202 = vadd.f32 %v8113, %v8201
      %8203 = vmatmul.bf16.gmra.mxu0 %v4667
      %v8204 = vpop.f32.mrf.mxu0
      %v8205 = vadd.f32 %v8116, %v8204
      %v8206 = vpop.f32.mrf.mxu0
      %v8207 = vadd.f32 %v8118, %v8206
      %8208 = vmatmul.bf16.gmra.mxu0 %v4670
      %v8209 = vpop.f32.mrf.mxu0
      %v8210 = vadd.f32 %v8121, %v8209
      %v8211 = vpop.f32.mrf.mxu0
      %v8212 = vadd.f32 %v8123, %v8211
      %8213 = vmatmul.bf16.gmra.mxu0 %v4673
      %v8214 = vpop.f32.mrf.mxu0
      %v8215 = vadd.f32 %v8126, %v8214
      %v8216 = vpop.f32.mrf.mxu0
      %v8217 = vadd.f32 %v8128, %v8216
      %8218 = vmatmul.bf16.gmra.mxu0 %v4676
      %v8219 = vpop.f32.mrf.mxu0
      %v8220 = vadd.f32 %v8131, %v8219
      %v8221 = vpop.f32.mrf.mxu0
      %v8222 = vadd.f32 %v8133, %v8221
      %8223 = vmatmul.bf16.gmra.mxu0 %v4679
      %v8224 = vpop.f32.mrf.mxu0
      %v8225 = vadd.f32 %v8136, %v8224
      %v8226 = vpop.f32.mrf.mxu0
      %v8227 = vadd.f32 %v8138, %v8226
      %8228 = vmatmul.bf16.gmra.mxu0 %v4682
      %v8229 = vpop.f32.mrf.mxu0
      %v8230 = vadd.f32 %v8141, %v8229
      %v8231 = vpop.f32.mrf.mxu0
      %v8232 = vadd.f32 %v8143, %v8231
      %8233 = vmatmul.bf16.gmra.mxu0 %v4685
      %v8234 = vpop.f32.mrf.mxu0
      %v8235 = vadd.f32 %v8146, %v8234
      %v8236 = vpop.f32.mrf.mxu0
      %v8237 = vadd.f32 %v8148, %v8236
      %8238 = vmatmul.bf16.gmra.mxu0 %v4688
      %v8239 = vpop.f32.mrf.mxu0
      %v8240 = vadd.f32 %v8151, %v8239
      %v8241 = vpop.f32.mrf.mxu0
      %v8242 = vadd.f32 %v8153, %v8241
      %8243 = vmatmul.bf16.gmra.mxu0 %v4691
      %v8244 = vpop.f32.mrf.mxu0
      %v8245 = vadd.f32 %v8156, %v8244
      %v8246 = vpop.f32.mrf.mxu0
      %v8247 = vadd.f32 %v8158, %v8246
      %8248 = vmatmul.bf16.gmra.mxu0 %v4694
      %v8249 = vpop.f32.mrf.mxu0
      %v8250 = vadd.f32 %v8161, %v8249
      %v8251 = vpop.f32.mrf.mxu0
      %v8252 = vadd.f32 %v8163, %v8251
      %8253 = vmatmul.bf16.gmra.mxu0 %v4697
      %v8254 = vpop.f32.mrf.mxu0
      %v8255 = vadd.f32 %v8166, %v8254
      %v8256 = vpop.f32.mrf.mxu0
      %v8257 = vadd.f32 %v8168, %v8256
      %8258 = vmatmul.bf16.gmra.mxu0 %v4700
      %v8259 = vpop.f32.mrf.mxu0
      %v8260 = vadd.f32 %v8171, %v8259
      %v8261 = vpop.f32.mrf.mxu0
      %v8262 = vadd.f32 %v8173, %v8261
      %8263 = vmatmul.bf16.gmra.mxu0 %v4703
      %v8264 = vpop.f32.mrf.mxu0
      %v8265 = vadd.f32 %v8176, %v8264
      %v8266 = vpop.f32.mrf.mxu0
      %v8267 = vadd.f32 %v8178, %v8266
      %8268 = vdwg.mxu0
      %v8269 = vmax.f32 %v8190, 0.0
      %v8270 = vmax.f32 %v8192, 0.0
      %v8271 = vmax.f32 %v8195, 0.0
      %v8272 = vmax.f32 %v8197, 0.0
      %v8273 = vmax.f32 %v8200, 0.0
      %v8274 = vmax.f32 %v8202, 0.0
      %v8275 = vmax.f32 %v8205, 0.0
      %v8276 = vmax.f32 %v8207, 0.0
      %v8277 = vmax.f32 %v8210, 0.0
      %v8278 = vmax.f32 %v8212, 0.0
      %v8279 = vmax.f32 %v8215, 0.0
      %v8280 = vmax.f32 %v8217, 0.0
      %v8281 = vmax.f32 %v8220, 0.0
      %v8282 = vmax.f32 %v8222, 0.0
      %v8283 = vmax.f32 %v8225, 0.0
      %v8284 = vmax.f32 %v8227, 0.0
      %v8285 = vmax.f32 %v8230, 0.0
      %v8286 = vmax.f32 %v8232, 0.0
      %v8287 = vmax.f32 %v8235, 0.0
      %v8288 = vmax.f32 %v8237, 0.0
      %v8289 = vmax.f32 %v8240, 0.0
      %v8290 = vmax.f32 %v8242, 0.0
      %v8291 = vmax.f32 %v8245, 0.0
      %v8292 = vmax.f32 %v8247, 0.0
      %v8293 = vmax.f32 %v8250, 0.0
      %v8294 = vmax.f32 %v8252, 0.0
      %v8295 = vmax.f32 %v8255, 0.0
      %v8296 = vmax.f32 %v8257, 0.0
      %v8297 = vmax.f32 %v8260, 0.0
      %v8298 = vmax.f32 %v8262, 0.0
      %v8299 = vmax.f32 %v8265, 0.0
      %v8300 = vmax.f32 %v8267, 0.0
      %v8301 = vpack.c.bf16 %v8270, %v8269
      %v8302 = vpack.c.bf16 %v8272, %v8271
      %v8303 = vpack.c.bf16 %v8274, %v8273
      %v8304 = vpack.c.bf16 %v8276, %v8275
      %v8305 = vpack.c.bf16 %v8278, %v8277
      %v8306 = vpack.c.bf16 %v8280, %v8279
      %v8307 = vpack.c.bf16 %v8282, %v8281
      %v8308 = vpack.c.bf16 %v8284, %v8283
      %v8309 = vpack.c.bf16 %v8286, %v8285
      %v8310 = vpack.c.bf16 %v8288, %v8287
      %v8311 = vpack.c.bf16 %v8290, %v8289
      %v8312 = vpack.c.bf16 %v8292, %v8291
      %v8313 = vpack.c.bf16 %v8294, %v8293
      %v8314 = vpack.c.bf16 %v8296, %v8295
      %v8315 = vpack.c.bf16 %v8298, %v8297
      %v8316 = vpack.c.bf16 %v8300, %v8299
      %v8317 = vld [vmem:[%s3] sm:$0xf]
      %v8318 = vld [vmem:[%s3 + $0x4] sm:$0xf]
      %v8319 = vld [vmem:[%s3 + $0x8] sm:$0xf]
      %v8320 = vld [vmem:[%s3 + $0xc] sm:$0xf]
      %v8321 = vld [vmem:[%s3 + $0x10] sm:$0xf]
      %v8322 = vld [vmem:[%s3 + $0x14] sm:$0xf]
      %v8323 = vld [vmem:[%s3 + $0x18] sm:$0xf]
      %v8324 = vld [vmem:[%s3 + $0x1c] sm:$0xf]
      %v8325 = vld [vmem:[%s3 + $0x20] sm:$0xf]
      %v8326 = vld [vmem:[%s3 + $0x24] sm:$0xf]
      %v8327 = vld [vmem:[%s3 + $0x28] sm:$0xf]
      %v8328 = vld [vmem:[%s3 + $0x2c] sm:$0xf]
      %v8329 = vld [vmem:[%s3 + $0x30] sm:$0xf]
      %v8330 = vld [vmem:[%s3 + $0x34] sm:$0xf]
      %v8331 = vld [vmem:[%s3 + $0x38] sm:$0xf]
      %v8332 = vld [vmem:[%s3 + $0x3c] sm:$0xf]
      %v8333 = vld [vmem:[%s4] sm:$0x1]
      %v8335 = vperm.slane %v8333, 0
      %v8353 = vunpack.c.l.b16 %v8317
      %v8354 = vunpack.c.l.b16 %v8318
      %v8355 = vunpack.c.l.b16 %v8319
      %v8356 = vunpack.c.l.b16 %v8320
      %v8357 = vunpack.c.l.b16 %v8321
      %v8358 = vunpack.c.l.b16 %v8322
      %v8359 = vunpack.c.l.b16 %v8323
      %v8360 = vunpack.c.l.b16 %v8324
      %v8361 = vunpack.c.l.b16 %v8325
      %v8362 = vunpack.c.l.b16 %v8326
      %v8363 = vunpack.c.l.b16 %v8327
      %v8364 = vunpack.c.l.b16 %v8328
      %v8365 = vunpack.c.l.b16 %v8329
      %v8366 = vunpack.c.l.b16 %v8330
      %v8367 = vunpack.c.l.b16 %v8331
      %v8368 = vunpack.c.l.b16 %v8332
      %v8369 = vpack.c.b16 %v8354, %v8353
      %v8370 = vpack.c.b16 %v8356, %v8355
      %v8371 = vpack.c.b16 %v8358, %v8357
      %v8372 = vpack.c.b16 %v8360, %v8359
      %v8373 = vpack.c.b16 %v8362, %v8361
      %v8374 = vpack.c.b16 %v8364, %v8363
      %v8375 = vpack.c.b16 %v8366, %v8365
      %v8376 = vpack.c.b16 %v8368, %v8367
      %8385 = vmatpush.bf16.msra.mxu0 %v8376
      %8386 = vmatpush.bf16.msra.mxu0 %v8375
      %8387 = vmatpush.bf16.msra.mxu0 %v8374
      %8388 = vmatpush.bf16.msra.mxu0 %v8373
      %8389 = vmatpush.bf16.msra.mxu0 %v8372
      %8390 = vmatpush.bf16.msra.mxu0 %v8371
      %8391 = vmatpush.bf16.msra.mxu0 %v8370
      %8392 = vmatpush.bf16.msra.mxu0 %v8369
      %8393 = vmatmul.bf16.gmra.mxu0 %v8301
      %v8394 = vpop.f32.mrf.mxu0
      %v8395 = vadd.f32 %v8335, %v8394
      %v8396 = vpop.f32.mrf.mxu0
      %v8397 = vadd.f32 %v8335, %v8396
      %8398 = vmatmul.bf16.gmra.mxu0 %v8302
      %v8399 = vpop.f32.mrf.mxu0
      %v8400 = vadd.f32 %v8335, %v8399
      %v8401 = vpop.f32.mrf.mxu0
      %v8402 = vadd.f32 %v8335, %v8401
      %8403 = vmatmul.bf16.gmra.mxu0 %v8303
      %v8404 = vpop.f32.mrf.mxu0
      %v8405 = vadd.f32 %v8335, %v8404
      %v8406 = vpop.f32.mrf.mxu0
      %v8407 = vadd.f32 %v8335, %v8406
      %8408 = vmatmul.bf16.gmra.mxu0 %v8304
      %v8409 = vpop.f32.mrf.mxu0
      %v8410 = vadd.f32 %v8335, %v8409
      %v8411 = vpop.f32.mrf.mxu0
      %v8412 = vadd.f32 %v8335, %v8411
      %8413 = vmatmul.bf16.gmra.mxu0 %v8305
      %v8414 = vpop.f32.mrf.mxu0
      %v8415 = vadd.f32 %v8335, %v8414
      %v8416 = vpop.f32.mrf.mxu0
      %v8417 = vadd.f32 %v8335, %v8416
      %8418 = vmatmul.bf16.gmra.mxu0 %v8306
      %v8419 = vpop.f32.mrf.mxu0
      %v8420 = vadd.f32 %v8335, %v8419
      %v8421 = vpop.f32.mrf.mxu0
      %v8422 = vadd.f32 %v8335, %v8421
      %8423 = vmatmul.bf16.gmra.mxu0 %v8307
      %v8424 = vpop.f32.mrf.mxu0
      %v8425 = vadd.f32 %v8335, %v8424
      %v8426 = vpop.f32.mrf.mxu0
      %v8427 = vadd.f32 %v8335, %v8426
      %8428 = vmatmul.bf16.gmra.mxu0 %v8308
      %v8429 = vpop.f32.mrf.mxu0
      %v8430 = vadd.f32 %v8335, %v8429
      %v8431 = vpop.f32.mrf.mxu0
      %v8432 = vadd.f32 %v8335, %v8431
      %8433 = vmatmul.bf16.gmra.mxu0 %v8309
      %v8434 = vpop.f32.mrf.mxu0
      %v8435 = vadd.f32 %v8335, %v8434
      %v8436 = vpop.f32.mrf.mxu0
      %v8437 = vadd.f32 %v8335, %v8436
      %8438 = vmatmul.bf16.gmra.mxu0 %v8310
      %v8439 = vpop.f32.mrf.mxu0
      %v8440 = vadd.f32 %v8335, %v8439
      %v8441 = vpop.f32.mrf.mxu0
      %v8442 = vadd.f32 %v8335, %v8441
      %8443 = vmatmul.bf16.gmra.mxu0 %v8311
      %v8444 = vpop.f32.mrf.mxu0
      %v8445 = vadd.f32 %v8335, %v8444
      %v8446 = vpop.f32.mrf.mxu0
      %v8447 = vadd.f32 %v8335, %v8446
      %8448 = vmatmul.bf16.gmra.mxu0 %v8312
      %v8449 = vpop.f32.mrf.mxu0
      %v8450 = vadd.f32 %v8335, %v8449
      %v8451 = vpop.f32.mrf.mxu0
      %v8452 = vadd.f32 %v8335, %v8451
      %8453 = vmatmul.bf16.gmra.mxu0 %v8313
      %v8454 = vpop.f32.mrf.mxu0
      %v8455 = vadd.f32 %v8335, %v8454
      %v8456 = vpop.f32.mrf.mxu0
      %v8457 = vadd.f32 %v8335, %v8456
      %8458 = vmatmul.bf16.gmra.mxu0 %v8314
      %v8459 = vpop.f32.mrf.mxu0
      %v8460 = vadd.f32 %v8335, %v8459
      %v8461 = vpop.f32.mrf.mxu0
      %v8462 = vadd.f32 %v8335, %v8461
      %8463 = vmatmul.bf16.gmra.mxu0 %v8315
      %v8464 = vpop.f32.mrf.mxu0
      %v8465 = vadd.f32 %v8335, %v8464
      %v8466 = vpop.f32.mrf.mxu0
      %v8467 = vadd.f32 %v8335, %v8466
      %8468 = vmatmul.bf16.gmra.mxu0 %v8316
      %v8469 = vpop.f32.mrf.mxu0
      %v8470 = vadd.f32 %v8335, %v8469
      %v8471 = vpop.f32.mrf.mxu0
      %v8472 = vadd.f32 %v8335, %v8471
      %8473 = vdwg.mxu0
      %vm8474 = vcmask 39936
      %8475 = vst.msk [vmem:[%s229] sm:$0xff] %vm8474, %v8395
      %8476 = vst.msk [vmem:[%s229 + $0x8] sm:$0xff] %vm8474, %v8397
      %8477 = vst.msk [vmem:[%s229 + $0x10] sm:$0xff] %vm8474, %v8400
      %8478 = vst.msk [vmem:[%s229 + $0x18] sm:$0xff] %vm8474, %v8402
      %8479 = vst.msk [vmem:[%s229 + $0x20] sm:$0xff] %vm8474, %v8405
      %8480 = vst.msk [vmem:[%s229 + $0x28] sm:$0xff] %vm8474, %v8407
      %8481 = vst.msk [vmem:[%s229 + $0x30] sm:$0xff] %vm8474, %v8410
      %8482 = vst.msk [vmem:[%s229 + $0x38] sm:$0xff] %vm8474, %v8412
      %8483 = vst.msk [vmem:[%s229 + $0x40] sm:$0xff] %vm8474, %v8415
      %8484 = vst.msk [vmem:[%s229 + $0x48] sm:$0xff] %vm8474, %v8417
      %8485 = vst.msk [vmem:[%s229 + $0x50] sm:$0xff] %vm8474, %v8420
      %8486 = vst.msk [vmem:[%s229 + $0x58] sm:$0xff] %vm8474, %v8422
      %8487 = vst.msk [vmem:[%s229 + $0x60] sm:$0xff] %vm8474, %v8425
      %8488 = vst.msk [vmem:[%s229 + $0x68] sm:$0xff] %vm8474, %v8427
      %8489 = vst.msk [vmem:[%s229 + $0x70] sm:$0xff] %vm8474, %v8430
      %8490 = vst.msk [vmem:[%s229 + $0x78] sm:$0xff] %vm8474, %v8432
      %8491 = vst.msk [vmem:[%s229 + $0x80] sm:$0xff] %vm8474, %v8435
      %8492 = vst.msk [vmem:[%s229 + $0x88] sm:$0xff] %vm8474, %v8437
      %8493 = vst.msk [vmem:[%s229 + $0x90] sm:$0xff] %vm8474, %v8440
      %8494 = vst.msk [vmem:[%s229 + $0x98] sm:$0xff] %vm8474, %v8442
      %8495 = vst.msk [vmem:[%s229 + $0xa0] sm:$0xff] %vm8474, %v8445
      %8496 = vst.msk [vmem:[%s229 + $0xa8] sm:$0xff] %vm8474, %v8447
      %8497 = vst.msk [vmem:[%s229 + $0xb0] sm:$0xff] %vm8474, %v8450
      %8498 = vst.msk [vmem:[%s229 + $0xb8] sm:$0xff] %vm8474, %v8452
      %8499 = vst.msk [vmem:[%s229 + $0xc0] sm:$0xff] %vm8474, %v8455
      %8500 = vst.msk [vmem:[%s229 + $0xc8] sm:$0xff] %vm8474, %v8457
      %8501 = vst.msk [vmem:[%s229 + $0xd0] sm:$0xff] %vm8474, %v8460
      %8502 = vst.msk [vmem:[%s229 + $0xd8] sm:$0xff] %vm8474, %v8462
      %8503 = vst.msk [vmem:[%s229 + $0xe0] sm:$0xff] %vm8474, %v8465
      %8504 = vst.msk [vmem:[%s229 + $0xe8] sm:$0xff] %vm8474, %v8467
      %8505 = vst.msk [vmem:[%s229 + $0xf0] sm:$0xff] %vm8474, %v8470
      %8506 = vst.msk [vmem:[%s229 + $0xf8] sm:$0xff] %vm8474, %v8472
      %s8507 = smul.u32 32, %s16
      %p8508 = scmp.lt.s32.totalorder %s8507, 127
      %s8509 = scalar_select %p8508, %s8507, 127
      %s8510 = smul.addr %s8509, 8
      %s8511 = scalar_lea.vmem %s5, %s8510
      // Predicated region
      $region41: #{tpu_custom_call.1} parent=39 // pred_check
        %p8512 = pneg %p144
      $region42: #{tpu_custom_call.1} parent=39 // pred_check_branch
        %8514 = sbr.rel (%p8512) target = $region44
      $region43: #{tpu_custom_call.1} parent=39 // pred_region
        %s8515 = smul.u32 32, %s16
      $region44: #{tpu_custom_call.1} parent=39 // pred_fallthru
        _
    $region40: #{tpu_custom_call.1} parent=5 // pred_fallthru
      _
    %p8516 = scmp.le.s32.totalorder 2, %s11
    // Predicated region
    $region45: #{tpu_custom_call.1} parent=5 // pred_check
      %p8517 = pneg %p8516
    $region46: #{tpu_custom_call.1} parent=5 // pred_check_branch
      %8519 = sbr.rel (%p8517) target = $region48
    $region47: #{tpu_custom_call.1} parent=5 // pred_region
      %s8520 = ssub.s32 %s11, 2
      // Predicated region
      $region49: #{tpu_custom_call.1} parent=47 // pred_check
        %p8521 = pneg %p150
      $region50: #{tpu_custom_call.1} parent=47 // pred_check_branch
        %8523 = sbr.rel (%p8521) target = $region52
      $region51: #{tpu_custom_call.1} parent=47 // pred_region
        %s8524 = smul.u32 32, %s17
        %p8525 = scmp.lt.s32.totalorder %s8524, 127
        %s8526 = scalar_select %p8525, %s8524, 127
        %s8527 = smul.addr %s8526, 8
        %s8528 = scalar_lea.vmem %s5, %s8527
      $region52: #{tpu_custom_call.1} parent=47 // pred_fallthru
        _
    $region48: #{tpu_custom_call.1} parent=5 // pred_fallthru
      _
  $region6: #{tpu_custom_call.1} parent=0 // loop_footer
    %s15 = sadd.s32 1, %s11
  $region7: #{tpu_custom_call.1} parent=0 // loop_footer_branch
    %10 = sbr.rel target = $region3
  $region8: #{tpu_custom_call.1} parent=0 // loop_exit
    _

</llo_original>
